<compile_context>
chip_gen: v7x
topology: tpu7x:2x2x1
jax: 0.10.0
libtpu: 0.0.40
codegen_flags: <defaults>
</compile_context>

<pallas_src>
import functools

import jax
import jax.numpy as jnp
from jax.experimental import pallas as pl
from jax.experimental.pallas import tpu as pltpu


def _fast_recip(x):
    # EUP reciprocal occupies a free VLIW slot; fall back to a VPU divide if unavailable.
    if hasattr(pl, "reciprocal"):
        return pl.reciprocal(x, approx=True)
    return 1.0 / x


# ----------------------------------------------------------------------------------
# Fused kernel: the whole encoder section for one batch element per grid step.
# ----------------------------------------------------------------------------------

def _encoder_kernel(x_ref,
                    wqkv_ref, bqkv_ref, wp_ref, bp_ref,
                    gpre_ref, bpre_ref, gpost_ref, bpost_ref,
                    w1_ref, b1_ref, w2_ref, b2_ref,
                    out_ref,
                    ctxt_sc, shuf_sc,
                    *, num_layers, seq, d_model):
    S, D = seq, d_model
    G = D // S  # wrapper asserts S | D

    def layernorm(v, g, b):
        mu = jnp.mean(v, axis=-1, keepdims=True)
        var = jnp.mean((v - mu) * (v - mu), axis=-1, keepdims=True)   # biased (PyTorch)
        return (v - mu) * jax.lax.rsqrt(var + 1e-5) * g + b

    def attention(xin, l, sl):
        # Fused Q/K/V projection (q-scale already folded into the Q slice of the weights).
        xb = xin.astype(jnp.bfloat16)
        qkv = jnp.dot(xb, wqkv_ref[l, sl],
                      preferred_element_type=jnp.float32) + bqkv_ref[l, sl]   # (S, 3D) f32
        q = qkv[:, 0 * D:1 * D]
        k = qkv[:, 1 * D:2 * D]
        v = qkv[:, 2 * D:3 * D]
        # scores = q @ k^T without materializing a transpose
        s = jax.lax.dot_general(q.astype(jnp.bfloat16), k.astype(jnp.bfloat16),
                                (((1,), (1,)), ((), ())),
                                preferred_element_type=jnp.float32)           # (S, S)
        s = s - jnp.max(s, axis=-1, keepdims=True)
        p = jnp.exp(s)
        p = p * _fast_recip(jnp.sum(p, axis=-1, keepdims=True))
        # ctx^T = (p @ v)^T = v^T @ p^T computed directly on the MXU: (D, S)
        ctxt = jax.lax.dot_general(v.astype(jnp.bfloat16), p.astype(jnp.bfloat16),
                                   (((0,), (1,)), ((), ())),
                                   preferred_element_type=jnp.float32)
        # PyTorch's (attn @ v).transpose(1, 2).reshape(b, s, c):
        #   shuffled[i, r*S + s] = ctx^T[i*G + r, s].
        # Built in VMEM with G strided sublane reads -> lane-block writes, so the output
        # projection below stays one full-width, lane-dense (S, D) @ (D, D) matmul.
        ctxt_sc[...] = ctxt
        for r in range(G):                       # static, small loop (G = D // S)
            shuf_sc[:, r * S:(r + 1) * S] = ctxt_sc[pl.ds(r, S, stride=G), :]
        shuf = shuf_sc[...]                                                  # (S, D) f32
        return jnp.dot(shuf.astype(jnp.bfloat16), wp_ref[l, sl],
                       preferred_element_type=jnp.float32) + bp_ref[l, sl]

    def mlp(v, l, sl):
        h = jnp.dot(v.astype(jnp.bfloat16), w1_ref[l, sl],
                    preferred_element_type=jnp.float32) + b1_ref[l, sl]
        h = 0.5 * h * (1.0 + jax.lax.erf(h * 0.7071067811865476))            # exact GELU
        return jnp.dot(h.astype(jnp.bfloat16), w2_ref[l, sl],
                       preferred_element_type=jnp.float32) + b2_ref[l, sl]

    x = x_ref[...]                                                           # (S, D) f32
    for l in range(num_layers):                  # static unroll; weights stay resident
        # --- sublayer 1: reference computes norm1a(x) and DISCARDS it -> attn on raw x.
        x = x + attention(x, l, 0)
        x = x + mlp(layernorm(x, gpost_ref[l, 0], bpost_ref[l, 0]), l, 0)
        # --- sublayer 2 (encoder, enc_output=None): q = k = v = norm2a(x).
        x = x + attention(layernorm(x, gpre_ref[l], bpre_ref[l]), l, 1)
        x = x + mlp(layernorm(x, gpost_ref[l, 1], bpost_ref[l, 1]), l, 1)
    out_ref[...] = x


# ----------------------------------------------------------------------------------
# Wrapper
# ----------------------------------------------------------------------------------

def encoder_section(latent, params):
    """Full EncoderSection forward (all layers) in a single pallas_call."""
    B, S, D = latent.shape
    L = params["wqkv"].shape[0]
    assert D % S == 0, "in-kernel transpose/reshape shuffle assumes seq_len divides d_model"
    # TODO(synk): general shuffle for S not dividing D (fall back to a separate attn-core
    #             kernel whose (B, D, S) output reshape realizes the shuffle for free).

    def const_spec(a):
        n = a.ndim
        return pl.BlockSpec(a.shape, lambda b: (0,) * n)   # resident across grid steps

    w_names = ("wqkv", "bqkv", "wp", "bp", "gpre", "bpre", "gpost", "bpost",
               "w1", "b1", "w2", "b2")
    w_args = [params[n] for n in w_names]

    kernel = functools.partial(_encoder_kernel, num_layers=L, seq=S, d_model=D)
    return pl.pallas_call(
        kernel,
        out_shape=jax.ShapeDtypeStruct((B, S, D), jnp.float32),
        grid=(B,),    # one batch element per step; grid >= 2 -> both v7x TensorCores
        in_specs=[pl.BlockSpec((None, S, D), lambda b: (b, 0, 0))]
                 + [const_spec(a) for a in w_args],
        out_specs=pl.BlockSpec((None, S, D), lambda b: (b, 0, 0)),
        scratch_shapes=[pltpu.VMEM((D, S), jnp.float32),    # ctx^T staging
                        pltpu.VMEM((S, D), jnp.float32)],   # shuffled context
        compiler_params=pltpu.CompilerParams(dimension_semantics=("parallel",)),
    )(latent, *w_args)


# ----------------------------------------------------------------------------------
# Deterministic parameter init (kernel-ready form)
#   * weights stored (in, out) = PyTorch W.T; matmul weights cast to bf16 for the MXU
#   * Q/K/V fused into one (D, 3D) weight; attention q-scale folded into the Q slice
#   * biases / LayerNorm params f32, shaped (1, dim) for broadcasting
#   * stacked with leading (layer, sublayer) dims so the kernel takes 12 arrays total
# ----------------------------------------------------------------------------------

def _init_linear(key, d_in, d_out):
    kw, kb = jax.random.split(key)
    bound = 1.0 / (d_in ** 0.5)
    w = jax.random.uniform(kw, (d_in, d_out), jnp.float32, -bound, bound)
    b = jax.random.uniform(kb, (d_out,), jnp.float32, -bound, bound)
    return w, b


def init_encoder_params(key, num_layers, d_model, num_head, mlp_expansion):
    assert d_model % num_head == 0
    D = d_model
    H = int(d_model * mlp_expansion)
    scale = float((d_model // num_head) ** -0.5)

    wqkv, bqkv, wp, bp = [], [], [], []
    gpre, bpre, gpost, bpost = [], [], [], []
    w1, b1, w2, b2 = [], [], [], []

    for _ in range(num_layers):
        l_wqkv, l_bqkv, l_wp, l_bp = [], [], [], []
        l_gpost, l_bpost = [], []
        l_w1, l_b1, l_w2, l_b2 = [], [], [], []
        for _sub in range(2):                       # (attn1, mlp1) and (attn2, mlp2)
            key, kq, kk, kv, kpr, k1, k2 = jax.random.split(key, 7)
            wq_, bq_ = _init_linear(kq, D, D)
            wk_, bk_ = _init_linear(kk, D, D)
            wv_, bv_ = _init_linear(kv, D, D)
            wpr, bpr = _init_linear(kpr, D, D)
            # fold the attention q-scale into the Q slice of the fused QKV weight/bias
            l_wqkv.append(jnp.concatenate([wq_ * scale, wk_, wv_], axis=1))
            l_bqkv.append(jnp.concatenate([bq_ * scale, bk_, bv_])[None, :])
            l_wp.append(wpr)
            l_bp.append(bpr[None, :])
            l_gpost.append(jnp.ones((1, D), jnp.float32))     # norm1b / norm2b
            l_bpost.append(jnp.zeros((1, D), jnp.float32))
            w1_, b1_ = _init_linear(k1, D, H)
            w2_, b2_ = _init_linear(k2, H, D)
            l_w1.append(w1_); l_b1.append(b1_[None, :])
            l_w2.append(w2_); l_b2.append(b2_[None, :])
        wqkv.append(jnp.stack(l_wqkv)); bqkv.append(jnp.stack(l_bqkv))
        wp.append(jnp.stack(l_wp)); bp.append(jnp.stack(l_bp))
        gpost.append(jnp.stack(l_gpost)); bpost.append(jnp.stack(l_bpost))
        w1.append(jnp.stack(l_w1)); b1.append(jnp.stack(l_b1))
        w2.append(jnp.stack(l_w2)); b2.append(jnp.stack(l_b2))
        gpre.append(jnp.ones((1, D), jnp.float32))            # norm2a
        bpre.append(jnp.zeros((1, D), jnp.float32))
        # norm1a exists in the reference but its output is discarded -> no params needed.

    return dict(
        wqkv=jnp.stack(wqkv).astype(jnp.bfloat16),   # (L, 2, D, 3D)
        bqkv=jnp.stack(bqkv),                        # (L, 2, 1, 3D) f32
        wp=jnp.stack(wp).astype(jnp.bfloat16),       # (L, 2, D, D)
        bp=jnp.stack(bp),                            # (L, 2, 1, D)
        gpre=jnp.stack(gpre),                        # (L, 1, D)
        bpre=jnp.stack(bpre),                        # (L, 1, D)
        gpost=jnp.stack(gpost),                      # (L, 2, 1, D)
        bpost=jnp.stack(bpost),                      # (L, 2, 1, D)
        w1=jnp.stack(w1).astype(jnp.bfloat16),       # (L, 2, D, H)
        b1=jnp.stack(b1),                            # (L, 2, 1, H)
        w2=jnp.stack(w2).astype(jnp.bfloat16),       # (L, 2, H, D)
        b2=jnp.stack(b2),                            # (L, 2, 1, D)
    )


# ----------------------------------------------------------------------------------

if __name__ == "__main__":
    NUM_LAYERS = 2
    D_MODEL = 128        # lane-dense channel dim (multiple of 128), divisible by SEQ
    NUM_HEAD = 4
    MLP_EXPANSION = 4
    BATCH = 2
    SEQ = 16

    key = jax.random.PRNGKey(0)
    key, kx, kp = jax.random.split(key, 3)

    latent = jax.random.normal(kx, (BATCH, SEQ, D_MODEL), jnp.float32)
    params = init_encoder_params(kp, NUM_LAYERS, D_MODEL, NUM_HEAD, MLP_EXPANSION)

    fwd = jax.jit(lambda x: encoder_section(x, params))
    out = fwd(latent)
    jax.block_until_ready(out)

    assert out.shape == (BATCH, SEQ, D_MODEL), out.shape
    assert bool(jnp.all(jnp.isfinite(out)))
    print("KERNEL_OK")
</pallas_src>

<mosaic_0001>
module attributes {stable_mosaic.version = 11 : i64} {
  func.func @_encoder_kernel(%arg0: i32, %arg1: memref<1x16x128xf32, #tpu.memory_space<vmem>>, %arg2: memref<2x2x128x384xbf16, #tpu.memory_space<vmem>>, %arg3: memref<2x2x1x384xf32, #tpu.memory_space<vmem>>, %arg4: memref<2x2x128x128xbf16, #tpu.memory_space<vmem>>, %arg5: memref<2x2x1x128xf32, #tpu.memory_space<vmem>>, %arg6: memref<2x1x128xf32, #tpu.memory_space<vmem>>, %arg7: memref<2x1x128xf32, #tpu.memory_space<vmem>>, %arg8: memref<2x2x1x128xf32, #tpu.memory_space<vmem>>, %arg9: memref<2x2x1x128xf32, #tpu.memory_space<vmem>>, %arg10: memref<2x2x128x512xbf16, #tpu.memory_space<vmem>>, %arg11: memref<2x2x1x512xf32, #tpu.memory_space<vmem>>, %arg12: memref<2x2x512x128xbf16, #tpu.memory_space<vmem>>, %arg13: memref<2x2x1x128xf32, #tpu.memory_space<vmem>>, %arg14: memref<1x16x128xf32, #tpu.memory_space<vmem>>, %arg15: memref<128x16xf32, #tpu.memory_space<vmem>>, %arg16: memref<16x128xf32, #tpu.memory_space<vmem>>) attributes {dimension_semantics = [#tpu.dimension_semantics<parallel>], iteration_bounds = array<i64: 2>, scalar_prefetch = 0 : i64, scratch_operands = 2 : i64, tpu.core_type = #tpu.core_type<tc>, window_params = [{transform_indices = @transform_0, window_bounds = array<i64: 1, 16, 128>}, {pipeline_mode = #tpu.pipeline_mode<synchronous>, transform_indices = @transform_1, window_bounds = array<i64: 2, 2, 128, 384>}, {pipeline_mode = #tpu.pipeline_mode<synchronous>, transform_indices = @transform_2, window_bounds = array<i64: 2, 2, 1, 384>}, {pipeline_mode = #tpu.pipeline_mode<synchronous>, transform_indices = @transform_3, window_bounds = array<i64: 2, 2, 128, 128>}, {pipeline_mode = #tpu.pipeline_mode<synchronous>, transform_indices = @transform_4, window_bounds = array<i64: 2, 2, 1, 128>}, {pipeline_mode = #tpu.pipeline_mode<synchronous>, transform_indices = @transform_5, window_bounds = array<i64: 2, 1, 128>}, {pipeline_mode = #tpu.pipeline_mode<synchronous>, transform_indices = @transform_6, window_bounds = array<i64: 2, 1, 128>}, {pipeline_mode = #tpu.pipeline_mode<synchronous>, transform_indices = @transform_7, window_bounds = array<i64: 2, 2, 1, 128>}, {pipeline_mode = #tpu.pipeline_mode<synchronous>, transform_indices = @transform_8, window_bounds = array<i64: 2, 2, 1, 128>}, {pipeline_mode = #tpu.pipeline_mode<synchronous>, transform_indices = @transform_9, window_bounds = array<i64: 2, 2, 128, 512>}, {pipeline_mode = #tpu.pipeline_mode<synchronous>, transform_indices = @transform_10, window_bounds = array<i64: 2, 2, 1, 512>}, {pipeline_mode = #tpu.pipeline_mode<synchronous>, transform_indices = @transform_11, window_bounds = array<i64: 2, 2, 512, 128>}, {pipeline_mode = #tpu.pipeline_mode<synchronous>, transform_indices = @transform_12, window_bounds = array<i64: 2, 2, 1, 128>}, {transform_indices = @transform_13, window_bounds = array<i64: 1, 16, 128>}]} {
    %c0 = arith.constant 0 : index
    %c0_0 = arith.constant 0 : index
    %c0_1 = arith.constant 0 : index
    %0 = vector.load %arg1[%c0, %c0_0, %c0_1] : memref<1x16x128xf32, #tpu.memory_space<vmem>>, vector<1x16x128xf32>
    %1 = vector.shape_cast %0 : vector<1x16x128xf32> to vector<16x128xf32>
    %2 = arith.truncf %1 : vector<16x128xf32> to vector<16x128xbf16>
    %c0_2 = arith.constant 0 : index
    %c0_3 = arith.constant 0 : index
    %c0_4 = arith.constant 0 : index
    %c0_5 = arith.constant 0 : index
    %3 = vector.load %arg2[%c0_2, %c0_3, %c0_4, %c0_5] : memref<2x2x128x384xbf16, #tpu.memory_space<vmem>>, vector<1x1x128x384xbf16>
    %4 = vector.shape_cast %3 : vector<1x1x128x384xbf16> to vector<128x384xbf16>
    %cst = arith.constant dense<0.000000e+00> : vector<16x384xf32>
    %5 = tpu.matmul %2, %4, %cst {dimension_numbers = #tpu.dot_dimension_numbers<[1], [0], [0], [1], [0, 0, 1, 1], [], []>} : vector<16x128xbf16>, vector<128x384xbf16>, vector<16x384xf32> -> vector<16x384xf32>
    %c0_6 = arith.constant 0 : index
    %c0_7 = arith.constant 0 : index
    %c0_8 = arith.constant 0 : index
    %c0_9 = arith.constant 0 : index
    %6 = vector.load %arg3[%c0_6, %c0_7, %c0_8, %c0_9] : memref<2x2x1x384xf32, #tpu.memory_space<vmem>>, vector<1x1x1x384xf32>
    %7 = vector.shape_cast %6 : vector<1x1x1x384xf32> to vector<1x384xf32>
    %8 = vector.broadcast %7 : vector<1x384xf32> to vector<16x384xf32>
    %9 = arith.addf %5, %8 : vector<16x384xf32>
    %10 = vector.extract_strided_slice %9 {offsets = [0, 0], sizes = [16, 128], strides = [1, 1]} : vector<16x384xf32> to vector<16x128xf32>
    %11 = vector.extract_strided_slice %9 {offsets = [0, 128], sizes = [16, 128], strides = [1, 1]} : vector<16x384xf32> to vector<16x128xf32>
    %12 = vector.extract_strided_slice %9 {offsets = [0, 256], sizes = [16, 128], strides = [1, 1]} : vector<16x384xf32> to vector<16x128xf32>
    %13 = arith.truncf %10 : vector<16x128xf32> to vector<16x128xbf16>
    %14 = arith.truncf %11 : vector<16x128xf32> to vector<16x128xbf16>
    %cst_10 = arith.constant dense<0.000000e+00> : vector<16x16xf32>
    %15 = tpu.matmul %13, %14, %cst_10 {dimension_numbers = #tpu.dot_dimension_numbers<[1], [1], [0], [0], [0, 0, 1, 0], [], []>} : vector<16x128xbf16>, vector<16x128xbf16>, vector<16x16xf32> -> vector<16x16xf32>
    %cst_11 = arith.constant dense<0xFF800000> : vector<16xf32>
    %16 = vector.multi_reduction <maximumf>, %15, %cst_11 [1] : vector<16x16xf32> to vector<16xf32>
    %17 = vector.shape_cast %16 : vector<16xf32> to vector<16x1xf32>
    %18 = vector.broadcast %17 : vector<16x1xf32> to vector<16x16xf32>
    %19 = arith.subf %15, %18 : vector<16x16xf32>
    %20 = math.exp %19 : vector<16x16xf32>
    %cst_12 = arith.constant dense<0.000000e+00> : vector<16xf32>
    %21 = vector.multi_reduction <add>, %20, %cst_12 [1] : vector<16x16xf32> to vector<16xf32>
    %22 = vector.shape_cast %21 : vector<16xf32> to vector<16x1xf32>
    %23 = tpu.reciprocal %22 {approx = true} : vector<16x1xf32> -> vector<16x1xf32>
    %24 = vector.broadcast %23 : vector<16x1xf32> to vector<16x16xf32>
    %25 = arith.mulf %20, %24 : vector<16x16xf32>
    %26 = arith.truncf %12 : vector<16x128xf32> to vector<16x128xbf16>
    %27 = arith.truncf %25 : vector<16x16xf32> to vector<16x16xbf16>
    %cst_13 = arith.constant dense<0.000000e+00> : vector<128x16xf32>
    %28 = tpu.matmul %26, %27, %cst_13 {dimension_numbers = #tpu.dot_dimension_numbers<[0], [1], [1], [0], [0, 1, 1, 0], [], []>} : vector<16x128xbf16>, vector<16x16xbf16>, vector<128x16xf32> -> vector<128x16xf32>
    %c0_14 = arith.constant 0 : index
    %c0_15 = arith.constant 0 : index
    %29 = vector.load %arg15[%c0_14, %c0_15] : memref<128x16xf32, #tpu.memory_space<vmem>>, vector<128x16xf32>
    tpu.vector_store %arg15[%c0_14, %c0_15], %28 {strides = array<i32>} : memref<128x16xf32, #tpu.memory_space<vmem>>, vector<128x16xf32>,
    %c0_16 = arith.constant 0 : index
    %c0_17 = arith.constant 0 : index
    %30 = tpu.strided_load %arg15[%c0_16, %c0_17] {strides = array<i32: 8, 1>} : memref<128x16xf32, #tpu.memory_space<vmem>>, vector<16x16xf32>
    %c0_18 = arith.constant 0 : index
    %c0_19 = arith.constant 0 : index
    %31 = vector.load %arg16[%c0_18, %c0_19] : memref<16x128xf32, #tpu.memory_space<vmem>>, vector<16x16xf32>
    tpu.vector_store %arg16[%c0_18, %c0_19], %30 {strides = array<i32>} : memref<16x128xf32, #tpu.memory_space<vmem>>, vector<16x16xf32>,
    %c1 = arith.constant 1 : index
    %c0_20 = arith.constant 0 : index
    %32 = tpu.strided_load %arg15[%c1, %c0_20] {strides = array<i32: 8, 1>} : memref<128x16xf32, #tpu.memory_space<vmem>>, vector<16x16xf32>
    %c0_21 = arith.constant 0 : index
    %c16 = arith.constant 16 : index
    %33 = vector.load %arg16[%c0_21, %c16] : memref<16x128xf32, #tpu.memory_space<vmem>>, vector<16x16xf32>
    tpu.vector_store %arg16[%c0_21, %c16], %32 {strides = array<i32>} : memref<16x128xf32, #tpu.memory_space<vmem>>, vector<16x16xf32>,
    %c2 = arith.constant 2 : index
    %c0_22 = arith.constant 0 : index
    %34 = tpu.strided_load %arg15[%c2, %c0_22] {strides = array<i32: 8, 1>} : memref<128x16xf32, #tpu.memory_space<vmem>>, vector<16x16xf32>
    %c0_23 = arith.constant 0 : index
    %c32 = arith.constant 32 : index
    %35 = vector.load %arg16[%c0_23, %c32] : memref<16x128xf32, #tpu.memory_space<vmem>>, vector<16x16xf32>
    tpu.vector_store %arg16[%c0_23, %c32], %34 {strides = array<i32>} : memref<16x128xf32, #tpu.memory_space<vmem>>, vector<16x16xf32>,
    %c3 = arith.constant 3 : index
    %c0_24 = arith.constant 0 : index
    %36 = tpu.strided_load %arg15[%c3, %c0_24] {strides = array<i32: 8, 1>} : memref<128x16xf32, #tpu.memory_space<vmem>>, vector<16x16xf32>
    %c0_25 = arith.constant 0 : index
    %c48 = arith.constant 48 : index
    %37 = vector.load %arg16[%c0_25, %c48] : memref<16x128xf32, #tpu.memory_space<vmem>>, vector<16x16xf32>
    tpu.vector_store %arg16[%c0_25, %c48], %36 {strides = array<i32>} : memref<16x128xf32, #tpu.memory_space<vmem>>, vector<16x16xf32>,
    %c4 = arith.constant 4 : index
    %c0_26 = arith.constant 0 : index
    %38 = tpu.strided_load %arg15[%c4, %c0_26] {strides = array<i32: 8, 1>} : memref<128x16xf32, #tpu.memory_space<vmem>>, vector<16x16xf32>
    %c0_27 = arith.constant 0 : index
    %c64 = arith.constant 64 : index
    %39 = vector.load %arg16[%c0_27, %c64] : memref<16x128xf32, #tpu.memory_space<vmem>>, vector<16x16xf32>
    tpu.vector_store %arg16[%c0_27, %c64], %38 {strides = array<i32>} : memref<16x128xf32, #tpu.memory_space<vmem>>, vector<16x16xf32>,
    %c5 = arith.constant 5 : index
    %c0_28 = arith.constant 0 : index
    %40 = tpu.strided_load %arg15[%c5, %c0_28] {strides = array<i32: 8, 1>} : memref<128x16xf32, #tpu.memory_space<vmem>>, vector<16x16xf32>
    %c0_29 = arith.constant 0 : index
    %c80 = arith.constant 80 : index
    %41 = vector.load %arg16[%c0_29, %c80] : memref<16x128xf32, #tpu.memory_space<vmem>>, vector<16x16xf32>
    tpu.vector_store %arg16[%c0_29, %c80], %40 {strides = array<i32>} : memref<16x128xf32, #tpu.memory_space<vmem>>, vector<16x16xf32>,
    %c6 = arith.constant 6 : index
    %c0_30 = arith.constant 0 : index
    %42 = tpu.strided_load %arg15[%c6, %c0_30] {strides = array<i32: 8, 1>} : memref<128x16xf32, #tpu.memory_space<vmem>>, vector<16x16xf32>
    %c0_31 = arith.constant 0 : index
    %c96 = arith.constant 96 : index
    %43 = vector.load %arg16[%c0_31, %c96] : memref<16x128xf32, #tpu.memory_space<vmem>>, vector<16x16xf32>
    tpu.vector_store %arg16[%c0_31, %c96], %42 {strides = array<i32>} : memref<16x128xf32, #tpu.memory_space<vmem>>, vector<16x16xf32>,
    %c7 = arith.constant 7 : index
    %c0_32 = arith.constant 0 : index
    %44 = tpu.strided_load %arg15[%c7, %c0_32] {strides = array<i32: 8, 1>} : memref<128x16xf32, #tpu.memory_space<vmem>>, vector<16x16xf32>
    %c0_33 = arith.constant 0 : index
    %c112 = arith.constant 112 : index
    %45 = vector.load %arg16[%c0_33, %c112] : memref<16x128xf32, #tpu.memory_space<vmem>>, vector<16x16xf32>
    tpu.vector_store %arg16[%c0_33, %c112], %44 {strides = array<i32>} : memref<16x128xf32, #tpu.memory_space<vmem>>, vector<16x16xf32>,
    %c0_34 = arith.constant 0 : index
    %c0_35 = arith.constant 0 : index
    %46 = vector.load %arg16[%c0_34, %c0_35] : memref<16x128xf32, #tpu.memory_space<vmem>>, vector<16x128xf32>
    %47 = arith.truncf %46 : vector<16x128xf32> to vector<16x128xbf16>
    %c0_36 = arith.constant 0 : index
    %c0_37 = arith.constant 0 : index
    %c0_38 = arith.constant 0 : index
    %c0_39 = arith.constant 0 : index
    %48 = vector.load %arg4[%c0_36, %c0_37, %c0_38, %c0_39] : memref<2x2x128x128xbf16, #tpu.memory_space<vmem>>, vector<1x1x128x128xbf16>
    %49 = vector.shape_cast %48 : vector<1x1x128x128xbf16> to vector<128x128xbf16>
    %cst_40 = arith.constant dense<0.000000e+00> : vector<16x128xf32>
    %50 = tpu.matmul %47, %49, %cst_40 {dimension_numbers = #tpu.dot_dimension_numbers<[1], [0], [0], [1], [0, 0, 1, 1], [], []>} : vector<16x128xbf16>, vector<128x128xbf16>, vector<16x128xf32> -> vector<16x128xf32>
    %c0_41 = arith.constant 0 : index
    %c0_42 = arith.constant 0 : index
    %c0_43 = arith.constant 0 : index
    %c0_44 = arith.constant 0 : index
    %51 = vector.load %arg5[%c0_41, %c0_42, %c0_43, %c0_44] : memref<2x2x1x128xf32, #tpu.memory_space<vmem>>, vector<1x1x1x128xf32>
    %52 = vector.shape_cast %51 : vector<1x1x1x128xf32> to vector<1x128xf32>
    %53 = vector.broadcast %52 : vector<1x128xf32> to vector<16x128xf32>
    %54 = arith.addf %50, %53 : vector<16x128xf32>
    %55 = arith.addf %1, %54 : vector<16x128xf32>
    %c0_45 = arith.constant 0 : index
    %c0_46 = arith.constant 0 : index
    %c0_47 = arith.constant 0 : index
    %c0_48 = arith.constant 0 : index
    %56 = vector.load %arg8[%c0_45, %c0_46, %c0_47, %c0_48] : memref<2x2x1x128xf32, #tpu.memory_space<vmem>>, vector<1x1x1x128xf32>
    %57 = vector.shape_cast %56 : vector<1x1x1x128xf32> to vector<1x128xf32>
    %c0_49 = arith.constant 0 : index
    %c0_50 = arith.constant 0 : index
    %c0_51 = arith.constant 0 : index
    %c0_52 = arith.constant 0 : index
    %58 = vector.load %arg9[%c0_49, %c0_50, %c0_51, %c0_52] : memref<2x2x1x128xf32, #tpu.memory_space<vmem>>, vector<1x1x1x128xf32>
    %59 = vector.shape_cast %58 : vector<1x1x1x128xf32> to vector<1x128xf32>
    %cst_53 = arith.constant dense<0.000000e+00> : vector<16xf32>
    %60 = vector.multi_reduction <add>, %55, %cst_53 [1] : vector<16x128xf32> to vector<16xf32>
    %61 = vector.shape_cast %60 : vector<16xf32> to vector<16x1xf32>
    %cst_54 = arith.constant 1.280000e+02 : f32
    %62 = vector.broadcast %cst_54 : f32 to vector<16x1xf32>
    %63 = arith.divf %61, %62 : vector<16x1xf32>
    %64 = vector.broadcast %63 : vector<16x1xf32> to vector<16x128xf32>
    %65 = arith.subf %55, %64 : vector<16x128xf32>
    %66 = vector.broadcast %63 : vector<16x1xf32> to vector<16x128xf32>
    %67 = arith.subf %55, %66 : vector<16x128xf32>
    %68 = arith.mulf %65, %67 : vector<16x128xf32>
    %cst_55 = arith.constant dense<0.000000e+00> : vector<16xf32>
    %69 = vector.multi_reduction <add>, %68, %cst_55 [1] : vector<16x128xf32> to vector<16xf32>
    %70 = vector.shape_cast %69 : vector<16xf32> to vector<16x1xf32>
    %cst_56 = arith.constant 1.280000e+02 : f32
    %71 = vector.broadcast %cst_56 : f32 to vector<16x1xf32>
    %72 = arith.divf %70, %71 : vector<16x1xf32>
    %73 = vector.broadcast %63 : vector<16x1xf32> to vector<16x128xf32>
    %74 = arith.subf %55, %73 : vector<16x128xf32>
    %cst_57 = arith.constant 9.99999974E-6 : f32
    %75 = vector.broadcast %cst_57 : f32 to vector<16x1xf32>
    %76 = arith.addf %72, %75 : vector<16x1xf32>
    %77 = math.rsqrt %76 : vector<16x1xf32>
    %78 = vector.broadcast %77 : vector<16x1xf32> to vector<16x128xf32>
    %79 = arith.mulf %74, %78 : vector<16x128xf32>
    %80 = vector.broadcast %57 : vector<1x128xf32> to vector<16x128xf32>
    %81 = arith.mulf %79, %80 : vector<16x128xf32>
    %82 = vector.broadcast %59 : vector<1x128xf32> to vector<16x128xf32>
    %83 = arith.addf %81, %82 : vector<16x128xf32>
    %84 = arith.truncf %83 : vector<16x128xf32> to vector<16x128xbf16>
    %c0_58 = arith.constant 0 : index
    %c0_59 = arith.constant 0 : index
    %c0_60 = arith.constant 0 : index
    %c0_61 = arith.constant 0 : index
    %85 = vector.load %arg10[%c0_58, %c0_59, %c0_60, %c0_61] : memref<2x2x128x512xbf16, #tpu.memory_space<vmem>>, vector<1x1x128x512xbf16>
    %86 = vector.shape_cast %85 : vector<1x1x128x512xbf16> to vector<128x512xbf16>
    %cst_62 = arith.constant dense<0.000000e+00> : vector<16x512xf32>
    %87 = tpu.matmul %84, %86, %cst_62 {dimension_numbers = #tpu.dot_dimension_numbers<[1], [0], [0], [1], [0, 0, 1, 1], [], []>} : vector<16x128xbf16>, vector<128x512xbf16>, vector<16x512xf32> -> vector<16x512xf32>
    %c0_63 = arith.constant 0 : index
    %c0_64 = arith.constant 0 : index
    %c0_65 = arith.constant 0 : index
    %c0_66 = arith.constant 0 : index
    %88 = vector.load %arg11[%c0_63, %c0_64, %c0_65, %c0_66] : memref<2x2x1x512xf32, #tpu.memory_space<vmem>>, vector<1x1x1x512xf32>
    %89 = vector.shape_cast %88 : vector<1x1x1x512xf32> to vector<1x512xf32>
    %90 = vector.broadcast %89 : vector<1x512xf32> to vector<16x512xf32>
    %91 = arith.addf %87, %90 : vector<16x512xf32>
    %cst_67 = arith.constant 5.000000e-01 : f32
    %92 = vector.broadcast %cst_67 : f32 to vector<16x512xf32>
    %93 = arith.mulf %92, %91 : vector<16x512xf32>
    %cst_68 = arith.constant 0.707106769 : f32
    %94 = vector.broadcast %cst_68 : f32 to vector<16x512xf32>
    %95 = arith.mulf %91, %94 : vector<16x512xf32>
    %96 = math.erf %95 : vector<16x512xf32>
    %cst_69 = arith.constant 1.000000e+00 : f32
    %97 = vector.broadcast %cst_69 : f32 to vector<16x512xf32>
    %98 = arith.addf %97, %96 : vector<16x512xf32>
    %99 = arith.mulf %93, %98 : vector<16x512xf32>
    %100 = arith.truncf %99 : vector<16x512xf32> to vector<16x512xbf16>
    %c0_70 = arith.constant 0 : index
    %c0_71 = arith.constant 0 : index
    %c0_72 = arith.constant 0 : index
    %c0_73 = arith.constant 0 : index
    %101 = vector.load %arg12[%c0_70, %c0_71, %c0_72, %c0_73] : memref<2x2x512x128xbf16, #tpu.memory_space<vmem>>, vector<1x1x512x128xbf16>
    %102 = vector.shape_cast %101 : vector<1x1x512x128xbf16> to vector<512x128xbf16>
    %cst_74 = arith.constant dense<0.000000e+00> : vector<16x128xf32>
    %103 = tpu.matmul %100, %102, %cst_74 {dimension_numbers = #tpu.dot_dimension_numbers<[1], [0], [0], [1], [0, 0, 1, 1], [], []>} : vector<16x512xbf16>, vector<512x128xbf16>, vector<16x128xf32> -> vector<16x128xf32>
    %c0_75 = arith.constant 0 : index
    %c0_76 = arith.constant 0 : index
    %c0_77 = arith.constant 0 : index
    %c0_78 = arith.constant 0 : index
    %104 = vector.load %arg13[%c0_75, %c0_76, %c0_77, %c0_78] : memref<2x2x1x128xf32, #tpu.memory_space<vmem>>, vector<1x1x1x128xf32>
    %105 = vector.shape_cast %104 : vector<1x1x1x128xf32> to vector<1x128xf32>
    %106 = vector.broadcast %105 : vector<1x128xf32> to vector<16x128xf32>
    %107 = arith.addf %103, %106 : vector<16x128xf32>
    %108 = arith.addf %55, %107 : vector<16x128xf32>
    %c0_79 = arith.constant 0 : index
    %c0_80 = arith.constant 0 : index
    %c0_81 = arith.constant 0 : index
    %109 = vector.load %arg6[%c0_79, %c0_80, %c0_81] : memref<2x1x128xf32, #tpu.memory_space<vmem>>, vector<1x1x128xf32>
    %110 = vector.shape_cast %109 : vector<1x1x128xf32> to vector<1x128xf32>
    %c0_82 = arith.constant 0 : index
    %c0_83 = arith.constant 0 : index
    %c0_84 = arith.constant 0 : index
    %111 = vector.load %arg7[%c0_82, %c0_83, %c0_84] : memref<2x1x128xf32, #tpu.memory_space<vmem>>, vector<1x1x128xf32>
    %112 = vector.shape_cast %111 : vector<1x1x128xf32> to vector<1x128xf32>
    %cst_85 = arith.constant dense<0.000000e+00> : vector<16xf32>
    %113 = vector.multi_reduction <add>, %108, %cst_85 [1] : vector<16x128xf32> to vector<16xf32>
    %114 = vector.shape_cast %113 : vector<16xf32> to vector<16x1xf32>
    %cst_86 = arith.constant 1.280000e+02 : f32
    %115 = vector.broadcast %cst_86 : f32 to vector<16x1xf32>
    %116 = arith.divf %114, %115 : vector<16x1xf32>
    %117 = vector.broadcast %116 : vector<16x1xf32> to vector<16x128xf32>
    %118 = arith.subf %108, %117 : vector<16x128xf32>
    %119 = vector.broadcast %116 : vector<16x1xf32> to vector<16x128xf32>
    %120 = arith.subf %108, %119 : vector<16x128xf32>
    %121 = arith.mulf %118, %120 : vector<16x128xf32>
    %cst_87 = arith.constant dense<0.000000e+00> : vector<16xf32>
    %122 = vector.multi_reduction <add>, %121, %cst_87 [1] : vector<16x128xf32> to vector<16xf32>
    %123 = vector.shape_cast %122 : vector<16xf32> to vector<16x1xf32>
    %cst_88 = arith.constant 1.280000e+02 : f32
    %124 = vector.broadcast %cst_88 : f32 to vector<16x1xf32>
    %125 = arith.divf %123, %124 : vector<16x1xf32>
    %126 = vector.broadcast %116 : vector<16x1xf32> to vector<16x128xf32>
    %127 = arith.subf %108, %126 : vector<16x128xf32>
    %cst_89 = arith.constant 9.99999974E-6 : f32
    %128 = vector.broadcast %cst_89 : f32 to vector<16x1xf32>
    %129 = arith.addf %125, %128 : vector<16x1xf32>
    %130 = math.rsqrt %129 : vector<16x1xf32>
    %131 = vector.broadcast %130 : vector<16x1xf32> to vector<16x128xf32>
    %132 = arith.mulf %127, %131 : vector<16x128xf32>
    %133 = vector.broadcast %110 : vector<1x128xf32> to vector<16x128xf32>
    %134 = arith.mulf %132, %133 : vector<16x128xf32>
    %135 = vector.broadcast %112 : vector<1x128xf32> to vector<16x128xf32>
    %136 = arith.addf %134, %135 : vector<16x128xf32>
    %137 = arith.truncf %136 : vector<16x128xf32> to vector<16x128xbf16>
    %c0_90 = arith.constant 0 : index
    %c1_91 = arith.constant 1 : index
    %c0_92 = arith.constant 0 : index
    %c0_93 = arith.constant 0 : index
    %138 = vector.load %arg2[%c0_90, %c1_91, %c0_92, %c0_93] : memref<2x2x128x384xbf16, #tpu.memory_space<vmem>>, vector<1x1x128x384xbf16>
    %139 = vector.shape_cast %138 : vector<1x1x128x384xbf16> to vector<128x384xbf16>
    %cst_94 = arith.constant dense<0.000000e+00> : vector<16x384xf32>
    %140 = tpu.matmul %137, %139, %cst_94 {dimension_numbers = #tpu.dot_dimension_numbers<[1], [0], [0], [1], [0, 0, 1, 1], [], []>} : vector<16x128xbf16>, vector<128x384xbf16>, vector<16x384xf32> -> vector<16x384xf32>
    %c0_95 = arith.constant 0 : index
    %c1_96 = arith.constant 1 : index
    %c0_97 = arith.constant 0 : index
    %c0_98 = arith.constant 0 : index
    %141 = vector.load %arg3[%c0_95, %c1_96, %c0_97, %c0_98] : memref<2x2x1x384xf32, #tpu.memory_space<vmem>>, vector<1x1x1x384xf32>
    %142 = vector.shape_cast %141 : vector<1x1x1x384xf32> to vector<1x384xf32>
    %143 = vector.broadcast %142 : vector<1x384xf32> to vector<16x384xf32>
    %144 = arith.addf %140, %143 : vector<16x384xf32>
    %145 = vector.extract_strided_slice %144 {offsets = [0, 0], sizes = [16, 128], strides = [1, 1]} : vector<16x384xf32> to vector<16x128xf32>
    %146 = vector.extract_strided_slice %144 {offsets = [0, 128], sizes = [16, 128], strides = [1, 1]} : vector<16x384xf32> to vector<16x128xf32>
    %147 = vector.extract_strided_slice %144 {offsets = [0, 256], sizes = [16, 128], strides = [1, 1]} : vector<16x384xf32> to vector<16x128xf32>
    %148 = arith.truncf %145 : vector<16x128xf32> to vector<16x128xbf16>
    %149 = arith.truncf %146 : vector<16x128xf32> to vector<16x128xbf16>
    %cst_99 = arith.constant dense<0.000000e+00> : vector<16x16xf32>
    %150 = tpu.matmul %148, %149, %cst_99 {dimension_numbers = #tpu.dot_dimension_numbers<[1], [1], [0], [0], [0, 0, 1, 0], [], []>} : vector<16x128xbf16>, vector<16x128xbf16>, vector<16x16xf32> -> vector<16x16xf32>
    %cst_100 = arith.constant dense<0xFF800000> : vector<16xf32>
    %151 = vector.multi_reduction <maximumf>, %150, %cst_100 [1] : vector<16x16xf32> to vector<16xf32>
    %152 = vector.shape_cast %151 : vector<16xf32> to vector<16x1xf32>
    %153 = vector.broadcast %152 : vector<16x1xf32> to vector<16x16xf32>
    %154 = arith.subf %150, %153 : vector<16x16xf32>
    %155 = math.exp %154 : vector<16x16xf32>
    %cst_101 = arith.constant dense<0.000000e+00> : vector<16xf32>
    %156 = vector.multi_reduction <add>, %155, %cst_101 [1] : vector<16x16xf32> to vector<16xf32>
    %157 = vector.shape_cast %156 : vector<16xf32> to vector<16x1xf32>
    %158 = tpu.reciprocal %157 {approx = true} : vector<16x1xf32> -> vector<16x1xf32>
    %159 = vector.broadcast %158 : vector<16x1xf32> to vector<16x16xf32>
    %160 = arith.mulf %155, %159 : vector<16x16xf32>
    %161 = arith.truncf %147 : vector<16x128xf32> to vector<16x128xbf16>
    %162 = arith.truncf %160 : vector<16x16xf32> to vector<16x16xbf16>
    %cst_102 = arith.constant dense<0.000000e+00> : vector<128x16xf32>
    %163 = tpu.matmul %161, %162, %cst_102 {dimension_numbers = #tpu.dot_dimension_numbers<[0], [1], [1], [0], [0, 1, 1, 0], [], []>} : vector<16x128xbf16>, vector<16x16xbf16>, vector<128x16xf32> -> vector<128x16xf32>
    %c0_103 = arith.constant 0 : index
    %c0_104 = arith.constant 0 : index
    %164 = vector.load %arg15[%c0_103, %c0_104] : memref<128x16xf32, #tpu.memory_space<vmem>>, vector<128x16xf32>
    tpu.vector_store %arg15[%c0_103, %c0_104], %163 {strides = array<i32>} : memref<128x16xf32, #tpu.memory_space<vmem>>, vector<128x16xf32>,
    %c0_105 = arith.constant 0 : index
    %c0_106 = arith.constant 0 : index
    %165 = tpu.strided_load %arg15[%c0_105, %c0_106] {strides = array<i32: 8, 1>} : memref<128x16xf32, #tpu.memory_space<vmem>>, vector<16x16xf32>
    %c0_107 = arith.constant 0 : index
    %c0_108 = arith.constant 0 : index
    %166 = vector.load %arg16[%c0_107, %c0_108] : memref<16x128xf32, #tpu.memory_space<vmem>>, vector<16x16xf32>
    tpu.vector_store %arg16[%c0_107, %c0_108], %165 {strides = array<i32>} : memref<16x128xf32, #tpu.memory_space<vmem>>, vector<16x16xf32>,
    %c1_109 = arith.constant 1 : index
    %c0_110 = arith.constant 0 : index
    %167 = tpu.strided_load %arg15[%c1_109, %c0_110] {strides = array<i32: 8, 1>} : memref<128x16xf32, #tpu.memory_space<vmem>>, vector<16x16xf32>
    %c0_111 = arith.constant 0 : index
    %c16_112 = arith.constant 16 : index
    %168 = vector.load %arg16[%c0_111, %c16_112] : memref<16x128xf32, #tpu.memory_space<vmem>>, vector<16x16xf32>
    tpu.vector_store %arg16[%c0_111, %c16_112], %167 {strides = array<i32>} : memref<16x128xf32, #tpu.memory_space<vmem>>, vector<16x16xf32>,
    %c2_113 = arith.constant 2 : index
    %c0_114 = arith.constant 0 : index
    %169 = tpu.strided_load %arg15[%c2_113, %c0_114] {strides = array<i32: 8, 1>} : memref<128x16xf32, #tpu.memory_space<vmem>>, vector<16x16xf32>
    %c0_115 = arith.constant 0 : index
    %c32_116 = arith.constant 32 : index
    %170 = vector.load %arg16[%c0_115, %c32_116] : memref<16x128xf32, #tpu.memory_space<vmem>>, vector<16x16xf32>
    tpu.vector_store %arg16[%c0_115, %c32_116], %169 {strides = array<i32>} : memref<16x128xf32, #tpu.memory_space<vmem>>, vector<16x16xf32>,
    %c3_117 = arith.constant 3 : index
    %c0_118 = arith.constant 0 : index
    %171 = tpu.strided_load %arg15[%c3_117, %c0_118] {strides = array<i32: 8, 1>} : memref<128x16xf32, #tpu.memory_space<vmem>>, vector<16x16xf32>
    %c0_119 = arith.constant 0 : index
    %c48_120 = arith.constant 48 : index
    %172 = vector.load %arg16[%c0_119, %c48_120] : memref<16x128xf32, #tpu.memory_space<vmem>>, vector<16x16xf32>
    tpu.vector_store %arg16[%c0_119, %c48_120], %171 {strides = array<i32>} : memref<16x128xf32, #tpu.memory_space<vmem>>, vector<16x16xf32>,
    %c4_121 = arith.constant 4 : index
    %c0_122 = arith.constant 0 : index
    %173 = tpu.strided_load %arg15[%c4_121, %c0_122] {strides = array<i32: 8, 1>} : memref<128x16xf32, #tpu.memory_space<vmem>>, vector<16x16xf32>
    %c0_123 = arith.constant 0 : index
    %c64_124 = arith.constant 64 : index
    %174 = vector.load %arg16[%c0_123, %c64_124] : memref<16x128xf32, #tpu.memory_space<vmem>>, vector<16x16xf32>
    tpu.vector_store %arg16[%c0_123, %c64_124], %173 {strides = array<i32>} : memref<16x128xf32, #tpu.memory_space<vmem>>, vector<16x16xf32>,
    %c5_125 = arith.constant 5 : index
    %c0_126 = arith.constant 0 : index
    %175 = tpu.strided_load %arg15[%c5_125, %c0_126] {strides = array<i32: 8, 1>} : memref<128x16xf32, #tpu.memory_space<vmem>>, vector<16x16xf32>
    %c0_127 = arith.constant 0 : index
    %c80_128 = arith.constant 80 : index
    %176 = vector.load %arg16[%c0_127, %c80_128] : memref<16x128xf32, #tpu.memory_space<vmem>>, vector<16x16xf32>
    tpu.vector_store %arg16[%c0_127, %c80_128], %175 {strides = array<i32>} : memref<16x128xf32, #tpu.memory_space<vmem>>, vector<16x16xf32>,
    %c6_129 = arith.constant 6 : index
    %c0_130 = arith.constant 0 : index
    %177 = tpu.strided_load %arg15[%c6_129, %c0_130] {strides = array<i32: 8, 1>} : memref<128x16xf32, #tpu.memory_space<vmem>>, vector<16x16xf32>
    %c0_131 = arith.constant 0 : index
    %c96_132 = arith.constant 96 : index
    %178 = vector.load %arg16[%c0_131, %c96_132] : memref<16x128xf32, #tpu.memory_space<vmem>>, vector<16x16xf32>
    tpu.vector_store %arg16[%c0_131, %c96_132], %177 {strides = array<i32>} : memref<16x128xf32, #tpu.memory_space<vmem>>, vector<16x16xf32>,
    %c7_133 = arith.constant 7 : index
    %c0_134 = arith.constant 0 : index
    %179 = tpu.strided_load %arg15[%c7_133, %c0_134] {strides = array<i32: 8, 1>} : memref<128x16xf32, #tpu.memory_space<vmem>>, vector<16x16xf32>
    %c0_135 = arith.constant 0 : index
    %c112_136 = arith.constant 112 : index
    %180 = vector.load %arg16[%c0_135, %c112_136] : memref<16x128xf32, #tpu.memory_space<vmem>>, vector<16x16xf32>
    tpu.vector_store %arg16[%c0_135, %c112_136], %179 {strides = array<i32>} : memref<16x128xf32, #tpu.memory_space<vmem>>, vector<16x16xf32>,
    %c0_137 = arith.constant 0 : index
    %c0_138 = arith.constant 0 : index
    %181 = vector.load %arg16[%c0_137, %c0_138] : memref<16x128xf32, #tpu.memory_space<vmem>>, vector<16x128xf32>
    %182 = arith.truncf %181 : vector<16x128xf32> to vector<16x128xbf16>
    %c0_139 = arith.constant 0 : index
    %c1_140 = arith.constant 1 : index
    %c0_141 = arith.constant 0 : index
    %c0_142 = arith.constant 0 : index
    %183 = vector.load %arg4[%c0_139, %c1_140, %c0_141, %c0_142] : memref<2x2x128x128xbf16, #tpu.memory_space<vmem>>, vector<1x1x128x128xbf16>
    %184 = vector.shape_cast %183 : vector<1x1x128x128xbf16> to vector<128x128xbf16>
    %cst_143 = arith.constant dense<0.000000e+00> : vector<16x128xf32>
    %185 = tpu.matmul %182, %184, %cst_143 {dimension_numbers = #tpu.dot_dimension_numbers<[1], [0], [0], [1], [0, 0, 1, 1], [], []>} : vector<16x128xbf16>, vector<128x128xbf16>, vector<16x128xf32> -> vector<16x128xf32>
    %c0_144 = arith.constant 0 : index
    %c1_145 = arith.constant 1 : index
    %c0_146 = arith.constant 0 : index
    %c0_147 = arith.constant 0 : index
    %186 = vector.load %arg5[%c0_144, %c1_145, %c0_146, %c0_147] : memref<2x2x1x128xf32, #tpu.memory_space<vmem>>, vector<1x1x1x128xf32>
    %187 = vector.shape_cast %186 : vector<1x1x1x128xf32> to vector<1x128xf32>
    %188 = vector.broadcast %187 : vector<1x128xf32> to vector<16x128xf32>
    %189 = arith.addf %185, %188 : vector<16x128xf32>
    %190 = arith.addf %108, %189 : vector<16x128xf32>
    %c0_148 = arith.constant 0 : index
    %c1_149 = arith.constant 1 : index
    %c0_150 = arith.constant 0 : index
    %c0_151 = arith.constant 0 : index
    %191 = vector.load %arg8[%c0_148, %c1_149, %c0_150, %c0_151] : memref<2x2x1x128xf32, #tpu.memory_space<vmem>>, vector<1x1x1x128xf32>
    %192 = vector.shape_cast %191 : vector<1x1x1x128xf32> to vector<1x128xf32>
    %c0_152 = arith.constant 0 : index
    %c1_153 = arith.constant 1 : index
    %c0_154 = arith.constant 0 : index
    %c0_155 = arith.constant 0 : index
    %193 = vector.load %arg9[%c0_152, %c1_153, %c0_154, %c0_155] : memref<2x2x1x128xf32, #tpu.memory_space<vmem>>, vector<1x1x1x128xf32>
    %194 = vector.shape_cast %193 : vector<1x1x1x128xf32> to vector<1x128xf32>
    %cst_156 = arith.constant dense<0.000000e+00> : vector<16xf32>
    %195 = vector.multi_reduction <add>, %190, %cst_156 [1] : vector<16x128xf32> to vector<16xf32>
    %196 = vector.shape_cast %195 : vector<16xf32> to vector<16x1xf32>
    %cst_157 = arith.constant 1.280000e+02 : f32
    %197 = vector.broadcast %cst_157 : f32 to vector<16x1xf32>
    %198 = arith.divf %196, %197 : vector<16x1xf32>
    %199 = vector.broadcast %198 : vector<16x1xf32> to vector<16x128xf32>
    %200 = arith.subf %190, %199 : vector<16x128xf32>
    %201 = vector.broadcast %198 : vector<16x1xf32> to vector<16x128xf32>
    %202 = arith.subf %190, %201 : vector<16x128xf32>
    %203 = arith.mulf %200, %202 : vector<16x128xf32>
    %cst_158 = arith.constant dense<0.000000e+00> : vector<16xf32>
    %204 = vector.multi_reduction <add>, %203, %cst_158 [1] : vector<16x128xf32> to vector<16xf32>
    %205 = vector.shape_cast %204 : vector<16xf32> to vector<16x1xf32>
    %cst_159 = arith.constant 1.280000e+02 : f32
    %206 = vector.broadcast %cst_159 : f32 to vector<16x1xf32>
    %207 = arith.divf %205, %206 : vector<16x1xf32>
    %208 = vector.broadcast %198 : vector<16x1xf32> to vector<16x128xf32>
    %209 = arith.subf %190, %208 : vector<16x128xf32>
    %cst_160 = arith.constant 9.99999974E-6 : f32
    %210 = vector.broadcast %cst_160 : f32 to vector<16x1xf32>
    %211 = arith.addf %207, %210 : vector<16x1xf32>
    %212 = math.rsqrt %211 : vector<16x1xf32>
    %213 = vector.broadcast %212 : vector<16x1xf32> to vector<16x128xf32>
    %214 = arith.mulf %209, %213 : vector<16x128xf32>
    %215 = vector.broadcast %192 : vector<1x128xf32> to vector<16x128xf32>
    %216 = arith.mulf %214, %215 : vector<16x128xf32>
    %217 = vector.broadcast %194 : vector<1x128xf32> to vector<16x128xf32>
    %218 = arith.addf %216, %217 : vector<16x128xf32>
    %219 = arith.truncf %218 : vector<16x128xf32> to vector<16x128xbf16>
    %c0_161 = arith.constant 0 : index
    %c1_162 = arith.constant 1 : index
    %c0_163 = arith.constant 0 : index
    %c0_164 = arith.constant 0 : index
    %220 = vector.load %arg10[%c0_161, %c1_162, %c0_163, %c0_164] : memref<2x2x128x512xbf16, #tpu.memory_space<vmem>>, vector<1x1x128x512xbf16>
    %221 = vector.shape_cast %220 : vector<1x1x128x512xbf16> to vector<128x512xbf16>
    %cst_165 = arith.constant dense<0.000000e+00> : vector<16x512xf32>
    %222 = tpu.matmul %219, %221, %cst_165 {dimension_numbers = #tpu.dot_dimension_numbers<[1], [0], [0], [1], [0, 0, 1, 1], [], []>} : vector<16x128xbf16>, vector<128x512xbf16>, vector<16x512xf32> -> vector<16x512xf32>
    %c0_166 = arith.constant 0 : index
    %c1_167 = arith.constant 1 : index
    %c0_168 = arith.constant 0 : index
    %c0_169 = arith.constant 0 : index
    %223 = vector.load %arg11[%c0_166, %c1_167, %c0_168, %c0_169] : memref<2x2x1x512xf32, #tpu.memory_space<vmem>>, vector<1x1x1x512xf32>
    %224 = vector.shape_cast %223 : vector<1x1x1x512xf32> to vector<1x512xf32>
    %225 = vector.broadcast %224 : vector<1x512xf32> to vector<16x512xf32>
    %226 = arith.addf %222, %225 : vector<16x512xf32>
    %cst_170 = arith.constant 5.000000e-01 : f32
    %227 = vector.broadcast %cst_170 : f32 to vector<16x512xf32>
    %228 = arith.mulf %227, %226 : vector<16x512xf32>
    %cst_171 = arith.constant 0.707106769 : f32
    %229 = vector.broadcast %cst_171 : f32 to vector<16x512xf32>
    %230 = arith.mulf %226, %229 : vector<16x512xf32>
    %231 = math.erf %230 : vector<16x512xf32>
    %cst_172 = arith.constant 1.000000e+00 : f32
    %232 = vector.broadcast %cst_172 : f32 to vector<16x512xf32>
    %233 = arith.addf %232, %231 : vector<16x512xf32>
    %234 = arith.mulf %228, %233 : vector<16x512xf32>
    %235 = arith.truncf %234 : vector<16x512xf32> to vector<16x512xbf16>
    %c0_173 = arith.constant 0 : index
    %c1_174 = arith.constant 1 : index
    %c0_175 = arith.constant 0 : index
    %c0_176 = arith.constant 0 : index
    %236 = vector.load %arg12[%c0_173, %c1_174, %c0_175, %c0_176] : memref<2x2x512x128xbf16, #tpu.memory_space<vmem>>, vector<1x1x512x128xbf16>
    %237 = vector.shape_cast %236 : vector<1x1x512x128xbf16> to vector<512x128xbf16>
    %cst_177 = arith.constant dense<0.000000e+00> : vector<16x128xf32>
    %238 = tpu.matmul %235, %237, %cst_177 {dimension_numbers = #tpu.dot_dimension_numbers<[1], [0], [0], [1], [0, 0, 1, 1], [], []>} : vector<16x512xbf16>, vector<512x128xbf16>, vector<16x128xf32> -> vector<16x128xf32>
    %c0_178 = arith.constant 0 : index
    %c1_179 = arith.constant 1 : index
    %c0_180 = arith.constant 0 : index
    %c0_181 = arith.constant 0 : index
    %239 = vector.load %arg13[%c0_178, %c1_179, %c0_180, %c0_181] : memref<2x2x1x128xf32, #tpu.memory_space<vmem>>, vector<1x1x1x128xf32>
    %240 = vector.shape_cast %239 : vector<1x1x1x128xf32> to vector<1x128xf32>
    %241 = vector.broadcast %240 : vector<1x128xf32> to vector<16x128xf32>
    %242 = arith.addf %238, %241 : vector<16x128xf32>
    %243 = arith.addf %190, %242 : vector<16x128xf32>
    %244 = arith.truncf %243 : vector<16x128xf32> to vector<16x128xbf16>
    %c1_182 = arith.constant 1 : index
    %c0_183 = arith.constant 0 : index
    %c0_184 = arith.constant 0 : index
    %c0_185 = arith.constant 0 : index
    %245 = vector.load %arg2[%c1_182, %c0_183, %c0_184, %c0_185] : memref<2x2x128x384xbf16, #tpu.memory_space<vmem>>, vector<1x1x128x384xbf16>
    %246 = vector.shape_cast %245 : vector<1x1x128x384xbf16> to vector<128x384xbf16>
    %cst_186 = arith.constant dense<0.000000e+00> : vector<16x384xf32>
    %247 = tpu.matmul %244, %246, %cst_186 {dimension_numbers = #tpu.dot_dimension_numbers<[1], [0], [0], [1], [0, 0, 1, 1], [], []>} : vector<16x128xbf16>, vector<128x384xbf16>, vector<16x384xf32> -> vector<16x384xf32>
    %c1_187 = arith.constant 1 : index
    %c0_188 = arith.constant 0 : index
    %c0_189 = arith.constant 0 : index
    %c0_190 = arith.constant 0 : index
    %248 = vector.load %arg3[%c1_187, %c0_188, %c0_189, %c0_190] : memref<2x2x1x384xf32, #tpu.memory_space<vmem>>, vector<1x1x1x384xf32>
    %249 = vector.shape_cast %248 : vector<1x1x1x384xf32> to vector<1x384xf32>
    %250 = vector.broadcast %249 : vector<1x384xf32> to vector<16x384xf32>
    %251 = arith.addf %247, %250 : vector<16x384xf32>
    %252 = vector.extract_strided_slice %251 {offsets = [0, 0], sizes = [16, 128], strides = [1, 1]} : vector<16x384xf32> to vector<16x128xf32>
    %253 = vector.extract_strided_slice %251 {offsets = [0, 128], sizes = [16, 128], strides = [1, 1]} : vector<16x384xf32> to vector<16x128xf32>
    %254 = vector.extract_strided_slice %251 {offsets = [0, 256], sizes = [16, 128], strides = [1, 1]} : vector<16x384xf32> to vector<16x128xf32>
    %255 = arith.truncf %252 : vector<16x128xf32> to vector<16x128xbf16>
    %256 = arith.truncf %253 : vector<16x128xf32> to vector<16x128xbf16>
    %cst_191 = arith.constant dense<0.000000e+00> : vector<16x16xf32>
    %257 = tpu.matmul %255, %256, %cst_191 {dimension_numbers = #tpu.dot_dimension_numbers<[1], [1], [0], [0], [0, 0, 1, 0], [], []>} : vector<16x128xbf16>, vector<16x128xbf16>, vector<16x16xf32> -> vector<16x16xf32>
    %cst_192 = arith.constant dense<0xFF800000> : vector<16xf32>
    %258 = vector.multi_reduction <maximumf>, %257, %cst_192 [1] : vector<16x16xf32> to vector<16xf32>
    %259 = vector.shape_cast %258 : vector<16xf32> to vector<16x1xf32>
    %260 = vector.broadcast %259 : vector<16x1xf32> to vector<16x16xf32>
    %261 = arith.subf %257, %260 : vector<16x16xf32>
    %262 = math.exp %261 : vector<16x16xf32>
    %cst_193 = arith.constant dense<0.000000e+00> : vector<16xf32>
    %263 = vector.multi_reduction <add>, %262, %cst_193 [1] : vector<16x16xf32> to vector<16xf32>
    %264 = vector.shape_cast %263 : vector<16xf32> to vector<16x1xf32>
    %265 = tpu.reciprocal %264 {approx = true} : vector<16x1xf32> -> vector<16x1xf32>
    %266 = vector.broadcast %265 : vector<16x1xf32> to vector<16x16xf32>
    %267 = arith.mulf %262, %266 : vector<16x16xf32>
    %268 = arith.truncf %254 : vector<16x128xf32> to vector<16x128xbf16>
    %269 = arith.truncf %267 : vector<16x16xf32> to vector<16x16xbf16>
    %cst_194 = arith.constant dense<0.000000e+00> : vector<128x16xf32>
    %270 = tpu.matmul %268, %269, %cst_194 {dimension_numbers = #tpu.dot_dimension_numbers<[0], [1], [1], [0], [0, 1, 1, 0], [], []>} : vector<16x128xbf16>, vector<16x16xbf16>, vector<128x16xf32> -> vector<128x16xf32>
    %c0_195 = arith.constant 0 : index
    %c0_196 = arith.constant 0 : index
    %271 = vector.load %arg15[%c0_195, %c0_196] : memref<128x16xf32, #tpu.memory_space<vmem>>, vector<128x16xf32>
    tpu.vector_store %arg15[%c0_195, %c0_196], %270 {strides = array<i32>} : memref<128x16xf32, #tpu.memory_space<vmem>>, vector<128x16xf32>,
    %c0_197 = arith.constant 0 : index
    %c0_198 = arith.constant 0 : index
    %272 = tpu.strided_load %arg15[%c0_197, %c0_198] {strides = array<i32: 8, 1>} : memref<128x16xf32, #tpu.memory_space<vmem>>, vector<16x16xf32>
    %c0_199 = arith.constant 0 : index
    %c0_200 = arith.constant 0 : index
    %273 = vector.load %arg16[%c0_199, %c0_200] : memref<16x128xf32, #tpu.memory_space<vmem>>, vector<16x16xf32>
    tpu.vector_store %arg16[%c0_199, %c0_200], %272 {strides = array<i32>} : memref<16x128xf32, #tpu.memory_space<vmem>>, vector<16x16xf32>,
    %c1_201 = arith.constant 1 : index
    %c0_202 = arith.constant 0 : index
    %274 = tpu.strided_load %arg15[%c1_201, %c0_202] {strides = array<i32: 8, 1>} : memref<128x16xf32, #tpu.memory_space<vmem>>, vector<16x16xf32>
    %c0_203 = arith.constant 0 : index
    %c16_204 = arith.constant 16 : index
    %275 = vector.load %arg16[%c0_203, %c16_204] : memref<16x128xf32, #tpu.memory_space<vmem>>, vector<16x16xf32>
    tpu.vector_store %arg16[%c0_203, %c16_204], %274 {strides = array<i32>} : memref<16x128xf32, #tpu.memory_space<vmem>>, vector<16x16xf32>,
    %c2_205 = arith.constant 2 : index
    %c0_206 = arith.constant 0 : index
    %276 = tpu.strided_load %arg15[%c2_205, %c0_206] {strides = array<i32: 8, 1>} : memref<128x16xf32, #tpu.memory_space<vmem>>, vector<16x16xf32>
    %c0_207 = arith.constant 0 : index
    %c32_208 = arith.constant 32 : index
    %277 = vector.load %arg16[%c0_207, %c32_208] : memref<16x128xf32, #tpu.memory_space<vmem>>, vector<16x16xf32>
    tpu.vector_store %arg16[%c0_207, %c32_208], %276 {strides = array<i32>} : memref<16x128xf32, #tpu.memory_space<vmem>>, vector<16x16xf32>,
    %c3_209 = arith.constant 3 : index
    %c0_210 = arith.constant 0 : index
    %278 = tpu.strided_load %arg15[%c3_209, %c0_210] {strides = array<i32: 8, 1>} : memref<128x16xf32, #tpu.memory_space<vmem>>, vector<16x16xf32>
    %c0_211 = arith.constant 0 : index
    %c48_212 = arith.constant 48 : index
    %279 = vector.load %arg16[%c0_211, %c48_212] : memref<16x128xf32, #tpu.memory_space<vmem>>, vector<16x16xf32>
    tpu.vector_store %arg16[%c0_211, %c48_212], %278 {strides = array<i32>} : memref<16x128xf32, #tpu.memory_space<vmem>>, vector<16x16xf32>,
    %c4_213 = arith.constant 4 : index
    %c0_214 = arith.constant 0 : index
    %280 = tpu.strided_load %arg15[%c4_213, %c0_214] {strides = array<i32: 8, 1>} : memref<128x16xf32, #tpu.memory_space<vmem>>, vector<16x16xf32>
    %c0_215 = arith.constant 0 : index
    %c64_216 = arith.constant 64 : index
    %281 = vector.load %arg16[%c0_215, %c64_216] : memref<16x128xf32, #tpu.memory_space<vmem>>, vector<16x16xf32>
    tpu.vector_store %arg16[%c0_215, %c64_216], %280 {strides = array<i32>} : memref<16x128xf32, #tpu.memory_space<vmem>>, vector<16x16xf32>,
    %c5_217 = arith.constant 5 : index
    %c0_218 = arith.constant 0 : index
    %282 = tpu.strided_load %arg15[%c5_217, %c0_218] {strides = array<i32: 8, 1>} : memref<128x16xf32, #tpu.memory_space<vmem>>, vector<16x16xf32>
    %c0_219 = arith.constant 0 : index
    %c80_220 = arith.constant 80 : index
    %283 = vector.load %arg16[%c0_219, %c80_220] : memref<16x128xf32, #tpu.memory_space<vmem>>, vector<16x16xf32>
    tpu.vector_store %arg16[%c0_219, %c80_220], %282 {strides = array<i32>} : memref<16x128xf32, #tpu.memory_space<vmem>>, vector<16x16xf32>,
    %c6_221 = arith.constant 6 : index
    %c0_222 = arith.constant 0 : index
    %284 = tpu.strided_load %arg15[%c6_221, %c0_222] {strides = array<i32: 8, 1>} : memref<128x16xf32, #tpu.memory_space<vmem>>, vector<16x16xf32>
    %c0_223 = arith.constant 0 : index
    %c96_224 = arith.constant 96 : index
    %285 = vector.load %arg16[%c0_223, %c96_224] : memref<16x128xf32, #tpu.memory_space<vmem>>, vector<16x16xf32>
    tpu.vector_store %arg16[%c0_223, %c96_224], %284 {strides = array<i32>} : memref<16x128xf32, #tpu.memory_space<vmem>>, vector<16x16xf32>,
    %c7_225 = arith.constant 7 : index
    %c0_226 = arith.constant 0 : index
    %286 = tpu.strided_load %arg15[%c7_225, %c0_226] {strides = array<i32: 8, 1>} : memref<128x16xf32, #tpu.memory_space<vmem>>, vector<16x16xf32>
    %c0_227 = arith.constant 0 : index
    %c112_228 = arith.constant 112 : index
    %287 = vector.load %arg16[%c0_227, %c112_228] : memref<16x128xf32, #tpu.memory_space<vmem>>, vector<16x16xf32>
    tpu.vector_store %arg16[%c0_227, %c112_228], %286 {strides = array<i32>} : memref<16x128xf32, #tpu.memory_space<vmem>>, vector<16x16xf32>,
    %c0_229 = arith.constant 0 : index
    %c0_230 = arith.constant 0 : index
    %288 = vector.load %arg16[%c0_229, %c0_230] : memref<16x128xf32, #tpu.memory_space<vmem>>, vector<16x128xf32>
    %289 = arith.truncf %288 : vector<16x128xf32> to vector<16x128xbf16>
    %c1_231 = arith.constant 1 : index
    %c0_232 = arith.constant 0 : index
    %c0_233 = arith.constant 0 : index
    %c0_234 = arith.constant 0 : index
    %290 = vector.load %arg4[%c1_231, %c0_232, %c0_233, %c0_234] : memref<2x2x128x128xbf16, #tpu.memory_space<vmem>>, vector<1x1x128x128xbf16>
    %291 = vector.shape_cast %290 : vector<1x1x128x128xbf16> to vector<128x128xbf16>
    %cst_235 = arith.constant dense<0.000000e+00> : vector<16x128xf32>
    %292 = tpu.matmul %289, %291, %cst_235 {dimension_numbers = #tpu.dot_dimension_numbers<[1], [0], [0], [1], [0, 0, 1, 1], [], []>} : vector<16x128xbf16>, vector<128x128xbf16>, vector<16x128xf32> -> vector<16x128xf32>
    %c1_236 = arith.constant 1 : index
    %c0_237 = arith.constant 0 : index
    %c0_238 = arith.constant 0 : index
    %c0_239 = arith.constant 0 : index
    %293 = vector.load %arg5[%c1_236, %c0_237, %c0_238, %c0_239] : memref<2x2x1x128xf32, #tpu.memory_space<vmem>>, vector<1x1x1x128xf32>
    %294 = vector.shape_cast %293 : vector<1x1x1x128xf32> to vector<1x128xf32>
    %295 = vector.broadcast %294 : vector<1x128xf32> to vector<16x128xf32>
    %296 = arith.addf %292, %295 : vector<16x128xf32>
    %297 = arith.addf %243, %296 : vector<16x128xf32>
    %c1_240 = arith.constant 1 : index
    %c0_241 = arith.constant 0 : index
    %c0_242 = arith.constant 0 : index
    %c0_243 = arith.constant 0 : index
    %298 = vector.load %arg8[%c1_240, %c0_241, %c0_242, %c0_243] : memref<2x2x1x128xf32, #tpu.memory_space<vmem>>, vector<1x1x1x128xf32>
    %299 = vector.shape_cast %298 : vector<1x1x1x128xf32> to vector<1x128xf32>
    %c1_244 = arith.constant 1 : index
    %c0_245 = arith.constant 0 : index
    %c0_246 = arith.constant 0 : index
    %c0_247 = arith.constant 0 : index
    %300 = vector.load %arg9[%c1_244, %c0_245, %c0_246, %c0_247] : memref<2x2x1x128xf32, #tpu.memory_space<vmem>>, vector<1x1x1x128xf32>
    %301 = vector.shape_cast %300 : vector<1x1x1x128xf32> to vector<1x128xf32>
    %cst_248 = arith.constant dense<0.000000e+00> : vector<16xf32>
    %302 = vector.multi_reduction <add>, %297, %cst_248 [1] : vector<16x128xf32> to vector<16xf32>
    %303 = vector.shape_cast %302 : vector<16xf32> to vector<16x1xf32>
    %cst_249 = arith.constant 1.280000e+02 : f32
    %304 = vector.broadcast %cst_249 : f32 to vector<16x1xf32>
    %305 = arith.divf %303, %304 : vector<16x1xf32>
    %306 = vector.broadcast %305 : vector<16x1xf32> to vector<16x128xf32>
    %307 = arith.subf %297, %306 : vector<16x128xf32>
    %308 = vector.broadcast %305 : vector<16x1xf32> to vector<16x128xf32>
    %309 = arith.subf %297, %308 : vector<16x128xf32>
    %310 = arith.mulf %307, %309 : vector<16x128xf32>
    %cst_250 = arith.constant dense<0.000000e+00> : vector<16xf32>
    %311 = vector.multi_reduction <add>, %310, %cst_250 [1] : vector<16x128xf32> to vector<16xf32>
    %312 = vector.shape_cast %311 : vector<16xf32> to vector<16x1xf32>
    %cst_251 = arith.constant 1.280000e+02 : f32
    %313 = vector.broadcast %cst_251 : f32 to vector<16x1xf32>
    %314 = arith.divf %312, %313 : vector<16x1xf32>
    %315 = vector.broadcast %305 : vector<16x1xf32> to vector<16x128xf32>
    %316 = arith.subf %297, %315 : vector<16x128xf32>
    %cst_252 = arith.constant 9.99999974E-6 : f32
    %317 = vector.broadcast %cst_252 : f32 to vector<16x1xf32>
    %318 = arith.addf %314, %317 : vector<16x1xf32>
    %319 = math.rsqrt %318 : vector<16x1xf32>
    %320 = vector.broadcast %319 : vector<16x1xf32> to vector<16x128xf32>
    %321 = arith.mulf %316, %320 : vector<16x128xf32>
    %322 = vector.broadcast %299 : vector<1x128xf32> to vector<16x128xf32>
    %323 = arith.mulf %321, %322 : vector<16x128xf32>
    %324 = vector.broadcast %301 : vector<1x128xf32> to vector<16x128xf32>
    %325 = arith.addf %323, %324 : vector<16x128xf32>
    %326 = arith.truncf %325 : vector<16x128xf32> to vector<16x128xbf16>
    %c1_253 = arith.constant 1 : index
    %c0_254 = arith.constant 0 : index
    %c0_255 = arith.constant 0 : index
    %c0_256 = arith.constant 0 : index
    %327 = vector.load %arg10[%c1_253, %c0_254, %c0_255, %c0_256] : memref<2x2x128x512xbf16, #tpu.memory_space<vmem>>, vector<1x1x128x512xbf16>
    %328 = vector.shape_cast %327 : vector<1x1x128x512xbf16> to vector<128x512xbf16>
    %cst_257 = arith.constant dense<0.000000e+00> : vector<16x512xf32>
    %329 = tpu.matmul %326, %328, %cst_257 {dimension_numbers = #tpu.dot_dimension_numbers<[1], [0], [0], [1], [0, 0, 1, 1], [], []>} : vector<16x128xbf16>, vector<128x512xbf16>, vector<16x512xf32> -> vector<16x512xf32>
    %c1_258 = arith.constant 1 : index
    %c0_259 = arith.constant 0 : index
    %c0_260 = arith.constant 0 : index
    %c0_261 = arith.constant 0 : index
    %330 = vector.load %arg11[%c1_258, %c0_259, %c0_260, %c0_261] : memref<2x2x1x512xf32, #tpu.memory_space<vmem>>, vector<1x1x1x512xf32>
    %331 = vector.shape_cast %330 : vector<1x1x1x512xf32> to vector<1x512xf32>
    %332 = vector.broadcast %331 : vector<1x512xf32> to vector<16x512xf32>
    %333 = arith.addf %329, %332 : vector<16x512xf32>
    %cst_262 = arith.constant 5.000000e-01 : f32
    %334 = vector.broadcast %cst_262 : f32 to vector<16x512xf32>
    %335 = arith.mulf %334, %333 : vector<16x512xf32>
    %cst_263 = arith.constant 0.707106769 : f32
    %336 = vector.broadcast %cst_263 : f32 to vector<16x512xf32>
    %337 = arith.mulf %333, %336 : vector<16x512xf32>
    %338 = math.erf %337 : vector<16x512xf32>
    %cst_264 = arith.constant 1.000000e+00 : f32
    %339 = vector.broadcast %cst_264 : f32 to vector<16x512xf32>
    %340 = arith.addf %339, %338 : vector<16x512xf32>
    %341 = arith.mulf %335, %340 : vector<16x512xf32>
    %342 = arith.truncf %341 : vector<16x512xf32> to vector<16x512xbf16>
    %c1_265 = arith.constant 1 : index
    %c0_266 = arith.constant 0 : index
    %c0_267 = arith.constant 0 : index
    %c0_268 = arith.constant 0 : index
    %343 = vector.load %arg12[%c1_265, %c0_266, %c0_267, %c0_268] : memref<2x2x512x128xbf16, #tpu.memory_space<vmem>>, vector<1x1x512x128xbf16>
    %344 = vector.shape_cast %343 : vector<1x1x512x128xbf16> to vector<512x128xbf16>
    %cst_269 = arith.constant dense<0.000000e+00> : vector<16x128xf32>
    %345 = tpu.matmul %342, %344, %cst_269 {dimension_numbers = #tpu.dot_dimension_numbers<[1], [0], [0], [1], [0, 0, 1, 1], [], []>} : vector<16x512xbf16>, vector<512x128xbf16>, vector<16x128xf32> -> vector<16x128xf32>
    %c1_270 = arith.constant 1 : index
    %c0_271 = arith.constant 0 : index
    %c0_272 = arith.constant 0 : index
    %c0_273 = arith.constant 0 : index
    %346 = vector.load %arg13[%c1_270, %c0_271, %c0_272, %c0_273] : memref<2x2x1x128xf32, #tpu.memory_space<vmem>>, vector<1x1x1x128xf32>
    %347 = vector.shape_cast %346 : vector<1x1x1x128xf32> to vector<1x128xf32>
    %348 = vector.broadcast %347 : vector<1x128xf32> to vector<16x128xf32>
    %349 = arith.addf %345, %348 : vector<16x128xf32>
    %350 = arith.addf %297, %349 : vector<16x128xf32>
    %c1_274 = arith.constant 1 : index
    %c0_275 = arith.constant 0 : index
    %c0_276 = arith.constant 0 : index
    %351 = vector.load %arg6[%c1_274, %c0_275, %c0_276] : memref<2x1x128xf32, #tpu.memory_space<vmem>>, vector<1x1x128xf32>
    %352 = vector.shape_cast %351 : vector<1x1x128xf32> to vector<1x128xf32>
    %c1_277 = arith.constant 1 : index
    %c0_278 = arith.constant 0 : index
    %c0_279 = arith.constant 0 : index
    %353 = vector.load %arg7[%c1_277, %c0_278, %c0_279] : memref<2x1x128xf32, #tpu.memory_space<vmem>>, vector<1x1x128xf32>
    %354 = vector.shape_cast %353 : vector<1x1x128xf32> to vector<1x128xf32>
    %cst_280 = arith.constant dense<0.000000e+00> : vector<16xf32>
    %355 = vector.multi_reduction <add>, %350, %cst_280 [1] : vector<16x128xf32> to vector<16xf32>
    %356 = vector.shape_cast %355 : vector<16xf32> to vector<16x1xf32>
    %cst_281 = arith.constant 1.280000e+02 : f32
    %357 = vector.broadcast %cst_281 : f32 to vector<16x1xf32>
    %358 = arith.divf %356, %357 : vector<16x1xf32>
    %359 = vector.broadcast %358 : vector<16x1xf32> to vector<16x128xf32>
    %360 = arith.subf %350, %359 : vector<16x128xf32>
    %361 = vector.broadcast %358 : vector<16x1xf32> to vector<16x128xf32>
    %362 = arith.subf %350, %361 : vector<16x128xf32>
    %363 = arith.mulf %360, %362 : vector<16x128xf32>
    %cst_282 = arith.constant dense<0.000000e+00> : vector<16xf32>
    %364 = vector.multi_reduction <add>, %363, %cst_282 [1] : vector<16x128xf32> to vector<16xf32>
    %365 = vector.shape_cast %364 : vector<16xf32> to vector<16x1xf32>
    %cst_283 = arith.constant 1.280000e+02 : f32
    %366 = vector.broadcast %cst_283 : f32 to vector<16x1xf32>
    %367 = arith.divf %365, %366 : vector<16x1xf32>
    %368 = vector.broadcast %358 : vector<16x1xf32> to vector<16x128xf32>
    %369 = arith.subf %350, %368 : vector<16x128xf32>
    %cst_284 = arith.constant 9.99999974E-6 : f32
    %370 = vector.broadcast %cst_284 : f32 to vector<16x1xf32>
    %371 = arith.addf %367, %370 : vector<16x1xf32>
    %372 = math.rsqrt %371 : vector<16x1xf32>
    %373 = vector.broadcast %372 : vector<16x1xf32> to vector<16x128xf32>
    %374 = arith.mulf %369, %373 : vector<16x128xf32>
    %375 = vector.broadcast %352 : vector<1x128xf32> to vector<16x128xf32>
    %376 = arith.mulf %374, %375 : vector<16x128xf32>
    %377 = vector.broadcast %354 : vector<1x128xf32> to vector<16x128xf32>
    %378 = arith.addf %376, %377 : vector<16x128xf32>
    %379 = arith.truncf %378 : vector<16x128xf32> to vector<16x128xbf16>
    %c1_285 = arith.constant 1 : index
    %c1_286 = arith.constant 1 : index
    %c0_287 = arith.constant 0 : index
    %c0_288 = arith.constant 0 : index
    %380 = vector.load %arg2[%c1_285, %c1_286, %c0_287, %c0_288] : memref<2x2x128x384xbf16, #tpu.memory_space<vmem>>, vector<1x1x128x384xbf16>
    %381 = vector.shape_cast %380 : vector<1x1x128x384xbf16> to vector<128x384xbf16>
    %cst_289 = arith.constant dense<0.000000e+00> : vector<16x384xf32>
    %382 = tpu.matmul %379, %381, %cst_289 {dimension_numbers = #tpu.dot_dimension_numbers<[1], [0], [0], [1], [0, 0, 1, 1], [], []>} : vector<16x128xbf16>, vector<128x384xbf16>, vector<16x384xf32> -> vector<16x384xf32>
    %c1_290 = arith.constant 1 : index
    %c1_291 = arith.constant 1 : index
    %c0_292 = arith.constant 0 : index
    %c0_293 = arith.constant 0 : index
    %383 = vector.load %arg3[%c1_290, %c1_291, %c0_292, %c0_293] : memref<2x2x1x384xf32, #tpu.memory_space<vmem>>, vector<1x1x1x384xf32>
    %384 = vector.shape_cast %383 : vector<1x1x1x384xf32> to vector<1x384xf32>
    %385 = vector.broadcast %384 : vector<1x384xf32> to vector<16x384xf32>
    %386 = arith.addf %382, %385 : vector<16x384xf32>
    %387 = vector.extract_strided_slice %386 {offsets = [0, 0], sizes = [16, 128], strides = [1, 1]} : vector<16x384xf32> to vector<16x128xf32>
    %388 = vector.extract_strided_slice %386 {offsets = [0, 128], sizes = [16, 128], strides = [1, 1]} : vector<16x384xf32> to vector<16x128xf32>
    %389 = vector.extract_strided_slice %386 {offsets = [0, 256], sizes = [16, 128], strides = [1, 1]} : vector<16x384xf32> to vector<16x128xf32>
    %390 = arith.truncf %387 : vector<16x128xf32> to vector<16x128xbf16>
    %391 = arith.truncf %388 : vector<16x128xf32> to vector<16x128xbf16>
    %cst_294 = arith.constant dense<0.000000e+00> : vector<16x16xf32>
    %392 = tpu.matmul %390, %391, %cst_294 {dimension_numbers = #tpu.dot_dimension_numbers<[1], [1], [0], [0], [0, 0, 1, 0], [], []>} : vector<16x128xbf16>, vector<16x128xbf16>, vector<16x16xf32> -> vector<16x16xf32>
    %cst_295 = arith.constant dense<0xFF800000> : vector<16xf32>
    %393 = vector.multi_reduction <maximumf>, %392, %cst_295 [1] : vector<16x16xf32> to vector<16xf32>
    %394 = vector.shape_cast %393 : vector<16xf32> to vector<16x1xf32>
    %395 = vector.broadcast %394 : vector<16x1xf32> to vector<16x16xf32>
    %396 = arith.subf %392, %395 : vector<16x16xf32>
    %397 = math.exp %396 : vector<16x16xf32>
    %cst_296 = arith.constant dense<0.000000e+00> : vector<16xf32>
    %398 = vector.multi_reduction <add>, %397, %cst_296 [1] : vector<16x16xf32> to vector<16xf32>
    %399 = vector.shape_cast %398 : vector<16xf32> to vector<16x1xf32>
    %400 = tpu.reciprocal %399 {approx = true} : vector<16x1xf32> -> vector<16x1xf32>
    %401 = vector.broadcast %400 : vector<16x1xf32> to vector<16x16xf32>
    %402 = arith.mulf %397, %401 : vector<16x16xf32>
    %403 = arith.truncf %389 : vector<16x128xf32> to vector<16x128xbf16>
    %404 = arith.truncf %402 : vector<16x16xf32> to vector<16x16xbf16>
    %cst_297 = arith.constant dense<0.000000e+00> : vector<128x16xf32>
    %405 = tpu.matmul %403, %404, %cst_297 {dimension_numbers = #tpu.dot_dimension_numbers<[0], [1], [1], [0], [0, 1, 1, 0], [], []>} : vector<16x128xbf16>, vector<16x16xbf16>, vector<128x16xf32> -> vector<128x16xf32>
    %c0_298 = arith.constant 0 : index
    %c0_299 = arith.constant 0 : index
    %406 = vector.load %arg15[%c0_298, %c0_299] : memref<128x16xf32, #tpu.memory_space<vmem>>, vector<128x16xf32>
    tpu.vector_store %arg15[%c0_298, %c0_299], %405 {strides = array<i32>} : memref<128x16xf32, #tpu.memory_space<vmem>>, vector<128x16xf32>,
    %c0_300 = arith.constant 0 : index
    %c0_301 = arith.constant 0 : index
    %407 = tpu.strided_load %arg15[%c0_300, %c0_301] {strides = array<i32: 8, 1>} : memref<128x16xf32, #tpu.memory_space<vmem>>, vector<16x16xf32>
    %c0_302 = arith.constant 0 : index
    %c0_303 = arith.constant 0 : index
    %408 = vector.load %arg16[%c0_302, %c0_303] : memref<16x128xf32, #tpu.memory_space<vmem>>, vector<16x16xf32>
    tpu.vector_store %arg16[%c0_302, %c0_303], %407 {strides = array<i32>} : memref<16x128xf32, #tpu.memory_space<vmem>>, vector<16x16xf32>,
    %c1_304 = arith.constant 1 : index
    %c0_305 = arith.constant 0 : index
    %409 = tpu.strided_load %arg15[%c1_304, %c0_305] {strides = array<i32: 8, 1>} : memref<128x16xf32, #tpu.memory_space<vmem>>, vector<16x16xf32>
    %c0_306 = arith.constant 0 : index
    %c16_307 = arith.constant 16 : index
    %410 = vector.load %arg16[%c0_306, %c16_307] : memref<16x128xf32, #tpu.memory_space<vmem>>, vector<16x16xf32>
    tpu.vector_store %arg16[%c0_306, %c16_307], %409 {strides = array<i32>} : memref<16x128xf32, #tpu.memory_space<vmem>>, vector<16x16xf32>,
    %c2_308 = arith.constant 2 : index
    %c0_309 = arith.constant 0 : index
    %411 = tpu.strided_load %arg15[%c2_308, %c0_309] {strides = array<i32: 8, 1>} : memref<128x16xf32, #tpu.memory_space<vmem>>, vector<16x16xf32>
    %c0_310 = arith.constant 0 : index
    %c32_311 = arith.constant 32 : index
    %412 = vector.load %arg16[%c0_310, %c32_311] : memref<16x128xf32, #tpu.memory_space<vmem>>, vector<16x16xf32>
    tpu.vector_store %arg16[%c0_310, %c32_311], %411 {strides = array<i32>} : memref<16x128xf32, #tpu.memory_space<vmem>>, vector<16x16xf32>,
    %c3_312 = arith.constant 3 : index
    %c0_313 = arith.constant 0 : index
    %413 = tpu.strided_load %arg15[%c3_312, %c0_313] {strides = array<i32: 8, 1>} : memref<128x16xf32, #tpu.memory_space<vmem>>, vector<16x16xf32>
    %c0_314 = arith.constant 0 : index
    %c48_315 = arith.constant 48 : index
    %414 = vector.load %arg16[%c0_314, %c48_315] : memref<16x128xf32, #tpu.memory_space<vmem>>, vector<16x16xf32>
    tpu.vector_store %arg16[%c0_314, %c48_315], %413 {strides = array<i32>} : memref<16x128xf32, #tpu.memory_space<vmem>>, vector<16x16xf32>,
    %c4_316 = arith.constant 4 : index
    %c0_317 = arith.constant 0 : index
    %415 = tpu.strided_load %arg15[%c4_316, %c0_317] {strides = array<i32: 8, 1>} : memref<128x16xf32, #tpu.memory_space<vmem>>, vector<16x16xf32>
    %c0_318 = arith.constant 0 : index
    %c64_319 = arith.constant 64 : index
    %416 = vector.load %arg16[%c0_318, %c64_319] : memref<16x128xf32, #tpu.memory_space<vmem>>, vector<16x16xf32>
    tpu.vector_store %arg16[%c0_318, %c64_319], %415 {strides = array<i32>} : memref<16x128xf32, #tpu.memory_space<vmem>>, vector<16x16xf32>,
    %c5_320 = arith.constant 5 : index
    %c0_321 = arith.constant 0 : index
    %417 = tpu.strided_load %arg15[%c5_320, %c0_321] {strides = array<i32: 8, 1>} : memref<128x16xf32, #tpu.memory_space<vmem>>, vector<16x16xf32>
    %c0_322 = arith.constant 0 : index
    %c80_323 = arith.constant 80 : index
    %418 = vector.load %arg16[%c0_322, %c80_323] : memref<16x128xf32, #tpu.memory_space<vmem>>, vector<16x16xf32>
    tpu.vector_store %arg16[%c0_322, %c80_323], %417 {strides = array<i32>} : memref<16x128xf32, #tpu.memory_space<vmem>>, vector<16x16xf32>,
    %c6_324 = arith.constant 6 : index
    %c0_325 = arith.constant 0 : index
    %419 = tpu.strided_load %arg15[%c6_324, %c0_325] {strides = array<i32: 8, 1>} : memref<128x16xf32, #tpu.memory_space<vmem>>, vector<16x16xf32>
    %c0_326 = arith.constant 0 : index
    %c96_327 = arith.constant 96 : index
    %420 = vector.load %arg16[%c0_326, %c96_327] : memref<16x128xf32, #tpu.memory_space<vmem>>, vector<16x16xf32>
    tpu.vector_store %arg16[%c0_326, %c96_327], %419 {strides = array<i32>} : memref<16x128xf32, #tpu.memory_space<vmem>>, vector<16x16xf32>,
    %c7_328 = arith.constant 7 : index
    %c0_329 = arith.constant 0 : index
    %421 = tpu.strided_load %arg15[%c7_328, %c0_329] {strides = array<i32: 8, 1>} : memref<128x16xf32, #tpu.memory_space<vmem>>, vector<16x16xf32>
    %c0_330 = arith.constant 0 : index
    %c112_331 = arith.constant 112 : index
    %422 = vector.load %arg16[%c0_330, %c112_331] : memref<16x128xf32, #tpu.memory_space<vmem>>, vector<16x16xf32>
    tpu.vector_store %arg16[%c0_330, %c112_331], %421 {strides = array<i32>} : memref<16x128xf32, #tpu.memory_space<vmem>>, vector<16x16xf32>,
    %c0_332 = arith.constant 0 : index
    %c0_333 = arith.constant 0 : index
    %423 = vector.load %arg16[%c0_332, %c0_333] : memref<16x128xf32, #tpu.memory_space<vmem>>, vector<16x128xf32>
    %424 = arith.truncf %423 : vector<16x128xf32> to vector<16x128xbf16>
    %c1_334 = arith.constant 1 : index
    %c1_335 = arith.constant 1 : index
    %c0_336 = arith.constant 0 : index
    %c0_337 = arith.constant 0 : index
    %425 = vector.load %arg4[%c1_334, %c1_335, %c0_336, %c0_337] : memref<2x2x128x128xbf16, #tpu.memory_space<vmem>>, vector<1x1x128x128xbf16>
    %426 = vector.shape_cast %425 : vector<1x1x128x128xbf16> to vector<128x128xbf16>
    %cst_338 = arith.constant dense<0.000000e+00> : vector<16x128xf32>
    %427 = tpu.matmul %424, %426, %cst_338 {dimension_numbers = #tpu.dot_dimension_numbers<[1], [0], [0], [1], [0, 0, 1, 1], [], []>} : vector<16x128xbf16>, vector<128x128xbf16>, vector<16x128xf32> -> vector<16x128xf32>
    %c1_339 = arith.constant 1 : index
    %c1_340 = arith.constant 1 : index
    %c0_341 = arith.constant 0 : index
    %c0_342 = arith.constant 0 : index
    %428 = vector.load %arg5[%c1_339, %c1_340, %c0_341, %c0_342] : memref<2x2x1x128xf32, #tpu.memory_space<vmem>>, vector<1x1x1x128xf32>
    %429 = vector.shape_cast %428 : vector<1x1x1x128xf32> to vector<1x128xf32>
    %430 = vector.broadcast %429 : vector<1x128xf32> to vector<16x128xf32>
    %431 = arith.addf %427, %430 : vector<16x128xf32>
    %432 = arith.addf %350, %431 : vector<16x128xf32>
    %c1_343 = arith.constant 1 : index
    %c1_344 = arith.constant 1 : index
    %c0_345 = arith.constant 0 : index
    %c0_346 = arith.constant 0 : index
    %433 = vector.load %arg8[%c1_343, %c1_344, %c0_345, %c0_346] : memref<2x2x1x128xf32, #tpu.memory_space<vmem>>, vector<1x1x1x128xf32>
    %434 = vector.shape_cast %433 : vector<1x1x1x128xf32> to vector<1x128xf32>
    %c1_347 = arith.constant 1 : index
    %c1_348 = arith.constant 1 : index
    %c0_349 = arith.constant 0 : index
    %c0_350 = arith.constant 0 : index
    %435 = vector.load %arg9[%c1_347, %c1_348, %c0_349, %c0_350] : memref<2x2x1x128xf32, #tpu.memory_space<vmem>>, vector<1x1x1x128xf32>
    %436 = vector.shape_cast %435 : vector<1x1x1x128xf32> to vector<1x128xf32>
    %cst_351 = arith.constant dense<0.000000e+00> : vector<16xf32>
    %437 = vector.multi_reduction <add>, %432, %cst_351 [1] : vector<16x128xf32> to vector<16xf32>
    %438 = vector.shape_cast %437 : vector<16xf32> to vector<16x1xf32>
    %cst_352 = arith.constant 1.280000e+02 : f32
    %439 = vector.broadcast %cst_352 : f32 to vector<16x1xf32>
    %440 = arith.divf %438, %439 : vector<16x1xf32>
    %441 = vector.broadcast %440 : vector<16x1xf32> to vector<16x128xf32>
    %442 = arith.subf %432, %441 : vector<16x128xf32>
    %443 = vector.broadcast %440 : vector<16x1xf32> to vector<16x128xf32>
    %444 = arith.subf %432, %443 : vector<16x128xf32>
    %445 = arith.mulf %442, %444 : vector<16x128xf32>
    %cst_353 = arith.constant dense<0.000000e+00> : vector<16xf32>
    %446 = vector.multi_reduction <add>, %445, %cst_353 [1] : vector<16x128xf32> to vector<16xf32>
    %447 = vector.shape_cast %446 : vector<16xf32> to vector<16x1xf32>
    %cst_354 = arith.constant 1.280000e+02 : f32
    %448 = vector.broadcast %cst_354 : f32 to vector<16x1xf32>
    %449 = arith.divf %447, %448 : vector<16x1xf32>
    %450 = vector.broadcast %440 : vector<16x1xf32> to vector<16x128xf32>
    %451 = arith.subf %432, %450 : vector<16x128xf32>
    %cst_355 = arith.constant 9.99999974E-6 : f32
    %452 = vector.broadcast %cst_355 : f32 to vector<16x1xf32>
    %453 = arith.addf %449, %452 : vector<16x1xf32>
    %454 = math.rsqrt %453 : vector<16x1xf32>
    %455 = vector.broadcast %454 : vector<16x1xf32> to vector<16x128xf32>
    %456 = arith.mulf %451, %455 : vector<16x128xf32>
    %457 = vector.broadcast %434 : vector<1x128xf32> to vector<16x128xf32>
    %458 = arith.mulf %456, %457 : vector<16x128xf32>
    %459 = vector.broadcast %436 : vector<1x128xf32> to vector<16x128xf32>
    %460 = arith.addf %458, %459 : vector<16x128xf32>
    %461 = arith.truncf %460 : vector<16x128xf32> to vector<16x128xbf16>
    %c1_356 = arith.constant 1 : index
    %c1_357 = arith.constant 1 : index
    %c0_358 = arith.constant 0 : index
    %c0_359 = arith.constant 0 : index
    %462 = vector.load %arg10[%c1_356, %c1_357, %c0_358, %c0_359] : memref<2x2x128x512xbf16, #tpu.memory_space<vmem>>, vector<1x1x128x512xbf16>
    %463 = vector.shape_cast %462 : vector<1x1x128x512xbf16> to vector<128x512xbf16>
    %cst_360 = arith.constant dense<0.000000e+00> : vector<16x512xf32>
    %464 = tpu.matmul %461, %463, %cst_360 {dimension_numbers = #tpu.dot_dimension_numbers<[1], [0], [0], [1], [0, 0, 1, 1], [], []>} : vector<16x128xbf16>, vector<128x512xbf16>, vector<16x512xf32> -> vector<16x512xf32>
    %c1_361 = arith.constant 1 : index
    %c1_362 = arith.constant 1 : index
    %c0_363 = arith.constant 0 : index
    %c0_364 = arith.constant 0 : index
    %465 = vector.load %arg11[%c1_361, %c1_362, %c0_363, %c0_364] : memref<2x2x1x512xf32, #tpu.memory_space<vmem>>, vector<1x1x1x512xf32>
    %466 = vector.shape_cast %465 : vector<1x1x1x512xf32> to vector<1x512xf32>
    %467 = vector.broadcast %466 : vector<1x512xf32> to vector<16x512xf32>
    %468 = arith.addf %464, %467 : vector<16x512xf32>
    %cst_365 = arith.constant 5.000000e-01 : f32
    %469 = vector.broadcast %cst_365 : f32 to vector<16x512xf32>
    %470 = arith.mulf %469, %468 : vector<16x512xf32>
    %cst_366 = arith.constant 0.707106769 : f32
    %471 = vector.broadcast %cst_366 : f32 to vector<16x512xf32>
    %472 = arith.mulf %468, %471 : vector<16x512xf32>
    %473 = math.erf %472 : vector<16x512xf32>
    %cst_367 = arith.constant 1.000000e+00 : f32
    %474 = vector.broadcast %cst_367 : f32 to vector<16x512xf32>
    %475 = arith.addf %474, %473 : vector<16x512xf32>
    %476 = arith.mulf %470, %475 : vector<16x512xf32>
    %477 = arith.truncf %476 : vector<16x512xf32> to vector<16x512xbf16>
    %c1_368 = arith.constant 1 : index
    %c1_369 = arith.constant 1 : index
    %c0_370 = arith.constant 0 : index
    %c0_371 = arith.constant 0 : index
    %478 = vector.load %arg12[%c1_368, %c1_369, %c0_370, %c0_371] : memref<2x2x512x128xbf16, #tpu.memory_space<vmem>>, vector<1x1x512x128xbf16>
    %479 = vector.shape_cast %478 : vector<1x1x512x128xbf16> to vector<512x128xbf16>
    %cst_372 = arith.constant dense<0.000000e+00> : vector<16x128xf32>
    %480 = tpu.matmul %477, %479, %cst_372 {dimension_numbers = #tpu.dot_dimension_numbers<[1], [0], [0], [1], [0, 0, 1, 1], [], []>} : vector<16x512xbf16>, vector<512x128xbf16>, vector<16x128xf32> -> vector<16x128xf32>
    %c1_373 = arith.constant 1 : index
    %c1_374 = arith.constant 1 : index
    %c0_375 = arith.constant 0 : index
    %c0_376 = arith.constant 0 : index
    %481 = vector.load %arg13[%c1_373, %c1_374, %c0_375, %c0_376] : memref<2x2x1x128xf32, #tpu.memory_space<vmem>>, vector<1x1x1x128xf32>
    %482 = vector.shape_cast %481 : vector<1x1x1x128xf32> to vector<1x128xf32>
    %483 = vector.broadcast %482 : vector<1x128xf32> to vector<16x128xf32>
    %484 = arith.addf %480, %483 : vector<16x128xf32>
    %485 = arith.addf %432, %484 : vector<16x128xf32>
    %c0_377 = arith.constant 0 : index
    %c0_378 = arith.constant 0 : index
    %c0_379 = arith.constant 0 : index
    %486 = vector.load %arg14[%c0_377, %c0_378, %c0_379] : memref<1x16x128xf32, #tpu.memory_space<vmem>>, vector<1x16x128xf32>
    %487 = vector.shape_cast %486 : vector<1x16x128xf32> to vector<16x128xf32>
    %488 = vector.shape_cast %485 : vector<16x128xf32> to vector<1x16x128xf32>
    tpu.vector_store %arg14[%c0_377, %c0_378, %c0_379], %488 {strides = array<i32>} : memref<1x16x128xf32, #tpu.memory_space<vmem>>, vector<1x16x128xf32>,
    return
  }
  func.func @transform_0(%arg0: i32) -> (i32, i32, i32) {
    %c0_i32 = arith.constant 0 : i32
    %c0_i32_0 = arith.constant 0 : i32
    %c0_i32_1 = arith.constant 0 : i32
    return %arg0, %c0_i32, %c0_i32_0 : i32, i32, i32
  }
  func.func @transform_1(%arg0: i32) -> (i32, i32, i32, i32) {
    %c0_i32 = arith.constant 0 : i32
    %c0_i32_0 = arith.constant 0 : i32
    %c0_i32_1 = arith.constant 0 : i32
    %c0_i32_2 = arith.constant 0 : i32
    %c0_i32_3 = arith.constant 0 : i32
    return %c0_i32, %c0_i32_0, %c0_i32_1, %c0_i32_2 : i32, i32, i32, i32
  }
  func.func @transform_2(%arg0: i32) -> (i32, i32, i32, i32) {
    %c0_i32 = arith.constant 0 : i32
    %c0_i32_0 = arith.constant 0 : i32
    %c0_i32_1 = arith.constant 0 : i32
    %c0_i32_2 = arith.constant 0 : i32
    %c0_i32_3 = arith.constant 0 : i32
    return %c0_i32, %c0_i32_0, %c0_i32_1, %c0_i32_2 : i32, i32, i32, i32
  }
  func.func @transform_3(%arg0: i32) -> (i32, i32, i32, i32) {
    %c0_i32 = arith.constant 0 : i32
    %c0_i32_0 = arith.constant 0 : i32
    %c0_i32_1 = arith.constant 0 : i32
    %c0_i32_2 = arith.constant 0 : i32
    %c0_i32_3 = arith.constant 0 : i32
    return %c0_i32, %c0_i32_0, %c0_i32_1, %c0_i32_2 : i32, i32, i32, i32
  }
  func.func @transform_4(%arg0: i32) -> (i32, i32, i32, i32) {
    %c0_i32 = arith.constant 0 : i32
    %c0_i32_0 = arith.constant 0 : i32
    %c0_i32_1 = arith.constant 0 : i32
    %c0_i32_2 = arith.constant 0 : i32
    %c0_i32_3 = arith.constant 0 : i32
    return %c0_i32, %c0_i32_0, %c0_i32_1, %c0_i32_2 : i32, i32, i32, i32
  }
  func.func @transform_5(%arg0: i32) -> (i32, i32, i32) {
    %c0_i32 = arith.constant 0 : i32
    %c0_i32_0 = arith.constant 0 : i32
    %c0_i32_1 = arith.constant 0 : i32
    %c0_i32_2 = arith.constant 0 : i32
    return %c0_i32, %c0_i32_0, %c0_i32_1 : i32, i32, i32
  }
  func.func @transform_6(%arg0: i32) -> (i32, i32, i32) {
    %c0_i32 = arith.constant 0 : i32
    %c0_i32_0 = arith.constant 0 : i32
    %c0_i32_1 = arith.constant 0 : i32
    %c0_i32_2 = arith.constant 0 : i32
    return %c0_i32, %c0_i32_0, %c0_i32_1 : i32, i32, i32
  }
  func.func @transform_7(%arg0: i32) -> (i32, i32, i32, i32) {
    %c0_i32 = arith.constant 0 : i32
    %c0_i32_0 = arith.constant 0 : i32
    %c0_i32_1 = arith.constant 0 : i32
    %c0_i32_2 = arith.constant 0 : i32
    %c0_i32_3 = arith.constant 0 : i32
    return %c0_i32, %c0_i32_0, %c0_i32_1, %c0_i32_2 : i32, i32, i32, i32
  }
  func.func @transform_8(%arg0: i32) -> (i32, i32, i32, i32) {
    %c0_i32 = arith.constant 0 : i32
    %c0_i32_0 = arith.constant 0 : i32
    %c0_i32_1 = arith.constant 0 : i32
    %c0_i32_2 = arith.constant 0 : i32
    %c0_i32_3 = arith.constant 0 : i32
    return %c0_i32, %c0_i32_0, %c0_i32_1, %c0_i32_2 : i32, i32, i32, i32
  }
  func.func @transform_9(%arg0: i32) -> (i32, i32, i32, i32) {
    %c0_i32 = arith.constant 0 : i32
    %c0_i32_0 = arith.constant 0 : i32
    %c0_i32_1 = arith.constant 0 : i32
    %c0_i32_2 = arith.constant 0 : i32
    %c0_i32_3 = arith.constant 0 : i32
    return %c0_i32, %c0_i32_0, %c0_i32_1, %c0_i32_2 : i32, i32, i32, i32
  }
  func.func @transform_10(%arg0: i32) -> (i32, i32, i32, i32) {
    %c0_i32 = arith.constant 0 : i32
    %c0_i32_0 = arith.constant 0 : i32
    %c0_i32_1 = arith.constant 0 : i32
    %c0_i32_2 = arith.constant 0 : i32
    %c0_i32_3 = arith.constant 0 : i32
    return %c0_i32, %c0_i32_0, %c0_i32_1, %c0_i32_2 : i32, i32, i32, i32
  }
  func.func @transform_11(%arg0: i32) -> (i32, i32, i32, i32) {
    %c0_i32 = arith.constant 0 : i32
    %c0_i32_0 = arith.constant 0 : i32
    %c0_i32_1 = arith.constant 0 : i32
    %c0_i32_2 = arith.constant 0 : i32
    %c0_i32_3 = arith.constant 0 : i32
    return %c0_i32, %c0_i32_0, %c0_i32_1, %c0_i32_2 : i32, i32, i32, i32
  }
  func.func @transform_12(%arg0: i32) -> (i32, i32, i32, i32) {
    %c0_i32 = arith.constant 0 : i32
    %c0_i32_0 = arith.constant 0 : i32
    %c0_i32_1 = arith.constant 0 : i32
    %c0_i32_2 = arith.constant 0 : i32
    %c0_i32_3 = arith.constant 0 : i32
    return %c0_i32, %c0_i32_0, %c0_i32_1, %c0_i32_2 : i32, i32, i32, i32
  }
  func.func @transform_13(%arg0: i32) -> (i32, i32, i32) {
    %c0_i32 = arith.constant 0 : i32
    %c0_i32_0 = arith.constant 0 : i32
    %c0_i32_1 = arith.constant 0 : i32
    return %arg0, %c0_i32, %c0_i32_0 : i32, i32, i32
  }
}

</mosaic_0001>

<llo_original>
// kernel: _lambda_.1
$region0: #{_lambda_.1}
  #allocation0 [shape = 'u32[]', space=smem, size = 0x4, offset = 0x4, fixed_abs, tag = 'smem constant byte address 0x4 - core index']
  #allocation1 [shape = 'u32[144,128]{1,0:T(1,128)}', space=vmem, size = 0x12000, scoped, tag = 'internal scratch']
  #allocation2 [shape = 'f32[128,16]{1,0:T(8,128)}', space=vmem, size = 0x10000, scoped, tag = 'scratch operand']
  #allocation3 [shape = 'f32[16,128]{1,0:T(8,128)}', space=vmem, size = 0x2000, scoped, tag = 'scratch operand']
  %s0 = inlined_call_operand.vmem [shape: f32[2,16,128], index: 0, kind: input, shape index: {}]
  %s1 = inlined_call_operand.vmem [shape: bf16[2,2,128,384], index: 1, kind: input, shape index: {}]
  %s2 = inlined_call_operand.vmem [shape: f32[2,2,1,384], index: 2, kind: input, shape index: {}]
  %s3 = inlined_call_operand.vmem [shape: bf16[2,2,128,128], index: 3, kind: input, shape index: {}]
  %s4 = inlined_call_operand.vmem [shape: f32[2,2,1,128], index: 4, kind: input, shape index: {}]
  %s5 = inlined_call_operand.vmem [shape: f32[2,1,128], index: 5, kind: input, shape index: {}]
  %s6 = inlined_call_operand.vmem [shape: f32[2,1,128], index: 6, kind: input, shape index: {}]
  %s7 = inlined_call_operand.vmem [shape: f32[2,2,1,128], index: 7, kind: input, shape index: {}]
  %s8 = inlined_call_operand.vmem [shape: f32[2,2,1,128], index: 8, kind: input, shape index: {}]
  %s9 = inlined_call_operand.vmem [shape: bf16[2,2,128,512], index: 9, kind: input, shape index: {}]
  %s10 = inlined_call_operand.vmem [shape: f32[2,2,1,512], index: 10, kind: input, shape index: {}]
  %s11 = inlined_call_operand.vmem [shape: bf16[2,2,512,128], index: 11, kind: input, shape index: {}]
  %s12 = inlined_call_operand.vmem [shape: f32[2,2,1,128], index: 12, kind: input, shape index: {}]
  %s13 = inlined_call_operand.hbm [shape: f32[2,16,128], index: 13, kind: output, shape index: {}]
  %s14 = sld [smem:[#allocation0]]
  $region85: #{_lambda_.1} parent=0
    _
  %s16 = ssub.s32 1, %s14
  %s17 = scalar_select 0, %s16, %s14
  $region1: #{_lambda_.1} parent=0
    #allocation4 [shape = 'u8[16384]{0}', space=vmem, size = 0x4000, scoped, tag = 'output window, operand 0']
    #allocation5 [shape = 's32[2]{0}', space=sflag, size = 0x8, scoped, tag = 'scoped memory for _lambda_.1']
    %18 = vsyncpa [#allocation5], 0
    %s19 = scalar_lea.sflag [#allocation5], 1
    %20 = vsyncpa %s19, 0
    loop: start=0, step=1, limit=4
    $region2: #{_lambda_.1} parent=1 // loop_pre_header
      _
    $region3: #{_lambda_.1} parent=1 // loop_header
      %s22 = sphi 0, %s26
      %p23 = scmp.ge.s32.totalorder %s22, 4
      %s32 = sphi 0, %s34
      %s35 = sphi 0, %s32
      %s36 = sphi 0, %s35
      %s52 = sphi 0, %s36
      %s56 = sphi 0, %s56
      %s58 = sphi 0, %s56
      %s59 = sphi 0, %s58
      %s73 = sphi 0, %s59
      %s77 = sphi 0, %s77
      %s79 = sphi 0, %s77
      %s80 = sphi 0, %s79
      %s94 = sphi 0, %s80
      %s98 = sphi 0, %s98
      %s100 = sphi 0, %s98
      %s101 = sphi 0, %s100
      %s115 = sphi 0, %s101
      %s119 = sphi 0, %s119
      %s121 = sphi 0, %s119
      %s122 = sphi 0, %s121
      %s136 = sphi 0, %s122
      %s140 = sphi 0, %s140
      %s142 = sphi 0, %s140
      %s143 = sphi 0, %s142
      %s157 = sphi 0, %s143
      %s161 = sphi 0, %s161
      %s163 = sphi 0, %s161
      %s164 = sphi 0, %s163
      %s178 = sphi 0, %s164
      %s182 = sphi 0, %s182
      %s184 = sphi 0, %s182
      %s185 = sphi 0, %s184
      %s199 = sphi 0, %s185
      %s203 = sphi 0, %s203
      %s205 = sphi 0, %s203
      %s206 = sphi 0, %s205
      %s220 = sphi 0, %s206
      %s224 = sphi 0, %s224
      %s226 = sphi 0, %s224
      %s227 = sphi 0, %s226
      %s241 = sphi 0, %s227
      %s245 = sphi 0, %s245
      %s247 = sphi 0, %s245
      %s248 = sphi 0, %s247
      %s262 = sphi 0, %s248
      %s266 = sphi 0, %s266
      %s268 = sphi 0, %s266
      %s269 = sphi 0, %s268
      %s283 = sphi 0, %s269
      %s287 = sphi 0, %s287
      %s289 = sphi 0, %s287
      %s290 = sphi 0, %s289
      %s304 = sphi 0, %s290
      %s310 = sphi 0, %s312
      %s313 = sphi 0, %s310
      %s314 = sphi 0, %s313
      %s330 = sphi 0, %s314
    $region4: #{_lambda_.1} parent=1 // loop_header_branch
      %25 = sbr.rel (%p23) target = $region8
    $region5: #{_lambda_.1} parent=1 // loop_body
      %s27 = ssub.s32 %s22, 1
      %s28 = ssub.s32 %s22, 2
      %s29 = sadd.s32 %s22, 1
      %s30 = ssub.s32 %s22, %s29
      %p31 = scmp.eq.s32.totalorder %s30, 0
      %s33 = sadd.s32 %s32, 1
      %s34 = scalar_select %p31, %s32, %s33
      %p37 = pneg %p31
      %p38 = scmp.eq.s32.totalorder %s22, 1
      %p39 = por %p37, %p38
      %p40 = scmp.ne.s32.totalorder %s32, %s35
      %p41 = scmp.eq.s32.totalorder %s22, 0
      %p42 = por %p40, %p41
      %p43 = scmp.ne.s32.totalorder %s32, %s35
      %p44 = scmp.eq.s32.totalorder %s27, 1
      %p45 = por %p43, %p44
      %p46 = scmp.ne.s32.totalorder %s35, %s36
      %p47 = scmp.eq.s32.totalorder %s27, 0
      %p48 = por %p46, %p47
      %p49 = scmp.ne.s32.totalorder %s35, %s36
      %p50 = scmp.eq.s32.totalorder %s28, 1
      %p51 = por %p49, %p50
      %p53 = scmp.ne.s32.totalorder %s36, %s52
      %p54 = scmp.eq.s32.totalorder %s28, 0
      %p55 = por %p53, %p54
      %s57 = sadd.s32 %s56, 1
      %p60 = scmp.eq.s32.totalorder %s22, 1
      %p61 = scmp.ne.s32.totalorder %s56, %s58
      %p62 = scmp.eq.s32.totalorder %s22, 0
      %p63 = por %p61, %p62
      %p64 = scmp.ne.s32.totalorder %s56, %s58
      %p65 = scmp.eq.s32.totalorder %s27, 1
      %p66 = por %p64, %p65
      %p67 = scmp.ne.s32.totalorder %s58, %s59
      %p68 = scmp.eq.s32.totalorder %s27, 0
      %p69 = por %p67, %p68
      %p70 = scmp.ne.s32.totalorder %s58, %s59
      %p71 = scmp.eq.s32.totalorder %s28, 1
      %p72 = por %p70, %p71
      %p74 = scmp.ne.s32.totalorder %s59, %s73
      %p75 = scmp.eq.s32.totalorder %s28, 0
      %p76 = por %p74, %p75
      %s78 = sadd.s32 %s77, 1
      %p81 = scmp.eq.s32.totalorder %s22, 1
      %p82 = scmp.ne.s32.totalorder %s77, %s79
      %p83 = scmp.eq.s32.totalorder %s22, 0
      %p84 = por %p82, %p83
      %p85 = scmp.ne.s32.totalorder %s77, %s79
      %p86 = scmp.eq.s32.totalorder %s27, 1
      %p87 = por %p85, %p86
      %p88 = scmp.ne.s32.totalorder %s79, %s80
      %p89 = scmp.eq.s32.totalorder %s27, 0
      %p90 = por %p88, %p89
      %p91 = scmp.ne.s32.totalorder %s79, %s80
      %p92 = scmp.eq.s32.totalorder %s28, 1
      %p93 = por %p91, %p92
      %p95 = scmp.ne.s32.totalorder %s80, %s94
      %p96 = scmp.eq.s32.totalorder %s28, 0
      %p97 = por %p95, %p96
      %s99 = sadd.s32 %s98, 1
      %p102 = scmp.eq.s32.totalorder %s22, 1
      %p103 = scmp.ne.s32.totalorder %s98, %s100
      %p104 = scmp.eq.s32.totalorder %s22, 0
      %p105 = por %p103, %p104
      %p106 = scmp.ne.s32.totalorder %s98, %s100
      %p107 = scmp.eq.s32.totalorder %s27, 1
      %p108 = por %p106, %p107
      %p109 = scmp.ne.s32.totalorder %s100, %s101
      %p110 = scmp.eq.s32.totalorder %s27, 0
      %p111 = por %p109, %p110
      %p112 = scmp.ne.s32.totalorder %s100, %s101
      %p113 = scmp.eq.s32.totalorder %s28, 1
      %p114 = por %p112, %p113
      %p116 = scmp.ne.s32.totalorder %s101, %s115
      %p117 = scmp.eq.s32.totalorder %s28, 0
      %p118 = por %p116, %p117
      %s120 = sadd.s32 %s119, 1
      %p123 = scmp.eq.s32.totalorder %s22, 1
      %p124 = scmp.ne.s32.totalorder %s119, %s121
      %p125 = scmp.eq.s32.totalorder %s22, 0
      %p126 = por %p124, %p125
      %p127 = scmp.ne.s32.totalorder %s119, %s121
      %p128 = scmp.eq.s32.totalorder %s27, 1
      %p129 = por %p127, %p128
      %p130 = scmp.ne.s32.totalorder %s121, %s122
      %p131 = scmp.eq.s32.totalorder %s27, 0
      %p132 = por %p130, %p131
      %p133 = scmp.ne.s32.totalorder %s121, %s122
      %p134 = scmp.eq.s32.totalorder %s28, 1
      %p135 = por %p133, %p134
      %p137 = scmp.ne.s32.totalorder %s122, %s136
      %p138 = scmp.eq.s32.totalorder %s28, 0
      %p139 = por %p137, %p138
      %s141 = sadd.s32 %s140, 1
      %p144 = scmp.eq.s32.totalorder %s22, 1
      %p145 = scmp.ne.s32.totalorder %s140, %s142
      %p146 = scmp.eq.s32.totalorder %s22, 0
      %p147 = por %p145, %p146
      %p148 = scmp.ne.s32.totalorder %s140, %s142
      %p149 = scmp.eq.s32.totalorder %s27, 1
      %p150 = por %p148, %p149
      %p151 = scmp.ne.s32.totalorder %s142, %s143
      %p152 = scmp.eq.s32.totalorder %s27, 0
      %p153 = por %p151, %p152
      %p154 = scmp.ne.s32.totalorder %s142, %s143
      %p155 = scmp.eq.s32.totalorder %s28, 1
      %p156 = por %p154, %p155
      %p158 = scmp.ne.s32.totalorder %s143, %s157
      %p159 = scmp.eq.s32.totalorder %s28, 0
      %p160 = por %p158, %p159
      %s162 = sadd.s32 %s161, 1
      %p165 = scmp.eq.s32.totalorder %s22, 1
      %p166 = scmp.ne.s32.totalorder %s161, %s163
      %p167 = scmp.eq.s32.totalorder %s22, 0
      %p168 = por %p166, %p167
      %p169 = scmp.ne.s32.totalorder %s161, %s163
      %p170 = scmp.eq.s32.totalorder %s27, 1
      %p171 = por %p169, %p170
      %p172 = scmp.ne.s32.totalorder %s163, %s164
      %p173 = scmp.eq.s32.totalorder %s27, 0
      %p174 = por %p172, %p173
      %p175 = scmp.ne.s32.totalorder %s163, %s164
      %p176 = scmp.eq.s32.totalorder %s28, 1
      %p177 = por %p175, %p176
      %p179 = scmp.ne.s32.totalorder %s164, %s178
      %p180 = scmp.eq.s32.totalorder %s28, 0
      %p181 = por %p179, %p180
      %s183 = sadd.s32 %s182, 1
      %p186 = scmp.eq.s32.totalorder %s22, 1
      %p187 = scmp.ne.s32.totalorder %s182, %s184
      %p188 = scmp.eq.s32.totalorder %s22, 0
      %p189 = por %p187, %p188
      %p190 = scmp.ne.s32.totalorder %s182, %s184
      %p191 = scmp.eq.s32.totalorder %s27, 1
      %p192 = por %p190, %p191
      %p193 = scmp.ne.s32.totalorder %s184, %s185
      %p194 = scmp.eq.s32.totalorder %s27, 0
      %p195 = por %p193, %p194
      %p196 = scmp.ne.s32.totalorder %s184, %s185
      %p197 = scmp.eq.s32.totalorder %s28, 1
      %p198 = por %p196, %p197
      %p200 = scmp.ne.s32.totalorder %s185, %s199
      %p201 = scmp.eq.s32.totalorder %s28, 0
      %p202 = por %p200, %p201
      %s204 = sadd.s32 %s203, 1
      %p207 = scmp.eq.s32.totalorder %s22, 1
      %p208 = scmp.ne.s32.totalorder %s203, %s205
      %p209 = scmp.eq.s32.totalorder %s22, 0
      %p210 = por %p208, %p209
      %p211 = scmp.ne.s32.totalorder %s203, %s205
      %p212 = scmp.eq.s32.totalorder %s27, 1
      %p213 = por %p211, %p212
      %p214 = scmp.ne.s32.totalorder %s205, %s206
      %p215 = scmp.eq.s32.totalorder %s27, 0
      %p216 = por %p214, %p215
      %p217 = scmp.ne.s32.totalorder %s205, %s206
      %p218 = scmp.eq.s32.totalorder %s28, 1
      %p219 = por %p217, %p218
      %p221 = scmp.ne.s32.totalorder %s206, %s220
      %p222 = scmp.eq.s32.totalorder %s28, 0
      %p223 = por %p221, %p222
      %s225 = sadd.s32 %s224, 1
      %p228 = scmp.eq.s32.totalorder %s22, 1
      %p229 = scmp.ne.s32.totalorder %s224, %s226
      %p230 = scmp.eq.s32.totalorder %s22, 0
      %p231 = por %p229, %p230
      %p232 = scmp.ne.s32.totalorder %s224, %s226
      %p233 = scmp.eq.s32.totalorder %s27, 1
      %p234 = por %p232, %p233
      %p235 = scmp.ne.s32.totalorder %s226, %s227
      %p236 = scmp.eq.s32.totalorder %s27, 0
      %p237 = por %p235, %p236
      %p238 = scmp.ne.s32.totalorder %s226, %s227
      %p239 = scmp.eq.s32.totalorder %s28, 1
      %p240 = por %p238, %p239
      %p242 = scmp.ne.s32.totalorder %s227, %s241
      %p243 = scmp.eq.s32.totalorder %s28, 0
      %p244 = por %p242, %p243
      %s246 = sadd.s32 %s245, 1
      %p249 = scmp.eq.s32.totalorder %s22, 1
      %p250 = scmp.ne.s32.totalorder %s245, %s247
      %p251 = scmp.eq.s32.totalorder %s22, 0
      %p252 = por %p250, %p251
      %p253 = scmp.ne.s32.totalorder %s245, %s247
      %p254 = scmp.eq.s32.totalorder %s27, 1
      %p255 = por %p253, %p254
      %p256 = scmp.ne.s32.totalorder %s247, %s248
      %p257 = scmp.eq.s32.totalorder %s27, 0
      %p258 = por %p256, %p257
      %p259 = scmp.ne.s32.totalorder %s247, %s248
      %p260 = scmp.eq.s32.totalorder %s28, 1
      %p261 = por %p259, %p260
      %p263 = scmp.ne.s32.totalorder %s248, %s262
      %p264 = scmp.eq.s32.totalorder %s28, 0
      %p265 = por %p263, %p264
      %s267 = sadd.s32 %s266, 1
      %p270 = scmp.eq.s32.totalorder %s22, 1
      %p271 = scmp.ne.s32.totalorder %s266, %s268
      %p272 = scmp.eq.s32.totalorder %s22, 0
      %p273 = por %p271, %p272
      %p274 = scmp.ne.s32.totalorder %s266, %s268
      %p275 = scmp.eq.s32.totalorder %s27, 1
      %p276 = por %p274, %p275
      %p277 = scmp.ne.s32.totalorder %s268, %s269
      %p278 = scmp.eq.s32.totalorder %s27, 0
      %p279 = por %p277, %p278
      %p280 = scmp.ne.s32.totalorder %s268, %s269
      %p281 = scmp.eq.s32.totalorder %s28, 1
      %p282 = por %p280, %p281
      %p284 = scmp.ne.s32.totalorder %s269, %s283
      %p285 = scmp.eq.s32.totalorder %s28, 0
      %p286 = por %p284, %p285
      %s288 = sadd.s32 %s287, 1
      %p291 = scmp.eq.s32.totalorder %s22, 1
      %p292 = scmp.ne.s32.totalorder %s287, %s289
      %p293 = scmp.eq.s32.totalorder %s22, 0
      %p294 = por %p292, %p293
      %p295 = scmp.ne.s32.totalorder %s287, %s289
      %p296 = scmp.eq.s32.totalorder %s27, 1
      %p297 = por %p295, %p296
      %p298 = scmp.ne.s32.totalorder %s289, %s290
      %p299 = scmp.eq.s32.totalorder %s27, 0
      %p300 = por %p298, %p299
      %p301 = scmp.ne.s32.totalorder %s289, %s290
      %p302 = scmp.eq.s32.totalorder %s28, 1
      %p303 = por %p301, %p302
      %p305 = scmp.ne.s32.totalorder %s290, %s304
      %p306 = scmp.eq.s32.totalorder %s28, 0
      %p307 = por %p305, %p306
      %s308 = ssub.s32 %s22, %s29
      %p309 = scmp.eq.s32.totalorder %s308, 0
      %s311 = sadd.s32 %s310, 1
      %s312 = scalar_select %p309, %s310, %s311
      %p315 = pneg %p309
      %p316 = scmp.eq.s32.totalorder %s22, 1
      %p317 = por %p315, %p316
      %p318 = scmp.ne.s32.totalorder %s310, %s313
      %p319 = scmp.eq.s32.totalorder %s22, 0
      %p320 = por %p318, %p319
      %p321 = scmp.ne.s32.totalorder %s310, %s313
      %p322 = scmp.eq.s32.totalorder %s27, 1
      %p323 = por %p321, %p322
      %p324 = scmp.ne.s32.totalorder %s313, %s314
      %p325 = scmp.eq.s32.totalorder %s27, 0
      %p326 = por %p324, %p325
      %p327 = scmp.ne.s32.totalorder %s313, %s314
      %p328 = scmp.eq.s32.totalorder %s28, 1
      %p329 = por %p327, %p328
      %p331 = scmp.ne.s32.totalorder %s314, %s330
      %p332 = scmp.eq.s32.totalorder %s28, 0
      %p333 = por %p331, %p332
      %p334 = scmp.le.s32.totalorder 1, %s22
      %p335 = scmp.lt.s32.totalorder %s22, 3
      %p336 = pnand %p334, %p335
      %p337 = pneg %p336
      // Predicated region
      $region9: #{_lambda_.1} parent=5 // pred_check
        _
      $region10: #{_lambda_.1} parent=5 // pred_check_branch
        %339 = sbr.rel (%p336) target = $region12
      $region11: #{_lambda_.1} parent=5 // pred_region
        %s340 = ssub.s32 %s22, 1
        // Predicated region
        $region13: #{_lambda_.1} parent=11 // pred_check
          %p341 = pneg %p69
        $region14: #{_lambda_.1} parent=11 // pred_check_branch
          %343 = sbr.rel (%p341) target = $region16
        $region15: #{_lambda_.1} parent=11 // pred_region
          _
        $region16: #{_lambda_.1} parent=11 // pred_fallthru
          _
        // Predicated region
        $region17: #{_lambda_.1} parent=11 // pred_check
          %p344 = pneg %p90
        $region18: #{_lambda_.1} parent=11 // pred_check_branch
          %346 = sbr.rel (%p344) target = $region20
        $region19: #{_lambda_.1} parent=11 // pred_region
          _
        $region20: #{_lambda_.1} parent=11 // pred_fallthru
          _
        // Predicated region
        $region21: #{_lambda_.1} parent=11 // pred_check
          %p347 = pneg %p111
        $region22: #{_lambda_.1} parent=11 // pred_check_branch
          %349 = sbr.rel (%p347) target = $region24
        $region23: #{_lambda_.1} parent=11 // pred_region
          _
        $region24: #{_lambda_.1} parent=11 // pred_fallthru
          _
        // Predicated region
        $region25: #{_lambda_.1} parent=11 // pred_check
          %p350 = pneg %p132
        $region26: #{_lambda_.1} parent=11 // pred_check_branch
          %352 = sbr.rel (%p350) target = $region28
        $region27: #{_lambda_.1} parent=11 // pred_region
          _
        $region28: #{_lambda_.1} parent=11 // pred_fallthru
          _
        // Predicated region
        $region29: #{_lambda_.1} parent=11 // pred_check
          %p353 = pneg %p153
        $region30: #{_lambda_.1} parent=11 // pred_check_branch
          %355 = sbr.rel (%p353) target = $region32
        $region31: #{_lambda_.1} parent=11 // pred_region
          _
        $region32: #{_lambda_.1} parent=11 // pred_fallthru
          _
        // Predicated region
        $region33: #{_lambda_.1} parent=11 // pred_check
          %p356 = pneg %p174
        $region34: #{_lambda_.1} parent=11 // pred_check_branch
          %358 = sbr.rel (%p356) target = $region36
        $region35: #{_lambda_.1} parent=11 // pred_region
          _
        $region36: #{_lambda_.1} parent=11 // pred_fallthru
          _
        // Predicated region
        $region37: #{_lambda_.1} parent=11 // pred_check
          %p359 = pneg %p195
        $region38: #{_lambda_.1} parent=11 // pred_check_branch
          %361 = sbr.rel (%p359) target = $region40
        $region39: #{_lambda_.1} parent=11 // pred_region
          _
        $region40: #{_lambda_.1} parent=11 // pred_fallthru
          _
        // Predicated region
        $region41: #{_lambda_.1} parent=11 // pred_check
          %p362 = pneg %p216
        $region42: #{_lambda_.1} parent=11 // pred_check_branch
          %364 = sbr.rel (%p362) target = $region44
        $region43: #{_lambda_.1} parent=11 // pred_region
          _
        $region44: #{_lambda_.1} parent=11 // pred_fallthru
          _
        // Predicated region
        $region45: #{_lambda_.1} parent=11 // pred_check
          %p365 = pneg %p237
        $region46: #{_lambda_.1} parent=11 // pred_check_branch
          %367 = sbr.rel (%p365) target = $region48
        $region47: #{_lambda_.1} parent=11 // pred_region
          _
        $region48: #{_lambda_.1} parent=11 // pred_fallthru
          _
        // Predicated region
        $region49: #{_lambda_.1} parent=11 // pred_check
          %p368 = pneg %p258
        $region50: #{_lambda_.1} parent=11 // pred_check_branch
          %370 = sbr.rel (%p368) target = $region52
        $region51: #{_lambda_.1} parent=11 // pred_region
          _
        $region52: #{_lambda_.1} parent=11 // pred_fallthru
          _
        // Predicated region
        $region53: #{_lambda_.1} parent=11 // pred_check
          %p371 = pneg %p279
        $region54: #{_lambda_.1} parent=11 // pred_check_branch
          %373 = sbr.rel (%p371) target = $region56
        $region55: #{_lambda_.1} parent=11 // pred_region
          _
        $region56: #{_lambda_.1} parent=11 // pred_fallthru
          _
        // Predicated region
        $region57: #{_lambda_.1} parent=11 // pred_check
          %p374 = pneg %p300
        $region58: #{_lambda_.1} parent=11 // pred_check_branch
          %376 = sbr.rel (%p374) target = $region60
        $region59: #{_lambda_.1} parent=11 // pred_region
          _
        $region60: #{_lambda_.1} parent=11 // pred_fallthru
          _
      $region12: #{_lambda_.1} parent=5 // pred_fallthru
        _
      %p377 = scmp.lt.s32.totalorder %s22, 2
      // Predicated region
      $region61: #{_lambda_.1} parent=5 // pred_check
        %p378 = pneg %p377
      $region62: #{_lambda_.1} parent=5 // pred_check_branch
        %380 = sbr.rel (%p378) target = $region64
      $region63: #{_lambda_.1} parent=5 // pred_region
        // Predicated region
        $region65: #{_lambda_.1} parent=63 // pred_check
          %p381 = pneg %p42
        $region66: #{_lambda_.1} parent=63 // pred_check_branch
          %383 = sbr.rel (%p381) target = $region68
        $region67: #{_lambda_.1} parent=63 // pred_region
          %p384 = scmp.lt.s32.totalorder %s22, 1
          %s385 = scalar_select %p384, %s22, 1
          %s386 = smul.addr %s385, 2
          %s387 = smul.addr %s386, 8
          %s388 = scalar_lea.vmem %s0, %s387
        $region68: #{_lambda_.1} parent=63 // pred_fallthru
          _
      $region64: #{_lambda_.1} parent=5 // pred_fallthru
        _
      %p389 = scmp.le.s32.totalorder 1, %s22
      %p390 = scmp.lt.s32.totalorder %s22, 3
      %p391 = pnand %p389, %p390
      %p392 = pneg %p391
      // Predicated region
      $region69: #{_lambda_.1} parent=5 // pred_check
        _
      $region70: #{_lambda_.1} parent=5 // pred_check_branch
        %394 = sbr.rel (%p391) target = $region72
      $region71: #{_lambda_.1} parent=5 // pred_region
        %s395 = ssub.s32 %s22, 1
        %p396 = scmp.lt.s32.totalorder %s27, 1
        %s397 = scalar_select %p396, %s27, 1
        %s398 = smul.addr %s397, 2
        %s399 = smul.addr %s398, 8
        %s400 = scalar_lea.vmem %s0, %s399
        %p401 = pneg %p48
        %p402 = pneg %p45
        %p403 = pneg %p69
        %p404 = pneg %p66
        %p405 = pneg %p90
        %p406 = pneg %p87
        %p407 = pneg %p111
        %p408 = pneg %p108
        %p409 = pneg %p132
        %p410 = pneg %p129
        %p411 = pneg %p153
        %p412 = pneg %p150
        %p413 = pneg %p174
        %p414 = pneg %p171
        %p415 = pneg %p195
        %p416 = pneg %p192
        %p417 = pneg %p216
        %p418 = pneg %p213
        %p419 = pneg %p237
        %p420 = pneg %p234
        %p421 = pneg %p258
        %p422 = pneg %p255
        %p423 = pneg %p279
        %p424 = pneg %p276
        %p425 = pneg %p300
        %p426 = pneg %p297
        %p427 = pneg %p326
        %p428 = pneg %p323
        %s429 = sand.u32 %s313, 1
        %s430 = scalar_lea.sflag [#allocation5], %s429
        %s431 = sand.u32 %s313, 1
        %s432 = smul.addr %s431, 16
        %s433 = scalar_lea.vmem [#allocation4], %s432
        %p434 = scmp.lt.s32.totalorder %s27, 1
        %s435 = scalar_select %p434, %s27, 1
        %s436 = smul.addr %s435, 2
        %s437 = smul.addr %s436, 8
        %s438 = scalar_lea.vmem %s0, %s437
        %v440 = vld [vmem:[%s438] sm:$0xff]
        %v441 = vld [vmem:[%s438 + $0x8] sm:$0xff]
        %v442 = vpack.c.bf16 %v441, %v440
        %v443 = vld [vmem:[%s1] sm:$0xff]
        %v444 = vld [vmem:[%s1 + $0x8] sm:$0xf]
        %v445 = vld [vmem:[%s1 + $0xc] sm:$0xff]
        %v446 = vld [vmem:[%s1 + $0x14] sm:$0xf]
        %v447 = vld [vmem:[%s1 + $0x18] sm:$0xff]
        %v448 = vld [vmem:[%s1 + $0x20] sm:$0xf]
        %v449 = vld [vmem:[%s1 + $0x24] sm:$0xff]
        %v450 = vld [vmem:[%s1 + $0x2c] sm:$0xf]
        %v451 = vld [vmem:[%s1 + $0x30] sm:$0xff]
        %v452 = vld [vmem:[%s1 + $0x38] sm:$0xf]
        %v453 = vld [vmem:[%s1 + $0x3c] sm:$0xff]
        %v454 = vld [vmem:[%s1 + $0x44] sm:$0xf]
        %v455 = vld [vmem:[%s1 + $0x48] sm:$0xff]
        %v456 = vld [vmem:[%s1 + $0x50] sm:$0xf]
        %v457 = vld [vmem:[%s1 + $0x54] sm:$0xff]
        %v458 = vld [vmem:[%s1 + $0x5c] sm:$0xf]
        %v459 = vld [vmem:[%s1 + $0x60] sm:$0xff]
        %v460 = vld [vmem:[%s1 + $0x68] sm:$0xf]
        %v461 = vld [vmem:[%s1 + $0x6c] sm:$0xff]
        %v462 = vld [vmem:[%s1 + $0x74] sm:$0xf]
        %v463 = vld [vmem:[%s1 + $0x78] sm:$0xff]
        %v464 = vld [vmem:[%s1 + $0x80] sm:$0xf]
        %v465 = vld [vmem:[%s1 + $0x84] sm:$0xff]
        %v466 = vld [vmem:[%s1 + $0x8c] sm:$0xf]
        %v467 = vld [vmem:[%s1 + $0x90] sm:$0xff]
        %v468 = vld [vmem:[%s1 + $0x98] sm:$0xf]
        %v469 = vld [vmem:[%s1 + $0x9c] sm:$0xff]
        %v470 = vld [vmem:[%s1 + $0xa4] sm:$0xf]
        %v471 = vld [vmem:[%s1 + $0xa8] sm:$0xff]
        %v472 = vld [vmem:[%s1 + $0xb0] sm:$0xf]
        %v473 = vld [vmem:[%s1 + $0xb4] sm:$0xff]
        %v474 = vld [vmem:[%s1 + $0xbc] sm:$0xf]
        %v475 = vld [vmem:[%s2] sm:$0x7]
        %v477 = vlaneseq
        %v478 = vshrl.u32 %v477, 7
        %v479 = vsub.s32 0, %v478
        %v480 = vrot.slane %v475, %v479
        %v481 = vlaneseq
        %v482 = vshrl.u32 %v481, 7
        %v483 = vsub.s32 1, %v482
        %v484 = vrot.slane %v475, %v483
        %v485 = vlaneseq
        %v486 = vshrl.u32 %v485, 7
        %v487 = vsub.s32 2, %v486
        %v488 = vrot.slane %v475, %v487
        %v524 = vunpack.c.l.b16 %v443
        %v525 = vunpack.c.h.b16 %v443
        %v526 = vunpack.c.l.b16 %v444
        %v527 = vunpack.c.l.b16 %v445
        %v528 = vunpack.c.h.b16 %v445
        %v529 = vunpack.c.l.b16 %v446
        %v530 = vunpack.c.l.b16 %v447
        %v531 = vunpack.c.h.b16 %v447
        %v532 = vunpack.c.l.b16 %v448
        %v533 = vunpack.c.l.b16 %v449
        %v534 = vunpack.c.h.b16 %v449
        %v535 = vunpack.c.l.b16 %v450
        %v536 = vunpack.c.l.b16 %v451
        %v537 = vunpack.c.h.b16 %v451
        %v538 = vunpack.c.l.b16 %v452
        %v539 = vunpack.c.l.b16 %v453
        %v540 = vunpack.c.h.b16 %v453
        %v541 = vunpack.c.l.b16 %v454
        %v542 = vunpack.c.l.b16 %v455
        %v543 = vunpack.c.h.b16 %v455
        %v544 = vunpack.c.l.b16 %v456
        %v545 = vunpack.c.l.b16 %v457
        %v546 = vunpack.c.h.b16 %v457
        %v547 = vunpack.c.l.b16 %v458
        %v548 = vunpack.c.l.b16 %v459
        %v549 = vunpack.c.h.b16 %v459
        %v550 = vunpack.c.l.b16 %v460
        %v551 = vunpack.c.l.b16 %v461
        %v552 = vunpack.c.h.b16 %v461
        %v553 = vunpack.c.l.b16 %v462
        %v554 = vunpack.c.l.b16 %v463
        %v555 = vunpack.c.h.b16 %v463
        %v556 = vunpack.c.l.b16 %v464
        %v557 = vunpack.c.l.b16 %v465
        %v558 = vunpack.c.h.b16 %v465
        %v559 = vunpack.c.l.b16 %v466
        %v560 = vunpack.c.l.b16 %v467
        %v561 = vunpack.c.h.b16 %v467
        %v562 = vunpack.c.l.b16 %v468
        %v563 = vunpack.c.l.b16 %v469
        %v564 = vunpack.c.h.b16 %v469
        %v565 = vunpack.c.l.b16 %v470
        %v566 = vunpack.c.l.b16 %v471
        %v567 = vunpack.c.h.b16 %v471
        %v568 = vunpack.c.l.b16 %v472
        %v569 = vunpack.c.l.b16 %v473
        %v570 = vunpack.c.h.b16 %v473
        %v571 = vunpack.c.l.b16 %v474
        %v572 = vpack.c.b16 %v527, %v524
        %v573 = vpack.c.b16 %v528, %v525
        %v574 = vpack.c.b16 %v529, %v526
        %v575 = vpack.c.b16 %v533, %v530
        %v576 = vpack.c.b16 %v534, %v531
        %v577 = vpack.c.b16 %v535, %v532
        %v578 = vpack.c.b16 %v539, %v536
        %v579 = vpack.c.b16 %v540, %v537
        %v580 = vpack.c.b16 %v541, %v538
        %v581 = vpack.c.b16 %v545, %v542
        %v582 = vpack.c.b16 %v546, %v543
        %v583 = vpack.c.b16 %v547, %v544
        %v584 = vpack.c.b16 %v551, %v548
        %v585 = vpack.c.b16 %v552, %v549
        %v586 = vpack.c.b16 %v553, %v550
        %v587 = vpack.c.b16 %v557, %v554
        %v588 = vpack.c.b16 %v558, %v555
        %v589 = vpack.c.b16 %v559, %v556
        %v590 = vpack.c.b16 %v563, %v560
        %v591 = vpack.c.b16 %v564, %v561
        %v592 = vpack.c.b16 %v565, %v562
        %v593 = vpack.c.b16 %v569, %v566
        %v594 = vpack.c.b16 %v570, %v567
        %v595 = vpack.c.b16 %v571, %v568
        %620 = vmatprep.subr.bf16.mxu0 %v573
        %621 = vmatpush1.bf16.msra.mxu0 %v572
        %622 = vmatprep.subr.bf16.mxu0 %v576
        %623 = vmatpush1.bf16.msra.mxu0 %v575
        %624 = vmatprep.subr.bf16.mxu0 %v579
        %625 = vmatpush1.bf16.msra.mxu0 %v578
        %626 = vmatprep.subr.bf16.mxu0 %v582
        %627 = vmatpush1.bf16.msra.mxu0 %v581
        %628 = vmatprep.subr.bf16.mxu0 %v585
        %629 = vmatpush1.bf16.msra.mxu0 %v584
        %630 = vmatprep.subr.bf16.mxu0 %v588
        %631 = vmatpush1.bf16.msra.mxu0 %v587
        %632 = vmatprep.subr.bf16.mxu0 %v591
        %633 = vmatpush1.bf16.msra.mxu0 %v590
        %634 = vmatprep.subr.bf16.mxu0 %v594
        %635 = vmatpush1.bf16.msra.mxu0 %v593
        %636 = vmatprep.subr.bf16.mxu0 0
        %637 = vmatpush1.bf16.msra.mxu0 0
        %638 = vmatprep.subr.bf16.mxu0 0
        %639 = vmatpush1.bf16.msra.mxu0 0
        %640 = vmatprep.subr.bf16.mxu0 0
        %641 = vmatpush1.bf16.msra.mxu0 0
        %642 = vmatprep.subr.bf16.mxu0 0
        %643 = vmatpush1.bf16.msra.mxu0 0
        %644 = vmatprep.subr.bf16.mxu0 0
        %645 = vmatpush1.bf16.msra.mxu0 0
        %646 = vmatprep.subr.bf16.mxu0 0
        %647 = vmatpush1.bf16.msra.mxu0 0
        %648 = vmatprep.subr.bf16.mxu0 0
        %649 = vmatpush1.bf16.msra.mxu0 0
        %650 = vmatprep.subr.bf16.mxu0 0
        %651 = vmatpush1.bf16.msra.mxu0 0
        %652 = vmatprep.mubr.bf16.mxu0 0
        %653 = vmatmul.mubr.bf16.gmra.mrb[0].mxu0 %v442
        %v654 = vpop.f32.mrb[0].mxu0
        %v655 = vadd.f32 %v480, %v654
        %v656 = vpop.f32.mrb[0].mxu0
        %v657 = vadd.f32 %v484, %v656
        %v658 = vpop.f32.mrb[0].mxu0
        %v659 = vadd.f32 %v480, %v658
        %v660 = vpop.f32.mrb[0].mxu0
        %v661 = vadd.f32 %v484, %v660
        %662 = vdwg.mxu0
        %663 = vmatprep.subr.bf16.mxu0 0
        %664 = vmatpush1.bf16.msra.mxu0 %v574
        %665 = vmatprep.subr.bf16.mxu0 0
        %666 = vmatpush1.bf16.msra.mxu0 %v577
        %667 = vmatprep.subr.bf16.mxu0 0
        %668 = vmatpush1.bf16.msra.mxu0 %v580
        %669 = vmatprep.subr.bf16.mxu0 0
        %670 = vmatpush1.bf16.msra.mxu0 %v583
        %671 = vmatprep.subr.bf16.mxu0 0
        %672 = vmatpush1.bf16.msra.mxu0 %v586
        %673 = vmatprep.subr.bf16.mxu0 0
        %674 = vmatpush1.bf16.msra.mxu0 %v589
        %675 = vmatprep.subr.bf16.mxu0 0
        %676 = vmatpush1.bf16.msra.mxu0 %v592
        %677 = vmatprep.subr.bf16.mxu0 0
        %678 = vmatpush1.bf16.msra.mxu0 %v595
        %679 = vmatprep.subr.bf16.mxu0 0
        %680 = vmatpush1.bf16.msra.mxu0 0
        %681 = vmatprep.subr.bf16.mxu0 0
        %682 = vmatpush1.bf16.msra.mxu0 0
        %683 = vmatprep.subr.bf16.mxu0 0
        %684 = vmatpush1.bf16.msra.mxu0 0
        %685 = vmatprep.subr.bf16.mxu0 0
        %686 = vmatpush1.bf16.msra.mxu0 0
        %687 = vmatprep.subr.bf16.mxu0 0
        %688 = vmatpush1.bf16.msra.mxu0 0
        %689 = vmatprep.subr.bf16.mxu0 0
        %690 = vmatpush1.bf16.msra.mxu0 0
        %691 = vmatprep.subr.bf16.mxu0 0
        %692 = vmatpush1.bf16.msra.mxu0 0
        %693 = vmatprep.subr.bf16.mxu0 0
        %694 = vmatpush1.bf16.msra.mxu0 0
        %695 = vmatprep.mubr.bf16.mxu0 0
        %696 = vmatmul.mubr.bf16.gmra.mrb[0].mxu0 %v442
        %v697 = vpop.f32.mrb[0].mxu0
        %v698 = vadd.f32 %v488, %v697
        %v699 = vpop.f32.mrb[0].mxu0
        %v700 = vpop.f32.mrb[0].mxu0
        %v701 = vadd.f32 %v488, %v700
        %v702 = vpop.f32.mrb[0].mxu0
        %703 = vdwg.mxu0
        %v704 = vpack.c.bf16 %v659, %v655
        %v705 = vpack.c.bf16 %v661, %v657
        %706 = vmatprep.subr.bf16.mxu0 0
        %707 = vmatpush1.bf16.xpose.msra.mxu0 %v705
        %708 = vmatprep.subr.bf16.mxu0 0
        %709 = vmatpush1.bf16.xpose.msra.mxu0 0
        %710 = vmatprep.subr.bf16.mxu0 0
        %711 = vmatpush1.bf16.xpose.msra.mxu0 0
        %712 = vmatprep.subr.bf16.mxu0 0
        %713 = vmatpush1.bf16.xpose.msra.mxu0 0
        %714 = vmatprep.subr.bf16.mxu0 0
        %715 = vmatpush1.bf16.xpose.msra.mxu0 0
        %716 = vmatprep.subr.bf16.mxu0 0
        %717 = vmatpush1.bf16.xpose.msra.mxu0 0
        %718 = vmatprep.subr.bf16.mxu0 0
        %719 = vmatpush1.bf16.xpose.msra.mxu0 0
        %720 = vmatprep.subr.bf16.mxu0 0
        %721 = vmatpush1.bf16.xpose.msra.mxu0 0
        %722 = vmatprep.subr.bf16.mxu0 0
        %723 = vmatpush1.bf16.xpose.msra.mxu0 0
        %724 = vmatprep.subr.bf16.mxu0 0
        %725 = vmatpush1.bf16.xpose.msra.mxu0 0
        %726 = vmatprep.subr.bf16.mxu0 0
        %727 = vmatpush1.bf16.xpose.msra.mxu0 0
        %728 = vmatprep.subr.bf16.mxu0 0
        %729 = vmatpush1.bf16.xpose.msra.mxu0 0
        %730 = vmatprep.subr.bf16.mxu0 0
        %731 = vmatpush1.bf16.xpose.msra.mxu0 0
        %732 = vmatprep.subr.bf16.mxu0 0
        %733 = vmatpush1.bf16.xpose.msra.mxu0 0
        %734 = vmatprep.subr.bf16.mxu0 0
        %735 = vmatpush1.bf16.xpose.msra.mxu0 0
        %736 = vmatprep.subr.bf16.mxu0 0
        %737 = vmatpush1.bf16.xpose.msra.mxu0 0
        %738 = vmatprep.mubr.bf16.mxu0 0
        %739 = vmatmul.mubr.bf16.gmra.mrb[0].mxu0 %v704
        %v740 = vpop.f32.mrb[0].mxu0
        %v741 = vadd.f32 0.0, %v740
        %v742 = vpop.f32.mrb[0].mxu0
        %v743 = vpop.f32.mrb[0].mxu0
        %v744 = vadd.f32 0.0, %v743
        %v745 = vpop.f32.mrb[0].mxu0
        %746 = vdwg.mxu0
        %vm747 = vcmask 130048
        %v748 = vsel %vm747, %v741, -inf
        %749 = vmax.xlane.f32.xlu0 %v748
        %v750 = vpop.xlane.xlu0 %749
        %v751 = vsel %vm747, %v744, -inf
        %752 = vmax.xlane.f32.xlu0 %v751
        %v753 = vpop.xlane.xlu0 %752
        %v754 = vsub.f32 %v741, %v750
        %v755 = vsub.f32 %v744, %v753
        %v756 = vmul.f32 %v754, 1.442695
        %v757 = vpow.pop %v756
        %v758 = vmul.f32 %v755, 1.442695
        %v759 = vpow.pop %v758
        %v760 = vsel %vm747, %v757, 0.0
        %761 = vadd.xlane.f32.xlu0 %v760
        %v762 = vpop.xlane.xlu0 %761
        %v763 = vsel %vm747, %v759, 0.0
        %764 = vadd.xlane.f32.xlu0 %v763
        %v765 = vpop.xlane.xlu0 %764
        %v766 = vrcp.pop %v762
        %v767 = vrcp.pop %v765
        %v768 = vmul.f32 %v757, %v766
        %v769 = vmul.f32 %v759, %v767
        %v770 = vpack.c.bf16 %v701, %v698
        %v771 = vpack.c.bf16 %v769, %v768
        %772 = vxpose.xlu0.c.b16.start [1/8] %v770, 128
        %773 = vxpose.xlu0.c.b16.cont [2/8] 0, 128
        %774 = vxpose.xlu0.c.b16.cont [3/8] 0, 128
        %775 = vxpose.xlu0.c.b16.cont [4/8] 0, 128
        %776 = vxpose.xlu0.c.b16.cont [5/8] 0, 128
        %777 = vxpose.xlu0.c.b16.cont [6/8] 0, 128
        %778 = vxpose.xlu0.c.b16.cont [7/8] 0, 128
        %779 = vxpose.xlu0.c.b16.end [8/8] 0, 128
        %v780 = vpop.trf.xlu0
        %v781 = vpop.trf.xlu0
        %v782 = vpop.trf.xlu0
        %v783 = vpop.trf.xlu0
        %v784 = vpop.trf.xlu0
        %v785 = vpop.trf.xlu0
        %v786 = vpop.trf.xlu0
        %v787 = vpop.trf.xlu0
        %v789 = vsel %vm747, %v780, 0
        %v792 = vsel %vm747, %v781, 0
        %v795 = vsel %vm747, %v782, 0
        %v798 = vsel %vm747, %v783, 0
        %v801 = vsel %vm747, %v784, 0
        %v804 = vsel %vm747, %v785, 0
        %v807 = vsel %vm747, %v786, 0
        %v810 = vsel %vm747, %v787, 0
        %v813 = vsel %vm747, %v771, 0
        %815 = vmatprep.subr.bf16.mxu0 0
        %816 = vmatpush1.bf16.xpose.msra.mxu0 %v813
        %817 = vmatprep.subr.bf16.mxu0 0
        %818 = vmatpush1.bf16.xpose.msra.mxu0 0
        %819 = vmatprep.subr.bf16.mxu0 0
        %820 = vmatpush1.bf16.xpose.msra.mxu0 0
        %821 = vmatprep.subr.bf16.mxu0 0
        %822 = vmatpush1.bf16.xpose.msra.mxu0 0
        %823 = vmatprep.subr.bf16.mxu0 0
        %824 = vmatpush1.bf16.xpose.msra.mxu0 0
        %825 = vmatprep.subr.bf16.mxu0 0
        %826 = vmatpush1.bf16.xpose.msra.mxu0 0
        %827 = vmatprep.subr.bf16.mxu0 0
        %828 = vmatpush1.bf16.xpose.msra.mxu0 0
        %829 = vmatprep.subr.bf16.mxu0 0
        %830 = vmatpush1.bf16.xpose.msra.mxu0 0
        %831 = vmatprep.subr.bf16.mxu0 0
        %832 = vmatpush1.bf16.xpose.msra.mxu0 0
        %833 = vmatprep.subr.bf16.mxu0 0
        %834 = vmatpush1.bf16.xpose.msra.mxu0 0
        %835 = vmatprep.subr.bf16.mxu0 0
        %836 = vmatpush1.bf16.xpose.msra.mxu0 0
        %837 = vmatprep.subr.bf16.mxu0 0
        %838 = vmatpush1.bf16.xpose.msra.mxu0 0
        %839 = vmatprep.subr.bf16.mxu0 0
        %840 = vmatpush1.bf16.xpose.msra.mxu0 0
        %841 = vmatprep.subr.bf16.mxu0 0
        %842 = vmatpush1.bf16.xpose.msra.mxu0 0
        %843 = vmatprep.subr.bf16.mxu0 0
        %844 = vmatpush1.bf16.xpose.msra.mxu0 0
        %845 = vmatprep.subr.bf16.mxu0 0
        %846 = vmatpush1.bf16.xpose.msra.mxu0 0
        %847 = vmatprep.mubr.bf16.mxu0 0
        %848 = vmatmul.mubr.bf16.gmra.mrb[0].mxu0 %v789
        %v849 = vpop.f32.mrb[0].mxu0
        %v850 = vadd.f32 0.0, %v849
        %v851 = vpop.f32.mrb[0].mxu0
        %v852 = vpop.f32.mrb[0].mxu0
        %v853 = vadd.f32 0.0, %v852
        %v854 = vpop.f32.mrb[0].mxu0
        %855 = vmatprep.mubr.bf16.mxu0 0
        %856 = vmatmul.mubr.bf16.gmra.mrb[0].mxu0 %v792
        %v857 = vpop.f32.mrb[0].mxu0
        %v858 = vadd.f32 0.0, %v857
        %v859 = vpop.f32.mrb[0].mxu0
        %v860 = vpop.f32.mrb[0].mxu0
        %v861 = vadd.f32 0.0, %v860
        %v862 = vpop.f32.mrb[0].mxu0
        %863 = vmatprep.mubr.bf16.mxu0 0
        %864 = vmatmul.mubr.bf16.gmra.mrb[0].mxu0 %v795
        %v865 = vpop.f32.mrb[0].mxu0
        %v866 = vadd.f32 0.0, %v865
        %v867 = vpop.f32.mrb[0].mxu0
        %v868 = vpop.f32.mrb[0].mxu0
        %v869 = vadd.f32 0.0, %v868
        %v870 = vpop.f32.mrb[0].mxu0
        %871 = vmatprep.mubr.bf16.mxu0 0
        %872 = vmatmul.mubr.bf16.gmra.mrb[0].mxu0 %v798
        %v873 = vpop.f32.mrb[0].mxu0
        %v874 = vadd.f32 0.0, %v873
        %v875 = vpop.f32.mrb[0].mxu0
        %v876 = vpop.f32.mrb[0].mxu0
        %v877 = vadd.f32 0.0, %v876
        %v878 = vpop.f32.mrb[0].mxu0
        %879 = vmatprep.mubr.bf16.mxu0 0
        %880 = vmatmul.mubr.bf16.gmra.mrb[0].mxu0 %v801
        %v881 = vpop.f32.mrb[0].mxu0
        %v882 = vadd.f32 0.0, %v881
        %v883 = vpop.f32.mrb[0].mxu0
        %v884 = vpop.f32.mrb[0].mxu0
        %v885 = vadd.f32 0.0, %v884
        %v886 = vpop.f32.mrb[0].mxu0
        %887 = vmatprep.mubr.bf16.mxu0 0
        %888 = vmatmul.mubr.bf16.gmra.mrb[0].mxu0 %v804
        %v889 = vpop.f32.mrb[0].mxu0
        %v890 = vadd.f32 0.0, %v889
        %v891 = vpop.f32.mrb[0].mxu0
        %v892 = vpop.f32.mrb[0].mxu0
        %v893 = vadd.f32 0.0, %v892
        %v894 = vpop.f32.mrb[0].mxu0
        %895 = vmatprep.mubr.bf16.mxu0 0
        %896 = vmatmul.mubr.bf16.gmra.mrb[0].mxu0 %v807
        %v897 = vpop.f32.mrb[0].mxu0
        %v898 = vadd.f32 0.0, %v897
        %v899 = vpop.f32.mrb[0].mxu0
        %v900 = vpop.f32.mrb[0].mxu0
        %v901 = vadd.f32 0.0, %v900
        %v902 = vpop.f32.mrb[0].mxu0
        %903 = vmatprep.mubr.bf16.mxu0 0
        %904 = vmatmul.mubr.bf16.gmra.mrb[0].mxu0 %v810
        %v905 = vpop.f32.mrb[0].mxu0
        %v906 = vadd.f32 0.0, %v905
        %v907 = vpop.f32.mrb[0].mxu0
        %v908 = vpop.f32.mrb[0].mxu0
        %v909 = vadd.f32 0.0, %v908
        %v910 = vpop.f32.mrb[0].mxu0
        %911 = vdwg.mxu0
        %912 = vst.msk [vmem:[#allocation2] sm:$0xff] %vm747, %v850
        %913 = vst.msk [vmem:[#allocation2 + $0x8] sm:$0xff] %vm747, %v853
        %914 = vst.msk [vmem:[#allocation2 + $0x10] sm:$0xff] %vm747, %v858
        %915 = vst.msk [vmem:[#allocation2 + $0x18] sm:$0xff] %vm747, %v861
        %916 = vst.msk [vmem:[#allocation2 + $0x20] sm:$0xff] %vm747, %v866
        %917 = vst.msk [vmem:[#allocation2 + $0x28] sm:$0xff] %vm747, %v869
        %918 = vst.msk [vmem:[#allocation2 + $0x30] sm:$0xff] %vm747, %v874
        %919 = vst.msk [vmem:[#allocation2 + $0x38] sm:$0xff] %vm747, %v877
        %920 = vst.msk [vmem:[#allocation2 + $0x40] sm:$0xff] %vm747, %v882
        %921 = vst.msk [vmem:[#allocation2 + $0x48] sm:$0xff] %vm747, %v885
        %922 = vst.msk [vmem:[#allocation2 + $0x50] sm:$0xff] %vm747, %v890
        %923 = vst.msk [vmem:[#allocation2 + $0x58] sm:$0xff] %vm747, %v893
        %924 = vst.msk [vmem:[#allocation2 + $0x60] sm:$0xff] %vm747, %v898
        %925 = vst.msk [vmem:[#allocation2 + $0x68] sm:$0xff] %vm747, %v901
        %926 = vst.msk [vmem:[#allocation2 + $0x70] sm:$0xff] %vm747, %v906
        %927 = vst.msk [vmem:[#allocation2 + $0x78] sm:$0xff] %vm747, %v909
        %v928 = vld [vmem:[#allocation2] ss:$8 sm:$0xf]
        %v929 = vld [vmem:[#allocation2] ss:$8 sm:$0xf0]
        %v930 = vor.u32 %v928, %v929
        %s931 = scalar_lea.vmem [#allocation2], 64
        %v932 = vld [vmem:[%s931] ss:$8 sm:$0xf]
        %v933 = vld [vmem:[%s931] ss:$8 sm:$0xf0]
        %v934 = vor.u32 %v932, %v933
        %935 = vst.msk [vmem:[#allocation3] sm:$0xff] %vm747, %v930
        %936 = vst.msk [vmem:[#allocation3 + $0x8] sm:$0xff] %vm747, %v934
        %s937 = scalar_lea.vmem [#allocation2], 1
        %v938 = vld [vmem:[%s937] ss:$8 sm:$0xf]
        %v939 = vld [vmem:[%s937] ss:$8 sm:$0xf0]
        %v940 = vor.u32 %v938, %v939
        %s941 = scalar_lea.vmem [#allocation2], 65
        %v942 = vld [vmem:[%s941] ss:$8 sm:$0xf]
        %v943 = vld [vmem:[%s941] ss:$8 sm:$0xf0]
        %v944 = vor.u32 %v942, %v943
        %947 = vrot.lane.b32.xlu0 %v940, 16
        %v948 = vpop.permute.xlu0 %947
        %949 = vrot.lane.b32.xlu0 %v944, 16
        %v950 = vpop.permute.xlu0 %949
        %vm953 = vcmask 261248
        %954 = vst.msk [vmem:[#allocation3] sm:$0xff] %vm953, %v948
        %955 = vst.msk [vmem:[#allocation3 + $0x8] sm:$0xff] %vm953, %v950
        %s956 = scalar_lea.vmem [#allocation2], 2
        %v957 = vld [vmem:[%s956] ss:$8 sm:$0xf]
        %v958 = vld [vmem:[%s956] ss:$8 sm:$0xf0]
        %v959 = vor.u32 %v957, %v958
        %s960 = scalar_lea.vmem [#allocation2], 66
        %v961 = vld [vmem:[%s960] ss:$8 sm:$0xf]
        %v962 = vld [vmem:[%s960] ss:$8 sm:$0xf0]
        %v963 = vor.u32 %v961, %v962
        %966 = vrot.lane.b32.xlu0 %v959, 32
        %v967 = vpop.permute.xlu0 %966
        %968 = vrot.lane.b32.xlu0 %v963, 32
        %v969 = vpop.permute.xlu0 %968
        %vm972 = vcmask 392448
        %973 = vst.msk [vmem:[#allocation3] sm:$0xff] %vm972, %v967
        %974 = vst.msk [vmem:[#allocation3 + $0x8] sm:$0xff] %vm972, %v969
        %s975 = scalar_lea.vmem [#allocation2], 3
        %v976 = vld [vmem:[%s975] ss:$8 sm:$0xf]
        %v977 = vld [vmem:[%s975] ss:$8 sm:$0xf0]
        %v978 = vor.u32 %v976, %v977
        %s979 = scalar_lea.vmem [#allocation2], 67
        %v980 = vld [vmem:[%s979] ss:$8 sm:$0xf]
        %v981 = vld [vmem:[%s979] ss:$8 sm:$0xf0]
        %v982 = vor.u32 %v980, %v981
        %985 = vrot.lane.b32.xlu0 %v978, 48
        %v986 = vpop.permute.xlu0 %985
        %987 = vrot.lane.b32.xlu0 %v982, 48
        %v988 = vpop.permute.xlu0 %987
        %vm991 = vcmask 523648
        %992 = vst.msk [vmem:[#allocation3] sm:$0xff] %vm991, %v986
        %993 = vst.msk [vmem:[#allocation3 + $0x8] sm:$0xff] %vm991, %v988
        %s994 = scalar_lea.vmem [#allocation2], 4
        %v995 = vld [vmem:[%s994] ss:$8 sm:$0xf]
        %v996 = vld [vmem:[%s994] ss:$8 sm:$0xf0]
        %v997 = vor.u32 %v995, %v996
        %s998 = scalar_lea.vmem [#allocation2], 68
        %v999 = vld [vmem:[%s998] ss:$8 sm:$0xf]
        %v1000 = vld [vmem:[%s998] ss:$8 sm:$0xf0]
        %v1001 = vor.u32 %v999, %v1000
        %1004 = vrot.lane.b32.xlu0 %v997, 64
        %v1005 = vpop.permute.xlu0 %1004
        %1006 = vrot.lane.b32.xlu0 %v1001, 64
        %v1007 = vpop.permute.xlu0 %1006
        %vm1010 = vcmask 654848
        %1011 = vst.msk [vmem:[#allocation3] sm:$0xff] %vm1010, %v1005
        %1012 = vst.msk [vmem:[#allocation3 + $0x8] sm:$0xff] %vm1010, %v1007
        %s1013 = scalar_lea.vmem [#allocation2], 5
        %v1014 = vld [vmem:[%s1013] ss:$8 sm:$0xf]
        %v1015 = vld [vmem:[%s1013] ss:$8 sm:$0xf0]
        %v1016 = vor.u32 %v1014, %v1015
        %s1017 = scalar_lea.vmem [#allocation2], 69
        %v1018 = vld [vmem:[%s1017] ss:$8 sm:$0xf]
        %v1019 = vld [vmem:[%s1017] ss:$8 sm:$0xf0]
        %v1020 = vor.u32 %v1018, %v1019
        %1023 = vrot.lane.b32.xlu0 %v1016, 80
        %v1024 = vpop.permute.xlu0 %1023
        %1025 = vrot.lane.b32.xlu0 %v1020, 80
        %v1026 = vpop.permute.xlu0 %1025
        %vm1029 = vcmask 786048
        %1030 = vst.msk [vmem:[#allocation3] sm:$0xff] %vm1029, %v1024
        %1031 = vst.msk [vmem:[#allocation3 + $0x8] sm:$0xff] %vm1029, %v1026
        %s1032 = scalar_lea.vmem [#allocation2], 6
        %v1033 = vld [vmem:[%s1032] ss:$8 sm:$0xf]
        %v1034 = vld [vmem:[%s1032] ss:$8 sm:$0xf0]
        %v1035 = vor.u32 %v1033, %v1034
        %s1036 = scalar_lea.vmem [#allocation2], 70
        %v1037 = vld [vmem:[%s1036] ss:$8 sm:$0xf]
        %v1038 = vld [vmem:[%s1036] ss:$8 sm:$0xf0]
        %v1039 = vor.u32 %v1037, %v1038
        %1042 = vrot.lane.b32.xlu0 %v1035, 96
        %v1043 = vpop.permute.xlu0 %1042
        %1044 = vrot.lane.b32.xlu0 %v1039, 96
        %v1045 = vpop.permute.xlu0 %1044
        %vm1048 = vcmask 917248
        %1049 = vst.msk [vmem:[#allocation3] sm:$0xff] %vm1048, %v1043
        %1050 = vst.msk [vmem:[#allocation3 + $0x8] sm:$0xff] %vm1048, %v1045
        %s1051 = scalar_lea.vmem [#allocation2], 7
        %v1052 = vld [vmem:[%s1051] ss:$8 sm:$0xf]
        %v1053 = vld [vmem:[%s1051] ss:$8 sm:$0xf0]
        %v1054 = vor.u32 %v1052, %v1053
        %s1055 = scalar_lea.vmem [#allocation2], 71
        %v1056 = vld [vmem:[%s1055] ss:$8 sm:$0xf]
        %v1057 = vld [vmem:[%s1055] ss:$8 sm:$0xf0]
        %v1058 = vor.u32 %v1056, %v1057
        %1061 = vrot.lane.b32.xlu0 %v1054, 112
        %v1062 = vpop.permute.xlu0 %1061
        %1063 = vrot.lane.b32.xlu0 %v1058, 112
        %v1064 = vpop.permute.xlu0 %1063
        %vm1067 = vcmask 1048448
        %1068 = vst.msk [vmem:[#allocation3] sm:$0xff] %vm1067, %v1062
        %1069 = vst.msk [vmem:[#allocation3 + $0x8] sm:$0xff] %vm1067, %v1064
        %v1070 = vld [vmem:[#allocation3] sm:$0xff]
        %v1071 = vld [vmem:[#allocation3 + $0x8] sm:$0xff]
        %v1072 = vpack.c.bf16 %v1071, %v1070
        %v1073 = vld [vmem:[%s3] sm:$0xf]
        %v1074 = vld [vmem:[%s3 + $0x4] sm:$0xf]
        %v1075 = vld [vmem:[%s3 + $0x8] sm:$0xf]
        %v1076 = vld [vmem:[%s3 + $0xc] sm:$0xf]
        %v1077 = vld [vmem:[%s3 + $0x10] sm:$0xf]
        %v1078 = vld [vmem:[%s3 + $0x14] sm:$0xf]
        %v1079 = vld [vmem:[%s3 + $0x18] sm:$0xf]
        %v1080 = vld [vmem:[%s3 + $0x1c] sm:$0xf]
        %v1081 = vld [vmem:[%s3 + $0x20] sm:$0xf]
        %v1082 = vld [vmem:[%s3 + $0x24] sm:$0xf]
        %v1083 = vld [vmem:[%s3 + $0x28] sm:$0xf]
        %v1084 = vld [vmem:[%s3 + $0x2c] sm:$0xf]
        %v1085 = vld [vmem:[%s3 + $0x30] sm:$0xf]
        %v1086 = vld [vmem:[%s3 + $0x34] sm:$0xf]
        %v1087 = vld [vmem:[%s3 + $0x38] sm:$0xf]
        %v1088 = vld [vmem:[%s3 + $0x3c] sm:$0xf]
        %v1089 = vld [vmem:[%s4] sm:$0x1]
        %v1091 = vlaneseq
        %v1092 = vshrl.u32 %v1091, 7
        %v1093 = vsub.s32 0, %v1092
        %v1094 = vrot.slane %v1089, %v1093
        %v1112 = vunpack.c.l.b16 %v1073
        %v1113 = vunpack.c.l.b16 %v1074
        %v1114 = vunpack.c.l.b16 %v1075
        %v1115 = vunpack.c.l.b16 %v1076
        %v1116 = vunpack.c.l.b16 %v1077
        %v1117 = vunpack.c.l.b16 %v1078
        %v1118 = vunpack.c.l.b16 %v1079
        %v1119 = vunpack.c.l.b16 %v1080
        %v1120 = vunpack.c.l.b16 %v1081
        %v1121 = vunpack.c.l.b16 %v1082
        %v1122 = vunpack.c.l.b16 %v1083
        %v1123 = vunpack.c.l.b16 %v1084
        %v1124 = vunpack.c.l.b16 %v1085
        %v1125 = vunpack.c.l.b16 %v1086
        %v1126 = vunpack.c.l.b16 %v1087
        %v1127 = vunpack.c.l.b16 %v1088
        %v1128 = vpack.c.b16 %v1113, %v1112
        %v1129 = vpack.c.b16 %v1115, %v1114
        %v1130 = vpack.c.b16 %v1117, %v1116
        %v1131 = vpack.c.b16 %v1119, %v1118
        %v1132 = vpack.c.b16 %v1121, %v1120
        %v1133 = vpack.c.b16 %v1123, %v1122
        %v1134 = vpack.c.b16 %v1125, %v1124
        %v1135 = vpack.c.b16 %v1127, %v1126
        %1144 = vmatprep.subr.bf16.mxu0 0
        %1145 = vmatpush1.bf16.msra.mxu0 %v1128
        %1146 = vmatprep.subr.bf16.mxu0 0
        %1147 = vmatpush1.bf16.msra.mxu0 %v1129
        %1148 = vmatprep.subr.bf16.mxu0 0
        %1149 = vmatpush1.bf16.msra.mxu0 %v1130
        %1150 = vmatprep.subr.bf16.mxu0 0
        %1151 = vmatpush1.bf16.msra.mxu0 %v1131
        %1152 = vmatprep.subr.bf16.mxu0 0
        %1153 = vmatpush1.bf16.msra.mxu0 %v1132
        %1154 = vmatprep.subr.bf16.mxu0 0
        %1155 = vmatpush1.bf16.msra.mxu0 %v1133
        %1156 = vmatprep.subr.bf16.mxu0 0
        %1157 = vmatpush1.bf16.msra.mxu0 %v1134
        %1158 = vmatprep.subr.bf16.mxu0 0
        %1159 = vmatpush1.bf16.msra.mxu0 %v1135
        %1160 = vmatprep.subr.bf16.mxu0 0
        %1161 = vmatpush1.bf16.msra.mxu0 0
        %1162 = vmatprep.subr.bf16.mxu0 0
        %1163 = vmatpush1.bf16.msra.mxu0 0
        %1164 = vmatprep.subr.bf16.mxu0 0
        %1165 = vmatpush1.bf16.msra.mxu0 0
        %1166 = vmatprep.subr.bf16.mxu0 0
        %1167 = vmatpush1.bf16.msra.mxu0 0
        %1168 = vmatprep.subr.bf16.mxu0 0
        %1169 = vmatpush1.bf16.msra.mxu0 0
        %1170 = vmatprep.subr.bf16.mxu0 0
        %1171 = vmatpush1.bf16.msra.mxu0 0
        %1172 = vmatprep.subr.bf16.mxu0 0
        %1173 = vmatpush1.bf16.msra.mxu0 0
        %1174 = vmatprep.subr.bf16.mxu0 0
        %1175 = vmatpush1.bf16.msra.mxu0 0
        %1176 = vmatprep.mubr.bf16.mxu0 0
        %1177 = vmatmul.mubr.bf16.gmra.mrb[0].mxu0 %v1072
        %v1178 = vpop.f32.mrb[0].mxu0
        %v1179 = vadd.f32 %v1094, %v1178
        %v1180 = vpop.f32.mrb[0].mxu0
        %v1181 = vpop.f32.mrb[0].mxu0
        %v1182 = vadd.f32 %v1094, %v1181
        %v1183 = vpop.f32.mrb[0].mxu0
        %1184 = vdwg.mxu0
        %v1185 = vadd.f32 %v440, %v1179
        %v1186 = vadd.f32 %v441, %v1182
        %v1187 = vld [vmem:[%s7] sm:$0x1]
        %v1188 = vld [vmem:[%s8] sm:$0x1]
        %1189 = vadd.xlane.f32.xlu0 %v1185
        %v1190 = vpop.xlane.xlu0 %1189
        %1191 = vadd.xlane.f32.xlu0 %v1186
        %v1192 = vpop.xlane.xlu0 %1191
        %v1193 = vrcp.pop 128.0
        %v1194 = vmul.f32 %v1190, %v1193
        %v1195 = vmul.f32 %v1192, %v1193
        %v1196 = vsub.f32 %v1185, %v1194
        %v1197 = vsub.f32 %v1186, %v1195
        %v1198 = vmul.f32 %v1196, %v1196
        %v1199 = vmul.f32 %v1197, %v1197
        %1200 = vadd.xlane.f32.xlu0 %v1198
        %v1201 = vpop.xlane.xlu0 %1200
        %1202 = vadd.xlane.f32.xlu0 %v1199
        %v1203 = vpop.xlane.xlu0 %1202
        %v1204 = vmul.f32 %v1201, %v1193
        %v1205 = vmul.f32 %v1203, %v1193
        %v1206 = vadd.f32 %v1204, 1e-05
        %v1207 = vadd.f32 %v1205, 1e-05
        %v1208 = vrsqrt.pop %v1206
        %v1209 = vrsqrt.pop %v1207
        %v1210 = vmul.f32 %v1196, %v1208
        %v1211 = vmul.f32 %v1197, %v1209
        %v1213 = vlaneseq
        %v1214 = vshrl.u32 %v1213, 7
        %v1215 = vsub.s32 0, %v1214
        %v1216 = vrot.slane %v1187, %v1215
        %v1218 = vmul.f32 %v1210, %v1216
        %v1219 = vmul.f32 %v1211, %v1216
        %v1221 = vlaneseq
        %v1222 = vshrl.u32 %v1221, 7
        %v1223 = vsub.s32 0, %v1222
        %v1224 = vrot.slane %v1188, %v1223
        %v1226 = vadd.f32 %v1218, %v1224
        %v1227 = vadd.f32 %v1219, %v1224
        %v1228 = vpack.c.bf16 %v1227, %v1226
        %v1229 = vld [vmem:[%s9] sm:$0xff]
        %v1230 = vld [vmem:[%s9 + $0x8] sm:$0xff]
        %v1231 = vld [vmem:[%s9 + $0x10] sm:$0xff]
        %v1232 = vld [vmem:[%s9 + $0x18] sm:$0xff]
        %v1233 = vld [vmem:[%s9 + $0x20] sm:$0xff]
        %v1234 = vld [vmem:[%s9 + $0x28] sm:$0xff]
        %v1235 = vld [vmem:[%s9 + $0x30] sm:$0xff]
        %v1236 = vld [vmem:[%s9 + $0x38] sm:$0xff]
        %v1237 = vld [vmem:[%s9 + $0x40] sm:$0xff]
        %v1238 = vld [vmem:[%s9 + $0x48] sm:$0xff]
        %v1239 = vld [vmem:[%s9 + $0x50] sm:$0xff]
        %v1240 = vld [vmem:[%s9 + $0x58] sm:$0xff]
        %v1241 = vld [vmem:[%s9 + $0x60] sm:$0xff]
        %v1242 = vld [vmem:[%s9 + $0x68] sm:$0xff]
        %v1243 = vld [vmem:[%s9 + $0x70] sm:$0xff]
        %v1244 = vld [vmem:[%s9 + $0x78] sm:$0xff]
        %v1245 = vld [vmem:[%s9 + $0x80] sm:$0xff]
        %v1246 = vld [vmem:[%s9 + $0x88] sm:$0xff]
        %v1247 = vld [vmem:[%s9 + $0x90] sm:$0xff]
        %v1248 = vld [vmem:[%s9 + $0x98] sm:$0xff]
        %v1249 = vld [vmem:[%s9 + $0xa0] sm:$0xff]
        %v1250 = vld [vmem:[%s9 + $0xa8] sm:$0xff]
        %v1251 = vld [vmem:[%s9 + $0xb0] sm:$0xff]
        %v1252 = vld [vmem:[%s9 + $0xb8] sm:$0xff]
        %v1253 = vld [vmem:[%s9 + $0xc0] sm:$0xff]
        %v1254 = vld [vmem:[%s9 + $0xc8] sm:$0xff]
        %v1255 = vld [vmem:[%s9 + $0xd0] sm:$0xff]
        %v1256 = vld [vmem:[%s9 + $0xd8] sm:$0xff]
        %v1257 = vld [vmem:[%s9 + $0xe0] sm:$0xff]
        %v1258 = vld [vmem:[%s9 + $0xe8] sm:$0xff]
        %v1259 = vld [vmem:[%s9 + $0xf0] sm:$0xff]
        %v1260 = vld [vmem:[%s9 + $0xf8] sm:$0xff]
        %v1261 = vld [vmem:[%s10] sm:$0xf]
        %v1263 = vlaneseq
        %v1264 = vshrl.u32 %v1263, 7
        %v1265 = vsub.s32 0, %v1264
        %v1266 = vrot.slane %v1261, %v1265
        %v1267 = vlaneseq
        %v1268 = vshrl.u32 %v1267, 7
        %v1269 = vsub.s32 1, %v1268
        %v1270 = vrot.slane %v1261, %v1269
        %v1271 = vlaneseq
        %v1272 = vshrl.u32 %v1271, 7
        %v1273 = vsub.s32 2, %v1272
        %v1274 = vrot.slane %v1261, %v1273
        %v1275 = vlaneseq
        %v1276 = vshrl.u32 %v1275, 7
        %v1277 = vsub.s32 3, %v1276
        %v1278 = vrot.slane %v1261, %v1277
        %v1315 = vunpack.c.l.b16 %v1229
        %v1316 = vunpack.c.h.b16 %v1229
        %v1317 = vunpack.c.l.b16 %v1230
        %v1318 = vunpack.c.h.b16 %v1230
        %v1319 = vunpack.c.l.b16 %v1231
        %v1320 = vunpack.c.h.b16 %v1231
        %v1321 = vunpack.c.l.b16 %v1232
        %v1322 = vunpack.c.h.b16 %v1232
        %v1323 = vunpack.c.l.b16 %v1233
        %v1324 = vunpack.c.h.b16 %v1233
        %v1325 = vunpack.c.l.b16 %v1234
        %v1326 = vunpack.c.h.b16 %v1234
        %v1327 = vunpack.c.l.b16 %v1235
        %v1328 = vunpack.c.h.b16 %v1235
        %v1329 = vunpack.c.l.b16 %v1236
        %v1330 = vunpack.c.h.b16 %v1236
        %v1331 = vunpack.c.l.b16 %v1237
        %v1332 = vunpack.c.h.b16 %v1237
        %v1333 = vunpack.c.l.b16 %v1238
        %v1334 = vunpack.c.h.b16 %v1238
        %v1335 = vunpack.c.l.b16 %v1239
        %v1336 = vunpack.c.h.b16 %v1239
        %v1337 = vunpack.c.l.b16 %v1240
        %v1338 = vunpack.c.h.b16 %v1240
        %v1339 = vunpack.c.l.b16 %v1241
        %v1340 = vunpack.c.h.b16 %v1241
        %v1341 = vunpack.c.l.b16 %v1242
        %v1342 = vunpack.c.h.b16 %v1242
        %v1343 = vunpack.c.l.b16 %v1243
        %v1344 = vunpack.c.h.b16 %v1243
        %v1345 = vunpack.c.l.b16 %v1244
        %v1346 = vunpack.c.h.b16 %v1244
        %v1347 = vunpack.c.l.b16 %v1245
        %v1348 = vunpack.c.h.b16 %v1245
        %v1349 = vunpack.c.l.b16 %v1246
        %v1350 = vunpack.c.h.b16 %v1246
        %v1351 = vunpack.c.l.b16 %v1247
        %v1352 = vunpack.c.h.b16 %v1247
        %v1353 = vunpack.c.l.b16 %v1248
        %v1354 = vunpack.c.h.b16 %v1248
        %v1355 = vunpack.c.l.b16 %v1249
        %v1356 = vunpack.c.h.b16 %v1249
        %v1357 = vunpack.c.l.b16 %v1250
        %v1358 = vunpack.c.h.b16 %v1250
        %v1359 = vunpack.c.l.b16 %v1251
        %v1360 = vunpack.c.h.b16 %v1251
        %v1361 = vunpack.c.l.b16 %v1252
        %v1362 = vunpack.c.h.b16 %v1252
        %v1363 = vunpack.c.l.b16 %v1253
        %v1364 = vunpack.c.h.b16 %v1253
        %v1365 = vunpack.c.l.b16 %v1254
        %v1366 = vunpack.c.h.b16 %v1254
        %v1367 = vunpack.c.l.b16 %v1255
        %v1368 = vunpack.c.h.b16 %v1255
        %v1369 = vunpack.c.l.b16 %v1256
        %v1370 = vunpack.c.h.b16 %v1256
        %v1371 = vunpack.c.l.b16 %v1257
        %v1372 = vunpack.c.h.b16 %v1257
        %v1373 = vunpack.c.l.b16 %v1258
        %v1374 = vunpack.c.h.b16 %v1258
        %v1375 = vunpack.c.l.b16 %v1259
        %v1376 = vunpack.c.h.b16 %v1259
        %v1377 = vunpack.c.l.b16 %v1260
        %v1378 = vunpack.c.h.b16 %v1260
        %v1379 = vpack.c.b16 %v1319, %v1315
        %v1380 = vpack.c.b16 %v1320, %v1316
        %v1381 = vpack.c.b16 %v1321, %v1317
        %v1382 = vpack.c.b16 %v1322, %v1318
        %v1383 = vpack.c.b16 %v1327, %v1323
        %v1384 = vpack.c.b16 %v1328, %v1324
        %v1385 = vpack.c.b16 %v1329, %v1325
        %v1386 = vpack.c.b16 %v1330, %v1326
        %v1387 = vpack.c.b16 %v1335, %v1331
        %v1388 = vpack.c.b16 %v1336, %v1332
        %v1389 = vpack.c.b16 %v1337, %v1333
        %v1390 = vpack.c.b16 %v1338, %v1334
        %v1391 = vpack.c.b16 %v1343, %v1339
        %v1392 = vpack.c.b16 %v1344, %v1340
        %v1393 = vpack.c.b16 %v1345, %v1341
        %v1394 = vpack.c.b16 %v1346, %v1342
        %v1395 = vpack.c.b16 %v1351, %v1347
        %v1396 = vpack.c.b16 %v1352, %v1348
        %v1397 = vpack.c.b16 %v1353, %v1349
        %v1398 = vpack.c.b16 %v1354, %v1350
        %v1399 = vpack.c.b16 %v1359, %v1355
        %v1400 = vpack.c.b16 %v1360, %v1356
        %v1401 = vpack.c.b16 %v1361, %v1357
        %v1402 = vpack.c.b16 %v1362, %v1358
        %v1403 = vpack.c.b16 %v1367, %v1363
        %v1404 = vpack.c.b16 %v1368, %v1364
        %v1405 = vpack.c.b16 %v1369, %v1365
        %v1406 = vpack.c.b16 %v1370, %v1366
        %v1407 = vpack.c.b16 %v1375, %v1371
        %v1408 = vpack.c.b16 %v1376, %v1372
        %v1409 = vpack.c.b16 %v1377, %v1373
        %v1410 = vpack.c.b16 %v1378, %v1374
        %1443 = vmatprep.subr.bf16.mxu0 %v1380
        %1444 = vmatpush1.bf16.msra.mxu0 %v1379
        %1445 = vmatprep.subr.bf16.mxu0 %v1384
        %1446 = vmatpush1.bf16.msra.mxu0 %v1383
        %1447 = vmatprep.subr.bf16.mxu0 %v1388
        %1448 = vmatpush1.bf16.msra.mxu0 %v1387
        %1449 = vmatprep.subr.bf16.mxu0 %v1392
        %1450 = vmatpush1.bf16.msra.mxu0 %v1391
        %1451 = vmatprep.subr.bf16.mxu0 %v1396
        %1452 = vmatpush1.bf16.msra.mxu0 %v1395
        %1453 = vmatprep.subr.bf16.mxu0 %v1400
        %1454 = vmatpush1.bf16.msra.mxu0 %v1399
        %1455 = vmatprep.subr.bf16.mxu0 %v1404
        %1456 = vmatpush1.bf16.msra.mxu0 %v1403
        %1457 = vmatprep.subr.bf16.mxu0 %v1408
        %1458 = vmatpush1.bf16.msra.mxu0 %v1407
        %1459 = vmatprep.subr.bf16.mxu0 0
        %1460 = vmatpush1.bf16.msra.mxu0 0
        %1461 = vmatprep.subr.bf16.mxu0 0
        %1462 = vmatpush1.bf16.msra.mxu0 0
        %1463 = vmatprep.subr.bf16.mxu0 0
        %1464 = vmatpush1.bf16.msra.mxu0 0
        %1465 = vmatprep.subr.bf16.mxu0 0
        %1466 = vmatpush1.bf16.msra.mxu0 0
        %1467 = vmatprep.subr.bf16.mxu0 0
        %1468 = vmatpush1.bf16.msra.mxu0 0
        %1469 = vmatprep.subr.bf16.mxu0 0
        %1470 = vmatpush1.bf16.msra.mxu0 0
        %1471 = vmatprep.subr.bf16.mxu0 0
        %1472 = vmatpush1.bf16.msra.mxu0 0
        %1473 = vmatprep.subr.bf16.mxu0 0
        %1474 = vmatpush1.bf16.msra.mxu0 0
        %1475 = vmatprep.mubr.bf16.mxu0 0
        %1476 = vmatmul.mubr.bf16.gmra.mrb[0].mxu0 %v1228
        %v1477 = vpop.f32.mrb[0].mxu0
        %v1478 = vadd.f32 %v1266, %v1477
        %v1479 = vpop.f32.mrb[0].mxu0
        %v1480 = vadd.f32 %v1270, %v1479
        %v1481 = vpop.f32.mrb[0].mxu0
        %v1482 = vadd.f32 %v1266, %v1481
        %v1483 = vpop.f32.mrb[0].mxu0
        %v1484 = vadd.f32 %v1270, %v1483
        %1485 = vdwg.mxu0
        %1486 = vmatprep.subr.bf16.mxu0 %v1382
        %1487 = vmatpush1.bf16.msra.mxu0 %v1381
        %1488 = vmatprep.subr.bf16.mxu0 %v1386
        %1489 = vmatpush1.bf16.msra.mxu0 %v1385
        %1490 = vmatprep.subr.bf16.mxu0 %v1390
        %1491 = vmatpush1.bf16.msra.mxu0 %v1389
        %1492 = vmatprep.subr.bf16.mxu0 %v1394
        %1493 = vmatpush1.bf16.msra.mxu0 %v1393
        %1494 = vmatprep.subr.bf16.mxu0 %v1398
        %1495 = vmatpush1.bf16.msra.mxu0 %v1397
        %1496 = vmatprep.subr.bf16.mxu0 %v1402
        %1497 = vmatpush1.bf16.msra.mxu0 %v1401
        %1498 = vmatprep.subr.bf16.mxu0 %v1406
        %1499 = vmatpush1.bf16.msra.mxu0 %v1405
        %1500 = vmatprep.subr.bf16.mxu0 %v1410
        %1501 = vmatpush1.bf16.msra.mxu0 %v1409
        %1502 = vmatprep.subr.bf16.mxu0 0
        %1503 = vmatpush1.bf16.msra.mxu0 0
        %1504 = vmatprep.subr.bf16.mxu0 0
        %1505 = vmatpush1.bf16.msra.mxu0 0
        %1506 = vmatprep.subr.bf16.mxu0 0
        %1507 = vmatpush1.bf16.msra.mxu0 0
        %1508 = vmatprep.subr.bf16.mxu0 0
        %1509 = vmatpush1.bf16.msra.mxu0 0
        %1510 = vmatprep.subr.bf16.mxu0 0
        %1511 = vmatpush1.bf16.msra.mxu0 0
        %1512 = vmatprep.subr.bf16.mxu0 0
        %1513 = vmatpush1.bf16.msra.mxu0 0
        %1514 = vmatprep.subr.bf16.mxu0 0
        %1515 = vmatpush1.bf16.msra.mxu0 0
        %1516 = vmatprep.subr.bf16.mxu0 0
        %1517 = vmatpush1.bf16.msra.mxu0 0
        %1518 = vmatprep.mubr.bf16.mxu0 0
        %1519 = vmatmul.mubr.bf16.gmra.mrb[0].mxu0 %v1228
        %v1520 = vpop.f32.mrb[0].mxu0
        %v1521 = vadd.f32 %v1274, %v1520
        %v1522 = vpop.f32.mrb[0].mxu0
        %v1523 = vadd.f32 %v1278, %v1522
        %v1524 = vpop.f32.mrb[0].mxu0
        %v1525 = vadd.f32 %v1274, %v1524
        %v1526 = vpop.f32.mrb[0].mxu0
        %v1527 = vadd.f32 %v1278, %v1526
        %1528 = vdwg.mxu0
        %v1529 = vmul.f32 %v1478, 0.5
        %v1530 = vmul.f32 %v1480, 0.5
        %v1531 = vmul.f32 %v1521, 0.5
        %v1532 = vmul.f32 %v1523, 0.5
        %v1533 = vmul.f32 %v1482, 0.5
        %v1534 = vmul.f32 %v1484, 0.5
        %v1535 = vmul.f32 %v1525, 0.5
        %v1536 = vmul.f32 %v1527, 0.5
        %v1537 = vmul.f32 %v1478, 0.70710677
        %v1538 = vmul.f32 %v1480, 0.70710677
        %v1539 = vmul.f32 %v1521, 0.70710677
        %v1540 = vmul.f32 %v1523, 0.70710677
        %v1541 = vmul.f32 %v1482, 0.70710677
        %v1542 = vmul.f32 %v1484, 0.70710677
        %v1543 = vmul.f32 %v1525, 0.70710677
        %v1544 = vmul.f32 %v1527, 0.70710677
        %v1545 = verf.f32.pop %v1537
        %v1546 = verf.f32.pop %v1538
        %v1547 = verf.f32.pop %v1539
        %v1548 = verf.f32.pop %v1540
        %v1549 = verf.f32.pop %v1541
        %v1550 = verf.f32.pop %v1542
        %v1551 = verf.f32.pop %v1543
        %v1552 = verf.f32.pop %v1544
        %v1553 = vadd.f32 %v1545, 1.0
        %v1554 = vadd.f32 %v1546, 1.0
        %v1555 = vadd.f32 %v1547, 1.0
        %v1556 = vadd.f32 %v1548, 1.0
        %v1557 = vadd.f32 %v1549, 1.0
        %v1558 = vadd.f32 %v1550, 1.0
        %v1559 = vadd.f32 %v1551, 1.0
        %v1560 = vadd.f32 %v1552, 1.0
        %v1561 = vmul.f32 %v1529, %v1553
        %v1562 = vmul.f32 %v1530, %v1554
        %v1563 = vmul.f32 %v1531, %v1555
        %v1564 = vmul.f32 %v1532, %v1556
        %v1565 = vmul.f32 %v1533, %v1557
        %v1566 = vmul.f32 %v1534, %v1558
        %v1567 = vmul.f32 %v1535, %v1559
        %v1568 = vmul.f32 %v1536, %v1560
        %v1569 = vpack.c.bf16 %v1565, %v1561
        %v1570 = vpack.c.bf16 %v1566, %v1562
        %v1571 = vpack.c.bf16 %v1567, %v1563
        %v1572 = vpack.c.bf16 %v1568, %v1564
        %v1573 = vld [vmem:[%s11] sm:$0xf]
        %v1574 = vld [vmem:[%s11 + $0x4] sm:$0xf]
        %v1575 = vld [vmem:[%s11 + $0x8] sm:$0xf]
        %v1576 = vld [vmem:[%s11 + $0xc] sm:$0xf]
        %v1577 = vld [vmem:[%s11 + $0x10] sm:$0xf]
        %v1578 = vld [vmem:[%s11 + $0x14] sm:$0xf]
        %v1579 = vld [vmem:[%s11 + $0x18] sm:$0xf]
        %v1580 = vld [vmem:[%s11 + $0x1c] sm:$0xf]
        %v1581 = vld [vmem:[%s11 + $0x20] sm:$0xf]
        %v1582 = vld [vmem:[%s11 + $0x24] sm:$0xf]
        %v1583 = vld [vmem:[%s11 + $0x28] sm:$0xf]
        %v1584 = vld [vmem:[%s11 + $0x2c] sm:$0xf]
        %v1585 = vld [vmem:[%s11 + $0x30] sm:$0xf]
        %v1586 = vld [vmem:[%s11 + $0x34] sm:$0xf]
        %v1587 = vld [vmem:[%s11 + $0x38] sm:$0xf]
        %v1588 = vld [vmem:[%s11 + $0x3c] sm:$0xf]
        %v1589 = vld [vmem:[%s11 + $0x40] sm:$0xf]
        %v1590 = vld [vmem:[%s11 + $0x44] sm:$0xf]
        %v1591 = vld [vmem:[%s11 + $0x48] sm:$0xf]
        %v1592 = vld [vmem:[%s11 + $0x4c] sm:$0xf]
        %v1593 = vld [vmem:[%s11 + $0x50] sm:$0xf]
        %v1594 = vld [vmem:[%s11 + $0x54] sm:$0xf]
        %v1595 = vld [vmem:[%s11 + $0x58] sm:$0xf]
        %v1596 = vld [vmem:[%s11 + $0x5c] sm:$0xf]
        %v1597 = vld [vmem:[%s11 + $0x60] sm:$0xf]
        %v1598 = vld [vmem:[%s11 + $0x64] sm:$0xf]
        %v1599 = vld [vmem:[%s11 + $0x68] sm:$0xf]
        %v1600 = vld [vmem:[%s11 + $0x6c] sm:$0xf]
        %v1601 = vld [vmem:[%s11 + $0x70] sm:$0xf]
        %v1602 = vld [vmem:[%s11 + $0x74] sm:$0xf]
        %v1603 = vld [vmem:[%s11 + $0x78] sm:$0xf]
        %v1604 = vld [vmem:[%s11 + $0x7c] sm:$0xf]
        %v1605 = vld [vmem:[%s11 + $0x80] sm:$0xf]
        %v1606 = vld [vmem:[%s11 + $0x84] sm:$0xf]
        %v1607 = vld [vmem:[%s11 + $0x88] sm:$0xf]
        %v1608 = vld [vmem:[%s11 + $0x8c] sm:$0xf]
        %v1609 = vld [vmem:[%s11 + $0x90] sm:$0xf]
        %v1610 = vld [vmem:[%s11 + $0x94] sm:$0xf]
        %v1611 = vld [vmem:[%s11 + $0x98] sm:$0xf]
        %v1612 = vld [vmem:[%s11 + $0x9c] sm:$0xf]
        %v1613 = vld [vmem:[%s11 + $0xa0] sm:$0xf]
        %v1614 = vld [vmem:[%s11 + $0xa4] sm:$0xf]
        %v1615 = vld [vmem:[%s11 + $0xa8] sm:$0xf]
        %v1616 = vld [vmem:[%s11 + $0xac] sm:$0xf]
        %v1617 = vld [vmem:[%s11 + $0xb0] sm:$0xf]
        %v1618 = vld [vmem:[%s11 + $0xb4] sm:$0xf]
        %v1619 = vld [vmem:[%s11 + $0xb8] sm:$0xf]
        %v1620 = vld [vmem:[%s11 + $0xbc] sm:$0xf]
        %v1621 = vld [vmem:[%s11 + $0xc0] sm:$0xf]
        %v1622 = vld [vmem:[%s11 + $0xc4] sm:$0xf]
        %v1623 = vld [vmem:[%s11 + $0xc8] sm:$0xf]
        %v1624 = vld [vmem:[%s11 + $0xcc] sm:$0xf]
        %v1625 = vld [vmem:[%s11 + $0xd0] sm:$0xf]
        %v1626 = vld [vmem:[%s11 + $0xd4] sm:$0xf]
        %v1627 = vld [vmem:[%s11 + $0xd8] sm:$0xf]
        %v1628 = vld [vmem:[%s11 + $0xdc] sm:$0xf]
        %v1629 = vld [vmem:[%s11 + $0xe0] sm:$0xf]
        %v1630 = vld [vmem:[%s11 + $0xe4] sm:$0xf]
        %v1631 = vld [vmem:[%s11 + $0xe8] sm:$0xf]
        %v1632 = vld [vmem:[%s11 + $0xec] sm:$0xf]
        %v1633 = vld [vmem:[%s11 + $0xf0] sm:$0xf]
        %v1634 = vld [vmem:[%s11 + $0xf4] sm:$0xf]
        %v1635 = vld [vmem:[%s11 + $0xf8] sm:$0xf]
        %v1636 = vld [vmem:[%s11 + $0xfc] sm:$0xf]
        %v1637 = vld [vmem:[%s12] sm:$0x1]
        %v1639 = vlaneseq
        %v1640 = vshrl.u32 %v1639, 7
        %v1641 = vsub.s32 0, %v1640
        %v1642 = vrot.slane %v1637, %v1641
        %v1708 = vunpack.c.l.b16 %v1573
        %v1709 = vunpack.c.l.b16 %v1574
        %v1710 = vunpack.c.l.b16 %v1575
        %v1711 = vunpack.c.l.b16 %v1576
        %v1712 = vunpack.c.l.b16 %v1577
        %v1713 = vunpack.c.l.b16 %v1578
        %v1714 = vunpack.c.l.b16 %v1579
        %v1715 = vunpack.c.l.b16 %v1580
        %v1716 = vunpack.c.l.b16 %v1581
        %v1717 = vunpack.c.l.b16 %v1582
        %v1718 = vunpack.c.l.b16 %v1583
        %v1719 = vunpack.c.l.b16 %v1584
        %v1720 = vunpack.c.l.b16 %v1585
        %v1721 = vunpack.c.l.b16 %v1586
        %v1722 = vunpack.c.l.b16 %v1587
        %v1723 = vunpack.c.l.b16 %v1588
        %v1724 = vunpack.c.l.b16 %v1589
        %v1725 = vunpack.c.l.b16 %v1590
        %v1726 = vunpack.c.l.b16 %v1591
        %v1727 = vunpack.c.l.b16 %v1592
        %v1728 = vunpack.c.l.b16 %v1593
        %v1729 = vunpack.c.l.b16 %v1594
        %v1730 = vunpack.c.l.b16 %v1595
        %v1731 = vunpack.c.l.b16 %v1596
        %v1732 = vunpack.c.l.b16 %v1597
        %v1733 = vunpack.c.l.b16 %v1598
        %v1734 = vunpack.c.l.b16 %v1599
        %v1735 = vunpack.c.l.b16 %v1600
        %v1736 = vunpack.c.l.b16 %v1601
        %v1737 = vunpack.c.l.b16 %v1602
        %v1738 = vunpack.c.l.b16 %v1603
        %v1739 = vunpack.c.l.b16 %v1604
        %v1740 = vunpack.c.l.b16 %v1605
        %v1741 = vunpack.c.l.b16 %v1606
        %v1742 = vunpack.c.l.b16 %v1607
        %v1743 = vunpack.c.l.b16 %v1608
        %v1744 = vunpack.c.l.b16 %v1609
        %v1745 = vunpack.c.l.b16 %v1610
        %v1746 = vunpack.c.l.b16 %v1611
        %v1747 = vunpack.c.l.b16 %v1612
        %v1748 = vunpack.c.l.b16 %v1613
        %v1749 = vunpack.c.l.b16 %v1614
        %v1750 = vunpack.c.l.b16 %v1615
        %v1751 = vunpack.c.l.b16 %v1616
        %v1752 = vunpack.c.l.b16 %v1617
        %v1753 = vunpack.c.l.b16 %v1618
        %v1754 = vunpack.c.l.b16 %v1619
        %v1755 = vunpack.c.l.b16 %v1620
        %v1756 = vunpack.c.l.b16 %v1621
        %v1757 = vunpack.c.l.b16 %v1622
        %v1758 = vunpack.c.l.b16 %v1623
        %v1759 = vunpack.c.l.b16 %v1624
        %v1760 = vunpack.c.l.b16 %v1625
        %v1761 = vunpack.c.l.b16 %v1626
        %v1762 = vunpack.c.l.b16 %v1627
        %v1763 = vunpack.c.l.b16 %v1628
        %v1764 = vunpack.c.l.b16 %v1629
        %v1765 = vunpack.c.l.b16 %v1630
        %v1766 = vunpack.c.l.b16 %v1631
        %v1767 = vunpack.c.l.b16 %v1632
        %v1768 = vunpack.c.l.b16 %v1633
        %v1769 = vunpack.c.l.b16 %v1634
        %v1770 = vunpack.c.l.b16 %v1635
        %v1771 = vunpack.c.l.b16 %v1636
        %v1772 = vpack.c.b16 %v1709, %v1708
        %v1773 = vpack.c.b16 %v1711, %v1710
        %v1774 = vpack.c.b16 %v1713, %v1712
        %v1775 = vpack.c.b16 %v1715, %v1714
        %v1776 = vpack.c.b16 %v1717, %v1716
        %v1777 = vpack.c.b16 %v1719, %v1718
        %v1778 = vpack.c.b16 %v1721, %v1720
        %v1779 = vpack.c.b16 %v1723, %v1722
        %v1780 = vpack.c.b16 %v1725, %v1724
        %v1781 = vpack.c.b16 %v1727, %v1726
        %v1782 = vpack.c.b16 %v1729, %v1728
        %v1783 = vpack.c.b16 %v1731, %v1730
        %v1784 = vpack.c.b16 %v1733, %v1732
        %v1785 = vpack.c.b16 %v1735, %v1734
        %v1786 = vpack.c.b16 %v1737, %v1736
        %v1787 = vpack.c.b16 %v1739, %v1738
        %v1788 = vpack.c.b16 %v1741, %v1740
        %v1789 = vpack.c.b16 %v1743, %v1742
        %v1790 = vpack.c.b16 %v1745, %v1744
        %v1791 = vpack.c.b16 %v1747, %v1746
        %v1792 = vpack.c.b16 %v1749, %v1748
        %v1793 = vpack.c.b16 %v1751, %v1750
        %v1794 = vpack.c.b16 %v1753, %v1752
        %v1795 = vpack.c.b16 %v1755, %v1754
        %v1796 = vpack.c.b16 %v1757, %v1756
        %v1797 = vpack.c.b16 %v1759, %v1758
        %v1798 = vpack.c.b16 %v1761, %v1760
        %v1799 = vpack.c.b16 %v1763, %v1762
        %v1800 = vpack.c.b16 %v1765, %v1764
        %v1801 = vpack.c.b16 %v1767, %v1766
        %v1802 = vpack.c.b16 %v1769, %v1768
        %v1803 = vpack.c.b16 %v1771, %v1770
        %1836 = vmatprep.subr.bf16.mxu0 0
        %1837 = vmatpush1.bf16.msra.mxu0 %v1772
        %1838 = vmatprep.subr.bf16.mxu0 0
        %1839 = vmatpush1.bf16.msra.mxu0 %v1773
        %1840 = vmatprep.subr.bf16.mxu0 0
        %1841 = vmatpush1.bf16.msra.mxu0 %v1774
        %1842 = vmatprep.subr.bf16.mxu0 0
        %1843 = vmatpush1.bf16.msra.mxu0 %v1775
        %1844 = vmatprep.subr.bf16.mxu0 0
        %1845 = vmatpush1.bf16.msra.mxu0 %v1776
        %1846 = vmatprep.subr.bf16.mxu0 0
        %1847 = vmatpush1.bf16.msra.mxu0 %v1777
        %1848 = vmatprep.subr.bf16.mxu0 0
        %1849 = vmatpush1.bf16.msra.mxu0 %v1778
        %1850 = vmatprep.subr.bf16.mxu0 0
        %1851 = vmatpush1.bf16.msra.mxu0 %v1779
        %1852 = vmatprep.subr.bf16.mxu0 0
        %1853 = vmatpush1.bf16.msra.mxu0 %v1780
        %1854 = vmatprep.subr.bf16.mxu0 0
        %1855 = vmatpush1.bf16.msra.mxu0 %v1781
        %1856 = vmatprep.subr.bf16.mxu0 0
        %1857 = vmatpush1.bf16.msra.mxu0 %v1782
        %1858 = vmatprep.subr.bf16.mxu0 0
        %1859 = vmatpush1.bf16.msra.mxu0 %v1783
        %1860 = vmatprep.subr.bf16.mxu0 0
        %1861 = vmatpush1.bf16.msra.mxu0 %v1784
        %1862 = vmatprep.subr.bf16.mxu0 0
        %1863 = vmatpush1.bf16.msra.mxu0 %v1785
        %1864 = vmatprep.subr.bf16.mxu0 0
        %1865 = vmatpush1.bf16.msra.mxu0 %v1786
        %1866 = vmatprep.subr.bf16.mxu0 0
        %1867 = vmatpush1.bf16.msra.mxu0 %v1787
        %1868 = vmatprep.mubr.bf16.mxu0 %v1570
        %1869 = vmatmul.mubr.bf16.gmra.mrb[0].mxu0 %v1569
        %v1870 = vpop.f32.mrb[0].mxu0
        %v1871 = vadd.f32 %v1642, %v1870
        %v1872 = vpop.f32.mrb[0].mxu0
        %v1873 = vpop.f32.mrb[0].mxu0
        %v1874 = vadd.f32 %v1642, %v1873
        %v1875 = vpop.f32.mrb[0].mxu0
        %1876 = vdwg.mxu0
        %1877 = vmatprep.subr.bf16.mxu0 0
        %1878 = vmatpush1.bf16.msra.mxu0 %v1788
        %1879 = vmatprep.subr.bf16.mxu0 0
        %1880 = vmatpush1.bf16.msra.mxu0 %v1789
        %1881 = vmatprep.subr.bf16.mxu0 0
        %1882 = vmatpush1.bf16.msra.mxu0 %v1790
        %1883 = vmatprep.subr.bf16.mxu0 0
        %1884 = vmatpush1.bf16.msra.mxu0 %v1791
        %1885 = vmatprep.subr.bf16.mxu0 0
        %1886 = vmatpush1.bf16.msra.mxu0 %v1792
        %1887 = vmatprep.subr.bf16.mxu0 0
        %1888 = vmatpush1.bf16.msra.mxu0 %v1793
        %1889 = vmatprep.subr.bf16.mxu0 0
        %1890 = vmatpush1.bf16.msra.mxu0 %v1794
        %1891 = vmatprep.subr.bf16.mxu0 0
        %1892 = vmatpush1.bf16.msra.mxu0 %v1795
        %1893 = vmatprep.subr.bf16.mxu0 0
        %1894 = vmatpush1.bf16.msra.mxu0 %v1796
        %1895 = vmatprep.subr.bf16.mxu0 0
        %1896 = vmatpush1.bf16.msra.mxu0 %v1797
        %1897 = vmatprep.subr.bf16.mxu0 0
        %1898 = vmatpush1.bf16.msra.mxu0 %v1798
        %1899 = vmatprep.subr.bf16.mxu0 0
        %1900 = vmatpush1.bf16.msra.mxu0 %v1799
        %1901 = vmatprep.subr.bf16.mxu0 0
        %1902 = vmatpush1.bf16.msra.mxu0 %v1800
        %1903 = vmatprep.subr.bf16.mxu0 0
        %1904 = vmatpush1.bf16.msra.mxu0 %v1801
        %1905 = vmatprep.subr.bf16.mxu0 0
        %1906 = vmatpush1.bf16.msra.mxu0 %v1802
        %1907 = vmatprep.subr.bf16.mxu0 0
        %1908 = vmatpush1.bf16.msra.mxu0 %v1803
        %1909 = vmatprep.mubr.bf16.mxu0 %v1572
        %1910 = vmatmul.mubr.bf16.gmra.mrb[0].mxu0 %v1571
        %v1911 = vpop.f32.mrb[0].mxu0
        %v1912 = vadd.f32 %v1871, %v1911
        %v1913 = vpop.f32.mrb[0].mxu0
        %v1914 = vpop.f32.mrb[0].mxu0
        %v1915 = vadd.f32 %v1874, %v1914
        %v1916 = vpop.f32.mrb[0].mxu0
        %1917 = vdwg.mxu0
        %v1918 = vadd.f32 %v1185, %v1912
        %v1919 = vadd.f32 %v1186, %v1915
        %v1920 = vld [vmem:[%s5] sm:$0x1]
        %v1921 = vld [vmem:[%s6] sm:$0x1]
        %1922 = vadd.xlane.f32.xlu0 %v1918
        %v1923 = vpop.xlane.xlu0 %1922
        %1924 = vadd.xlane.f32.xlu0 %v1919
        %v1925 = vpop.xlane.xlu0 %1924
        %v1926 = vmul.f32 %v1923, %v1193
        %v1927 = vmul.f32 %v1925, %v1193
        %v1928 = vsub.f32 %v1918, %v1926
        %v1929 = vsub.f32 %v1919, %v1927
        %v1930 = vmul.f32 %v1928, %v1928
        %v1931 = vmul.f32 %v1929, %v1929
        %1932 = vadd.xlane.f32.xlu0 %v1930
        %v1933 = vpop.xlane.xlu0 %1932
        %1934 = vadd.xlane.f32.xlu0 %v1931
        %v1935 = vpop.xlane.xlu0 %1934
        %v1936 = vmul.f32 %v1933, %v1193
        %v1937 = vmul.f32 %v1935, %v1193
        %v1938 = vadd.f32 %v1936, 1e-05
        %v1939 = vadd.f32 %v1937, 1e-05
        %v1940 = vrsqrt.pop %v1938
        %v1941 = vrsqrt.pop %v1939
        %v1942 = vmul.f32 %v1928, %v1940
        %v1943 = vmul.f32 %v1929, %v1941
        %v1945 = vlaneseq
        %v1946 = vshrl.u32 %v1945, 7
        %v1947 = vsub.s32 0, %v1946
        %v1948 = vrot.slane %v1920, %v1947
        %v1950 = vmul.f32 %v1942, %v1948
        %v1951 = vmul.f32 %v1943, %v1948
        %v1953 = vlaneseq
        %v1954 = vshrl.u32 %v1953, 7
        %v1955 = vsub.s32 0, %v1954
        %v1956 = vrot.slane %v1921, %v1955
        %v1958 = vadd.f32 %v1950, %v1956
        %v1959 = vadd.f32 %v1951, %v1956
        %v1960 = vpack.c.bf16 %v1959, %v1958
        %s1961 = scalar_lea.vmem %s1, 192
        %v1962 = vld [vmem:[%s1961] sm:$0xff]
        %v1963 = vld [vmem:[%s1961 + $0x8] sm:$0xf]
        %v1964 = vld [vmem:[%s1961 + $0xc] sm:$0xff]
        %v1965 = vld [vmem:[%s1961 + $0x14] sm:$0xf]
        %v1966 = vld [vmem:[%s1961 + $0x18] sm:$0xff]
        %v1967 = vld [vmem:[%s1961 + $0x20] sm:$0xf]
        %v1968 = vld [vmem:[%s1961 + $0x24] sm:$0xff]
        %v1969 = vld [vmem:[%s1961 + $0x2c] sm:$0xf]
        %v1970 = vld [vmem:[%s1961 + $0x30] sm:$0xff]
        %v1971 = vld [vmem:[%s1961 + $0x38] sm:$0xf]
        %v1972 = vld [vmem:[%s1961 + $0x3c] sm:$0xff]
        %v1973 = vld [vmem:[%s1961 + $0x44] sm:$0xf]
        %v1974 = vld [vmem:[%s1961 + $0x48] sm:$0xff]
        %v1975 = vld [vmem:[%s1961 + $0x50] sm:$0xf]
        %v1976 = vld [vmem:[%s1961 + $0x54] sm:$0xff]
        %v1977 = vld [vmem:[%s1961 + $0x5c] sm:$0xf]
        %v1978 = vld [vmem:[%s1961 + $0x60] sm:$0xff]
        %v1979 = vld [vmem:[%s1961 + $0x68] sm:$0xf]
        %v1980 = vld [vmem:[%s1961 + $0x6c] sm:$0xff]
        %v1981 = vld [vmem:[%s1961 + $0x74] sm:$0xf]
        %v1982 = vld [vmem:[%s1961 + $0x78] sm:$0xff]
        %v1983 = vld [vmem:[%s1961 + $0x80] sm:$0xf]
        %v1984 = vld [vmem:[%s1961 + $0x84] sm:$0xff]
        %v1985 = vld [vmem:[%s1961 + $0x8c] sm:$0xf]
        %v1986 = vld [vmem:[%s1961 + $0x90] sm:$0xff]
        %v1987 = vld [vmem:[%s1961 + $0x98] sm:$0xf]
        %v1988 = vld [vmem:[%s1961 + $0x9c] sm:$0xff]
        %v1989 = vld [vmem:[%s1961 + $0xa4] sm:$0xf]
        %v1990 = vld [vmem:[%s1961 + $0xa8] sm:$0xff]
        %v1991 = vld [vmem:[%s1961 + $0xb0] sm:$0xf]
        %v1992 = vld [vmem:[%s1961 + $0xb4] sm:$0xff]
        %v1993 = vld [vmem:[%s1961 + $0xbc] sm:$0xf]
        %s1994 = scalar_lea.vmem %s2, 3
        %v1995 = vld [vmem:[%s1994] sm:$0x7]
        %v1997 = vlaneseq
        %v1998 = vshrl.u32 %v1997, 7
        %v1999 = vsub.s32 0, %v1998
        %v2000 = vrot.slane %v1995, %v1999
        %v2001 = vlaneseq
        %v2002 = vshrl.u32 %v2001, 7
        %v2003 = vsub.s32 1, %v2002
        %v2004 = vrot.slane %v1995, %v2003
        %v2005 = vlaneseq
        %v2006 = vshrl.u32 %v2005, 7
        %v2007 = vsub.s32 2, %v2006
        %v2008 = vrot.slane %v1995, %v2007
        %v2044 = vunpack.c.l.b16 %v1962
        %v2045 = vunpack.c.h.b16 %v1962
        %v2046 = vunpack.c.l.b16 %v1963
        %v2047 = vunpack.c.l.b16 %v1964
        %v2048 = vunpack.c.h.b16 %v1964
        %v2049 = vunpack.c.l.b16 %v1965
        %v2050 = vunpack.c.l.b16 %v1966
        %v2051 = vunpack.c.h.b16 %v1966
        %v2052 = vunpack.c.l.b16 %v1967
        %v2053 = vunpack.c.l.b16 %v1968
        %v2054 = vunpack.c.h.b16 %v1968
        %v2055 = vunpack.c.l.b16 %v1969
        %v2056 = vunpack.c.l.b16 %v1970
        %v2057 = vunpack.c.h.b16 %v1970
        %v2058 = vunpack.c.l.b16 %v1971
        %v2059 = vunpack.c.l.b16 %v1972
        %v2060 = vunpack.c.h.b16 %v1972
        %v2061 = vunpack.c.l.b16 %v1973
        %v2062 = vunpack.c.l.b16 %v1974
        %v2063 = vunpack.c.h.b16 %v1974
        %v2064 = vunpack.c.l.b16 %v1975
        %v2065 = vunpack.c.l.b16 %v1976
        %v2066 = vunpack.c.h.b16 %v1976
        %v2067 = vunpack.c.l.b16 %v1977
        %v2068 = vunpack.c.l.b16 %v1978
        %v2069 = vunpack.c.h.b16 %v1978
        %v2070 = vunpack.c.l.b16 %v1979
        %v2071 = vunpack.c.l.b16 %v1980
        %v2072 = vunpack.c.h.b16 %v1980
        %v2073 = vunpack.c.l.b16 %v1981
        %v2074 = vunpack.c.l.b16 %v1982
        %v2075 = vunpack.c.h.b16 %v1982
        %v2076 = vunpack.c.l.b16 %v1983
        %v2077 = vunpack.c.l.b16 %v1984
        %v2078 = vunpack.c.h.b16 %v1984
        %v2079 = vunpack.c.l.b16 %v1985
        %v2080 = vunpack.c.l.b16 %v1986
        %v2081 = vunpack.c.h.b16 %v1986
        %v2082 = vunpack.c.l.b16 %v1987
        %v2083 = vunpack.c.l.b16 %v1988
        %v2084 = vunpack.c.h.b16 %v1988
        %v2085 = vunpack.c.l.b16 %v1989
        %v2086 = vunpack.c.l.b16 %v1990
        %v2087 = vunpack.c.h.b16 %v1990
        %v2088 = vunpack.c.l.b16 %v1991
        %v2089 = vunpack.c.l.b16 %v1992
        %v2090 = vunpack.c.h.b16 %v1992
        %v2091 = vunpack.c.l.b16 %v1993
        %v2092 = vpack.c.b16 %v2047, %v2044
        %v2093 = vpack.c.b16 %v2048, %v2045
        %v2094 = vpack.c.b16 %v2049, %v2046
        %v2095 = vpack.c.b16 %v2053, %v2050
        %v2096 = vpack.c.b16 %v2054, %v2051
        %v2097 = vpack.c.b16 %v2055, %v2052
        %v2098 = vpack.c.b16 %v2059, %v2056
        %v2099 = vpack.c.b16 %v2060, %v2057
        %v2100 = vpack.c.b16 %v2061, %v2058
        %v2101 = vpack.c.b16 %v2065, %v2062
        %v2102 = vpack.c.b16 %v2066, %v2063
        %v2103 = vpack.c.b16 %v2067, %v2064
        %v2104 = vpack.c.b16 %v2071, %v2068
        %v2105 = vpack.c.b16 %v2072, %v2069
        %v2106 = vpack.c.b16 %v2073, %v2070
        %v2107 = vpack.c.b16 %v2077, %v2074
        %v2108 = vpack.c.b16 %v2078, %v2075
        %v2109 = vpack.c.b16 %v2079, %v2076
        %v2110 = vpack.c.b16 %v2083, %v2080
        %v2111 = vpack.c.b16 %v2084, %v2081
        %v2112 = vpack.c.b16 %v2085, %v2082
        %v2113 = vpack.c.b16 %v2089, %v2086
        %v2114 = vpack.c.b16 %v2090, %v2087
        %v2115 = vpack.c.b16 %v2091, %v2088
        %2140 = vmatprep.subr.bf16.mxu0 %v2093
        %2141 = vmatpush1.bf16.msra.mxu0 %v2092
        %2142 = vmatprep.subr.bf16.mxu0 %v2096
        %2143 = vmatpush1.bf16.msra.mxu0 %v2095
        %2144 = vmatprep.subr.bf16.mxu0 %v2099
        %2145 = vmatpush1.bf16.msra.mxu0 %v2098
        %2146 = vmatprep.subr.bf16.mxu0 %v2102
        %2147 = vmatpush1.bf16.msra.mxu0 %v2101
        %2148 = vmatprep.subr.bf16.mxu0 %v2105
        %2149 = vmatpush1.bf16.msra.mxu0 %v2104
        %2150 = vmatprep.subr.bf16.mxu0 %v2108
        %2151 = vmatpush1.bf16.msra.mxu0 %v2107
        %2152 = vmatprep.subr.bf16.mxu0 %v2111
        %2153 = vmatpush1.bf16.msra.mxu0 %v2110
        %2154 = vmatprep.subr.bf16.mxu0 %v2114
        %2155 = vmatpush1.bf16.msra.mxu0 %v2113
        %2156 = vmatprep.subr.bf16.mxu0 0
        %2157 = vmatpush1.bf16.msra.mxu0 0
        %2158 = vmatprep.subr.bf16.mxu0 0
        %2159 = vmatpush1.bf16.msra.mxu0 0
        %2160 = vmatprep.subr.bf16.mxu0 0
        %2161 = vmatpush1.bf16.msra.mxu0 0
        %2162 = vmatprep.subr.bf16.mxu0 0
        %2163 = vmatpush1.bf16.msra.mxu0 0
        %2164 = vmatprep.subr.bf16.mxu0 0
        %2165 = vmatpush1.bf16.msra.mxu0 0
        %2166 = vmatprep.subr.bf16.mxu0 0
        %2167 = vmatpush1.bf16.msra.mxu0 0
        %2168 = vmatprep.subr.bf16.mxu0 0
        %2169 = vmatpush1.bf16.msra.mxu0 0
        %2170 = vmatprep.subr.bf16.mxu0 0
        %2171 = vmatpush1.bf16.msra.mxu0 0
        %2172 = vmatprep.mubr.bf16.mxu0 0
        %2173 = vmatmul.mubr.bf16.gmra.mrb[0].mxu0 %v1960
        %v2174 = vpop.f32.mrb[0].mxu0
        %v2175 = vadd.f32 %v2000, %v2174
        %v2176 = vpop.f32.mrb[0].mxu0
        %v2177 = vadd.f32 %v2004, %v2176
        %v2178 = vpop.f32.mrb[0].mxu0
        %v2179 = vadd.f32 %v2000, %v2178
        %v2180 = vpop.f32.mrb[0].mxu0
        %v2181 = vadd.f32 %v2004, %v2180
        %2182 = vdwg.mxu0
        %2183 = vmatprep.subr.bf16.mxu0 0
        %2184 = vmatpush1.bf16.msra.mxu0 %v2094
        %2185 = vmatprep.subr.bf16.mxu0 0
        %2186 = vmatpush1.bf16.msra.mxu0 %v2097
        %2187 = vmatprep.subr.bf16.mxu0 0
        %2188 = vmatpush1.bf16.msra.mxu0 %v2100
        %2189 = vmatprep.subr.bf16.mxu0 0
        %2190 = vmatpush1.bf16.msra.mxu0 %v2103
        %2191 = vmatprep.subr.bf16.mxu0 0
        %2192 = vmatpush1.bf16.msra.mxu0 %v2106
        %2193 = vmatprep.subr.bf16.mxu0 0
        %2194 = vmatpush1.bf16.msra.mxu0 %v2109
        %2195 = vmatprep.subr.bf16.mxu0 0
        %2196 = vmatpush1.bf16.msra.mxu0 %v2112
        %2197 = vmatprep.subr.bf16.mxu0 0
        %2198 = vmatpush1.bf16.msra.mxu0 %v2115
        %2199 = vmatprep.subr.bf16.mxu0 0
        %2200 = vmatpush1.bf16.msra.mxu0 0
        %2201 = vmatprep.subr.bf16.mxu0 0
        %2202 = vmatpush1.bf16.msra.mxu0 0
        %2203 = vmatprep.subr.bf16.mxu0 0
        %2204 = vmatpush1.bf16.msra.mxu0 0
        %2205 = vmatprep.subr.bf16.mxu0 0
        %2206 = vmatpush1.bf16.msra.mxu0 0
        %2207 = vmatprep.subr.bf16.mxu0 0
        %2208 = vmatpush1.bf16.msra.mxu0 0
        %2209 = vmatprep.subr.bf16.mxu0 0
        %2210 = vmatpush1.bf16.msra.mxu0 0
        %2211 = vmatprep.subr.bf16.mxu0 0
        %2212 = vmatpush1.bf16.msra.mxu0 0
        %2213 = vmatprep.subr.bf16.mxu0 0
        %2214 = vmatpush1.bf16.msra.mxu0 0
        %2215 = vmatprep.mubr.bf16.mxu0 0
        %2216 = vmatmul.mubr.bf16.gmra.mrb[0].mxu0 %v1960
        %v2217 = vpop.f32.mrb[0].mxu0
        %v2218 = vadd.f32 %v2008, %v2217
        %v2219 = vpop.f32.mrb[0].mxu0
        %v2220 = vpop.f32.mrb[0].mxu0
        %v2221 = vadd.f32 %v2008, %v2220
        %v2222 = vpop.f32.mrb[0].mxu0
        %2223 = vdwg.mxu0
        %v2224 = vpack.c.bf16 %v2179, %v2175
        %v2225 = vpack.c.bf16 %v2181, %v2177
        %2226 = vmatprep.subr.bf16.mxu0 0
        %2227 = vmatpush1.bf16.xpose.msra.mxu0 %v2225
        %2228 = vmatprep.subr.bf16.mxu0 0
        %2229 = vmatpush1.bf16.xpose.msra.mxu0 0
        %2230 = vmatprep.subr.bf16.mxu0 0
        %2231 = vmatpush1.bf16.xpose.msra.mxu0 0
        %2232 = vmatprep.subr.bf16.mxu0 0
        %2233 = vmatpush1.bf16.xpose.msra.mxu0 0
        %2234 = vmatprep.subr.bf16.mxu0 0
        %2235 = vmatpush1.bf16.xpose.msra.mxu0 0
        %2236 = vmatprep.subr.bf16.mxu0 0
        %2237 = vmatpush1.bf16.xpose.msra.mxu0 0
        %2238 = vmatprep.subr.bf16.mxu0 0
        %2239 = vmatpush1.bf16.xpose.msra.mxu0 0
        %2240 = vmatprep.subr.bf16.mxu0 0
        %2241 = vmatpush1.bf16.xpose.msra.mxu0 0
        %2242 = vmatprep.subr.bf16.mxu0 0
        %2243 = vmatpush1.bf16.xpose.msra.mxu0 0
        %2244 = vmatprep.subr.bf16.mxu0 0
        %2245 = vmatpush1.bf16.xpose.msra.mxu0 0
        %2246 = vmatprep.subr.bf16.mxu0 0
        %2247 = vmatpush1.bf16.xpose.msra.mxu0 0
        %2248 = vmatprep.subr.bf16.mxu0 0
        %2249 = vmatpush1.bf16.xpose.msra.mxu0 0
        %2250 = vmatprep.subr.bf16.mxu0 0
        %2251 = vmatpush1.bf16.xpose.msra.mxu0 0
        %2252 = vmatprep.subr.bf16.mxu0 0
        %2253 = vmatpush1.bf16.xpose.msra.mxu0 0
        %2254 = vmatprep.subr.bf16.mxu0 0
        %2255 = vmatpush1.bf16.xpose.msra.mxu0 0
        %2256 = vmatprep.subr.bf16.mxu0 0
        %2257 = vmatpush1.bf16.xpose.msra.mxu0 0
        %2258 = vmatprep.mubr.bf16.mxu0 0
        %2259 = vmatmul.mubr.bf16.gmra.mrb[0].mxu0 %v2224
        %v2260 = vpop.f32.mrb[0].mxu0
        %v2261 = vadd.f32 0.0, %v2260
        %v2262 = vpop.f32.mrb[0].mxu0
        %v2263 = vpop.f32.mrb[0].mxu0
        %v2264 = vadd.f32 0.0, %v2263
        %v2265 = vpop.f32.mrb[0].mxu0
        %2266 = vdwg.mxu0
        %v2267 = vsel %vm747, %v2261, -inf
        %2268 = vmax.xlane.f32.xlu0 %v2267
        %v2269 = vpop.xlane.xlu0 %2268
        %v2270 = vsel %vm747, %v2264, -inf
        %2271 = vmax.xlane.f32.xlu0 %v2270
        %v2272 = vpop.xlane.xlu0 %2271
        %v2273 = vsub.f32 %v2261, %v2269
        %v2274 = vsub.f32 %v2264, %v2272
        %v2275 = vmul.f32 %v2273, 1.442695
        %v2276 = vpow.pop %v2275
        %v2277 = vmul.f32 %v2274, 1.442695
        %v2278 = vpow.pop %v2277
        %v2279 = vsel %vm747, %v2276, 0.0
        %2280 = vadd.xlane.f32.xlu0 %v2279
        %v2281 = vpop.xlane.xlu0 %2280
        %v2282 = vsel %vm747, %v2278, 0.0
        %2283 = vadd.xlane.f32.xlu0 %v2282
        %v2284 = vpop.xlane.xlu0 %2283
        %v2285 = vrcp.pop %v2281
        %v2286 = vrcp.pop %v2284
        %v2287 = vmul.f32 %v2276, %v2285
        %v2288 = vmul.f32 %v2278, %v2286
        %v2289 = vpack.c.bf16 %v2221, %v2218
        %v2290 = vpack.c.bf16 %v2288, %v2287
        %2291 = vxpose.xlu0.c.b16.start [1/8] %v2289, 128
        %2292 = vxpose.xlu0.c.b16.cont [2/8] 0, 128
        %2293 = vxpose.xlu0.c.b16.cont [3/8] 0, 128
        %2294 = vxpose.xlu0.c.b16.cont [4/8] 0, 128
        %2295 = vxpose.xlu0.c.b16.cont [5/8] 0, 128
        %2296 = vxpose.xlu0.c.b16.cont [6/8] 0, 128
        %2297 = vxpose.xlu0.c.b16.cont [7/8] 0, 128
        %2298 = vxpose.xlu0.c.b16.end [8/8] 0, 128
        %v2299 = vpop.trf.xlu0
        %v2300 = vpop.trf.xlu0
        %v2301 = vpop.trf.xlu0
        %v2302 = vpop.trf.xlu0
        %v2303 = vpop.trf.xlu0
        %v2304 = vpop.trf.xlu0
        %v2305 = vpop.trf.xlu0
        %v2306 = vpop.trf.xlu0
        %v2308 = vsel %vm747, %v2299, 0
        %v2311 = vsel %vm747, %v2300, 0
        %v2314 = vsel %vm747, %v2301, 0
        %v2317 = vsel %vm747, %v2302, 0
        %v2320 = vsel %vm747, %v2303, 0
        %v2323 = vsel %vm747, %v2304, 0
        %v2326 = vsel %vm747, %v2305, 0
        %v2329 = vsel %vm747, %v2306, 0
        %v2332 = vsel %vm747, %v2290, 0
        %2334 = vmatprep.subr.bf16.mxu0 0
        %2335 = vmatpush1.bf16.xpose.msra.mxu0 %v2332
        %2336 = vmatprep.subr.bf16.mxu0 0
        %2337 = vmatpush1.bf16.xpose.msra.mxu0 0
        %2338 = vmatprep.subr.bf16.mxu0 0
        %2339 = vmatpush1.bf16.xpose.msra.mxu0 0
        %2340 = vmatprep.subr.bf16.mxu0 0
        %2341 = vmatpush1.bf16.xpose.msra.mxu0 0
        %2342 = vmatprep.subr.bf16.mxu0 0
        %2343 = vmatpush1.bf16.xpose.msra.mxu0 0
        %2344 = vmatprep.subr.bf16.mxu0 0
        %2345 = vmatpush1.bf16.xpose.msra.mxu0 0
        %2346 = vmatprep.subr.bf16.mxu0 0
        %2347 = vmatpush1.bf16.xpose.msra.mxu0 0
        %2348 = vmatprep.subr.bf16.mxu0 0
        %2349 = vmatpush1.bf16.xpose.msra.mxu0 0
        %2350 = vmatprep.subr.bf16.mxu0 0
        %2351 = vmatpush1.bf16.xpose.msra.mxu0 0
        %2352 = vmatprep.subr.bf16.mxu0 0
        %2353 = vmatpush1.bf16.xpose.msra.mxu0 0
        %2354 = vmatprep.subr.bf16.mxu0 0
        %2355 = vmatpush1.bf16.xpose.msra.mxu0 0
        %2356 = vmatprep.subr.bf16.mxu0 0
        %2357 = vmatpush1.bf16.xpose.msra.mxu0 0
        %2358 = vmatprep.subr.bf16.mxu0 0
        %2359 = vmatpush1.bf16.xpose.msra.mxu0 0
        %2360 = vmatprep.subr.bf16.mxu0 0
        %2361 = vmatpush1.bf16.xpose.msra.mxu0 0
        %2362 = vmatprep.subr.bf16.mxu0 0
        %2363 = vmatpush1.bf16.xpose.msra.mxu0 0
        %2364 = vmatprep.subr.bf16.mxu0 0
        %2365 = vmatpush1.bf16.xpose.msra.mxu0 0
        %2366 = vmatprep.mubr.bf16.mxu0 0
        %2367 = vmatmul.mubr.bf16.gmra.mrb[0].mxu0 %v2308
        %v2368 = vpop.f32.mrb[0].mxu0
        %v2369 = vadd.f32 0.0, %v2368
        %v2370 = vpop.f32.mrb[0].mxu0
        %v2371 = vpop.f32.mrb[0].mxu0
        %v2372 = vadd.f32 0.0, %v2371
        %v2373 = vpop.f32.mrb[0].mxu0
        %2374 = vmatprep.mubr.bf16.mxu0 0
        %2375 = vmatmul.mubr.bf16.gmra.mrb[0].mxu0 %v2311
        %v2376 = vpop.f32.mrb[0].mxu0
        %v2377 = vadd.f32 0.0, %v2376
        %v2378 = vpop.f32.mrb[0].mxu0
        %v2379 = vpop.f32.mrb[0].mxu0
        %v2380 = vadd.f32 0.0, %v2379
        %v2381 = vpop.f32.mrb[0].mxu0
        %2382 = vmatprep.mubr.bf16.mxu0 0
        %2383 = vmatmul.mubr.bf16.gmra.mrb[0].mxu0 %v2314
        %v2384 = vpop.f32.mrb[0].mxu0
        %v2385 = vadd.f32 0.0, %v2384
        %v2386 = vpop.f32.mrb[0].mxu0
        %v2387 = vpop.f32.mrb[0].mxu0
        %v2388 = vadd.f32 0.0, %v2387
        %v2389 = vpop.f32.mrb[0].mxu0
        %2390 = vmatprep.mubr.bf16.mxu0 0
        %2391 = vmatmul.mubr.bf16.gmra.mrb[0].mxu0 %v2317
        %v2392 = vpop.f32.mrb[0].mxu0
        %v2393 = vadd.f32 0.0, %v2392
        %v2394 = vpop.f32.mrb[0].mxu0
        %v2395 = vpop.f32.mrb[0].mxu0
        %v2396 = vadd.f32 0.0, %v2395
        %v2397 = vpop.f32.mrb[0].mxu0
        %2398 = vmatprep.mubr.bf16.mxu0 0
        %2399 = vmatmul.mubr.bf16.gmra.mrb[0].mxu0 %v2320
        %v2400 = vpop.f32.mrb[0].mxu0
        %v2401 = vadd.f32 0.0, %v2400
        %v2402 = vpop.f32.mrb[0].mxu0
        %v2403 = vpop.f32.mrb[0].mxu0
        %v2404 = vadd.f32 0.0, %v2403
        %v2405 = vpop.f32.mrb[0].mxu0
        %2406 = vmatprep.mubr.bf16.mxu0 0
        %2407 = vmatmul.mubr.bf16.gmra.mrb[0].mxu0 %v2323
        %v2408 = vpop.f32.mrb[0].mxu0
        %v2409 = vadd.f32 0.0, %v2408
        %v2410 = vpop.f32.mrb[0].mxu0
        %v2411 = vpop.f32.mrb[0].mxu0
        %v2412 = vadd.f32 0.0, %v2411
        %v2413 = vpop.f32.mrb[0].mxu0
        %2414 = vmatprep.mubr.bf16.mxu0 0
        %2415 = vmatmul.mubr.bf16.gmra.mrb[0].mxu0 %v2326
        %v2416 = vpop.f32.mrb[0].mxu0
        %v2417 = vadd.f32 0.0, %v2416
        %v2418 = vpop.f32.mrb[0].mxu0
        %v2419 = vpop.f32.mrb[0].mxu0
        %v2420 = vadd.f32 0.0, %v2419
        %v2421 = vpop.f32.mrb[0].mxu0
        %2422 = vmatprep.mubr.bf16.mxu0 0
        %2423 = vmatmul.mubr.bf16.gmra.mrb[0].mxu0 %v2329
        %v2424 = vpop.f32.mrb[0].mxu0
        %v2425 = vadd.f32 0.0, %v2424
        %v2426 = vpop.f32.mrb[0].mxu0
        %v2427 = vpop.f32.mrb[0].mxu0
        %v2428 = vadd.f32 0.0, %v2427
        %v2429 = vpop.f32.mrb[0].mxu0
        %2430 = vdwg.mxu0
        %2431 = vst.msk [vmem:[#allocation2] sm:$0xff] %vm747, %v2369
        %2432 = vst.msk [vmem:[#allocation2 + $0x8] sm:$0xff] %vm747, %v2372
        %2433 = vst.msk [vmem:[#allocation2 + $0x10] sm:$0xff] %vm747, %v2377
        %2434 = vst.msk [vmem:[#allocation2 + $0x18] sm:$0xff] %vm747, %v2380
        %2435 = vst.msk [vmem:[#allocation2 + $0x20] sm:$0xff] %vm747, %v2385
        %2436 = vst.msk [vmem:[#allocation2 + $0x28] sm:$0xff] %vm747, %v2388
        %2437 = vst.msk [vmem:[#allocation2 + $0x30] sm:$0xff] %vm747, %v2393
        %2438 = vst.msk [vmem:[#allocation2 + $0x38] sm:$0xff] %vm747, %v2396
        %2439 = vst.msk [vmem:[#allocation2 + $0x40] sm:$0xff] %vm747, %v2401
        %2440 = vst.msk [vmem:[#allocation2 + $0x48] sm:$0xff] %vm747, %v2404
        %2441 = vst.msk [vmem:[#allocation2 + $0x50] sm:$0xff] %vm747, %v2409
        %2442 = vst.msk [vmem:[#allocation2 + $0x58] sm:$0xff] %vm747, %v2412
        %2443 = vst.msk [vmem:[#allocation2 + $0x60] sm:$0xff] %vm747, %v2417
        %2444 = vst.msk [vmem:[#allocation2 + $0x68] sm:$0xff] %vm747, %v2420
        %2445 = vst.msk [vmem:[#allocation2 + $0x70] sm:$0xff] %vm747, %v2425
        %2446 = vst.msk [vmem:[#allocation2 + $0x78] sm:$0xff] %vm747, %v2428
        %v2447 = vld [vmem:[#allocation2] ss:$8 sm:$0xf]
        %v2448 = vld [vmem:[#allocation2] ss:$8 sm:$0xf0]
        %v2449 = vor.u32 %v2447, %v2448
        %v2450 = vld [vmem:[%s931] ss:$8 sm:$0xf]
        %v2451 = vld [vmem:[%s931] ss:$8 sm:$0xf0]
        %v2452 = vor.u32 %v2450, %v2451
        %2453 = vst.msk [vmem:[#allocation3] sm:$0xff] %vm747, %v2449
        %2454 = vst.msk [vmem:[#allocation3 + $0x8] sm:$0xff] %vm747, %v2452
        %v2455 = vld [vmem:[%s937] ss:$8 sm:$0xf]
        %v2456 = vld [vmem:[%s937] ss:$8 sm:$0xf0]
        %v2457 = vor.u32 %v2455, %v2456
        %v2458 = vld [vmem:[%s941] ss:$8 sm:$0xf]
        %v2459 = vld [vmem:[%s941] ss:$8 sm:$0xf0]
        %v2460 = vor.u32 %v2458, %v2459
        %2463 = vrot.lane.b32.xlu0 %v2457, 16
        %v2464 = vpop.permute.xlu0 %2463
        %2465 = vrot.lane.b32.xlu0 %v2460, 16
        %v2466 = vpop.permute.xlu0 %2465
        %2469 = vst.msk [vmem:[#allocation3] sm:$0xff] %vm953, %v2464
        %2470 = vst.msk [vmem:[#allocation3 + $0x8] sm:$0xff] %vm953, %v2466
        %v2471 = vld [vmem:[%s956] ss:$8 sm:$0xf]
        %v2472 = vld [vmem:[%s956] ss:$8 sm:$0xf0]
        %v2473 = vor.u32 %v2471, %v2472
        %v2474 = vld [vmem:[%s960] ss:$8 sm:$0xf]
        %v2475 = vld [vmem:[%s960] ss:$8 sm:$0xf0]
        %v2476 = vor.u32 %v2474, %v2475
        %2479 = vrot.lane.b32.xlu0 %v2473, 32
        %v2480 = vpop.permute.xlu0 %2479
        %2481 = vrot.lane.b32.xlu0 %v2476, 32
        %v2482 = vpop.permute.xlu0 %2481
        %2485 = vst.msk [vmem:[#allocation3] sm:$0xff] %vm972, %v2480
        %2486 = vst.msk [vmem:[#allocation3 + $0x8] sm:$0xff] %vm972, %v2482
        %v2487 = vld [vmem:[%s975] ss:$8 sm:$0xf]
        %v2488 = vld [vmem:[%s975] ss:$8 sm:$0xf0]
        %v2489 = vor.u32 %v2487, %v2488
        %v2490 = vld [vmem:[%s979] ss:$8 sm:$0xf]
        %v2491 = vld [vmem:[%s979] ss:$8 sm:$0xf0]
        %v2492 = vor.u32 %v2490, %v2491
        %2495 = vrot.lane.b32.xlu0 %v2489, 48
        %v2496 = vpop.permute.xlu0 %2495
        %2497 = vrot.lane.b32.xlu0 %v2492, 48
        %v2498 = vpop.permute.xlu0 %2497
        %2501 = vst.msk [vmem:[#allocation3] sm:$0xff] %vm991, %v2496
        %2502 = vst.msk [vmem:[#allocation3 + $0x8] sm:$0xff] %vm991, %v2498
        %v2503 = vld [vmem:[%s994] ss:$8 sm:$0xf]
        %v2504 = vld [vmem:[%s994] ss:$8 sm:$0xf0]
        %v2505 = vor.u32 %v2503, %v2504
        %v2506 = vld [vmem:[%s998] ss:$8 sm:$0xf]
        %v2507 = vld [vmem:[%s998] ss:$8 sm:$0xf0]
        %v2508 = vor.u32 %v2506, %v2507
        %2511 = vrot.lane.b32.xlu0 %v2505, 64
        %v2512 = vpop.permute.xlu0 %2511
        %2513 = vrot.lane.b32.xlu0 %v2508, 64
        %v2514 = vpop.permute.xlu0 %2513
        %2517 = vst.msk [vmem:[#allocation3] sm:$0xff] %vm1010, %v2512
        %2518 = vst.msk [vmem:[#allocation3 + $0x8] sm:$0xff] %vm1010, %v2514
        %v2519 = vld [vmem:[%s1013] ss:$8 sm:$0xf]
        %v2520 = vld [vmem:[%s1013] ss:$8 sm:$0xf0]
        %v2521 = vor.u32 %v2519, %v2520
        %v2522 = vld [vmem:[%s1017] ss:$8 sm:$0xf]
        %v2523 = vld [vmem:[%s1017] ss:$8 sm:$0xf0]
        %v2524 = vor.u32 %v2522, %v2523
        %2527 = vrot.lane.b32.xlu0 %v2521, 80
        %v2528 = vpop.permute.xlu0 %2527
        %2529 = vrot.lane.b32.xlu0 %v2524, 80
        %v2530 = vpop.permute.xlu0 %2529
        %2533 = vst.msk [vmem:[#allocation3] sm:$0xff] %vm1029, %v2528
        %2534 = vst.msk [vmem:[#allocation3 + $0x8] sm:$0xff] %vm1029, %v2530
        %v2535 = vld [vmem:[%s1032] ss:$8 sm:$0xf]
        %v2536 = vld [vmem:[%s1032] ss:$8 sm:$0xf0]
        %v2537 = vor.u32 %v2535, %v2536
        %v2538 = vld [vmem:[%s1036] ss:$8 sm:$0xf]
        %v2539 = vld [vmem:[%s1036] ss:$8 sm:$0xf0]
        %v2540 = vor.u32 %v2538, %v2539
        %2543 = vrot.lane.b32.xlu0 %v2537, 96
        %v2544 = vpop.permute.xlu0 %2543
        %2545 = vrot.lane.b32.xlu0 %v2540, 96
        %v2546 = vpop.permute.xlu0 %2545
        %2549 = vst.msk [vmem:[#allocation3] sm:$0xff] %vm1048, %v2544
        %2550 = vst.msk [vmem:[#allocation3 + $0x8] sm:$0xff] %vm1048, %v2546
        %v2551 = vld [vmem:[%s1051] ss:$8 sm:$0xf]
        %v2552 = vld [vmem:[%s1051] ss:$8 sm:$0xf0]
        %v2553 = vor.u32 %v2551, %v2552
        %v2554 = vld [vmem:[%s1055] ss:$8 sm:$0xf]
        %v2555 = vld [vmem:[%s1055] ss:$8 sm:$0xf0]
        %v2556 = vor.u32 %v2554, %v2555
        %2559 = vrot.lane.b32.xlu0 %v2553, 112
        %v2560 = vpop.permute.xlu0 %2559
        %2561 = vrot.lane.b32.xlu0 %v2556, 112
        %v2562 = vpop.permute.xlu0 %2561
        %2565 = vst.msk [vmem:[#allocation3] sm:$0xff] %vm1067, %v2560
        %2566 = vst.msk [vmem:[#allocation3 + $0x8] sm:$0xff] %vm1067, %v2562
        %v2567 = vld [vmem:[#allocation3] sm:$0xff]
        %v2568 = vld [vmem:[#allocation3 + $0x8] sm:$0xff]
        %v2569 = vpack.c.bf16 %v2568, %v2567
        %s2570 = scalar_lea.vmem %s3, 64
        %v2571 = vld [vmem:[%s2570] sm:$0xf]
        %v2572 = vld [vmem:[%s2570 + $0x4] sm:$0xf]
        %v2573 = vld [vmem:[%s2570 + $0x8] sm:$0xf]
        %v2574 = vld [vmem:[%s2570 + $0xc] sm:$0xf]
        %v2575 = vld [vmem:[%s2570 + $0x10] sm:$0xf]
        %v2576 = vld [vmem:[%s2570 + $0x14] sm:$0xf]
        %v2577 = vld [vmem:[%s2570 + $0x18] sm:$0xf]
        %v2578 = vld [vmem:[%s2570 + $0x1c] sm:$0xf]
        %v2579 = vld [vmem:[%s2570 + $0x20] sm:$0xf]
        %v2580 = vld [vmem:[%s2570 + $0x24] sm:$0xf]
        %v2581 = vld [vmem:[%s2570 + $0x28] sm:$0xf]
        %v2582 = vld [vmem:[%s2570 + $0x2c] sm:$0xf]
        %v2583 = vld [vmem:[%s2570 + $0x30] sm:$0xf]
        %v2584 = vld [vmem:[%s2570 + $0x34] sm:$0xf]
        %v2585 = vld [vmem:[%s2570 + $0x38] sm:$0xf]
        %v2586 = vld [vmem:[%s2570 + $0x3c] sm:$0xf]
        %s2587 = scalar_lea.vmem %s4, 1
        %v2588 = vld [vmem:[%s2587] sm:$0x1]
        %v2590 = vlaneseq
        %v2591 = vshrl.u32 %v2590, 7
        %v2592 = vsub.s32 0, %v2591
        %v2593 = vrot.slane %v2588, %v2592
        %v2611 = vunpack.c.l.b16 %v2571
        %v2612 = vunpack.c.l.b16 %v2572
        %v2613 = vunpack.c.l.b16 %v2573
        %v2614 = vunpack.c.l.b16 %v2574
        %v2615 = vunpack.c.l.b16 %v2575
        %v2616 = vunpack.c.l.b16 %v2576
        %v2617 = vunpack.c.l.b16 %v2577
        %v2618 = vunpack.c.l.b16 %v2578
        %v2619 = vunpack.c.l.b16 %v2579
        %v2620 = vunpack.c.l.b16 %v2580
        %v2621 = vunpack.c.l.b16 %v2581
        %v2622 = vunpack.c.l.b16 %v2582
        %v2623 = vunpack.c.l.b16 %v2583
        %v2624 = vunpack.c.l.b16 %v2584
        %v2625 = vunpack.c.l.b16 %v2585
        %v2626 = vunpack.c.l.b16 %v2586
        %v2627 = vpack.c.b16 %v2612, %v2611
        %v2628 = vpack.c.b16 %v2614, %v2613
        %v2629 = vpack.c.b16 %v2616, %v2615
        %v2630 = vpack.c.b16 %v2618, %v2617
        %v2631 = vpack.c.b16 %v2620, %v2619
        %v2632 = vpack.c.b16 %v2622, %v2621
        %v2633 = vpack.c.b16 %v2624, %v2623
        %v2634 = vpack.c.b16 %v2626, %v2625
        %2643 = vmatprep.subr.bf16.mxu0 0
        %2644 = vmatpush1.bf16.msra.mxu0 %v2627
        %2645 = vmatprep.subr.bf16.mxu0 0
        %2646 = vmatpush1.bf16.msra.mxu0 %v2628
        %2647 = vmatprep.subr.bf16.mxu0 0
        %2648 = vmatpush1.bf16.msra.mxu0 %v2629
        %2649 = vmatprep.subr.bf16.mxu0 0
        %2650 = vmatpush1.bf16.msra.mxu0 %v2630
        %2651 = vmatprep.subr.bf16.mxu0 0
        %2652 = vmatpush1.bf16.msra.mxu0 %v2631
        %2653 = vmatprep.subr.bf16.mxu0 0
        %2654 = vmatpush1.bf16.msra.mxu0 %v2632
        %2655 = vmatprep.subr.bf16.mxu0 0
        %2656 = vmatpush1.bf16.msra.mxu0 %v2633
        %2657 = vmatprep.subr.bf16.mxu0 0
        %2658 = vmatpush1.bf16.msra.mxu0 %v2634
        %2659 = vmatprep.subr.bf16.mxu0 0
        %2660 = vmatpush1.bf16.msra.mxu0 0
        %2661 = vmatprep.subr.bf16.mxu0 0
        %2662 = vmatpush1.bf16.msra.mxu0 0
        %2663 = vmatprep.subr.bf16.mxu0 0
        %2664 = vmatpush1.bf16.msra.mxu0 0
        %2665 = vmatprep.subr.bf16.mxu0 0
        %2666 = vmatpush1.bf16.msra.mxu0 0
        %2667 = vmatprep.subr.bf16.mxu0 0
        %2668 = vmatpush1.bf16.msra.mxu0 0
        %2669 = vmatprep.subr.bf16.mxu0 0
        %2670 = vmatpush1.bf16.msra.mxu0 0
        %2671 = vmatprep.subr.bf16.mxu0 0
        %2672 = vmatpush1.bf16.msra.mxu0 0
        %2673 = vmatprep.subr.bf16.mxu0 0
        %2674 = vmatpush1.bf16.msra.mxu0 0
        %2675 = vmatprep.mubr.bf16.mxu0 0
        %2676 = vmatmul.mubr.bf16.gmra.mrb[0].mxu0 %v2569
        %v2677 = vpop.f32.mrb[0].mxu0
        %v2678 = vadd.f32 %v2593, %v2677
        %v2679 = vpop.f32.mrb[0].mxu0
        %v2680 = vpop.f32.mrb[0].mxu0
        %v2681 = vadd.f32 %v2593, %v2680
        %v2682 = vpop.f32.mrb[0].mxu0
        %2683 = vdwg.mxu0
        %v2684 = vadd.f32 %v1918, %v2678
        %v2685 = vadd.f32 %v1919, %v2681
        %s2686 = scalar_lea.vmem %s7, 1
        %v2687 = vld [vmem:[%s2686] sm:$0x1]
        %s2688 = scalar_lea.vmem %s8, 1
        %v2689 = vld [vmem:[%s2688] sm:$0x1]
        %2690 = vadd.xlane.f32.xlu0 %v2684
        %v2691 = vpop.xlane.xlu0 %2690
        %2692 = vadd.xlane.f32.xlu0 %v2685
        %v2693 = vpop.xlane.xlu0 %2692
        %v2694 = vmul.f32 %v2691, %v1193
        %v2695 = vmul.f32 %v2693, %v1193
        %v2696 = vsub.f32 %v2684, %v2694
        %v2697 = vsub.f32 %v2685, %v2695
        %v2698 = vmul.f32 %v2696, %v2696
        %v2699 = vmul.f32 %v2697, %v2697
        %2700 = vadd.xlane.f32.xlu0 %v2698
        %v2701 = vpop.xlane.xlu0 %2700
        %2702 = vadd.xlane.f32.xlu0 %v2699
        %v2703 = vpop.xlane.xlu0 %2702
        %v2704 = vmul.f32 %v2701, %v1193
        %v2705 = vmul.f32 %v2703, %v1193
        %v2706 = vadd.f32 %v2704, 1e-05
        %v2707 = vadd.f32 %v2705, 1e-05
        %v2708 = vrsqrt.pop %v2706
        %v2709 = vrsqrt.pop %v2707
        %v2710 = vmul.f32 %v2696, %v2708
        %v2711 = vmul.f32 %v2697, %v2709
        %v2713 = vlaneseq
        %v2714 = vshrl.u32 %v2713, 7
        %v2715 = vsub.s32 0, %v2714
        %v2716 = vrot.slane %v2687, %v2715
        %v2718 = vmul.f32 %v2710, %v2716
        %v2719 = vmul.f32 %v2711, %v2716
        %v2721 = vlaneseq
        %v2722 = vshrl.u32 %v2721, 7
        %v2723 = vsub.s32 0, %v2722
        %v2724 = vrot.slane %v2689, %v2723
        %v2726 = vadd.f32 %v2718, %v2724
        %v2727 = vadd.f32 %v2719, %v2724
        %v2728 = vpack.c.bf16 %v2727, %v2726
        %s2729 = scalar_lea.vmem %s9, 256
        %v2730 = vld [vmem:[%s2729] sm:$0xff]
        %v2731 = vld [vmem:[%s2729 + $0x8] sm:$0xff]
        %v2732 = vld [vmem:[%s2729 + $0x10] sm:$0xff]
        %v2733 = vld [vmem:[%s2729 + $0x18] sm:$0xff]
        %v2734 = vld [vmem:[%s2729 + $0x20] sm:$0xff]
        %v2735 = vld [vmem:[%s2729 + $0x28] sm:$0xff]
        %v2736 = vld [vmem:[%s2729 + $0x30] sm:$0xff]
        %v2737 = vld [vmem:[%s2729 + $0x38] sm:$0xff]
        %v2738 = vld [vmem:[%s2729 + $0x40] sm:$0xff]
        %v2739 = vld [vmem:[%s2729 + $0x48] sm:$0xff]
        %v2740 = vld [vmem:[%s2729 + $0x50] sm:$0xff]
        %v2741 = vld [vmem:[%s2729 + $0x58] sm:$0xff]
        %v2742 = vld [vmem:[%s2729 + $0x60] sm:$0xff]
        %v2743 = vld [vmem:[%s2729 + $0x68] sm:$0xff]
        %v2744 = vld [vmem:[%s2729 + $0x70] sm:$0xff]
        %v2745 = vld [vmem:[%s2729 + $0x78] sm:$0xff]
        %v2746 = vld [vmem:[%s2729 + $0x80] sm:$0xff]
        %v2747 = vld [vmem:[%s2729 + $0x88] sm:$0xff]
        %v2748 = vld [vmem:[%s2729 + $0x90] sm:$0xff]
        %v2749 = vld [vmem:[%s2729 + $0x98] sm:$0xff]
        %v2750 = vld [vmem:[%s2729 + $0xa0] sm:$0xff]
        %v2751 = vld [vmem:[%s2729 + $0xa8] sm:$0xff]
        %v2752 = vld [vmem:[%s2729 + $0xb0] sm:$0xff]
        %v2753 = vld [vmem:[%s2729 + $0xb8] sm:$0xff]
        %v2754 = vld [vmem:[%s2729 + $0xc0] sm:$0xff]
        %v2755 = vld [vmem:[%s2729 + $0xc8] sm:$0xff]
        %v2756 = vld [vmem:[%s2729 + $0xd0] sm:$0xff]
        %v2757 = vld [vmem:[%s2729 + $0xd8] sm:$0xff]
        %v2758 = vld [vmem:[%s2729 + $0xe0] sm:$0xff]
        %v2759 = vld [vmem:[%s2729 + $0xe8] sm:$0xff]
        %v2760 = vld [vmem:[%s2729 + $0xf0] sm:$0xff]
        %v2761 = vld [vmem:[%s2729 + $0xf8] sm:$0xff]
        %s2762 = scalar_lea.vmem %s10, 4
        %v2763 = vld [vmem:[%s2762] sm:$0xf]
        %v2765 = vlaneseq
        %v2766 = vshrl.u32 %v2765, 7
        %v2767 = vsub.s32 0, %v2766
        %v2768 = vrot.slane %v2763, %v2767
        %v2769 = vlaneseq
        %v2770 = vshrl.u32 %v2769, 7
        %v2771 = vsub.s32 1, %v2770
        %v2772 = vrot.slane %v2763, %v2771
        %v2773 = vlaneseq
        %v2774 = vshrl.u32 %v2773, 7
        %v2775 = vsub.s32 2, %v2774
        %v2776 = vrot.slane %v2763, %v2775
        %v2777 = vlaneseq
        %v2778 = vshrl.u32 %v2777, 7
        %v2779 = vsub.s32 3, %v2778
        %v2780 = vrot.slane %v2763, %v2779
        %v2817 = vunpack.c.l.b16 %v2730
        %v2818 = vunpack.c.h.b16 %v2730
        %v2819 = vunpack.c.l.b16 %v2731
        %v2820 = vunpack.c.h.b16 %v2731
        %v2821 = vunpack.c.l.b16 %v2732
        %v2822 = vunpack.c.h.b16 %v2732
        %v2823 = vunpack.c.l.b16 %v2733
        %v2824 = vunpack.c.h.b16 %v2733
        %v2825 = vunpack.c.l.b16 %v2734
        %v2826 = vunpack.c.h.b16 %v2734
        %v2827 = vunpack.c.l.b16 %v2735
        %v2828 = vunpack.c.h.b16 %v2735
        %v2829 = vunpack.c.l.b16 %v2736
        %v2830 = vunpack.c.h.b16 %v2736
        %v2831 = vunpack.c.l.b16 %v2737
        %v2832 = vunpack.c.h.b16 %v2737
        %v2833 = vunpack.c.l.b16 %v2738
        %v2834 = vunpack.c.h.b16 %v2738
        %v2835 = vunpack.c.l.b16 %v2739
        %v2836 = vunpack.c.h.b16 %v2739
        %v2837 = vunpack.c.l.b16 %v2740
        %v2838 = vunpack.c.h.b16 %v2740
        %v2839 = vunpack.c.l.b16 %v2741
        %v2840 = vunpack.c.h.b16 %v2741
        %v2841 = vunpack.c.l.b16 %v2742
        %v2842 = vunpack.c.h.b16 %v2742
        %v2843 = vunpack.c.l.b16 %v2743
        %v2844 = vunpack.c.h.b16 %v2743
        %v2845 = vunpack.c.l.b16 %v2744
        %v2846 = vunpack.c.h.b16 %v2744
        %v2847 = vunpack.c.l.b16 %v2745
        %v2848 = vunpack.c.h.b16 %v2745
        %v2849 = vunpack.c.l.b16 %v2746
        %v2850 = vunpack.c.h.b16 %v2746
        %v2851 = vunpack.c.l.b16 %v2747
        %v2852 = vunpack.c.h.b16 %v2747
        %v2853 = vunpack.c.l.b16 %v2748
        %v2854 = vunpack.c.h.b16 %v2748
        %v2855 = vunpack.c.l.b16 %v2749
        %v2856 = vunpack.c.h.b16 %v2749
        %v2857 = vunpack.c.l.b16 %v2750
        %v2858 = vunpack.c.h.b16 %v2750
        %v2859 = vunpack.c.l.b16 %v2751
        %v2860 = vunpack.c.h.b16 %v2751
        %v2861 = vunpack.c.l.b16 %v2752
        %v2862 = vunpack.c.h.b16 %v2752
        %v2863 = vunpack.c.l.b16 %v2753
        %v2864 = vunpack.c.h.b16 %v2753
        %v2865 = vunpack.c.l.b16 %v2754
        %v2866 = vunpack.c.h.b16 %v2754
        %v2867 = vunpack.c.l.b16 %v2755
        %v2868 = vunpack.c.h.b16 %v2755
        %v2869 = vunpack.c.l.b16 %v2756
        %v2870 = vunpack.c.h.b16 %v2756
        %v2871 = vunpack.c.l.b16 %v2757
        %v2872 = vunpack.c.h.b16 %v2757
        %v2873 = vunpack.c.l.b16 %v2758
        %v2874 = vunpack.c.h.b16 %v2758
        %v2875 = vunpack.c.l.b16 %v2759
        %v2876 = vunpack.c.h.b16 %v2759
        %v2877 = vunpack.c.l.b16 %v2760
        %v2878 = vunpack.c.h.b16 %v2760
        %v2879 = vunpack.c.l.b16 %v2761
        %v2880 = vunpack.c.h.b16 %v2761
        %v2881 = vpack.c.b16 %v2821, %v2817
        %v2882 = vpack.c.b16 %v2822, %v2818
        %v2883 = vpack.c.b16 %v2823, %v2819
        %v2884 = vpack.c.b16 %v2824, %v2820
        %v2885 = vpack.c.b16 %v2829, %v2825
        %v2886 = vpack.c.b16 %v2830, %v2826
        %v2887 = vpack.c.b16 %v2831, %v2827
        %v2888 = vpack.c.b16 %v2832, %v2828
        %v2889 = vpack.c.b16 %v2837, %v2833
        %v2890 = vpack.c.b16 %v2838, %v2834
        %v2891 = vpack.c.b16 %v2839, %v2835
        %v2892 = vpack.c.b16 %v2840, %v2836
        %v2893 = vpack.c.b16 %v2845, %v2841
        %v2894 = vpack.c.b16 %v2846, %v2842
        %v2895 = vpack.c.b16 %v2847, %v2843
        %v2896 = vpack.c.b16 %v2848, %v2844
        %v2897 = vpack.c.b16 %v2853, %v2849
        %v2898 = vpack.c.b16 %v2854, %v2850
        %v2899 = vpack.c.b16 %v2855, %v2851
        %v2900 = vpack.c.b16 %v2856, %v2852
        %v2901 = vpack.c.b16 %v2861, %v2857
        %v2902 = vpack.c.b16 %v2862, %v2858
        %v2903 = vpack.c.b16 %v2863, %v2859
        %v2904 = vpack.c.b16 %v2864, %v2860
        %v2905 = vpack.c.b16 %v2869, %v2865
        %v2906 = vpack.c.b16 %v2870, %v2866
        %v2907 = vpack.c.b16 %v2871, %v2867
        %v2908 = vpack.c.b16 %v2872, %v2868
        %v2909 = vpack.c.b16 %v2877, %v2873
        %v2910 = vpack.c.b16 %v2878, %v2874
        %v2911 = vpack.c.b16 %v2879, %v2875
        %v2912 = vpack.c.b16 %v2880, %v2876
        %2945 = vmatprep.subr.bf16.mxu0 %v2882
        %2946 = vmatpush1.bf16.msra.mxu0 %v2881
        %2947 = vmatprep.subr.bf16.mxu0 %v2886
        %2948 = vmatpush1.bf16.msra.mxu0 %v2885
        %2949 = vmatprep.subr.bf16.mxu0 %v2890
        %2950 = vmatpush1.bf16.msra.mxu0 %v2889
        %2951 = vmatprep.subr.bf16.mxu0 %v2894
        %2952 = vmatpush1.bf16.msra.mxu0 %v2893
        %2953 = vmatprep.subr.bf16.mxu0 %v2898
        %2954 = vmatpush1.bf16.msra.mxu0 %v2897
        %2955 = vmatprep.subr.bf16.mxu0 %v2902
        %2956 = vmatpush1.bf16.msra.mxu0 %v2901
        %2957 = vmatprep.subr.bf16.mxu0 %v2906
        %2958 = vmatpush1.bf16.msra.mxu0 %v2905
        %2959 = vmatprep.subr.bf16.mxu0 %v2910
        %2960 = vmatpush1.bf16.msra.mxu0 %v2909
        %2961 = vmatprep.subr.bf16.mxu0 0
        %2962 = vmatpush1.bf16.msra.mxu0 0
        %2963 = vmatprep.subr.bf16.mxu0 0
        %2964 = vmatpush1.bf16.msra.mxu0 0
        %2965 = vmatprep.subr.bf16.mxu0 0
        %2966 = vmatpush1.bf16.msra.mxu0 0
        %2967 = vmatprep.subr.bf16.mxu0 0
        %2968 = vmatpush1.bf16.msra.mxu0 0
        %2969 = vmatprep.subr.bf16.mxu0 0
        %2970 = vmatpush1.bf16.msra.mxu0 0
        %2971 = vmatprep.subr.bf16.mxu0 0
        %2972 = vmatpush1.bf16.msra.mxu0 0
        %2973 = vmatprep.subr.bf16.mxu0 0
        %2974 = vmatpush1.bf16.msra.mxu0 0
        %2975 = vmatprep.subr.bf16.mxu0 0
        %2976 = vmatpush1.bf16.msra.mxu0 0
        %2977 = vmatprep.mubr.bf16.mxu0 0
        %2978 = vmatmul.mubr.bf16.gmra.mrb[0].mxu0 %v2728
        %v2979 = vpop.f32.mrb[0].mxu0
        %v2980 = vadd.f32 %v2768, %v2979
        %v2981 = vpop.f32.mrb[0].mxu0
        %v2982 = vadd.f32 %v2772, %v2981
        %v2983 = vpop.f32.mrb[0].mxu0
        %v2984 = vadd.f32 %v2768, %v2983
        %v2985 = vpop.f32.mrb[0].mxu0
        %v2986 = vadd.f32 %v2772, %v2985
        %2987 = vdwg.mxu0
        %2988 = vmatprep.subr.bf16.mxu0 %v2884
        %2989 = vmatpush1.bf16.msra.mxu0 %v2883
        %2990 = vmatprep.subr.bf16.mxu0 %v2888
        %2991 = vmatpush1.bf16.msra.mxu0 %v2887
        %2992 = vmatprep.subr.bf16.mxu0 %v2892
        %2993 = vmatpush1.bf16.msra.mxu0 %v2891
        %2994 = vmatprep.subr.bf16.mxu0 %v2896
        %2995 = vmatpush1.bf16.msra.mxu0 %v2895
        %2996 = vmatprep.subr.bf16.mxu0 %v2900
        %2997 = vmatpush1.bf16.msra.mxu0 %v2899
        %2998 = vmatprep.subr.bf16.mxu0 %v2904
        %2999 = vmatpush1.bf16.msra.mxu0 %v2903
        %3000 = vmatprep.subr.bf16.mxu0 %v2908
        %3001 = vmatpush1.bf16.msra.mxu0 %v2907
        %3002 = vmatprep.subr.bf16.mxu0 %v2912
        %3003 = vmatpush1.bf16.msra.mxu0 %v2911
        %3004 = vmatprep.subr.bf16.mxu0 0
        %3005 = vmatpush1.bf16.msra.mxu0 0
        %3006 = vmatprep.subr.bf16.mxu0 0
        %3007 = vmatpush1.bf16.msra.mxu0 0
        %3008 = vmatprep.subr.bf16.mxu0 0
        %3009 = vmatpush1.bf16.msra.mxu0 0
        %3010 = vmatprep.subr.bf16.mxu0 0
        %3011 = vmatpush1.bf16.msra.mxu0 0
        %3012 = vmatprep.subr.bf16.mxu0 0
        %3013 = vmatpush1.bf16.msra.mxu0 0
        %3014 = vmatprep.subr.bf16.mxu0 0
        %3015 = vmatpush1.bf16.msra.mxu0 0
        %3016 = vmatprep.subr.bf16.mxu0 0
        %3017 = vmatpush1.bf16.msra.mxu0 0
        %3018 = vmatprep.subr.bf16.mxu0 0
        %3019 = vmatpush1.bf16.msra.mxu0 0
        %3020 = vmatprep.mubr.bf16.mxu0 0
        %3021 = vmatmul.mubr.bf16.gmra.mrb[0].mxu0 %v2728
        %v3022 = vpop.f32.mrb[0].mxu0
        %v3023 = vadd.f32 %v2776, %v3022
        %v3024 = vpop.f32.mrb[0].mxu0
        %v3025 = vadd.f32 %v2780, %v3024
        %v3026 = vpop.f32.mrb[0].mxu0
        %v3027 = vadd.f32 %v2776, %v3026
        %v3028 = vpop.f32.mrb[0].mxu0
        %v3029 = vadd.f32 %v2780, %v3028
        %3030 = vdwg.mxu0
        %v3031 = vmul.f32 %v2980, 0.5
        %v3032 = vmul.f32 %v2982, 0.5
        %v3033 = vmul.f32 %v3023, 0.5
        %v3034 = vmul.f32 %v3025, 0.5
        %v3035 = vmul.f32 %v2984, 0.5
        %v3036 = vmul.f32 %v2986, 0.5
        %v3037 = vmul.f32 %v3027, 0.5
        %v3038 = vmul.f32 %v3029, 0.5
        %v3039 = vmul.f32 %v2980, 0.70710677
        %v3040 = vmul.f32 %v2982, 0.70710677
        %v3041 = vmul.f32 %v3023, 0.70710677
        %v3042 = vmul.f32 %v3025, 0.70710677
        %v3043 = vmul.f32 %v2984, 0.70710677
        %v3044 = vmul.f32 %v2986, 0.70710677
        %v3045 = vmul.f32 %v3027, 0.70710677
        %v3046 = vmul.f32 %v3029, 0.70710677
        %v3047 = verf.f32.pop %v3039
        %v3048 = verf.f32.pop %v3040
        %v3049 = verf.f32.pop %v3041
        %v3050 = verf.f32.pop %v3042
        %v3051 = verf.f32.pop %v3043
        %v3052 = verf.f32.pop %v3044
        %v3053 = verf.f32.pop %v3045
        %v3054 = verf.f32.pop %v3046
        %v3055 = vadd.f32 %v3047, 1.0
        %v3056 = vadd.f32 %v3048, 1.0
        %v3057 = vadd.f32 %v3049, 1.0
        %v3058 = vadd.f32 %v3050, 1.0
        %v3059 = vadd.f32 %v3051, 1.0
        %v3060 = vadd.f32 %v3052, 1.0
        %v3061 = vadd.f32 %v3053, 1.0
        %v3062 = vadd.f32 %v3054, 1.0
        %v3063 = vmul.f32 %v3031, %v3055
        %v3064 = vmul.f32 %v3032, %v3056
        %v3065 = vmul.f32 %v3033, %v3057
        %v3066 = vmul.f32 %v3034, %v3058
        %v3067 = vmul.f32 %v3035, %v3059
        %v3068 = vmul.f32 %v3036, %v3060
        %v3069 = vmul.f32 %v3037, %v3061
        %v3070 = vmul.f32 %v3038, %v3062
        %v3071 = vpack.c.bf16 %v3067, %v3063
        %v3072 = vpack.c.bf16 %v3068, %v3064
        %v3073 = vpack.c.bf16 %v3069, %v3065
        %v3074 = vpack.c.bf16 %v3070, %v3066
        %s3075 = scalar_lea.vmem %s11, 256
        %v3076 = vld [vmem:[%s3075] sm:$0xf]
        %v3077 = vld [vmem:[%s3075 + $0x4] sm:$0xf]
        %v3078 = vld [vmem:[%s3075 + $0x8] sm:$0xf]
        %v3079 = vld [vmem:[%s3075 + $0xc] sm:$0xf]
        %v3080 = vld [vmem:[%s3075 + $0x10] sm:$0xf]
        %v3081 = vld [vmem:[%s3075 + $0x14] sm:$0xf]
        %v3082 = vld [vmem:[%s3075 + $0x18] sm:$0xf]
        %v3083 = vld [vmem:[%s3075 + $0x1c] sm:$0xf]
        %v3084 = vld [vmem:[%s3075 + $0x20] sm:$0xf]
        %v3085 = vld [vmem:[%s3075 + $0x24] sm:$0xf]
        %v3086 = vld [vmem:[%s3075 + $0x28] sm:$0xf]
        %v3087 = vld [vmem:[%s3075 + $0x2c] sm:$0xf]
        %v3088 = vld [vmem:[%s3075 + $0x30] sm:$0xf]
        %v3089 = vld [vmem:[%s3075 + $0x34] sm:$0xf]
        %v3090 = vld [vmem:[%s3075 + $0x38] sm:$0xf]
        %v3091 = vld [vmem:[%s3075 + $0x3c] sm:$0xf]
        %v3092 = vld [vmem:[%s3075 + $0x40] sm:$0xf]
        %v3093 = vld [vmem:[%s3075 + $0x44] sm:$0xf]
        %v3094 = vld [vmem:[%s3075 + $0x48] sm:$0xf]
        %v3095 = vld [vmem:[%s3075 + $0x4c] sm:$0xf]
        %v3096 = vld [vmem:[%s3075 + $0x50] sm:$0xf]
        %v3097 = vld [vmem:[%s3075 + $0x54] sm:$0xf]
        %v3098 = vld [vmem:[%s3075 + $0x58] sm:$0xf]
        %v3099 = vld [vmem:[%s3075 + $0x5c] sm:$0xf]
        %v3100 = vld [vmem:[%s3075 + $0x60] sm:$0xf]
        %v3101 = vld [vmem:[%s3075 + $0x64] sm:$0xf]
        %v3102 = vld [vmem:[%s3075 + $0x68] sm:$0xf]
        %v3103 = vld [vmem:[%s3075 + $0x6c] sm:$0xf]
        %v3104 = vld [vmem:[%s3075 + $0x70] sm:$0xf]
        %v3105 = vld [vmem:[%s3075 + $0x74] sm:$0xf]
        %v3106 = vld [vmem:[%s3075 + $0x78] sm:$0xf]
        %v3107 = vld [vmem:[%s3075 + $0x7c] sm:$0xf]
        %v3108 = vld [vmem:[%s3075 + $0x80] sm:$0xf]
        %v3109 = vld [vmem:[%s3075 + $0x84] sm:$0xf]
        %v3110 = vld [vmem:[%s3075 + $0x88] sm:$0xf]
        %v3111 = vld [vmem:[%s3075 + $0x8c] sm:$0xf]
        %v3112 = vld [vmem:[%s3075 + $0x90] sm:$0xf]
        %v3113 = vld [vmem:[%s3075 + $0x94] sm:$0xf]
        %v3114 = vld [vmem:[%s3075 + $0x98] sm:$0xf]
        %v3115 = vld [vmem:[%s3075 + $0x9c] sm:$0xf]
        %v3116 = vld [vmem:[%s3075 + $0xa0] sm:$0xf]
        %v3117 = vld [vmem:[%s3075 + $0xa4] sm:$0xf]
        %v3118 = vld [vmem:[%s3075 + $0xa8] sm:$0xf]
        %v3119 = vld [vmem:[%s3075 + $0xac] sm:$0xf]
        %v3120 = vld [vmem:[%s3075 + $0xb0] sm:$0xf]
        %v3121 = vld [vmem:[%s3075 + $0xb4] sm:$0xf]
        %v3122 = vld [vmem:[%s3075 + $0xb8] sm:$0xf]
        %v3123 = vld [vmem:[%s3075 + $0xbc] sm:$0xf]
        %v3124 = vld [vmem:[%s3075 + $0xc0] sm:$0xf]
        %v3125 = vld [vmem:[%s3075 + $0xc4] sm:$0xf]
        %v3126 = vld [vmem:[%s3075 + $0xc8] sm:$0xf]
        %v3127 = vld [vmem:[%s3075 + $0xcc] sm:$0xf]
        %v3128 = vld [vmem:[%s3075 + $0xd0] sm:$0xf]
        %v3129 = vld [vmem:[%s3075 + $0xd4] sm:$0xf]
        %v3130 = vld [vmem:[%s3075 + $0xd8] sm:$0xf]
        %v3131 = vld [vmem:[%s3075 + $0xdc] sm:$0xf]
        %v3132 = vld [vmem:[%s3075 + $0xe0] sm:$0xf]
        %v3133 = vld [vmem:[%s3075 + $0xe4] sm:$0xf]
        %v3134 = vld [vmem:[%s3075 + $0xe8] sm:$0xf]
        %v3135 = vld [vmem:[%s3075 + $0xec] sm:$0xf]
        %v3136 = vld [vmem:[%s3075 + $0xf0] sm:$0xf]
        %v3137 = vld [vmem:[%s3075 + $0xf4] sm:$0xf]
        %v3138 = vld [vmem:[%s3075 + $0xf8] sm:$0xf]
        %v3139 = vld [vmem:[%s3075 + $0xfc] sm:$0xf]
        %s3140 = scalar_lea.vmem %s12, 1
        %v3141 = vld [vmem:[%s3140] sm:$0x1]
        %v3143 = vlaneseq
        %v3144 = vshrl.u32 %v3143, 7
        %v3145 = vsub.s32 0, %v3144
        %v3146 = vrot.slane %v3141, %v3145
        %v3212 = vunpack.c.l.b16 %v3076
        %v3213 = vunpack.c.l.b16 %v3077
        %v3214 = vunpack.c.l.b16 %v3078
        %v3215 = vunpack.c.l.b16 %v3079
        %v3216 = vunpack.c.l.b16 %v3080
        %v3217 = vunpack.c.l.b16 %v3081
        %v3218 = vunpack.c.l.b16 %v3082
        %v3219 = vunpack.c.l.b16 %v3083
        %v3220 = vunpack.c.l.b16 %v3084
        %v3221 = vunpack.c.l.b16 %v3085
        %v3222 = vunpack.c.l.b16 %v3086
        %v3223 = vunpack.c.l.b16 %v3087
        %v3224 = vunpack.c.l.b16 %v3088
        %v3225 = vunpack.c.l.b16 %v3089
        %v3226 = vunpack.c.l.b16 %v3090
        %v3227 = vunpack.c.l.b16 %v3091
        %v3228 = vunpack.c.l.b16 %v3092
        %v3229 = vunpack.c.l.b16 %v3093
        %v3230 = vunpack.c.l.b16 %v3094
        %v3231 = vunpack.c.l.b16 %v3095
        %v3232 = vunpack.c.l.b16 %v3096
        %v3233 = vunpack.c.l.b16 %v3097
        %v3234 = vunpack.c.l.b16 %v3098
        %v3235 = vunpack.c.l.b16 %v3099
        %v3236 = vunpack.c.l.b16 %v3100
        %v3237 = vunpack.c.l.b16 %v3101
        %v3238 = vunpack.c.l.b16 %v3102
        %v3239 = vunpack.c.l.b16 %v3103
        %v3240 = vunpack.c.l.b16 %v3104
        %v3241 = vunpack.c.l.b16 %v3105
        %v3242 = vunpack.c.l.b16 %v3106
        %v3243 = vunpack.c.l.b16 %v3107
        %v3244 = vunpack.c.l.b16 %v3108
        %v3245 = vunpack.c.l.b16 %v3109
        %v3246 = vunpack.c.l.b16 %v3110
        %v3247 = vunpack.c.l.b16 %v3111
        %v3248 = vunpack.c.l.b16 %v3112
        %v3249 = vunpack.c.l.b16 %v3113
        %v3250 = vunpack.c.l.b16 %v3114
        %v3251 = vunpack.c.l.b16 %v3115
        %v3252 = vunpack.c.l.b16 %v3116
        %v3253 = vunpack.c.l.b16 %v3117
        %v3254 = vunpack.c.l.b16 %v3118
        %v3255 = vunpack.c.l.b16 %v3119
        %v3256 = vunpack.c.l.b16 %v3120
        %v3257 = vunpack.c.l.b16 %v3121
        %v3258 = vunpack.c.l.b16 %v3122
        %v3259 = vunpack.c.l.b16 %v3123
        %v3260 = vunpack.c.l.b16 %v3124
        %v3261 = vunpack.c.l.b16 %v3125
        %v3262 = vunpack.c.l.b16 %v3126
        %v3263 = vunpack.c.l.b16 %v3127
        %v3264 = vunpack.c.l.b16 %v3128
        %v3265 = vunpack.c.l.b16 %v3129
        %v3266 = vunpack.c.l.b16 %v3130
        %v3267 = vunpack.c.l.b16 %v3131
        %v3268 = vunpack.c.l.b16 %v3132
        %v3269 = vunpack.c.l.b16 %v3133
        %v3270 = vunpack.c.l.b16 %v3134
        %v3271 = vunpack.c.l.b16 %v3135
        %v3272 = vunpack.c.l.b16 %v3136
        %v3273 = vunpack.c.l.b16 %v3137
        %v3274 = vunpack.c.l.b16 %v3138
        %v3275 = vunpack.c.l.b16 %v3139
        %v3276 = vpack.c.b16 %v3213, %v3212
        %v3277 = vpack.c.b16 %v3215, %v3214
        %v3278 = vpack.c.b16 %v3217, %v3216
        %v3279 = vpack.c.b16 %v3219, %v3218
        %v3280 = vpack.c.b16 %v3221, %v3220
        %v3281 = vpack.c.b16 %v3223, %v3222
        %v3282 = vpack.c.b16 %v3225, %v3224
        %v3283 = vpack.c.b16 %v3227, %v3226
        %v3284 = vpack.c.b16 %v3229, %v3228
        %v3285 = vpack.c.b16 %v3231, %v3230
        %v3286 = vpack.c.b16 %v3233, %v3232
        %v3287 = vpack.c.b16 %v3235, %v3234
        %v3288 = vpack.c.b16 %v3237, %v3236
        %v3289 = vpack.c.b16 %v3239, %v3238
        %v3290 = vpack.c.b16 %v3241, %v3240
        %v3291 = vpack.c.b16 %v3243, %v3242
        %v3292 = vpack.c.b16 %v3245, %v3244
        %v3293 = vpack.c.b16 %v3247, %v3246
        %v3294 = vpack.c.b16 %v3249, %v3248
        %v3295 = vpack.c.b16 %v3251, %v3250
        %v3296 = vpack.c.b16 %v3253, %v3252
        %v3297 = vpack.c.b16 %v3255, %v3254
        %v3298 = vpack.c.b16 %v3257, %v3256
        %v3299 = vpack.c.b16 %v3259, %v3258
        %v3300 = vpack.c.b16 %v3261, %v3260
        %v3301 = vpack.c.b16 %v3263, %v3262
        %v3302 = vpack.c.b16 %v3265, %v3264
        %v3303 = vpack.c.b16 %v3267, %v3266
        %v3304 = vpack.c.b16 %v3269, %v3268
        %v3305 = vpack.c.b16 %v3271, %v3270
        %v3306 = vpack.c.b16 %v3273, %v3272
        %v3307 = vpack.c.b16 %v3275, %v3274
        %3340 = vmatprep.subr.bf16.mxu0 0
        %3341 = vmatpush1.bf16.msra.mxu0 %v3276
        %3342 = vmatprep.subr.bf16.mxu0 0
        %3343 = vmatpush1.bf16.msra.mxu0 %v3277
        %3344 = vmatprep.subr.bf16.mxu0 0
        %3345 = vmatpush1.bf16.msra.mxu0 %v3278
        %3346 = vmatprep.subr.bf16.mxu0 0
        %3347 = vmatpush1.bf16.msra.mxu0 %v3279
        %3348 = vmatprep.subr.bf16.mxu0 0
        %3349 = vmatpush1.bf16.msra.mxu0 %v3280
        %3350 = vmatprep.subr.bf16.mxu0 0
        %3351 = vmatpush1.bf16.msra.mxu0 %v3281
        %3352 = vmatprep.subr.bf16.mxu0 0
        %3353 = vmatpush1.bf16.msra.mxu0 %v3282
        %3354 = vmatprep.subr.bf16.mxu0 0
        %3355 = vmatpush1.bf16.msra.mxu0 %v3283
        %3356 = vmatprep.subr.bf16.mxu0 0
        %3357 = vmatpush1.bf16.msra.mxu0 %v3284
        %3358 = vmatprep.subr.bf16.mxu0 0
        %3359 = vmatpush1.bf16.msra.mxu0 %v3285
        %3360 = vmatprep.subr.bf16.mxu0 0
        %3361 = vmatpush1.bf16.msra.mxu0 %v3286
        %3362 = vmatprep.subr.bf16.mxu0 0
        %3363 = vmatpush1.bf16.msra.mxu0 %v3287
        %3364 = vmatprep.subr.bf16.mxu0 0
        %3365 = vmatpush1.bf16.msra.mxu0 %v3288
        %3366 = vmatprep.subr.bf16.mxu0 0
        %3367 = vmatpush1.bf16.msra.mxu0 %v3289
        %3368 = vmatprep.subr.bf16.mxu0 0
        %3369 = vmatpush1.bf16.msra.mxu0 %v3290
        %3370 = vmatprep.subr.bf16.mxu0 0
        %3371 = vmatpush1.bf16.msra.mxu0 %v3291
        %3372 = vmatprep.mubr.bf16.mxu0 %v3072
        %3373 = vmatmul.mubr.bf16.gmra.mrb[0].mxu0 %v3071
        %v3374 = vpop.f32.mrb[0].mxu0
        %v3375 = vadd.f32 %v3146, %v3374
        %v3376 = vpop.f32.mrb[0].mxu0
        %v3377 = vpop.f32.mrb[0].mxu0
        %v3378 = vadd.f32 %v3146, %v3377
        %v3379 = vpop.f32.mrb[0].mxu0
        %3380 = vdwg.mxu0
        %3381 = vmatprep.subr.bf16.mxu0 0
        %3382 = vmatpush1.bf16.msra.mxu0 %v3292
        %3383 = vmatprep.subr.bf16.mxu0 0
        %3384 = vmatpush1.bf16.msra.mxu0 %v3293
        %3385 = vmatprep.subr.bf16.mxu0 0
        %3386 = vmatpush1.bf16.msra.mxu0 %v3294
        %3387 = vmatprep.subr.bf16.mxu0 0
        %3388 = vmatpush1.bf16.msra.mxu0 %v3295
        %3389 = vmatprep.subr.bf16.mxu0 0
        %3390 = vmatpush1.bf16.msra.mxu0 %v3296
        %3391 = vmatprep.subr.bf16.mxu0 0
        %3392 = vmatpush1.bf16.msra.mxu0 %v3297
        %3393 = vmatprep.subr.bf16.mxu0 0
        %3394 = vmatpush1.bf16.msra.mxu0 %v3298
        %3395 = vmatprep.subr.bf16.mxu0 0
        %3396 = vmatpush1.bf16.msra.mxu0 %v3299
        %3397 = vmatprep.subr.bf16.mxu0 0
        %3398 = vmatpush1.bf16.msra.mxu0 %v3300
        %3399 = vmatprep.subr.bf16.mxu0 0
        %3400 = vmatpush1.bf16.msra.mxu0 %v3301
        %3401 = vmatprep.subr.bf16.mxu0 0
        %3402 = vmatpush1.bf16.msra.mxu0 %v3302
        %3403 = vmatprep.subr.bf16.mxu0 0
        %3404 = vmatpush1.bf16.msra.mxu0 %v3303
        %3405 = vmatprep.subr.bf16.mxu0 0
        %3406 = vmatpush1.bf16.msra.mxu0 %v3304
        %3407 = vmatprep.subr.bf16.mxu0 0
        %3408 = vmatpush1.bf16.msra.mxu0 %v3305
        %3409 = vmatprep.subr.bf16.mxu0 0
        %3410 = vmatpush1.bf16.msra.mxu0 %v3306
        %3411 = vmatprep.subr.bf16.mxu0 0
        %3412 = vmatpush1.bf16.msra.mxu0 %v3307
        %3413 = vmatprep.mubr.bf16.mxu0 %v3074
        %3414 = vmatmul.mubr.bf16.gmra.mrb[0].mxu0 %v3073
        %v3415 = vpop.f32.mrb[0].mxu0
        %v3416 = vadd.f32 %v3375, %v3415
        %v3417 = vpop.f32.mrb[0].mxu0
        %v3418 = vpop.f32.mrb[0].mxu0
        %v3419 = vadd.f32 %v3378, %v3418
        %v3420 = vpop.f32.mrb[0].mxu0
        %3421 = vdwg.mxu0
        %v3422 = vadd.f32 %v2684, %v3416
        %v3423 = vadd.f32 %v2685, %v3419
        %v3424 = vpack.c.bf16 %v3423, %v3422
        %s3425 = scalar_lea.vmem %s1, 384
        %v3426 = vld [vmem:[%s3425] sm:$0xff]
        %v3427 = vld [vmem:[%s3425 + $0x8] sm:$0xf]
        %v3428 = vld [vmem:[%s3425 + $0xc] sm:$0xff]
        %v3429 = vld [vmem:[%s3425 + $0x14] sm:$0xf]
        %v3430 = vld [vmem:[%s3425 + $0x18] sm:$0xff]
        %v3431 = vld [vmem:[%s3425 + $0x20] sm:$0xf]
        %v3432 = vld [vmem:[%s3425 + $0x24] sm:$0xff]
        %v3433 = vld [vmem:[%s3425 + $0x2c] sm:$0xf]
        %v3434 = vld [vmem:[%s3425 + $0x30] sm:$0xff]
        %v3435 = vld [vmem:[%s3425 + $0x38] sm:$0xf]
        %v3436 = vld [vmem:[%s3425 + $0x3c] sm:$0xff]
        %v3437 = vld [vmem:[%s3425 + $0x44] sm:$0xf]
        %v3438 = vld [vmem:[%s3425 + $0x48] sm:$0xff]
        %v3439 = vld [vmem:[%s3425 + $0x50] sm:$0xf]
        %v3440 = vld [vmem:[%s3425 + $0x54] sm:$0xff]
        %v3441 = vld [vmem:[%s3425 + $0x5c] sm:$0xf]
        %v3442 = vld [vmem:[%s3425 + $0x60] sm:$0xff]
        %v3443 = vld [vmem:[%s3425 + $0x68] sm:$0xf]
        %v3444 = vld [vmem:[%s3425 + $0x6c] sm:$0xff]
        %v3445 = vld [vmem:[%s3425 + $0x74] sm:$0xf]
        %v3446 = vld [vmem:[%s3425 + $0x78] sm:$0xff]
        %v3447 = vld [vmem:[%s3425 + $0x80] sm:$0xf]
        %v3448 = vld [vmem:[%s3425 + $0x84] sm:$0xff]
        %v3449 = vld [vmem:[%s3425 + $0x8c] sm:$0xf]
        %v3450 = vld [vmem:[%s3425 + $0x90] sm:$0xff]
        %v3451 = vld [vmem:[%s3425 + $0x98] sm:$0xf]
        %v3452 = vld [vmem:[%s3425 + $0x9c] sm:$0xff]
        %v3453 = vld [vmem:[%s3425 + $0xa4] sm:$0xf]
        %v3454 = vld [vmem:[%s3425 + $0xa8] sm:$0xff]
        %v3455 = vld [vmem:[%s3425 + $0xb0] sm:$0xf]
        %v3456 = vld [vmem:[%s3425 + $0xb4] sm:$0xff]
        %v3457 = vld [vmem:[%s3425 + $0xbc] sm:$0xf]
        %s3458 = scalar_lea.vmem %s2, 6
        %v3459 = vld [vmem:[%s3458] sm:$0x7]
        %v3461 = vlaneseq
        %v3462 = vshrl.u32 %v3461, 7
        %v3463 = vsub.s32 0, %v3462
        %v3464 = vrot.slane %v3459, %v3463
        %v3465 = vlaneseq
        %v3466 = vshrl.u32 %v3465, 7
        %v3467 = vsub.s32 1, %v3466
        %v3468 = vrot.slane %v3459, %v3467
        %v3469 = vlaneseq
        %v3470 = vshrl.u32 %v3469, 7
        %v3471 = vsub.s32 2, %v3470
        %v3472 = vrot.slane %v3459, %v3471
        %v3508 = vunpack.c.l.b16 %v3426
        %v3509 = vunpack.c.h.b16 %v3426
        %v3510 = vunpack.c.l.b16 %v3427
        %v3511 = vunpack.c.l.b16 %v3428
        %v3512 = vunpack.c.h.b16 %v3428
        %v3513 = vunpack.c.l.b16 %v3429
        %v3514 = vunpack.c.l.b16 %v3430
        %v3515 = vunpack.c.h.b16 %v3430
        %v3516 = vunpack.c.l.b16 %v3431
        %v3517 = vunpack.c.l.b16 %v3432
        %v3518 = vunpack.c.h.b16 %v3432
        %v3519 = vunpack.c.l.b16 %v3433
        %v3520 = vunpack.c.l.b16 %v3434
        %v3521 = vunpack.c.h.b16 %v3434
        %v3522 = vunpack.c.l.b16 %v3435
        %v3523 = vunpack.c.l.b16 %v3436
        %v3524 = vunpack.c.h.b16 %v3436
        %v3525 = vunpack.c.l.b16 %v3437
        %v3526 = vunpack.c.l.b16 %v3438
        %v3527 = vunpack.c.h.b16 %v3438
        %v3528 = vunpack.c.l.b16 %v3439
        %v3529 = vunpack.c.l.b16 %v3440
        %v3530 = vunpack.c.h.b16 %v3440
        %v3531 = vunpack.c.l.b16 %v3441
        %v3532 = vunpack.c.l.b16 %v3442
        %v3533 = vunpack.c.h.b16 %v3442
        %v3534 = vunpack.c.l.b16 %v3443
        %v3535 = vunpack.c.l.b16 %v3444
        %v3536 = vunpack.c.h.b16 %v3444
        %v3537 = vunpack.c.l.b16 %v3445
        %v3538 = vunpack.c.l.b16 %v3446
        %v3539 = vunpack.c.h.b16 %v3446
        %v3540 = vunpack.c.l.b16 %v3447
        %v3541 = vunpack.c.l.b16 %v3448
        %v3542 = vunpack.c.h.b16 %v3448
        %v3543 = vunpack.c.l.b16 %v3449
        %v3544 = vunpack.c.l.b16 %v3450
        %v3545 = vunpack.c.h.b16 %v3450
        %v3546 = vunpack.c.l.b16 %v3451
        %v3547 = vunpack.c.l.b16 %v3452
        %v3548 = vunpack.c.h.b16 %v3452
        %v3549 = vunpack.c.l.b16 %v3453
        %v3550 = vunpack.c.l.b16 %v3454
        %v3551 = vunpack.c.h.b16 %v3454
        %v3552 = vunpack.c.l.b16 %v3455
        %v3553 = vunpack.c.l.b16 %v3456
        %v3554 = vunpack.c.h.b16 %v3456
        %v3555 = vunpack.c.l.b16 %v3457
        %v3556 = vpack.c.b16 %v3511, %v3508
        %v3557 = vpack.c.b16 %v3512, %v3509
        %v3558 = vpack.c.b16 %v3513, %v3510
        %v3559 = vpack.c.b16 %v3517, %v3514
        %v3560 = vpack.c.b16 %v3518, %v3515
        %v3561 = vpack.c.b16 %v3519, %v3516
        %v3562 = vpack.c.b16 %v3523, %v3520
        %v3563 = vpack.c.b16 %v3524, %v3521
        %v3564 = vpack.c.b16 %v3525, %v3522
        %v3565 = vpack.c.b16 %v3529, %v3526
        %v3566 = vpack.c.b16 %v3530, %v3527
        %v3567 = vpack.c.b16 %v3531, %v3528
        %v3568 = vpack.c.b16 %v3535, %v3532
        %v3569 = vpack.c.b16 %v3536, %v3533
        %v3570 = vpack.c.b16 %v3537, %v3534
        %v3571 = vpack.c.b16 %v3541, %v3538
        %v3572 = vpack.c.b16 %v3542, %v3539
        %v3573 = vpack.c.b16 %v3543, %v3540
        %v3574 = vpack.c.b16 %v3547, %v3544
        %v3575 = vpack.c.b16 %v3548, %v3545
        %v3576 = vpack.c.b16 %v3549, %v3546
        %v3577 = vpack.c.b16 %v3553, %v3550
        %v3578 = vpack.c.b16 %v3554, %v3551
        %v3579 = vpack.c.b16 %v3555, %v3552
        %3604 = vmatprep.subr.bf16.mxu0 %v3557
        %3605 = vmatpush1.bf16.msra.mxu0 %v3556
        %3606 = vmatprep.subr.bf16.mxu0 %v3560
        %3607 = vmatpush1.bf16.msra.mxu0 %v3559
        %3608 = vmatprep.subr.bf16.mxu0 %v3563
        %3609 = vmatpush1.bf16.msra.mxu0 %v3562
        %3610 = vmatprep.subr.bf16.mxu0 %v3566
        %3611 = vmatpush1.bf16.msra.mxu0 %v3565
        %3612 = vmatprep.subr.bf16.mxu0 %v3569
        %3613 = vmatpush1.bf16.msra.mxu0 %v3568
        %3614 = vmatprep.subr.bf16.mxu0 %v3572
        %3615 = vmatpush1.bf16.msra.mxu0 %v3571
        %3616 = vmatprep.subr.bf16.mxu0 %v3575
        %3617 = vmatpush1.bf16.msra.mxu0 %v3574
        %3618 = vmatprep.subr.bf16.mxu0 %v3578
        %3619 = vmatpush1.bf16.msra.mxu0 %v3577
        %3620 = vmatprep.subr.bf16.mxu0 0
        %3621 = vmatpush1.bf16.msra.mxu0 0
        %3622 = vmatprep.subr.bf16.mxu0 0
        %3623 = vmatpush1.bf16.msra.mxu0 0
        %3624 = vmatprep.subr.bf16.mxu0 0
        %3625 = vmatpush1.bf16.msra.mxu0 0
        %3626 = vmatprep.subr.bf16.mxu0 0
        %3627 = vmatpush1.bf16.msra.mxu0 0
        %3628 = vmatprep.subr.bf16.mxu0 0
        %3629 = vmatpush1.bf16.msra.mxu0 0
        %3630 = vmatprep.subr.bf16.mxu0 0
        %3631 = vmatpush1.bf16.msra.mxu0 0
        %3632 = vmatprep.subr.bf16.mxu0 0
        %3633 = vmatpush1.bf16.msra.mxu0 0
        %3634 = vmatprep.subr.bf16.mxu0 0
        %3635 = vmatpush1.bf16.msra.mxu0 0
        %3636 = vmatprep.mubr.bf16.mxu0 0
        %3637 = vmatmul.mubr.bf16.gmra.mrb[0].mxu0 %v3424
        %v3638 = vpop.f32.mrb[0].mxu0
        %v3639 = vadd.f32 %v3464, %v3638
        %v3640 = vpop.f32.mrb[0].mxu0
        %v3641 = vadd.f32 %v3468, %v3640
        %v3642 = vpop.f32.mrb[0].mxu0
        %v3643 = vadd.f32 %v3464, %v3642
        %v3644 = vpop.f32.mrb[0].mxu0
        %v3645 = vadd.f32 %v3468, %v3644
        %3646 = vdwg.mxu0
        %3647 = vmatprep.subr.bf16.mxu0 0
        %3648 = vmatpush1.bf16.msra.mxu0 %v3558
        %3649 = vmatprep.subr.bf16.mxu0 0
        %3650 = vmatpush1.bf16.msra.mxu0 %v3561
        %3651 = vmatprep.subr.bf16.mxu0 0
        %3652 = vmatpush1.bf16.msra.mxu0 %v3564
        %3653 = vmatprep.subr.bf16.mxu0 0
        %3654 = vmatpush1.bf16.msra.mxu0 %v3567
        %3655 = vmatprep.subr.bf16.mxu0 0
        %3656 = vmatpush1.bf16.msra.mxu0 %v3570
        %3657 = vmatprep.subr.bf16.mxu0 0
        %3658 = vmatpush1.bf16.msra.mxu0 %v3573
        %3659 = vmatprep.subr.bf16.mxu0 0
        %3660 = vmatpush1.bf16.msra.mxu0 %v3576
        %3661 = vmatprep.subr.bf16.mxu0 0
        %3662 = vmatpush1.bf16.msra.mxu0 %v3579
        %3663 = vmatprep.subr.bf16.mxu0 0
        %3664 = vmatpush1.bf16.msra.mxu0 0
        %3665 = vmatprep.subr.bf16.mxu0 0
        %3666 = vmatpush1.bf16.msra.mxu0 0
        %3667 = vmatprep.subr.bf16.mxu0 0
        %3668 = vmatpush1.bf16.msra.mxu0 0
        %3669 = vmatprep.subr.bf16.mxu0 0
        %3670 = vmatpush1.bf16.msra.mxu0 0
        %3671 = vmatprep.subr.bf16.mxu0 0
        %3672 = vmatpush1.bf16.msra.mxu0 0
        %3673 = vmatprep.subr.bf16.mxu0 0
        %3674 = vmatpush1.bf16.msra.mxu0 0
        %3675 = vmatprep.subr.bf16.mxu0 0
        %3676 = vmatpush1.bf16.msra.mxu0 0
        %3677 = vmatprep.subr.bf16.mxu0 0
        %3678 = vmatpush1.bf16.msra.mxu0 0
        %3679 = vmatprep.mubr.bf16.mxu0 0
        %3680 = vmatmul.mubr.bf16.gmra.mrb[0].mxu0 %v3424
        %v3681 = vpop.f32.mrb[0].mxu0
        %v3682 = vadd.f32 %v3472, %v3681
        %v3683 = vpop.f32.mrb[0].mxu0
        %v3684 = vpop.f32.mrb[0].mxu0
        %v3685 = vadd.f32 %v3472, %v3684
        %v3686 = vpop.f32.mrb[0].mxu0
        %3687 = vdwg.mxu0
        %v3688 = vpack.c.bf16 %v3643, %v3639
        %v3689 = vpack.c.bf16 %v3645, %v3641
        %3690 = vmatprep.subr.bf16.mxu0 0
        %3691 = vmatpush1.bf16.xpose.msra.mxu0 %v3689
        %3692 = vmatprep.subr.bf16.mxu0 0
        %3693 = vmatpush1.bf16.xpose.msra.mxu0 0
        %3694 = vmatprep.subr.bf16.mxu0 0
        %3695 = vmatpush1.bf16.xpose.msra.mxu0 0
        %3696 = vmatprep.subr.bf16.mxu0 0
        %3697 = vmatpush1.bf16.xpose.msra.mxu0 0
        %3698 = vmatprep.subr.bf16.mxu0 0
        %3699 = vmatpush1.bf16.xpose.msra.mxu0 0
        %3700 = vmatprep.subr.bf16.mxu0 0
        %3701 = vmatpush1.bf16.xpose.msra.mxu0 0
        %3702 = vmatprep.subr.bf16.mxu0 0
        %3703 = vmatpush1.bf16.xpose.msra.mxu0 0
        %3704 = vmatprep.subr.bf16.mxu0 0
        %3705 = vmatpush1.bf16.xpose.msra.mxu0 0
        %3706 = vmatprep.subr.bf16.mxu0 0
        %3707 = vmatpush1.bf16.xpose.msra.mxu0 0
        %3708 = vmatprep.subr.bf16.mxu0 0
        %3709 = vmatpush1.bf16.xpose.msra.mxu0 0
        %3710 = vmatprep.subr.bf16.mxu0 0
        %3711 = vmatpush1.bf16.xpose.msra.mxu0 0
        %3712 = vmatprep.subr.bf16.mxu0 0
        %3713 = vmatpush1.bf16.xpose.msra.mxu0 0
        %3714 = vmatprep.subr.bf16.mxu0 0
        %3715 = vmatpush1.bf16.xpose.msra.mxu0 0
        %3716 = vmatprep.subr.bf16.mxu0 0
        %3717 = vmatpush1.bf16.xpose.msra.mxu0 0
        %3718 = vmatprep.subr.bf16.mxu0 0
        %3719 = vmatpush1.bf16.xpose.msra.mxu0 0
        %3720 = vmatprep.subr.bf16.mxu0 0
        %3721 = vmatpush1.bf16.xpose.msra.mxu0 0
        %3722 = vmatprep.mubr.bf16.mxu0 0
        %3723 = vmatmul.mubr.bf16.gmra.mrb[0].mxu0 %v3688
        %v3724 = vpop.f32.mrb[0].mxu0
        %v3725 = vadd.f32 0.0, %v3724
        %v3726 = vpop.f32.mrb[0].mxu0
        %v3727 = vpop.f32.mrb[0].mxu0
        %v3728 = vadd.f32 0.0, %v3727
        %v3729 = vpop.f32.mrb[0].mxu0
        %3730 = vdwg.mxu0
        %v3731 = vsel %vm747, %v3725, -inf
        %3732 = vmax.xlane.f32.xlu0 %v3731
        %v3733 = vpop.xlane.xlu0 %3732
        %v3734 = vsel %vm747, %v3728, -inf
        %3735 = vmax.xlane.f32.xlu0 %v3734
        %v3736 = vpop.xlane.xlu0 %3735
        %v3737 = vsub.f32 %v3725, %v3733
        %v3738 = vsub.f32 %v3728, %v3736
        %v3739 = vmul.f32 %v3737, 1.442695
        %v3740 = vpow.pop %v3739
        %v3741 = vmul.f32 %v3738, 1.442695
        %v3742 = vpow.pop %v3741
        %v3743 = vsel %vm747, %v3740, 0.0
        %3744 = vadd.xlane.f32.xlu0 %v3743
        %v3745 = vpop.xlane.xlu0 %3744
        %v3746 = vsel %vm747, %v3742, 0.0
        %3747 = vadd.xlane.f32.xlu0 %v3746
        %v3748 = vpop.xlane.xlu0 %3747
        %v3749 = vrcp.pop %v3745
        %v3750 = vrcp.pop %v3748
        %v3751 = vmul.f32 %v3740, %v3749
        %v3752 = vmul.f32 %v3742, %v3750
        %v3753 = vpack.c.bf16 %v3685, %v3682
        %v3754 = vpack.c.bf16 %v3752, %v3751
        %3755 = vxpose.xlu0.c.b16.start [1/8] %v3753, 128
        %3756 = vxpose.xlu0.c.b16.cont [2/8] 0, 128
        %3757 = vxpose.xlu0.c.b16.cont [3/8] 0, 128
        %3758 = vxpose.xlu0.c.b16.cont [4/8] 0, 128
        %3759 = vxpose.xlu0.c.b16.cont [5/8] 0, 128
        %3760 = vxpose.xlu0.c.b16.cont [6/8] 0, 128
        %3761 = vxpose.xlu0.c.b16.cont [7/8] 0, 128
        %3762 = vxpose.xlu0.c.b16.end [8/8] 0, 128
        %v3763 = vpop.trf.xlu0
        %v3764 = vpop.trf.xlu0
        %v3765 = vpop.trf.xlu0
        %v3766 = vpop.trf.xlu0
        %v3767 = vpop.trf.xlu0
        %v3768 = vpop.trf.xlu0
        %v3769 = vpop.trf.xlu0
        %v3770 = vpop.trf.xlu0
        %v3772 = vsel %vm747, %v3763, 0
        %v3775 = vsel %vm747, %v3764, 0
        %v3778 = vsel %vm747, %v3765, 0
        %v3781 = vsel %vm747, %v3766, 0
        %v3784 = vsel %vm747, %v3767, 0
        %v3787 = vsel %vm747, %v3768, 0
        %v3790 = vsel %vm747, %v3769, 0
        %v3793 = vsel %vm747, %v3770, 0
        %v3796 = vsel %vm747, %v3754, 0
        %3798 = vmatprep.subr.bf16.mxu0 0
        %3799 = vmatpush1.bf16.xpose.msra.mxu0 %v3796
        %3800 = vmatprep.subr.bf16.mxu0 0
        %3801 = vmatpush1.bf16.xpose.msra.mxu0 0
        %3802 = vmatprep.subr.bf16.mxu0 0
        %3803 = vmatpush1.bf16.xpose.msra.mxu0 0
        %3804 = vmatprep.subr.bf16.mxu0 0
        %3805 = vmatpush1.bf16.xpose.msra.mxu0 0
        %3806 = vmatprep.subr.bf16.mxu0 0
        %3807 = vmatpush1.bf16.xpose.msra.mxu0 0
        %3808 = vmatprep.subr.bf16.mxu0 0
        %3809 = vmatpush1.bf16.xpose.msra.mxu0 0
        %3810 = vmatprep.subr.bf16.mxu0 0
        %3811 = vmatpush1.bf16.xpose.msra.mxu0 0
        %3812 = vmatprep.subr.bf16.mxu0 0
        %3813 = vmatpush1.bf16.xpose.msra.mxu0 0
        %3814 = vmatprep.subr.bf16.mxu0 0
        %3815 = vmatpush1.bf16.xpose.msra.mxu0 0
        %3816 = vmatprep.subr.bf16.mxu0 0
        %3817 = vmatpush1.bf16.xpose.msra.mxu0 0
        %3818 = vmatprep.subr.bf16.mxu0 0
        %3819 = vmatpush1.bf16.xpose.msra.mxu0 0
        %3820 = vmatprep.subr.bf16.mxu0 0
        %3821 = vmatpush1.bf16.xpose.msra.mxu0 0
        %3822 = vmatprep.subr.bf16.mxu0 0
        %3823 = vmatpush1.bf16.xpose.msra.mxu0 0
        %3824 = vmatprep.subr.bf16.mxu0 0
        %3825 = vmatpush1.bf16.xpose.msra.mxu0 0
        %3826 = vmatprep.subr.bf16.mxu0 0
        %3827 = vmatpush1.bf16.xpose.msra.mxu0 0
        %3828 = vmatprep.subr.bf16.mxu0 0
        %3829 = vmatpush1.bf16.xpose.msra.mxu0 0
        %3830 = vmatprep.mubr.bf16.mxu0 0
        %3831 = vmatmul.mubr.bf16.gmra.mrb[0].mxu0 %v3772
        %v3832 = vpop.f32.mrb[0].mxu0
        %v3833 = vadd.f32 0.0, %v3832
        %v3834 = vpop.f32.mrb[0].mxu0
        %v3835 = vpop.f32.mrb[0].mxu0
        %v3836 = vadd.f32 0.0, %v3835
        %v3837 = vpop.f32.mrb[0].mxu0
        %3838 = vmatprep.mubr.bf16.mxu0 0
        %3839 = vmatmul.mubr.bf16.gmra.mrb[0].mxu0 %v3775
        %v3840 = vpop.f32.mrb[0].mxu0
        %v3841 = vadd.f32 0.0, %v3840
        %v3842 = vpop.f32.mrb[0].mxu0
        %v3843 = vpop.f32.mrb[0].mxu0
        %v3844 = vadd.f32 0.0, %v3843
        %v3845 = vpop.f32.mrb[0].mxu0
        %3846 = vmatprep.mubr.bf16.mxu0 0
        %3847 = vmatmul.mubr.bf16.gmra.mrb[0].mxu0 %v3778
        %v3848 = vpop.f32.mrb[0].mxu0
        %v3849 = vadd.f32 0.0, %v3848
        %v3850 = vpop.f32.mrb[0].mxu0
        %v3851 = vpop.f32.mrb[0].mxu0
        %v3852 = vadd.f32 0.0, %v3851
        %v3853 = vpop.f32.mrb[0].mxu0
        %3854 = vmatprep.mubr.bf16.mxu0 0
        %3855 = vmatmul.mubr.bf16.gmra.mrb[0].mxu0 %v3781
        %v3856 = vpop.f32.mrb[0].mxu0
        %v3857 = vadd.f32 0.0, %v3856
        %v3858 = vpop.f32.mrb[0].mxu0
        %v3859 = vpop.f32.mrb[0].mxu0
        %v3860 = vadd.f32 0.0, %v3859
        %v3861 = vpop.f32.mrb[0].mxu0
        %3862 = vmatprep.mubr.bf16.mxu0 0
        %3863 = vmatmul.mubr.bf16.gmra.mrb[0].mxu0 %v3784
        %v3864 = vpop.f32.mrb[0].mxu0
        %v3865 = vadd.f32 0.0, %v3864
        %v3866 = vpop.f32.mrb[0].mxu0
        %v3867 = vpop.f32.mrb[0].mxu0
        %v3868 = vadd.f32 0.0, %v3867
        %v3869 = vpop.f32.mrb[0].mxu0
        %3870 = vmatprep.mubr.bf16.mxu0 0
        %3871 = vmatmul.mubr.bf16.gmra.mrb[0].mxu0 %v3787
        %v3872 = vpop.f32.mrb[0].mxu0
        %v3873 = vadd.f32 0.0, %v3872
        %v3874 = vpop.f32.mrb[0].mxu0
        %v3875 = vpop.f32.mrb[0].mxu0
        %v3876 = vadd.f32 0.0, %v3875
        %v3877 = vpop.f32.mrb[0].mxu0
        %3878 = vmatprep.mubr.bf16.mxu0 0
        %3879 = vmatmul.mubr.bf16.gmra.mrb[0].mxu0 %v3790
        %v3880 = vpop.f32.mrb[0].mxu0
        %v3881 = vadd.f32 0.0, %v3880
        %v3882 = vpop.f32.mrb[0].mxu0
        %v3883 = vpop.f32.mrb[0].mxu0
        %v3884 = vadd.f32 0.0, %v3883
        %v3885 = vpop.f32.mrb[0].mxu0
        %3886 = vmatprep.mubr.bf16.mxu0 0
        %3887 = vmatmul.mubr.bf16.gmra.mrb[0].mxu0 %v3793
        %v3888 = vpop.f32.mrb[0].mxu0
        %v3889 = vadd.f32 0.0, %v3888
        %v3890 = vpop.f32.mrb[0].mxu0
        %v3891 = vpop.f32.mrb[0].mxu0
        %v3892 = vadd.f32 0.0, %v3891
        %v3893 = vpop.f32.mrb[0].mxu0
        %3894 = vdwg.mxu0
        %3895 = vst.msk [vmem:[#allocation2] sm:$0xff] %vm747, %v3833
        %3896 = vst.msk [vmem:[#allocation2 + $0x8] sm:$0xff] %vm747, %v3836
        %3897 = vst.msk [vmem:[#allocation2 + $0x10] sm:$0xff] %vm747, %v3841
        %3898 = vst.msk [vmem:[#allocation2 + $0x18] sm:$0xff] %vm747, %v3844
        %3899 = vst.msk [vmem:[#allocation2 + $0x20] sm:$0xff] %vm747, %v3849
        %3900 = vst.msk [vmem:[#allocation2 + $0x28] sm:$0xff] %vm747, %v3852
        %3901 = vst.msk [vmem:[#allocation2 + $0x30] sm:$0xff] %vm747, %v3857
        %3902 = vst.msk [vmem:[#allocation2 + $0x38] sm:$0xff] %vm747, %v3860
        %3903 = vst.msk [vmem:[#allocation2 + $0x40] sm:$0xff] %vm747, %v3865
        %3904 = vst.msk [vmem:[#allocation2 + $0x48] sm:$0xff] %vm747, %v3868
        %3905 = vst.msk [vmem:[#allocation2 + $0x50] sm:$0xff] %vm747, %v3873
        %3906 = vst.msk [vmem:[#allocation2 + $0x58] sm:$0xff] %vm747, %v3876
        %3907 = vst.msk [vmem:[#allocation2 + $0x60] sm:$0xff] %vm747, %v3881
        %3908 = vst.msk [vmem:[#allocation2 + $0x68] sm:$0xff] %vm747, %v3884
        %3909 = vst.msk [vmem:[#allocation2 + $0x70] sm:$0xff] %vm747, %v3889
        %3910 = vst.msk [vmem:[#allocation2 + $0x78] sm:$0xff] %vm747, %v3892
        %v3911 = vld [vmem:[#allocation2] ss:$8 sm:$0xf]
        %v3912 = vld [vmem:[#allocation2] ss:$8 sm:$0xf0]
        %v3913 = vor.u32 %v3911, %v3912
        %v3914 = vld [vmem:[%s931] ss:$8 sm:$0xf]
        %v3915 = vld [vmem:[%s931] ss:$8 sm:$0xf0]
        %v3916 = vor.u32 %v3914, %v3915
        %3917 = vst.msk [vmem:[#allocation3] sm:$0xff] %vm747, %v3913
        %3918 = vst.msk [vmem:[#allocation3 + $0x8] sm:$0xff] %vm747, %v3916
        %v3919 = vld [vmem:[%s937] ss:$8 sm:$0xf]
        %v3920 = vld [vmem:[%s937] ss:$8 sm:$0xf0]
        %v3921 = vor.u32 %v3919, %v3920
        %v3922 = vld [vmem:[%s941] ss:$8 sm:$0xf]
        %v3923 = vld [vmem:[%s941] ss:$8 sm:$0xf0]
        %v3924 = vor.u32 %v3922, %v3923
        %3927 = vrot.lane.b32.xlu0 %v3921, 16
        %v3928 = vpop.permute.xlu0 %3927
        %3929 = vrot.lane.b32.xlu0 %v3924, 16
        %v3930 = vpop.permute.xlu0 %3929
        %3933 = vst.msk [vmem:[#allocation3] sm:$0xff] %vm953, %v3928
        %3934 = vst.msk [vmem:[#allocation3 + $0x8] sm:$0xff] %vm953, %v3930
        %v3935 = vld [vmem:[%s956] ss:$8 sm:$0xf]
        %v3936 = vld [vmem:[%s956] ss:$8 sm:$0xf0]
        %v3937 = vor.u32 %v3935, %v3936
        %v3938 = vld [vmem:[%s960] ss:$8 sm:$0xf]
        %v3939 = vld [vmem:[%s960] ss:$8 sm:$0xf0]
        %v3940 = vor.u32 %v3938, %v3939
        %3943 = vrot.lane.b32.xlu0 %v3937, 32
        %v3944 = vpop.permute.xlu0 %3943
        %3945 = vrot.lane.b32.xlu0 %v3940, 32
        %v3946 = vpop.permute.xlu0 %3945
        %3949 = vst.msk [vmem:[#allocation3] sm:$0xff] %vm972, %v3944
        %3950 = vst.msk [vmem:[#allocation3 + $0x8] sm:$0xff] %vm972, %v3946
        %v3951 = vld [vmem:[%s975] ss:$8 sm:$0xf]
        %v3952 = vld [vmem:[%s975] ss:$8 sm:$0xf0]
        %v3953 = vor.u32 %v3951, %v3952
        %v3954 = vld [vmem:[%s979] ss:$8 sm:$0xf]
        %v3955 = vld [vmem:[%s979] ss:$8 sm:$0xf0]
        %v3956 = vor.u32 %v3954, %v3955
        %3959 = vrot.lane.b32.xlu0 %v3953, 48
        %v3960 = vpop.permute.xlu0 %3959
        %3961 = vrot.lane.b32.xlu0 %v3956, 48
        %v3962 = vpop.permute.xlu0 %3961
        %3965 = vst.msk [vmem:[#allocation3] sm:$0xff] %vm991, %v3960
        %3966 = vst.msk [vmem:[#allocation3 + $0x8] sm:$0xff] %vm991, %v3962
        %v3967 = vld [vmem:[%s994] ss:$8 sm:$0xf]
        %v3968 = vld [vmem:[%s994] ss:$8 sm:$0xf0]
        %v3969 = vor.u32 %v3967, %v3968
        %v3970 = vld [vmem:[%s998] ss:$8 sm:$0xf]
        %v3971 = vld [vmem:[%s998] ss:$8 sm:$0xf0]
        %v3972 = vor.u32 %v3970, %v3971
        %3975 = vrot.lane.b32.xlu0 %v3969, 64
        %v3976 = vpop.permute.xlu0 %3975
        %3977 = vrot.lane.b32.xlu0 %v3972, 64
        %v3978 = vpop.permute.xlu0 %3977
        %3981 = vst.msk [vmem:[#allocation3] sm:$0xff] %vm1010, %v3976
        %3982 = vst.msk [vmem:[#allocation3 + $0x8] sm:$0xff] %vm1010, %v3978
        %v3983 = vld [vmem:[%s1013] ss:$8 sm:$0xf]
        %v3984 = vld [vmem:[%s1013] ss:$8 sm:$0xf0]
        %v3985 = vor.u32 %v3983, %v3984
        %v3986 = vld [vmem:[%s1017] ss:$8 sm:$0xf]
        %v3987 = vld [vmem:[%s1017] ss:$8 sm:$0xf0]
        %v3988 = vor.u32 %v3986, %v3987
        %3991 = vrot.lane.b32.xlu0 %v3985, 80
        %v3992 = vpop.permute.xlu0 %3991
        %3993 = vrot.lane.b32.xlu0 %v3988, 80
        %v3994 = vpop.permute.xlu0 %3993
        %3997 = vst.msk [vmem:[#allocation3] sm:$0xff] %vm1029, %v3992
        %3998 = vst.msk [vmem:[#allocation3 + $0x8] sm:$0xff] %vm1029, %v3994
        %v3999 = vld [vmem:[%s1032] ss:$8 sm:$0xf]
        %v4000 = vld [vmem:[%s1032] ss:$8 sm:$0xf0]
        %v4001 = vor.u32 %v3999, %v4000
        %v4002 = vld [vmem:[%s1036] ss:$8 sm:$0xf]
        %v4003 = vld [vmem:[%s1036] ss:$8 sm:$0xf0]
        %v4004 = vor.u32 %v4002, %v4003
        %4007 = vrot.lane.b32.xlu0 %v4001, 96
        %v4008 = vpop.permute.xlu0 %4007
        %4009 = vrot.lane.b32.xlu0 %v4004, 96
        %v4010 = vpop.permute.xlu0 %4009
        %4013 = vst.msk [vmem:[#allocation3] sm:$0xff] %vm1048, %v4008
        %4014 = vst.msk [vmem:[#allocation3 + $0x8] sm:$0xff] %vm1048, %v4010
        %v4015 = vld [vmem:[%s1051] ss:$8 sm:$0xf]
        %v4016 = vld [vmem:[%s1051] ss:$8 sm:$0xf0]
        %v4017 = vor.u32 %v4015, %v4016
        %v4018 = vld [vmem:[%s1055] ss:$8 sm:$0xf]
        %v4019 = vld [vmem:[%s1055] ss:$8 sm:$0xf0]
        %v4020 = vor.u32 %v4018, %v4019
        %4023 = vrot.lane.b32.xlu0 %v4017, 112
        %v4024 = vpop.permute.xlu0 %4023
        %4025 = vrot.lane.b32.xlu0 %v4020, 112
        %v4026 = vpop.permute.xlu0 %4025
        %4029 = vst.msk [vmem:[#allocation3] sm:$0xff] %vm1067, %v4024
        %4030 = vst.msk [vmem:[#allocation3 + $0x8] sm:$0xff] %vm1067, %v4026
        %v4031 = vld [vmem:[#allocation3] sm:$0xff]
        %v4032 = vld [vmem:[#allocation3 + $0x8] sm:$0xff]
        %v4033 = vpack.c.bf16 %v4032, %v4031
        %s4034 = scalar_lea.vmem %s3, 128
        %v4035 = vld [vmem:[%s4034] sm:$0xf]
        %v4036 = vld [vmem:[%s4034 + $0x4] sm:$0xf]
        %v4037 = vld [vmem:[%s4034 + $0x8] sm:$0xf]
        %v4038 = vld [vmem:[%s4034 + $0xc] sm:$0xf]
        %v4039 = vld [vmem:[%s4034 + $0x10] sm:$0xf]
        %v4040 = vld [vmem:[%s4034 + $0x14] sm:$0xf]
        %v4041 = vld [vmem:[%s4034 + $0x18] sm:$0xf]
        %v4042 = vld [vmem:[%s4034 + $0x1c] sm:$0xf]
        %v4043 = vld [vmem:[%s4034 + $0x20] sm:$0xf]
        %v4044 = vld [vmem:[%s4034 + $0x24] sm:$0xf]
        %v4045 = vld [vmem:[%s4034 + $0x28] sm:$0xf]
        %v4046 = vld [vmem:[%s4034 + $0x2c] sm:$0xf]
        %v4047 = vld [vmem:[%s4034 + $0x30] sm:$0xf]
        %v4048 = vld [vmem:[%s4034 + $0x34] sm:$0xf]
        %v4049 = vld [vmem:[%s4034 + $0x38] sm:$0xf]
        %v4050 = vld [vmem:[%s4034 + $0x3c] sm:$0xf]
        %s4051 = scalar_lea.vmem %s4, 2
        %v4052 = vld [vmem:[%s4051] sm:$0x1]
        %v4054 = vlaneseq
        %v4055 = vshrl.u32 %v4054, 7
        %v4056 = vsub.s32 0, %v4055
        %v4057 = vrot.slane %v4052, %v4056
        %v4075 = vunpack.c.l.b16 %v4035
        %v4076 = vunpack.c.l.b16 %v4036
        %v4077 = vunpack.c.l.b16 %v4037
        %v4078 = vunpack.c.l.b16 %v4038
        %v4079 = vunpack.c.l.b16 %v4039
        %v4080 = vunpack.c.l.b16 %v4040
        %v4081 = vunpack.c.l.b16 %v4041
        %v4082 = vunpack.c.l.b16 %v4042
        %v4083 = vunpack.c.l.b16 %v4043
        %v4084 = vunpack.c.l.b16 %v4044
        %v4085 = vunpack.c.l.b16 %v4045
        %v4086 = vunpack.c.l.b16 %v4046
        %v4087 = vunpack.c.l.b16 %v4047
        %v4088 = vunpack.c.l.b16 %v4048
        %v4089 = vunpack.c.l.b16 %v4049
        %v4090 = vunpack.c.l.b16 %v4050
        %v4091 = vpack.c.b16 %v4076, %v4075
        %v4092 = vpack.c.b16 %v4078, %v4077
        %v4093 = vpack.c.b16 %v4080, %v4079
        %v4094 = vpack.c.b16 %v4082, %v4081
        %v4095 = vpack.c.b16 %v4084, %v4083
        %v4096 = vpack.c.b16 %v4086, %v4085
        %v4097 = vpack.c.b16 %v4088, %v4087
        %v4098 = vpack.c.b16 %v4090, %v4089
        %4107 = vmatprep.subr.bf16.mxu0 0
        %4108 = vmatpush1.bf16.msra.mxu0 %v4091
        %4109 = vmatprep.subr.bf16.mxu0 0
        %4110 = vmatpush1.bf16.msra.mxu0 %v4092
        %4111 = vmatprep.subr.bf16.mxu0 0
        %4112 = vmatpush1.bf16.msra.mxu0 %v4093
        %4113 = vmatprep.subr.bf16.mxu0 0
        %4114 = vmatpush1.bf16.msra.mxu0 %v4094
        %4115 = vmatprep.subr.bf16.mxu0 0
        %4116 = vmatpush1.bf16.msra.mxu0 %v4095
        %4117 = vmatprep.subr.bf16.mxu0 0
        %4118 = vmatpush1.bf16.msra.mxu0 %v4096
        %4119 = vmatprep.subr.bf16.mxu0 0
        %4120 = vmatpush1.bf16.msra.mxu0 %v4097
        %4121 = vmatprep.subr.bf16.mxu0 0
        %4122 = vmatpush1.bf16.msra.mxu0 %v4098
        %4123 = vmatprep.subr.bf16.mxu0 0
        %4124 = vmatpush1.bf16.msra.mxu0 0
        %4125 = vmatprep.subr.bf16.mxu0 0
        %4126 = vmatpush1.bf16.msra.mxu0 0
        %4127 = vmatprep.subr.bf16.mxu0 0
        %4128 = vmatpush1.bf16.msra.mxu0 0
        %4129 = vmatprep.subr.bf16.mxu0 0
        %4130 = vmatpush1.bf16.msra.mxu0 0
        %4131 = vmatprep.subr.bf16.mxu0 0
        %4132 = vmatpush1.bf16.msra.mxu0 0
        %4133 = vmatprep.subr.bf16.mxu0 0
        %4134 = vmatpush1.bf16.msra.mxu0 0
        %4135 = vmatprep.subr.bf16.mxu0 0
        %4136 = vmatpush1.bf16.msra.mxu0 0
        %4137 = vmatprep.subr.bf16.mxu0 0
        %4138 = vmatpush1.bf16.msra.mxu0 0
        %4139 = vmatprep.mubr.bf16.mxu0 0
        %4140 = vmatmul.mubr.bf16.gmra.mrb[0].mxu0 %v4033
        %v4141 = vpop.f32.mrb[0].mxu0
        %v4142 = vadd.f32 %v4057, %v4141
        %v4143 = vpop.f32.mrb[0].mxu0
        %v4144 = vpop.f32.mrb[0].mxu0
        %v4145 = vadd.f32 %v4057, %v4144
        %v4146 = vpop.f32.mrb[0].mxu0
        %4147 = vdwg.mxu0
        %v4148 = vadd.f32 %v3422, %v4142
        %v4149 = vadd.f32 %v3423, %v4145
        %s4150 = scalar_lea.vmem %s7, 2
        %v4151 = vld [vmem:[%s4150] sm:$0x1]
        %s4152 = scalar_lea.vmem %s8, 2
        %v4153 = vld [vmem:[%s4152] sm:$0x1]
        %4154 = vadd.xlane.f32.xlu0 %v4148
        %v4155 = vpop.xlane.xlu0 %4154
        %4156 = vadd.xlane.f32.xlu0 %v4149
        %v4157 = vpop.xlane.xlu0 %4156
        %v4158 = vmul.f32 %v4155, %v1193
        %v4159 = vmul.f32 %v4157, %v1193
        %v4160 = vsub.f32 %v4148, %v4158
        %v4161 = vsub.f32 %v4149, %v4159
        %v4162 = vmul.f32 %v4160, %v4160
        %v4163 = vmul.f32 %v4161, %v4161
        %4164 = vadd.xlane.f32.xlu0 %v4162
        %v4165 = vpop.xlane.xlu0 %4164
        %4166 = vadd.xlane.f32.xlu0 %v4163
        %v4167 = vpop.xlane.xlu0 %4166
        %v4168 = vmul.f32 %v4165, %v1193
        %v4169 = vmul.f32 %v4167, %v1193
        %v4170 = vadd.f32 %v4168, 1e-05
        %v4171 = vadd.f32 %v4169, 1e-05
        %v4172 = vrsqrt.pop %v4170
        %v4173 = vrsqrt.pop %v4171
        %v4174 = vmul.f32 %v4160, %v4172
        %v4175 = vmul.f32 %v4161, %v4173
        %v4177 = vlaneseq
        %v4178 = vshrl.u32 %v4177, 7
        %v4179 = vsub.s32 0, %v4178
        %v4180 = vrot.slane %v4151, %v4179
        %v4182 = vmul.f32 %v4174, %v4180
        %v4183 = vmul.f32 %v4175, %v4180
        %v4185 = vlaneseq
        %v4186 = vshrl.u32 %v4185, 7
        %v4187 = vsub.s32 0, %v4186
        %v4188 = vrot.slane %v4153, %v4187
        %v4190 = vadd.f32 %v4182, %v4188
        %v4191 = vadd.f32 %v4183, %v4188
        %v4192 = vpack.c.bf16 %v4191, %v4190
        %s4193 = scalar_lea.vmem %s9, 512
        %v4194 = vld [vmem:[%s4193] sm:$0xff]
        %v4195 = vld [vmem:[%s4193 + $0x8] sm:$0xff]
        %v4196 = vld [vmem:[%s4193 + $0x10] sm:$0xff]
        %v4197 = vld [vmem:[%s4193 + $0x18] sm:$0xff]
        %v4198 = vld [vmem:[%s4193 + $0x20] sm:$0xff]
        %v4199 = vld [vmem:[%s4193 + $0x28] sm:$0xff]
        %v4200 = vld [vmem:[%s4193 + $0x30] sm:$0xff]
        %v4201 = vld [vmem:[%s4193 + $0x38] sm:$0xff]
        %v4202 = vld [vmem:[%s4193 + $0x40] sm:$0xff]
        %v4203 = vld [vmem:[%s4193 + $0x48] sm:$0xff]
        %v4204 = vld [vmem:[%s4193 + $0x50] sm:$0xff]
        %v4205 = vld [vmem:[%s4193 + $0x58] sm:$0xff]
        %v4206 = vld [vmem:[%s4193 + $0x60] sm:$0xff]
        %v4207 = vld [vmem:[%s4193 + $0x68] sm:$0xff]
        %v4208 = vld [vmem:[%s4193 + $0x70] sm:$0xff]
        %v4209 = vld [vmem:[%s4193 + $0x78] sm:$0xff]
        %v4210 = vld [vmem:[%s4193 + $0x80] sm:$0xff]
        %v4211 = vld [vmem:[%s4193 + $0x88] sm:$0xff]
        %v4212 = vld [vmem:[%s4193 + $0x90] sm:$0xff]
        %v4213 = vld [vmem:[%s4193 + $0x98] sm:$0xff]
        %v4214 = vld [vmem:[%s4193 + $0xa0] sm:$0xff]
        %v4215 = vld [vmem:[%s4193 + $0xa8] sm:$0xff]
        %v4216 = vld [vmem:[%s4193 + $0xb0] sm:$0xff]
        %v4217 = vld [vmem:[%s4193 + $0xb8] sm:$0xff]
        %v4218 = vld [vmem:[%s4193 + $0xc0] sm:$0xff]
        %v4219 = vld [vmem:[%s4193 + $0xc8] sm:$0xff]
        %v4220 = vld [vmem:[%s4193 + $0xd0] sm:$0xff]
        %v4221 = vld [vmem:[%s4193 + $0xd8] sm:$0xff]
        %v4222 = vld [vmem:[%s4193 + $0xe0] sm:$0xff]
        %v4223 = vld [vmem:[%s4193 + $0xe8] sm:$0xff]
        %v4224 = vld [vmem:[%s4193 + $0xf0] sm:$0xff]
        %v4225 = vld [vmem:[%s4193 + $0xf8] sm:$0xff]
        %s4226 = scalar_lea.vmem %s10, 8
        %v4227 = vld [vmem:[%s4226] sm:$0xf]
        %v4229 = vlaneseq
        %v4230 = vshrl.u32 %v4229, 7
        %v4231 = vsub.s32 0, %v4230
        %v4232 = vrot.slane %v4227, %v4231
        %v4233 = vlaneseq
        %v4234 = vshrl.u32 %v4233, 7
        %v4235 = vsub.s32 1, %v4234
        %v4236 = vrot.slane %v4227, %v4235
        %v4237 = vlaneseq
        %v4238 = vshrl.u32 %v4237, 7
        %v4239 = vsub.s32 2, %v4238
        %v4240 = vrot.slane %v4227, %v4239
        %v4241 = vlaneseq
        %v4242 = vshrl.u32 %v4241, 7
        %v4243 = vsub.s32 3, %v4242
        %v4244 = vrot.slane %v4227, %v4243
        %v4281 = vunpack.c.l.b16 %v4194
        %v4282 = vunpack.c.h.b16 %v4194
        %v4283 = vunpack.c.l.b16 %v4195
        %v4284 = vunpack.c.h.b16 %v4195
        %v4285 = vunpack.c.l.b16 %v4196
        %v4286 = vunpack.c.h.b16 %v4196
        %v4287 = vunpack.c.l.b16 %v4197
        %v4288 = vunpack.c.h.b16 %v4197
        %v4289 = vunpack.c.l.b16 %v4198
        %v4290 = vunpack.c.h.b16 %v4198
        %v4291 = vunpack.c.l.b16 %v4199
        %v4292 = vunpack.c.h.b16 %v4199
        %v4293 = vunpack.c.l.b16 %v4200
        %v4294 = vunpack.c.h.b16 %v4200
        %v4295 = vunpack.c.l.b16 %v4201
        %v4296 = vunpack.c.h.b16 %v4201
        %v4297 = vunpack.c.l.b16 %v4202
        %v4298 = vunpack.c.h.b16 %v4202
        %v4299 = vunpack.c.l.b16 %v4203
        %v4300 = vunpack.c.h.b16 %v4203
        %v4301 = vunpack.c.l.b16 %v4204
        %v4302 = vunpack.c.h.b16 %v4204
        %v4303 = vunpack.c.l.b16 %v4205
        %v4304 = vunpack.c.h.b16 %v4205
        %v4305 = vunpack.c.l.b16 %v4206
        %v4306 = vunpack.c.h.b16 %v4206
        %v4307 = vunpack.c.l.b16 %v4207
        %v4308 = vunpack.c.h.b16 %v4207
        %v4309 = vunpack.c.l.b16 %v4208
        %v4310 = vunpack.c.h.b16 %v4208
        %v4311 = vunpack.c.l.b16 %v4209
        %v4312 = vunpack.c.h.b16 %v4209
        %v4313 = vunpack.c.l.b16 %v4210
        %v4314 = vunpack.c.h.b16 %v4210
        %v4315 = vunpack.c.l.b16 %v4211
        %v4316 = vunpack.c.h.b16 %v4211
        %v4317 = vunpack.c.l.b16 %v4212
        %v4318 = vunpack.c.h.b16 %v4212
        %v4319 = vunpack.c.l.b16 %v4213
        %v4320 = vunpack.c.h.b16 %v4213
        %v4321 = vunpack.c.l.b16 %v4214
        %v4322 = vunpack.c.h.b16 %v4214
        %v4323 = vunpack.c.l.b16 %v4215
        %v4324 = vunpack.c.h.b16 %v4215
        %v4325 = vunpack.c.l.b16 %v4216
        %v4326 = vunpack.c.h.b16 %v4216
        %v4327 = vunpack.c.l.b16 %v4217
        %v4328 = vunpack.c.h.b16 %v4217
        %v4329 = vunpack.c.l.b16 %v4218
        %v4330 = vunpack.c.h.b16 %v4218
        %v4331 = vunpack.c.l.b16 %v4219
        %v4332 = vunpack.c.h.b16 %v4219
        %v4333 = vunpack.c.l.b16 %v4220
        %v4334 = vunpack.c.h.b16 %v4220
        %v4335 = vunpack.c.l.b16 %v4221
        %v4336 = vunpack.c.h.b16 %v4221
        %v4337 = vunpack.c.l.b16 %v4222
        %v4338 = vunpack.c.h.b16 %v4222
        %v4339 = vunpack.c.l.b16 %v4223
        %v4340 = vunpack.c.h.b16 %v4223
        %v4341 = vunpack.c.l.b16 %v4224
        %v4342 = vunpack.c.h.b16 %v4224
        %v4343 = vunpack.c.l.b16 %v4225
        %v4344 = vunpack.c.h.b16 %v4225
        %v4345 = vpack.c.b16 %v4285, %v4281
        %v4346 = vpack.c.b16 %v4286, %v4282
        %v4347 = vpack.c.b16 %v4287, %v4283
        %v4348 = vpack.c.b16 %v4288, %v4284
        %v4349 = vpack.c.b16 %v4293, %v4289
        %v4350 = vpack.c.b16 %v4294, %v4290
        %v4351 = vpack.c.b16 %v4295, %v4291
        %v4352 = vpack.c.b16 %v4296, %v4292
        %v4353 = vpack.c.b16 %v4301, %v4297
        %v4354 = vpack.c.b16 %v4302, %v4298
        %v4355 = vpack.c.b16 %v4303, %v4299
        %v4356 = vpack.c.b16 %v4304, %v4300
        %v4357 = vpack.c.b16 %v4309, %v4305
        %v4358 = vpack.c.b16 %v4310, %v4306
        %v4359 = vpack.c.b16 %v4311, %v4307
        %v4360 = vpack.c.b16 %v4312, %v4308
        %v4361 = vpack.c.b16 %v4317, %v4313
        %v4362 = vpack.c.b16 %v4318, %v4314
        %v4363 = vpack.c.b16 %v4319, %v4315
        %v4364 = vpack.c.b16 %v4320, %v4316
        %v4365 = vpack.c.b16 %v4325, %v4321
        %v4366 = vpack.c.b16 %v4326, %v4322
        %v4367 = vpack.c.b16 %v4327, %v4323
        %v4368 = vpack.c.b16 %v4328, %v4324
        %v4369 = vpack.c.b16 %v4333, %v4329
        %v4370 = vpack.c.b16 %v4334, %v4330
        %v4371 = vpack.c.b16 %v4335, %v4331
        %v4372 = vpack.c.b16 %v4336, %v4332
        %v4373 = vpack.c.b16 %v4341, %v4337
        %v4374 = vpack.c.b16 %v4342, %v4338
        %v4375 = vpack.c.b16 %v4343, %v4339
        %v4376 = vpack.c.b16 %v4344, %v4340
        %4409 = vmatprep.subr.bf16.mxu0 %v4346
        %4410 = vmatpush1.bf16.msra.mxu0 %v4345
        %4411 = vmatprep.subr.bf16.mxu0 %v4350
        %4412 = vmatpush1.bf16.msra.mxu0 %v4349
        %4413 = vmatprep.subr.bf16.mxu0 %v4354
        %4414 = vmatpush1.bf16.msra.mxu0 %v4353
        %4415 = vmatprep.subr.bf16.mxu0 %v4358
        %4416 = vmatpush1.bf16.msra.mxu0 %v4357
        %4417 = vmatprep.subr.bf16.mxu0 %v4362
        %4418 = vmatpush1.bf16.msra.mxu0 %v4361
        %4419 = vmatprep.subr.bf16.mxu0 %v4366
        %4420 = vmatpush1.bf16.msra.mxu0 %v4365
        %4421 = vmatprep.subr.bf16.mxu0 %v4370
        %4422 = vmatpush1.bf16.msra.mxu0 %v4369
        %4423 = vmatprep.subr.bf16.mxu0 %v4374
        %4424 = vmatpush1.bf16.msra.mxu0 %v4373
        %4425 = vmatprep.subr.bf16.mxu0 0
        %4426 = vmatpush1.bf16.msra.mxu0 0
        %4427 = vmatprep.subr.bf16.mxu0 0
        %4428 = vmatpush1.bf16.msra.mxu0 0
        %4429 = vmatprep.subr.bf16.mxu0 0
        %4430 = vmatpush1.bf16.msra.mxu0 0
        %4431 = vmatprep.subr.bf16.mxu0 0
        %4432 = vmatpush1.bf16.msra.mxu0 0
        %4433 = vmatprep.subr.bf16.mxu0 0
        %4434 = vmatpush1.bf16.msra.mxu0 0
        %4435 = vmatprep.subr.bf16.mxu0 0
        %4436 = vmatpush1.bf16.msra.mxu0 0
        %4437 = vmatprep.subr.bf16.mxu0 0
        %4438 = vmatpush1.bf16.msra.mxu0 0
        %4439 = vmatprep.subr.bf16.mxu0 0
        %4440 = vmatpush1.bf16.msra.mxu0 0
        %4441 = vmatprep.mubr.bf16.mxu0 0
        %4442 = vmatmul.mubr.bf16.gmra.mrb[0].mxu0 %v4192
        %v4443 = vpop.f32.mrb[0].mxu0
        %v4444 = vadd.f32 %v4232, %v4443
        %v4445 = vpop.f32.mrb[0].mxu0
        %v4446 = vadd.f32 %v4236, %v4445
        %v4447 = vpop.f32.mrb[0].mxu0
        %v4448 = vadd.f32 %v4232, %v4447
        %v4449 = vpop.f32.mrb[0].mxu0
        %v4450 = vadd.f32 %v4236, %v4449
        %4451 = vdwg.mxu0
        %4452 = vmatprep.subr.bf16.mxu0 %v4348
        %4453 = vmatpush1.bf16.msra.mxu0 %v4347
        %4454 = vmatprep.subr.bf16.mxu0 %v4352
        %4455 = vmatpush1.bf16.msra.mxu0 %v4351
        %4456 = vmatprep.subr.bf16.mxu0 %v4356
        %4457 = vmatpush1.bf16.msra.mxu0 %v4355
        %4458 = vmatprep.subr.bf16.mxu0 %v4360
        %4459 = vmatpush1.bf16.msra.mxu0 %v4359
        %4460 = vmatprep.subr.bf16.mxu0 %v4364
        %4461 = vmatpush1.bf16.msra.mxu0 %v4363
        %4462 = vmatprep.subr.bf16.mxu0 %v4368
        %4463 = vmatpush1.bf16.msra.mxu0 %v4367
        %4464 = vmatprep.subr.bf16.mxu0 %v4372
        %4465 = vmatpush1.bf16.msra.mxu0 %v4371
        %4466 = vmatprep.subr.bf16.mxu0 %v4376
        %4467 = vmatpush1.bf16.msra.mxu0 %v4375
        %4468 = vmatprep.subr.bf16.mxu0 0
        %4469 = vmatpush1.bf16.msra.mxu0 0
        %4470 = vmatprep.subr.bf16.mxu0 0
        %4471 = vmatpush1.bf16.msra.mxu0 0
        %4472 = vmatprep.subr.bf16.mxu0 0
        %4473 = vmatpush1.bf16.msra.mxu0 0
        %4474 = vmatprep.subr.bf16.mxu0 0
        %4475 = vmatpush1.bf16.msra.mxu0 0
        %4476 = vmatprep.subr.bf16.mxu0 0
        %4477 = vmatpush1.bf16.msra.mxu0 0
        %4478 = vmatprep.subr.bf16.mxu0 0
        %4479 = vmatpush1.bf16.msra.mxu0 0
        %4480 = vmatprep.subr.bf16.mxu0 0
        %4481 = vmatpush1.bf16.msra.mxu0 0
        %4482 = vmatprep.subr.bf16.mxu0 0
        %4483 = vmatpush1.bf16.msra.mxu0 0
        %4484 = vmatprep.mubr.bf16.mxu0 0
        %4485 = vmatmul.mubr.bf16.gmra.mrb[0].mxu0 %v4192
        %v4486 = vpop.f32.mrb[0].mxu0
        %v4487 = vadd.f32 %v4240, %v4486
        %v4488 = vpop.f32.mrb[0].mxu0
        %v4489 = vadd.f32 %v4244, %v4488
        %v4490 = vpop.f32.mrb[0].mxu0
        %v4491 = vadd.f32 %v4240, %v4490
        %v4492 = vpop.f32.mrb[0].mxu0
        %v4493 = vadd.f32 %v4244, %v4492
        %4494 = vdwg.mxu0
        %v4495 = vmul.f32 %v4444, 0.5
        %v4496 = vmul.f32 %v4446, 0.5
        %v4497 = vmul.f32 %v4487, 0.5
        %v4498 = vmul.f32 %v4489, 0.5
        %v4499 = vmul.f32 %v4448, 0.5
        %v4500 = vmul.f32 %v4450, 0.5
        %v4501 = vmul.f32 %v4491, 0.5
        %v4502 = vmul.f32 %v4493, 0.5
        %v4503 = vmul.f32 %v4444, 0.70710677
        %v4504 = vmul.f32 %v4446, 0.70710677
        %v4505 = vmul.f32 %v4487, 0.70710677
        %v4506 = vmul.f32 %v4489, 0.70710677
        %v4507 = vmul.f32 %v4448, 0.70710677
        %v4508 = vmul.f32 %v4450, 0.70710677
        %v4509 = vmul.f32 %v4491, 0.70710677
        %v4510 = vmul.f32 %v4493, 0.70710677
        %v4511 = verf.f32.pop %v4503
        %v4512 = verf.f32.pop %v4504
        %v4513 = verf.f32.pop %v4505
        %v4514 = verf.f32.pop %v4506
        %v4515 = verf.f32.pop %v4507
        %v4516 = verf.f32.pop %v4508
        %v4517 = verf.f32.pop %v4509
        %v4518 = verf.f32.pop %v4510
        %v4519 = vadd.f32 %v4511, 1.0
        %v4520 = vadd.f32 %v4512, 1.0
        %v4521 = vadd.f32 %v4513, 1.0
        %v4522 = vadd.f32 %v4514, 1.0
        %v4523 = vadd.f32 %v4515, 1.0
        %v4524 = vadd.f32 %v4516, 1.0
        %v4525 = vadd.f32 %v4517, 1.0
        %v4526 = vadd.f32 %v4518, 1.0
        %v4527 = vmul.f32 %v4495, %v4519
        %v4528 = vmul.f32 %v4496, %v4520
        %v4529 = vmul.f32 %v4497, %v4521
        %v4530 = vmul.f32 %v4498, %v4522
        %v4531 = vmul.f32 %v4499, %v4523
        %v4532 = vmul.f32 %v4500, %v4524
        %v4533 = vmul.f32 %v4501, %v4525
        %v4534 = vmul.f32 %v4502, %v4526
        %v4535 = vpack.c.bf16 %v4531, %v4527
        %v4536 = vpack.c.bf16 %v4532, %v4528
        %v4537 = vpack.c.bf16 %v4533, %v4529
        %v4538 = vpack.c.bf16 %v4534, %v4530
        %s4539 = scalar_lea.vmem %s11, 512
        %v4540 = vld [vmem:[%s4539] sm:$0xf]
        %v4541 = vld [vmem:[%s4539 + $0x4] sm:$0xf]
        %v4542 = vld [vmem:[%s4539 + $0x8] sm:$0xf]
        %v4543 = vld [vmem:[%s4539 + $0xc] sm:$0xf]
        %v4544 = vld [vmem:[%s4539 + $0x10] sm:$0xf]
        %v4545 = vld [vmem:[%s4539 + $0x14] sm:$0xf]
        %v4546 = vld [vmem:[%s4539 + $0x18] sm:$0xf]
        %v4547 = vld [vmem:[%s4539 + $0x1c] sm:$0xf]
        %v4548 = vld [vmem:[%s4539 + $0x20] sm:$0xf]
        %v4549 = vld [vmem:[%s4539 + $0x24] sm:$0xf]
        %v4550 = vld [vmem:[%s4539 + $0x28] sm:$0xf]
        %v4551 = vld [vmem:[%s4539 + $0x2c] sm:$0xf]
        %v4552 = vld [vmem:[%s4539 + $0x30] sm:$0xf]
        %v4553 = vld [vmem:[%s4539 + $0x34] sm:$0xf]
        %v4554 = vld [vmem:[%s4539 + $0x38] sm:$0xf]
        %v4555 = vld [vmem:[%s4539 + $0x3c] sm:$0xf]
        %v4556 = vld [vmem:[%s4539 + $0x40] sm:$0xf]
        %v4557 = vld [vmem:[%s4539 + $0x44] sm:$0xf]
        %v4558 = vld [vmem:[%s4539 + $0x48] sm:$0xf]
        %v4559 = vld [vmem:[%s4539 + $0x4c] sm:$0xf]
        %v4560 = vld [vmem:[%s4539 + $0x50] sm:$0xf]
        %v4561 = vld [vmem:[%s4539 + $0x54] sm:$0xf]
        %v4562 = vld [vmem:[%s4539 + $0x58] sm:$0xf]
        %v4563 = vld [vmem:[%s4539 + $0x5c] sm:$0xf]
        %v4564 = vld [vmem:[%s4539 + $0x60] sm:$0xf]
        %v4565 = vld [vmem:[%s4539 + $0x64] sm:$0xf]
        %v4566 = vld [vmem:[%s4539 + $0x68] sm:$0xf]
        %v4567 = vld [vmem:[%s4539 + $0x6c] sm:$0xf]
        %v4568 = vld [vmem:[%s4539 + $0x70] sm:$0xf]
        %v4569 = vld [vmem:[%s4539 + $0x74] sm:$0xf]
        %v4570 = vld [vmem:[%s4539 + $0x78] sm:$0xf]
        %v4571 = vld [vmem:[%s4539 + $0x7c] sm:$0xf]
        %v4572 = vld [vmem:[%s4539 + $0x80] sm:$0xf]
        %v4573 = vld [vmem:[%s4539 + $0x84] sm:$0xf]
        %v4574 = vld [vmem:[%s4539 + $0x88] sm:$0xf]
        %v4575 = vld [vmem:[%s4539 + $0x8c] sm:$0xf]
        %v4576 = vld [vmem:[%s4539 + $0x90] sm:$0xf]
        %v4577 = vld [vmem:[%s4539 + $0x94] sm:$0xf]
        %v4578 = vld [vmem:[%s4539 + $0x98] sm:$0xf]
        %v4579 = vld [vmem:[%s4539 + $0x9c] sm:$0xf]
        %v4580 = vld [vmem:[%s4539 + $0xa0] sm:$0xf]
        %v4581 = vld [vmem:[%s4539 + $0xa4] sm:$0xf]
        %v4582 = vld [vmem:[%s4539 + $0xa8] sm:$0xf]
        %v4583 = vld [vmem:[%s4539 + $0xac] sm:$0xf]
        %v4584 = vld [vmem:[%s4539 + $0xb0] sm:$0xf]
        %v4585 = vld [vmem:[%s4539 + $0xb4] sm:$0xf]
        %v4586 = vld [vmem:[%s4539 + $0xb8] sm:$0xf]
        %v4587 = vld [vmem:[%s4539 + $0xbc] sm:$0xf]
        %v4588 = vld [vmem:[%s4539 + $0xc0] sm:$0xf]
        %v4589 = vld [vmem:[%s4539 + $0xc4] sm:$0xf]
        %v4590 = vld [vmem:[%s4539 + $0xc8] sm:$0xf]
        %v4591 = vld [vmem:[%s4539 + $0xcc] sm:$0xf]
        %v4592 = vld [vmem:[%s4539 + $0xd0] sm:$0xf]
        %v4593 = vld [vmem:[%s4539 + $0xd4] sm:$0xf]
        %v4594 = vld [vmem:[%s4539 + $0xd8] sm:$0xf]
        %v4595 = vld [vmem:[%s4539 + $0xdc] sm:$0xf]
        %v4596 = vld [vmem:[%s4539 + $0xe0] sm:$0xf]
        %v4597 = vld [vmem:[%s4539 + $0xe4] sm:$0xf]
        %v4598 = vld [vmem:[%s4539 + $0xe8] sm:$0xf]
        %v4599 = vld [vmem:[%s4539 + $0xec] sm:$0xf]
        %v4600 = vld [vmem:[%s4539 + $0xf0] sm:$0xf]
        %v4601 = vld [vmem:[%s4539 + $0xf4] sm:$0xf]
        %v4602 = vld [vmem:[%s4539 + $0xf8] sm:$0xf]
        %v4603 = vld [vmem:[%s4539 + $0xfc] sm:$0xf]
        %s4604 = scalar_lea.vmem %s12, 2
        %v4605 = vld [vmem:[%s4604] sm:$0x1]
        %v4607 = vlaneseq
        %v4608 = vshrl.u32 %v4607, 7
        %v4609 = vsub.s32 0, %v4608
        %v4610 = vrot.slane %v4605, %v4609
        %v4676 = vunpack.c.l.b16 %v4540
        %v4677 = vunpack.c.l.b16 %v4541
        %v4678 = vunpack.c.l.b16 %v4542
        %v4679 = vunpack.c.l.b16 %v4543
        %v4680 = vunpack.c.l.b16 %v4544
        %v4681 = vunpack.c.l.b16 %v4545
        %v4682 = vunpack.c.l.b16 %v4546
        %v4683 = vunpack.c.l.b16 %v4547
        %v4684 = vunpack.c.l.b16 %v4548
        %v4685 = vunpack.c.l.b16 %v4549
        %v4686 = vunpack.c.l.b16 %v4550
        %v4687 = vunpack.c.l.b16 %v4551
        %v4688 = vunpack.c.l.b16 %v4552
        %v4689 = vunpack.c.l.b16 %v4553
        %v4690 = vunpack.c.l.b16 %v4554
        %v4691 = vunpack.c.l.b16 %v4555
        %v4692 = vunpack.c.l.b16 %v4556
        %v4693 = vunpack.c.l.b16 %v4557
        %v4694 = vunpack.c.l.b16 %v4558
        %v4695 = vunpack.c.l.b16 %v4559
        %v4696 = vunpack.c.l.b16 %v4560
        %v4697 = vunpack.c.l.b16 %v4561
        %v4698 = vunpack.c.l.b16 %v4562
        %v4699 = vunpack.c.l.b16 %v4563
        %v4700 = vunpack.c.l.b16 %v4564
        %v4701 = vunpack.c.l.b16 %v4565
        %v4702 = vunpack.c.l.b16 %v4566
        %v4703 = vunpack.c.l.b16 %v4567
        %v4704 = vunpack.c.l.b16 %v4568
        %v4705 = vunpack.c.l.b16 %v4569
        %v4706 = vunpack.c.l.b16 %v4570
        %v4707 = vunpack.c.l.b16 %v4571
        %v4708 = vunpack.c.l.b16 %v4572
        %v4709 = vunpack.c.l.b16 %v4573
        %v4710 = vunpack.c.l.b16 %v4574
        %v4711 = vunpack.c.l.b16 %v4575
        %v4712 = vunpack.c.l.b16 %v4576
        %v4713 = vunpack.c.l.b16 %v4577
        %v4714 = vunpack.c.l.b16 %v4578
        %v4715 = vunpack.c.l.b16 %v4579
        %v4716 = vunpack.c.l.b16 %v4580
        %v4717 = vunpack.c.l.b16 %v4581
        %v4718 = vunpack.c.l.b16 %v4582
        %v4719 = vunpack.c.l.b16 %v4583
        %v4720 = vunpack.c.l.b16 %v4584
        %v4721 = vunpack.c.l.b16 %v4585
        %v4722 = vunpack.c.l.b16 %v4586
        %v4723 = vunpack.c.l.b16 %v4587
        %v4724 = vunpack.c.l.b16 %v4588
        %v4725 = vunpack.c.l.b16 %v4589
        %v4726 = vunpack.c.l.b16 %v4590
        %v4727 = vunpack.c.l.b16 %v4591
        %v4728 = vunpack.c.l.b16 %v4592
        %v4729 = vunpack.c.l.b16 %v4593
        %v4730 = vunpack.c.l.b16 %v4594
        %v4731 = vunpack.c.l.b16 %v4595
        %v4732 = vunpack.c.l.b16 %v4596
        %v4733 = vunpack.c.l.b16 %v4597
        %v4734 = vunpack.c.l.b16 %v4598
        %v4735 = vunpack.c.l.b16 %v4599
        %v4736 = vunpack.c.l.b16 %v4600
        %v4737 = vunpack.c.l.b16 %v4601
        %v4738 = vunpack.c.l.b16 %v4602
        %v4739 = vunpack.c.l.b16 %v4603
        %v4740 = vpack.c.b16 %v4677, %v4676
        %v4741 = vpack.c.b16 %v4679, %v4678
        %v4742 = vpack.c.b16 %v4681, %v4680
        %v4743 = vpack.c.b16 %v4683, %v4682
        %v4744 = vpack.c.b16 %v4685, %v4684
        %v4745 = vpack.c.b16 %v4687, %v4686
        %v4746 = vpack.c.b16 %v4689, %v4688
        %v4747 = vpack.c.b16 %v4691, %v4690
        %v4748 = vpack.c.b16 %v4693, %v4692
        %v4749 = vpack.c.b16 %v4695, %v4694
        %v4750 = vpack.c.b16 %v4697, %v4696
        %v4751 = vpack.c.b16 %v4699, %v4698
        %v4752 = vpack.c.b16 %v4701, %v4700
        %v4753 = vpack.c.b16 %v4703, %v4702
        %v4754 = vpack.c.b16 %v4705, %v4704
        %v4755 = vpack.c.b16 %v4707, %v4706
        %v4756 = vpack.c.b16 %v4709, %v4708
        %v4757 = vpack.c.b16 %v4711, %v4710
        %v4758 = vpack.c.b16 %v4713, %v4712
        %v4759 = vpack.c.b16 %v4715, %v4714
        %v4760 = vpack.c.b16 %v4717, %v4716
        %v4761 = vpack.c.b16 %v4719, %v4718
        %v4762 = vpack.c.b16 %v4721, %v4720
        %v4763 = vpack.c.b16 %v4723, %v4722
        %v4764 = vpack.c.b16 %v4725, %v4724
        %v4765 = vpack.c.b16 %v4727, %v4726
        %v4766 = vpack.c.b16 %v4729, %v4728
        %v4767 = vpack.c.b16 %v4731, %v4730
        %v4768 = vpack.c.b16 %v4733, %v4732
        %v4769 = vpack.c.b16 %v4735, %v4734
        %v4770 = vpack.c.b16 %v4737, %v4736
        %v4771 = vpack.c.b16 %v4739, %v4738
        %4804 = vmatprep.subr.bf16.mxu0 0
        %4805 = vmatpush1.bf16.msra.mxu0 %v4740
        %4806 = vmatprep.subr.bf16.mxu0 0
        %4807 = vmatpush1.bf16.msra.mxu0 %v4741
        %4808 = vmatprep.subr.bf16.mxu0 0
        %4809 = vmatpush1.bf16.msra.mxu0 %v4742
        %4810 = vmatprep.subr.bf16.mxu0 0
        %4811 = vmatpush1.bf16.msra.mxu0 %v4743
        %4812 = vmatprep.subr.bf16.mxu0 0
        %4813 = vmatpush1.bf16.msra.mxu0 %v4744
        %4814 = vmatprep.subr.bf16.mxu0 0
        %4815 = vmatpush1.bf16.msra.mxu0 %v4745
        %4816 = vmatprep.subr.bf16.mxu0 0
        %4817 = vmatpush1.bf16.msra.mxu0 %v4746
        %4818 = vmatprep.subr.bf16.mxu0 0
        %4819 = vmatpush1.bf16.msra.mxu0 %v4747
        %4820 = vmatprep.subr.bf16.mxu0 0
        %4821 = vmatpush1.bf16.msra.mxu0 %v4748
        %4822 = vmatprep.subr.bf16.mxu0 0
        %4823 = vmatpush1.bf16.msra.mxu0 %v4749
        %4824 = vmatprep.subr.bf16.mxu0 0
        %4825 = vmatpush1.bf16.msra.mxu0 %v4750
        %4826 = vmatprep.subr.bf16.mxu0 0
        %4827 = vmatpush1.bf16.msra.mxu0 %v4751
        %4828 = vmatprep.subr.bf16.mxu0 0
        %4829 = vmatpush1.bf16.msra.mxu0 %v4752
        %4830 = vmatprep.subr.bf16.mxu0 0
        %4831 = vmatpush1.bf16.msra.mxu0 %v4753
        %4832 = vmatprep.subr.bf16.mxu0 0
        %4833 = vmatpush1.bf16.msra.mxu0 %v4754
        %4834 = vmatprep.subr.bf16.mxu0 0
        %4835 = vmatpush1.bf16.msra.mxu0 %v4755
        %4836 = vmatprep.mubr.bf16.mxu0 %v4536
        %4837 = vmatmul.mubr.bf16.gmra.mrb[0].mxu0 %v4535
        %v4838 = vpop.f32.mrb[0].mxu0
        %v4839 = vadd.f32 %v4610, %v4838
        %v4840 = vpop.f32.mrb[0].mxu0
        %v4841 = vpop.f32.mrb[0].mxu0
        %v4842 = vadd.f32 %v4610, %v4841
        %v4843 = vpop.f32.mrb[0].mxu0
        %4844 = vdwg.mxu0
        %4845 = vmatprep.subr.bf16.mxu0 0
        %4846 = vmatpush1.bf16.msra.mxu0 %v4756
        %4847 = vmatprep.subr.bf16.mxu0 0
        %4848 = vmatpush1.bf16.msra.mxu0 %v4757
        %4849 = vmatprep.subr.bf16.mxu0 0
        %4850 = vmatpush1.bf16.msra.mxu0 %v4758
        %4851 = vmatprep.subr.bf16.mxu0 0
        %4852 = vmatpush1.bf16.msra.mxu0 %v4759
        %4853 = vmatprep.subr.bf16.mxu0 0
        %4854 = vmatpush1.bf16.msra.mxu0 %v4760
        %4855 = vmatprep.subr.bf16.mxu0 0
        %4856 = vmatpush1.bf16.msra.mxu0 %v4761
        %4857 = vmatprep.subr.bf16.mxu0 0
        %4858 = vmatpush1.bf16.msra.mxu0 %v4762
        %4859 = vmatprep.subr.bf16.mxu0 0
        %4860 = vmatpush1.bf16.msra.mxu0 %v4763
        %4861 = vmatprep.subr.bf16.mxu0 0
        %4862 = vmatpush1.bf16.msra.mxu0 %v4764
        %4863 = vmatprep.subr.bf16.mxu0 0
        %4864 = vmatpush1.bf16.msra.mxu0 %v4765
        %4865 = vmatprep.subr.bf16.mxu0 0
        %4866 = vmatpush1.bf16.msra.mxu0 %v4766
        %4867 = vmatprep.subr.bf16.mxu0 0
        %4868 = vmatpush1.bf16.msra.mxu0 %v4767
        %4869 = vmatprep.subr.bf16.mxu0 0
        %4870 = vmatpush1.bf16.msra.mxu0 %v4768
        %4871 = vmatprep.subr.bf16.mxu0 0
        %4872 = vmatpush1.bf16.msra.mxu0 %v4769
        %4873 = vmatprep.subr.bf16.mxu0 0
        %4874 = vmatpush1.bf16.msra.mxu0 %v4770
        %4875 = vmatprep.subr.bf16.mxu0 0
        %4876 = vmatpush1.bf16.msra.mxu0 %v4771
        %4877 = vmatprep.mubr.bf16.mxu0 %v4538
        %4878 = vmatmul.mubr.bf16.gmra.mrb[0].mxu0 %v4537
        %v4879 = vpop.f32.mrb[0].mxu0
        %v4880 = vadd.f32 %v4839, %v4879
        %v4881 = vpop.f32.mrb[0].mxu0
        %v4882 = vpop.f32.mrb[0].mxu0
        %v4883 = vadd.f32 %v4842, %v4882
        %v4884 = vpop.f32.mrb[0].mxu0
        %4885 = vdwg.mxu0
        %v4886 = vadd.f32 %v4148, %v4880
        %v4887 = vadd.f32 %v4149, %v4883
        %s4888 = scalar_lea.vmem %s5, 1
        %v4889 = vld [vmem:[%s4888] sm:$0x1]
        %s4890 = scalar_lea.vmem %s6, 1
        %v4891 = vld [vmem:[%s4890] sm:$0x1]
        %4892 = vadd.xlane.f32.xlu0 %v4886
        %v4893 = vpop.xlane.xlu0 %4892
        %4894 = vadd.xlane.f32.xlu0 %v4887
        %v4895 = vpop.xlane.xlu0 %4894
        %v4896 = vmul.f32 %v4893, %v1193
        %v4897 = vmul.f32 %v4895, %v1193
        %v4898 = vsub.f32 %v4886, %v4896
        %v4899 = vsub.f32 %v4887, %v4897
        %v4900 = vmul.f32 %v4898, %v4898
        %v4901 = vmul.f32 %v4899, %v4899
        %4902 = vadd.xlane.f32.xlu0 %v4900
        %v4903 = vpop.xlane.xlu0 %4902
        %4904 = vadd.xlane.f32.xlu0 %v4901
        %v4905 = vpop.xlane.xlu0 %4904
        %v4906 = vmul.f32 %v4903, %v1193
        %v4907 = vmul.f32 %v4905, %v1193
        %v4908 = vadd.f32 %v4906, 1e-05
        %v4909 = vadd.f32 %v4907, 1e-05
        %v4910 = vrsqrt.pop %v4908
        %v4911 = vrsqrt.pop %v4909
        %v4912 = vmul.f32 %v4898, %v4910
        %v4913 = vmul.f32 %v4899, %v4911
        %v4915 = vlaneseq
        %v4916 = vshrl.u32 %v4915, 7
        %v4917 = vsub.s32 0, %v4916
        %v4918 = vrot.slane %v4889, %v4917
        %v4920 = vmul.f32 %v4912, %v4918
        %v4921 = vmul.f32 %v4913, %v4918
        %v4923 = vlaneseq
        %v4924 = vshrl.u32 %v4923, 7
        %v4925 = vsub.s32 0, %v4924
        %v4926 = vrot.slane %v4891, %v4925
        %v4928 = vadd.f32 %v4920, %v4926
        %v4929 = vadd.f32 %v4921, %v4926
        %v4930 = vpack.c.bf16 %v4929, %v4928
        %s4931 = scalar_lea.vmem %s1, 576
        %v4932 = vld [vmem:[%s4931] sm:$0xff]
        %v4933 = vld [vmem:[%s4931 + $0x8] sm:$0xf]
        %v4934 = vld [vmem:[%s4931 + $0xc] sm:$0xff]
        %v4935 = vld [vmem:[%s4931 + $0x14] sm:$0xf]
        %v4936 = vld [vmem:[%s4931 + $0x18] sm:$0xff]
        %v4937 = vld [vmem:[%s4931 + $0x20] sm:$0xf]
        %v4938 = vld [vmem:[%s4931 + $0x24] sm:$0xff]
        %v4939 = vld [vmem:[%s4931 + $0x2c] sm:$0xf]
        %v4940 = vld [vmem:[%s4931 + $0x30] sm:$0xff]
        %v4941 = vld [vmem:[%s4931 + $0x38] sm:$0xf]
        %v4942 = vld [vmem:[%s4931 + $0x3c] sm:$0xff]
        %v4943 = vld [vmem:[%s4931 + $0x44] sm:$0xf]
        %v4944 = vld [vmem:[%s4931 + $0x48] sm:$0xff]
        %v4945 = vld [vmem:[%s4931 + $0x50] sm:$0xf]
        %v4946 = vld [vmem:[%s4931 + $0x54] sm:$0xff]
        %v4947 = vld [vmem:[%s4931 + $0x5c] sm:$0xf]
        %v4948 = vld [vmem:[%s4931 + $0x60] sm:$0xff]
        %v4949 = vld [vmem:[%s4931 + $0x68] sm:$0xf]
        %v4950 = vld [vmem:[%s4931 + $0x6c] sm:$0xff]
        %v4951 = vld [vmem:[%s4931 + $0x74] sm:$0xf]
        %v4952 = vld [vmem:[%s4931 + $0x78] sm:$0xff]
        %v4953 = vld [vmem:[%s4931 + $0x80] sm:$0xf]
        %v4954 = vld [vmem:[%s4931 + $0x84] sm:$0xff]
        %v4955 = vld [vmem:[%s4931 + $0x8c] sm:$0xf]
        %v4956 = vld [vmem:[%s4931 + $0x90] sm:$0xff]
        %v4957 = vld [vmem:[%s4931 + $0x98] sm:$0xf]
        %v4958 = vld [vmem:[%s4931 + $0x9c] sm:$0xff]
        %v4959 = vld [vmem:[%s4931 + $0xa4] sm:$0xf]
        %v4960 = vld [vmem:[%s4931 + $0xa8] sm:$0xff]
        %v4961 = vld [vmem:[%s4931 + $0xb0] sm:$0xf]
        %v4962 = vld [vmem:[%s4931 + $0xb4] sm:$0xff]
        %v4963 = vld [vmem:[%s4931 + $0xbc] sm:$0xf]
        %s4964 = scalar_lea.vmem %s2, 9
        %v4965 = vld [vmem:[%s4964] sm:$0x7]
        %v4967 = vlaneseq
        %v4968 = vshrl.u32 %v4967, 7
        %v4969 = vsub.s32 0, %v4968
        %v4970 = vrot.slane %v4965, %v4969
        %v4971 = vlaneseq
        %v4972 = vshrl.u32 %v4971, 7
        %v4973 = vsub.s32 1, %v4972
        %v4974 = vrot.slane %v4965, %v4973
        %v4975 = vlaneseq
        %v4976 = vshrl.u32 %v4975, 7
        %v4977 = vsub.s32 2, %v4976
        %v4978 = vrot.slane %v4965, %v4977
        %v5014 = vunpack.c.l.b16 %v4932
        %v5015 = vunpack.c.h.b16 %v4932
        %v5016 = vunpack.c.l.b16 %v4933
        %v5017 = vunpack.c.l.b16 %v4934
        %v5018 = vunpack.c.h.b16 %v4934
        %v5019 = vunpack.c.l.b16 %v4935
        %v5020 = vunpack.c.l.b16 %v4936
        %v5021 = vunpack.c.h.b16 %v4936
        %v5022 = vunpack.c.l.b16 %v4937
        %v5023 = vunpack.c.l.b16 %v4938
        %v5024 = vunpack.c.h.b16 %v4938
        %v5025 = vunpack.c.l.b16 %v4939
        %v5026 = vunpack.c.l.b16 %v4940
        %v5027 = vunpack.c.h.b16 %v4940
        %v5028 = vunpack.c.l.b16 %v4941
        %v5029 = vunpack.c.l.b16 %v4942
        %v5030 = vunpack.c.h.b16 %v4942
        %v5031 = vunpack.c.l.b16 %v4943
        %v5032 = vunpack.c.l.b16 %v4944
        %v5033 = vunpack.c.h.b16 %v4944
        %v5034 = vunpack.c.l.b16 %v4945
        %v5035 = vunpack.c.l.b16 %v4946
        %v5036 = vunpack.c.h.b16 %v4946
        %v5037 = vunpack.c.l.b16 %v4947
        %v5038 = vunpack.c.l.b16 %v4948
        %v5039 = vunpack.c.h.b16 %v4948
        %v5040 = vunpack.c.l.b16 %v4949
        %v5041 = vunpack.c.l.b16 %v4950
        %v5042 = vunpack.c.h.b16 %v4950
        %v5043 = vunpack.c.l.b16 %v4951
        %v5044 = vunpack.c.l.b16 %v4952
        %v5045 = vunpack.c.h.b16 %v4952
        %v5046 = vunpack.c.l.b16 %v4953
        %v5047 = vunpack.c.l.b16 %v4954
        %v5048 = vunpack.c.h.b16 %v4954
        %v5049 = vunpack.c.l.b16 %v4955
        %v5050 = vunpack.c.l.b16 %v4956
        %v5051 = vunpack.c.h.b16 %v4956
        %v5052 = vunpack.c.l.b16 %v4957
        %v5053 = vunpack.c.l.b16 %v4958
        %v5054 = vunpack.c.h.b16 %v4958
        %v5055 = vunpack.c.l.b16 %v4959
        %v5056 = vunpack.c.l.b16 %v4960
        %v5057 = vunpack.c.h.b16 %v4960
        %v5058 = vunpack.c.l.b16 %v4961
        %v5059 = vunpack.c.l.b16 %v4962
        %v5060 = vunpack.c.h.b16 %v4962
        %v5061 = vunpack.c.l.b16 %v4963
        %v5062 = vpack.c.b16 %v5017, %v5014
        %v5063 = vpack.c.b16 %v5018, %v5015
        %v5064 = vpack.c.b16 %v5019, %v5016
        %v5065 = vpack.c.b16 %v5023, %v5020
        %v5066 = vpack.c.b16 %v5024, %v5021
        %v5067 = vpack.c.b16 %v5025, %v5022
        %v5068 = vpack.c.b16 %v5029, %v5026
        %v5069 = vpack.c.b16 %v5030, %v5027
        %v5070 = vpack.c.b16 %v5031, %v5028
        %v5071 = vpack.c.b16 %v5035, %v5032
        %v5072 = vpack.c.b16 %v5036, %v5033
        %v5073 = vpack.c.b16 %v5037, %v5034
        %v5074 = vpack.c.b16 %v5041, %v5038
        %v5075 = vpack.c.b16 %v5042, %v5039
        %v5076 = vpack.c.b16 %v5043, %v5040
        %v5077 = vpack.c.b16 %v5047, %v5044
        %v5078 = vpack.c.b16 %v5048, %v5045
        %v5079 = vpack.c.b16 %v5049, %v5046
        %v5080 = vpack.c.b16 %v5053, %v5050
        %v5081 = vpack.c.b16 %v5054, %v5051
        %v5082 = vpack.c.b16 %v5055, %v5052
        %v5083 = vpack.c.b16 %v5059, %v5056
        %v5084 = vpack.c.b16 %v5060, %v5057
        %v5085 = vpack.c.b16 %v5061, %v5058
        %5110 = vmatprep.subr.bf16.mxu0 %v5063
        %5111 = vmatpush1.bf16.msra.mxu0 %v5062
        %5112 = vmatprep.subr.bf16.mxu0 %v5066
        %5113 = vmatpush1.bf16.msra.mxu0 %v5065
        %5114 = vmatprep.subr.bf16.mxu0 %v5069
        %5115 = vmatpush1.bf16.msra.mxu0 %v5068
        %5116 = vmatprep.subr.bf16.mxu0 %v5072
        %5117 = vmatpush1.bf16.msra.mxu0 %v5071
        %5118 = vmatprep.subr.bf16.mxu0 %v5075
        %5119 = vmatpush1.bf16.msra.mxu0 %v5074
        %5120 = vmatprep.subr.bf16.mxu0 %v5078
        %5121 = vmatpush1.bf16.msra.mxu0 %v5077
        %5122 = vmatprep.subr.bf16.mxu0 %v5081
        %5123 = vmatpush1.bf16.msra.mxu0 %v5080
        %5124 = vmatprep.subr.bf16.mxu0 %v5084
        %5125 = vmatpush1.bf16.msra.mxu0 %v5083
        %5126 = vmatprep.subr.bf16.mxu0 0
        %5127 = vmatpush1.bf16.msra.mxu0 0
        %5128 = vmatprep.subr.bf16.mxu0 0
        %5129 = vmatpush1.bf16.msra.mxu0 0
        %5130 = vmatprep.subr.bf16.mxu0 0
        %5131 = vmatpush1.bf16.msra.mxu0 0
        %5132 = vmatprep.subr.bf16.mxu0 0
        %5133 = vmatpush1.bf16.msra.mxu0 0
        %5134 = vmatprep.subr.bf16.mxu0 0
        %5135 = vmatpush1.bf16.msra.mxu0 0
        %5136 = vmatprep.subr.bf16.mxu0 0
        %5137 = vmatpush1.bf16.msra.mxu0 0
        %5138 = vmatprep.subr.bf16.mxu0 0
        %5139 = vmatpush1.bf16.msra.mxu0 0
        %5140 = vmatprep.subr.bf16.mxu0 0
        %5141 = vmatpush1.bf16.msra.mxu0 0
        %5142 = vmatprep.mubr.bf16.mxu0 0
        %5143 = vmatmul.mubr.bf16.gmra.mrb[0].mxu0 %v4930
        %v5144 = vpop.f32.mrb[0].mxu0
        %v5145 = vadd.f32 %v4970, %v5144
        %v5146 = vpop.f32.mrb[0].mxu0
        %v5147 = vadd.f32 %v4974, %v5146
        %v5148 = vpop.f32.mrb[0].mxu0
        %v5149 = vadd.f32 %v4970, %v5148
        %v5150 = vpop.f32.mrb[0].mxu0
        %v5151 = vadd.f32 %v4974, %v5150
        %5152 = vdwg.mxu0
        %5153 = vmatprep.subr.bf16.mxu0 0
        %5154 = vmatpush1.bf16.msra.mxu0 %v5064
        %5155 = vmatprep.subr.bf16.mxu0 0
        %5156 = vmatpush1.bf16.msra.mxu0 %v5067
        %5157 = vmatprep.subr.bf16.mxu0 0
        %5158 = vmatpush1.bf16.msra.mxu0 %v5070
        %5159 = vmatprep.subr.bf16.mxu0 0
        %5160 = vmatpush1.bf16.msra.mxu0 %v5073
        %5161 = vmatprep.subr.bf16.mxu0 0
        %5162 = vmatpush1.bf16.msra.mxu0 %v5076
        %5163 = vmatprep.subr.bf16.mxu0 0
        %5164 = vmatpush1.bf16.msra.mxu0 %v5079
        %5165 = vmatprep.subr.bf16.mxu0 0
        %5166 = vmatpush1.bf16.msra.mxu0 %v5082
        %5167 = vmatprep.subr.bf16.mxu0 0
        %5168 = vmatpush1.bf16.msra.mxu0 %v5085
        %5169 = vmatprep.subr.bf16.mxu0 0
        %5170 = vmatpush1.bf16.msra.mxu0 0
        %5171 = vmatprep.subr.bf16.mxu0 0
        %5172 = vmatpush1.bf16.msra.mxu0 0
        %5173 = vmatprep.subr.bf16.mxu0 0
        %5174 = vmatpush1.bf16.msra.mxu0 0
        %5175 = vmatprep.subr.bf16.mxu0 0
        %5176 = vmatpush1.bf16.msra.mxu0 0
        %5177 = vmatprep.subr.bf16.mxu0 0
        %5178 = vmatpush1.bf16.msra.mxu0 0
        %5179 = vmatprep.subr.bf16.mxu0 0
        %5180 = vmatpush1.bf16.msra.mxu0 0
        %5181 = vmatprep.subr.bf16.mxu0 0
        %5182 = vmatpush1.bf16.msra.mxu0 0
        %5183 = vmatprep.subr.bf16.mxu0 0
        %5184 = vmatpush1.bf16.msra.mxu0 0
        %5185 = vmatprep.mubr.bf16.mxu0 0
        %5186 = vmatmul.mubr.bf16.gmra.mrb[0].mxu0 %v4930
        %v5187 = vpop.f32.mrb[0].mxu0
        %v5188 = vadd.f32 %v4978, %v5187
        %v5189 = vpop.f32.mrb[0].mxu0
        %v5190 = vpop.f32.mrb[0].mxu0
        %v5191 = vadd.f32 %v4978, %v5190
        %v5192 = vpop.f32.mrb[0].mxu0
        %5193 = vdwg.mxu0
        %v5194 = vpack.c.bf16 %v5149, %v5145
        %v5195 = vpack.c.bf16 %v5151, %v5147
        %5196 = vmatprep.subr.bf16.mxu0 0
        %5197 = vmatpush1.bf16.xpose.msra.mxu0 %v5195
        %5198 = vmatprep.subr.bf16.mxu0 0
        %5199 = vmatpush1.bf16.xpose.msra.mxu0 0
        %5200 = vmatprep.subr.bf16.mxu0 0
        %5201 = vmatpush1.bf16.xpose.msra.mxu0 0
        %5202 = vmatprep.subr.bf16.mxu0 0
        %5203 = vmatpush1.bf16.xpose.msra.mxu0 0
        %5204 = vmatprep.subr.bf16.mxu0 0
        %5205 = vmatpush1.bf16.xpose.msra.mxu0 0
        %5206 = vmatprep.subr.bf16.mxu0 0
        %5207 = vmatpush1.bf16.xpose.msra.mxu0 0
        %5208 = vmatprep.subr.bf16.mxu0 0
        %5209 = vmatpush1.bf16.xpose.msra.mxu0 0
        %5210 = vmatprep.subr.bf16.mxu0 0
        %5211 = vmatpush1.bf16.xpose.msra.mxu0 0
        %5212 = vmatprep.subr.bf16.mxu0 0
        %5213 = vmatpush1.bf16.xpose.msra.mxu0 0
        %5214 = vmatprep.subr.bf16.mxu0 0
        %5215 = vmatpush1.bf16.xpose.msra.mxu0 0
        %5216 = vmatprep.subr.bf16.mxu0 0
        %5217 = vmatpush1.bf16.xpose.msra.mxu0 0
        %5218 = vmatprep.subr.bf16.mxu0 0
        %5219 = vmatpush1.bf16.xpose.msra.mxu0 0
        %5220 = vmatprep.subr.bf16.mxu0 0
        %5221 = vmatpush1.bf16.xpose.msra.mxu0 0
        %5222 = vmatprep.subr.bf16.mxu0 0
        %5223 = vmatpush1.bf16.xpose.msra.mxu0 0
        %5224 = vmatprep.subr.bf16.mxu0 0
        %5225 = vmatpush1.bf16.xpose.msra.mxu0 0
        %5226 = vmatprep.subr.bf16.mxu0 0
        %5227 = vmatpush1.bf16.xpose.msra.mxu0 0
        %5228 = vmatprep.mubr.bf16.mxu0 0
        %5229 = vmatmul.mubr.bf16.gmra.mrb[0].mxu0 %v5194
        %v5230 = vpop.f32.mrb[0].mxu0
        %v5231 = vadd.f32 0.0, %v5230
        %v5232 = vpop.f32.mrb[0].mxu0
        %v5233 = vpop.f32.mrb[0].mxu0
        %v5234 = vadd.f32 0.0, %v5233
        %v5235 = vpop.f32.mrb[0].mxu0
        %5236 = vdwg.mxu0
        %v5237 = vsel %vm747, %v5231, -inf
        %5238 = vmax.xlane.f32.xlu0 %v5237
        %v5239 = vpop.xlane.xlu0 %5238
        %v5240 = vsel %vm747, %v5234, -inf
        %5241 = vmax.xlane.f32.xlu0 %v5240
        %v5242 = vpop.xlane.xlu0 %5241
        %v5243 = vsub.f32 %v5231, %v5239
        %v5244 = vsub.f32 %v5234, %v5242
        %v5245 = vmul.f32 %v5243, 1.442695
        %v5246 = vpow.pop %v5245
        %v5247 = vmul.f32 %v5244, 1.442695
        %v5248 = vpow.pop %v5247
        %v5249 = vsel %vm747, %v5246, 0.0
        %5250 = vadd.xlane.f32.xlu0 %v5249
        %v5251 = vpop.xlane.xlu0 %5250
        %v5252 = vsel %vm747, %v5248, 0.0
        %5253 = vadd.xlane.f32.xlu0 %v5252
        %v5254 = vpop.xlane.xlu0 %5253
        %v5255 = vrcp.pop %v5251
        %v5256 = vrcp.pop %v5254
        %v5257 = vmul.f32 %v5246, %v5255
        %v5258 = vmul.f32 %v5248, %v5256
        %v5259 = vpack.c.bf16 %v5191, %v5188
        %v5260 = vpack.c.bf16 %v5258, %v5257
        %5261 = vxpose.xlu0.c.b16.start [1/8] %v5259, 128
        %5262 = vxpose.xlu0.c.b16.cont [2/8] 0, 128
        %5263 = vxpose.xlu0.c.b16.cont [3/8] 0, 128
        %5264 = vxpose.xlu0.c.b16.cont [4/8] 0, 128
        %5265 = vxpose.xlu0.c.b16.cont [5/8] 0, 128
        %5266 = vxpose.xlu0.c.b16.cont [6/8] 0, 128
        %5267 = vxpose.xlu0.c.b16.cont [7/8] 0, 128
        %5268 = vxpose.xlu0.c.b16.end [8/8] 0, 128
        %v5269 = vpop.trf.xlu0
        %v5270 = vpop.trf.xlu0
        %v5271 = vpop.trf.xlu0
        %v5272 = vpop.trf.xlu0
        %v5273 = vpop.trf.xlu0
        %v5274 = vpop.trf.xlu0
        %v5275 = vpop.trf.xlu0
        %v5276 = vpop.trf.xlu0
        %v5278 = vsel %vm747, %v5269, 0
        %v5281 = vsel %vm747, %v5270, 0
        %v5284 = vsel %vm747, %v5271, 0
        %v5287 = vsel %vm747, %v5272, 0
        %v5290 = vsel %vm747, %v5273, 0
        %v5293 = vsel %vm747, %v5274, 0
        %v5296 = vsel %vm747, %v5275, 0
        %v5299 = vsel %vm747, %v5276, 0
        %v5302 = vsel %vm747, %v5260, 0
        %5304 = vmatprep.subr.bf16.mxu0 0
        %5305 = vmatpush1.bf16.xpose.msra.mxu0 %v5302
        %5306 = vmatprep.subr.bf16.mxu0 0
        %5307 = vmatpush1.bf16.xpose.msra.mxu0 0
        %5308 = vmatprep.subr.bf16.mxu0 0
        %5309 = vmatpush1.bf16.xpose.msra.mxu0 0
        %5310 = vmatprep.subr.bf16.mxu0 0
        %5311 = vmatpush1.bf16.xpose.msra.mxu0 0
        %5312 = vmatprep.subr.bf16.mxu0 0
        %5313 = vmatpush1.bf16.xpose.msra.mxu0 0
        %5314 = vmatprep.subr.bf16.mxu0 0
        %5315 = vmatpush1.bf16.xpose.msra.mxu0 0
        %5316 = vmatprep.subr.bf16.mxu0 0
        %5317 = vmatpush1.bf16.xpose.msra.mxu0 0
        %5318 = vmatprep.subr.bf16.mxu0 0
        %5319 = vmatpush1.bf16.xpose.msra.mxu0 0
        %5320 = vmatprep.subr.bf16.mxu0 0
        %5321 = vmatpush1.bf16.xpose.msra.mxu0 0
        %5322 = vmatprep.subr.bf16.mxu0 0
        %5323 = vmatpush1.bf16.xpose.msra.mxu0 0
        %5324 = vmatprep.subr.bf16.mxu0 0
        %5325 = vmatpush1.bf16.xpose.msra.mxu0 0
        %5326 = vmatprep.subr.bf16.mxu0 0
        %5327 = vmatpush1.bf16.xpose.msra.mxu0 0
        %5328 = vmatprep.subr.bf16.mxu0 0
        %5329 = vmatpush1.bf16.xpose.msra.mxu0 0
        %5330 = vmatprep.subr.bf16.mxu0 0
        %5331 = vmatpush1.bf16.xpose.msra.mxu0 0
        %5332 = vmatprep.subr.bf16.mxu0 0
        %5333 = vmatpush1.bf16.xpose.msra.mxu0 0
        %5334 = vmatprep.subr.bf16.mxu0 0
        %5335 = vmatpush1.bf16.xpose.msra.mxu0 0
        %5336 = vmatprep.mubr.bf16.mxu0 0
        %5337 = vmatmul.mubr.bf16.gmra.mrb[0].mxu0 %v5278
        %v5338 = vpop.f32.mrb[0].mxu0
        %v5339 = vadd.f32 0.0, %v5338
        %v5340 = vpop.f32.mrb[0].mxu0
        %v5341 = vpop.f32.mrb[0].mxu0
        %v5342 = vadd.f32 0.0, %v5341
        %v5343 = vpop.f32.mrb[0].mxu0
        %5344 = vmatprep.mubr.bf16.mxu0 0
        %5345 = vmatmul.mubr.bf16.gmra.mrb[0].mxu0 %v5281
        %v5346 = vpop.f32.mrb[0].mxu0
        %v5347 = vadd.f32 0.0, %v5346
        %v5348 = vpop.f32.mrb[0].mxu0
        %v5349 = vpop.f32.mrb[0].mxu0
        %v5350 = vadd.f32 0.0, %v5349
        %v5351 = vpop.f32.mrb[0].mxu0
        %5352 = vmatprep.mubr.bf16.mxu0 0
        %5353 = vmatmul.mubr.bf16.gmra.mrb[0].mxu0 %v5284
        %v5354 = vpop.f32.mrb[0].mxu0
        %v5355 = vadd.f32 0.0, %v5354
        %v5356 = vpop.f32.mrb[0].mxu0
        %v5357 = vpop.f32.mrb[0].mxu0
        %v5358 = vadd.f32 0.0, %v5357
        %v5359 = vpop.f32.mrb[0].mxu0
        %5360 = vmatprep.mubr.bf16.mxu0 0
        %5361 = vmatmul.mubr.bf16.gmra.mrb[0].mxu0 %v5287
        %v5362 = vpop.f32.mrb[0].mxu0
        %v5363 = vadd.f32 0.0, %v5362
        %v5364 = vpop.f32.mrb[0].mxu0
        %v5365 = vpop.f32.mrb[0].mxu0
        %v5366 = vadd.f32 0.0, %v5365
        %v5367 = vpop.f32.mrb[0].mxu0
        %5368 = vmatprep.mubr.bf16.mxu0 0
        %5369 = vmatmul.mubr.bf16.gmra.mrb[0].mxu0 %v5290
        %v5370 = vpop.f32.mrb[0].mxu0
        %v5371 = vadd.f32 0.0, %v5370
        %v5372 = vpop.f32.mrb[0].mxu0
        %v5373 = vpop.f32.mrb[0].mxu0
        %v5374 = vadd.f32 0.0, %v5373
        %v5375 = vpop.f32.mrb[0].mxu0
        %5376 = vmatprep.mubr.bf16.mxu0 0
        %5377 = vmatmul.mubr.bf16.gmra.mrb[0].mxu0 %v5293
        %v5378 = vpop.f32.mrb[0].mxu0
        %v5379 = vadd.f32 0.0, %v5378
        %v5380 = vpop.f32.mrb[0].mxu0
        %v5381 = vpop.f32.mrb[0].mxu0
        %v5382 = vadd.f32 0.0, %v5381
        %v5383 = vpop.f32.mrb[0].mxu0
        %5384 = vmatprep.mubr.bf16.mxu0 0
        %5385 = vmatmul.mubr.bf16.gmra.mrb[0].mxu0 %v5296
        %v5386 = vpop.f32.mrb[0].mxu0
        %v5387 = vadd.f32 0.0, %v5386
        %v5388 = vpop.f32.mrb[0].mxu0
        %v5389 = vpop.f32.mrb[0].mxu0
        %v5390 = vadd.f32 0.0, %v5389
        %v5391 = vpop.f32.mrb[0].mxu0
        %5392 = vmatprep.mubr.bf16.mxu0 0
        %5393 = vmatmul.mubr.bf16.gmra.mrb[0].mxu0 %v5299
        %v5394 = vpop.f32.mrb[0].mxu0
        %v5395 = vadd.f32 0.0, %v5394
        %v5396 = vpop.f32.mrb[0].mxu0
        %v5397 = vpop.f32.mrb[0].mxu0
        %v5398 = vadd.f32 0.0, %v5397
        %v5399 = vpop.f32.mrb[0].mxu0
        %5400 = vdwg.mxu0
        %5401 = vst.msk [vmem:[#allocation2] sm:$0xff] %vm747, %v5339
        %5402 = vst.msk [vmem:[#allocation2 + $0x8] sm:$0xff] %vm747, %v5342
        %5403 = vst.msk [vmem:[#allocation2 + $0x10] sm:$0xff] %vm747, %v5347
        %5404 = vst.msk [vmem:[#allocation2 + $0x18] sm:$0xff] %vm747, %v5350
        %5405 = vst.msk [vmem:[#allocation2 + $0x20] sm:$0xff] %vm747, %v5355
        %5406 = vst.msk [vmem:[#allocation2 + $0x28] sm:$0xff] %vm747, %v5358
        %5407 = vst.msk [vmem:[#allocation2 + $0x30] sm:$0xff] %vm747, %v5363
        %5408 = vst.msk [vmem:[#allocation2 + $0x38] sm:$0xff] %vm747, %v5366
        %5409 = vst.msk [vmem:[#allocation2 + $0x40] sm:$0xff] %vm747, %v5371
        %5410 = vst.msk [vmem:[#allocation2 + $0x48] sm:$0xff] %vm747, %v5374
        %5411 = vst.msk [vmem:[#allocation2 + $0x50] sm:$0xff] %vm747, %v5379
        %5412 = vst.msk [vmem:[#allocation2 + $0x58] sm:$0xff] %vm747, %v5382
        %5413 = vst.msk [vmem:[#allocation2 + $0x60] sm:$0xff] %vm747, %v5387
        %5414 = vst.msk [vmem:[#allocation2 + $0x68] sm:$0xff] %vm747, %v5390
        %5415 = vst.msk [vmem:[#allocation2 + $0x70] sm:$0xff] %vm747, %v5395
        %5416 = vst.msk [vmem:[#allocation2 + $0x78] sm:$0xff] %vm747, %v5398
        %v5417 = vld [vmem:[#allocation2] ss:$8 sm:$0xf]
        %v5418 = vld [vmem:[#allocation2] ss:$8 sm:$0xf0]
        %v5419 = vor.u32 %v5417, %v5418
        %v5420 = vld [vmem:[%s931] ss:$8 sm:$0xf]
        %v5421 = vld [vmem:[%s931] ss:$8 sm:$0xf0]
        %v5422 = vor.u32 %v5420, %v5421
        %5423 = vst.msk [vmem:[#allocation3] sm:$0xff] %vm747, %v5419
        %5424 = vst.msk [vmem:[#allocation3 + $0x8] sm:$0xff] %vm747, %v5422
        %v5425 = vld [vmem:[%s937] ss:$8 sm:$0xf]
        %v5426 = vld [vmem:[%s937] ss:$8 sm:$0xf0]
        %v5427 = vor.u32 %v5425, %v5426
        %v5428 = vld [vmem:[%s941] ss:$8 sm:$0xf]
        %v5429 = vld [vmem:[%s941] ss:$8 sm:$0xf0]
        %v5430 = vor.u32 %v5428, %v5429
        %5433 = vrot.lane.b32.xlu0 %v5427, 16
        %v5434 = vpop.permute.xlu0 %5433
        %5435 = vrot.lane.b32.xlu0 %v5430, 16
        %v5436 = vpop.permute.xlu0 %5435
        %5439 = vst.msk [vmem:[#allocation3] sm:$0xff] %vm953, %v5434
        %5440 = vst.msk [vmem:[#allocation3 + $0x8] sm:$0xff] %vm953, %v5436
        %v5441 = vld [vmem:[%s956] ss:$8 sm:$0xf]
        %v5442 = vld [vmem:[%s956] ss:$8 sm:$0xf0]
        %v5443 = vor.u32 %v5441, %v5442
        %v5444 = vld [vmem:[%s960] ss:$8 sm:$0xf]
        %v5445 = vld [vmem:[%s960] ss:$8 sm:$0xf0]
        %v5446 = vor.u32 %v5444, %v5445
        %5449 = vrot.lane.b32.xlu0 %v5443, 32
        %v5450 = vpop.permute.xlu0 %5449
        %5451 = vrot.lane.b32.xlu0 %v5446, 32
        %v5452 = vpop.permute.xlu0 %5451
        %5455 = vst.msk [vmem:[#allocation3] sm:$0xff] %vm972, %v5450
        %5456 = vst.msk [vmem:[#allocation3 + $0x8] sm:$0xff] %vm972, %v5452
        %v5457 = vld [vmem:[%s975] ss:$8 sm:$0xf]
        %v5458 = vld [vmem:[%s975] ss:$8 sm:$0xf0]
        %v5459 = vor.u32 %v5457, %v5458
        %v5460 = vld [vmem:[%s979] ss:$8 sm:$0xf]
        %v5461 = vld [vmem:[%s979] ss:$8 sm:$0xf0]
        %v5462 = vor.u32 %v5460, %v5461
        %5465 = vrot.lane.b32.xlu0 %v5459, 48
        %v5466 = vpop.permute.xlu0 %5465
        %5467 = vrot.lane.b32.xlu0 %v5462, 48
        %v5468 = vpop.permute.xlu0 %5467
        %5471 = vst.msk [vmem:[#allocation3] sm:$0xff] %vm991, %v5466
        %5472 = vst.msk [vmem:[#allocation3 + $0x8] sm:$0xff] %vm991, %v5468
        %v5473 = vld [vmem:[%s994] ss:$8 sm:$0xf]
        %v5474 = vld [vmem:[%s994] ss:$8 sm:$0xf0]
        %v5475 = vor.u32 %v5473, %v5474
        %v5476 = vld [vmem:[%s998] ss:$8 sm:$0xf]
        %v5477 = vld [vmem:[%s998] ss:$8 sm:$0xf0]
        %v5478 = vor.u32 %v5476, %v5477
        %5481 = vrot.lane.b32.xlu0 %v5475, 64
        %v5482 = vpop.permute.xlu0 %5481
        %5483 = vrot.lane.b32.xlu0 %v5478, 64
        %v5484 = vpop.permute.xlu0 %5483
        %5487 = vst.msk [vmem:[#allocation3] sm:$0xff] %vm1010, %v5482
        %5488 = vst.msk [vmem:[#allocation3 + $0x8] sm:$0xff] %vm1010, %v5484
        %v5489 = vld [vmem:[%s1013] ss:$8 sm:$0xf]
        %v5490 = vld [vmem:[%s1013] ss:$8 sm:$0xf0]
        %v5491 = vor.u32 %v5489, %v5490
        %v5492 = vld [vmem:[%s1017] ss:$8 sm:$0xf]
        %v5493 = vld [vmem:[%s1017] ss:$8 sm:$0xf0]
        %v5494 = vor.u32 %v5492, %v5493
        %5497 = vrot.lane.b32.xlu0 %v5491, 80
        %v5498 = vpop.permute.xlu0 %5497
        %5499 = vrot.lane.b32.xlu0 %v5494, 80
        %v5500 = vpop.permute.xlu0 %5499
        %5503 = vst.msk [vmem:[#allocation3] sm:$0xff] %vm1029, %v5498
        %5504 = vst.msk [vmem:[#allocation3 + $0x8] sm:$0xff] %vm1029, %v5500
        %v5505 = vld [vmem:[%s1032] ss:$8 sm:$0xf]
        %v5506 = vld [vmem:[%s1032] ss:$8 sm:$0xf0]
        %v5507 = vor.u32 %v5505, %v5506
        %v5508 = vld [vmem:[%s1036] ss:$8 sm:$0xf]
        %v5509 = vld [vmem:[%s1036] ss:$8 sm:$0xf0]
        %v5510 = vor.u32 %v5508, %v5509
        %5513 = vrot.lane.b32.xlu0 %v5507, 96
        %v5514 = vpop.permute.xlu0 %5513
        %5515 = vrot.lane.b32.xlu0 %v5510, 96
        %v5516 = vpop.permute.xlu0 %5515
        %5519 = vst.msk [vmem:[#allocation3] sm:$0xff] %vm1048, %v5514
        %5520 = vst.msk [vmem:[#allocation3 + $0x8] sm:$0xff] %vm1048, %v5516
        %v5521 = vld [vmem:[%s1051] ss:$8 sm:$0xf]
        %v5522 = vld [vmem:[%s1051] ss:$8 sm:$0xf0]
        %v5523 = vor.u32 %v5521, %v5522
        %v5524 = vld [vmem:[%s1055] ss:$8 sm:$0xf]
        %v5525 = vld [vmem:[%s1055] ss:$8 sm:$0xf0]
        %v5526 = vor.u32 %v5524, %v5525
        %5529 = vrot.lane.b32.xlu0 %v5523, 112
        %v5530 = vpop.permute.xlu0 %5529
        %5531 = vrot.lane.b32.xlu0 %v5526, 112
        %v5532 = vpop.permute.xlu0 %5531
        %5535 = vst.msk [vmem:[#allocation3] sm:$0xff] %vm1067, %v5530
        %5536 = vst.msk [vmem:[#allocation3 + $0x8] sm:$0xff] %vm1067, %v5532
        %v5537 = vld [vmem:[#allocation3] sm:$0xff]
        %v5538 = vld [vmem:[#allocation3 + $0x8] sm:$0xff]
        %v5539 = vpack.c.bf16 %v5538, %v5537
        %s5540 = scalar_lea.vmem %s3, 192
        %v5541 = vld [vmem:[%s5540] sm:$0xf]
        %v5542 = vld [vmem:[%s5540 + $0x4] sm:$0xf]
        %v5543 = vld [vmem:[%s5540 + $0x8] sm:$0xf]
        %v5544 = vld [vmem:[%s5540 + $0xc] sm:$0xf]
        %v5545 = vld [vmem:[%s5540 + $0x10] sm:$0xf]
        %v5546 = vld [vmem:[%s5540 + $0x14] sm:$0xf]
        %v5547 = vld [vmem:[%s5540 + $0x18] sm:$0xf]
        %v5548 = vld [vmem:[%s5540 + $0x1c] sm:$0xf]
        %v5549 = vld [vmem:[%s5540 + $0x20] sm:$0xf]
        %v5550 = vld [vmem:[%s5540 + $0x24] sm:$0xf]
        %v5551 = vld [vmem:[%s5540 + $0x28] sm:$0xf]
        %v5552 = vld [vmem:[%s5540 + $0x2c] sm:$0xf]
        %v5553 = vld [vmem:[%s5540 + $0x30] sm:$0xf]
        %v5554 = vld [vmem:[%s5540 + $0x34] sm:$0xf]
        %v5555 = vld [vmem:[%s5540 + $0x38] sm:$0xf]
        %v5556 = vld [vmem:[%s5540 + $0x3c] sm:$0xf]
        %s5557 = scalar_lea.vmem %s4, 3
        %v5558 = vld [vmem:[%s5557] sm:$0x1]
        %v5560 = vlaneseq
        %v5561 = vshrl.u32 %v5560, 7
        %v5562 = vsub.s32 0, %v5561
        %v5563 = vrot.slane %v5558, %v5562
        %v5581 = vunpack.c.l.b16 %v5541
        %v5582 = vunpack.c.l.b16 %v5542
        %v5583 = vunpack.c.l.b16 %v5543
        %v5584 = vunpack.c.l.b16 %v5544
        %v5585 = vunpack.c.l.b16 %v5545
        %v5586 = vunpack.c.l.b16 %v5546
        %v5587 = vunpack.c.l.b16 %v5547
        %v5588 = vunpack.c.l.b16 %v5548
        %v5589 = vunpack.c.l.b16 %v5549
        %v5590 = vunpack.c.l.b16 %v5550
        %v5591 = vunpack.c.l.b16 %v5551
        %v5592 = vunpack.c.l.b16 %v5552
        %v5593 = vunpack.c.l.b16 %v5553
        %v5594 = vunpack.c.l.b16 %v5554
        %v5595 = vunpack.c.l.b16 %v5555
        %v5596 = vunpack.c.l.b16 %v5556
        %v5597 = vpack.c.b16 %v5582, %v5581
        %v5598 = vpack.c.b16 %v5584, %v5583
        %v5599 = vpack.c.b16 %v5586, %v5585
        %v5600 = vpack.c.b16 %v5588, %v5587
        %v5601 = vpack.c.b16 %v5590, %v5589
        %v5602 = vpack.c.b16 %v5592, %v5591
        %v5603 = vpack.c.b16 %v5594, %v5593
        %v5604 = vpack.c.b16 %v5596, %v5595
        %5613 = vmatprep.subr.bf16.mxu0 0
        %5614 = vmatpush1.bf16.msra.mxu0 %v5597
        %5615 = vmatprep.subr.bf16.mxu0 0
        %5616 = vmatpush1.bf16.msra.mxu0 %v5598
        %5617 = vmatprep.subr.bf16.mxu0 0
        %5618 = vmatpush1.bf16.msra.mxu0 %v5599
        %5619 = vmatprep.subr.bf16.mxu0 0
        %5620 = vmatpush1.bf16.msra.mxu0 %v5600
        %5621 = vmatprep.subr.bf16.mxu0 0
        %5622 = vmatpush1.bf16.msra.mxu0 %v5601
        %5623 = vmatprep.subr.bf16.mxu0 0
        %5624 = vmatpush1.bf16.msra.mxu0 %v5602
        %5625 = vmatprep.subr.bf16.mxu0 0
        %5626 = vmatpush1.bf16.msra.mxu0 %v5603
        %5627 = vmatprep.subr.bf16.mxu0 0
        %5628 = vmatpush1.bf16.msra.mxu0 %v5604
        %5629 = vmatprep.subr.bf16.mxu0 0
        %5630 = vmatpush1.bf16.msra.mxu0 0
        %5631 = vmatprep.subr.bf16.mxu0 0
        %5632 = vmatpush1.bf16.msra.mxu0 0
        %5633 = vmatprep.subr.bf16.mxu0 0
        %5634 = vmatpush1.bf16.msra.mxu0 0
        %5635 = vmatprep.subr.bf16.mxu0 0
        %5636 = vmatpush1.bf16.msra.mxu0 0
        %5637 = vmatprep.subr.bf16.mxu0 0
        %5638 = vmatpush1.bf16.msra.mxu0 0
        %5639 = vmatprep.subr.bf16.mxu0 0
        %5640 = vmatpush1.bf16.msra.mxu0 0
        %5641 = vmatprep.subr.bf16.mxu0 0
        %5642 = vmatpush1.bf16.msra.mxu0 0
        %5643 = vmatprep.subr.bf16.mxu0 0
        %5644 = vmatpush1.bf16.msra.mxu0 0
        %5645 = vmatprep.mubr.bf16.mxu0 0
        %5646 = vmatmul.mubr.bf16.gmra.mrb[0].mxu0 %v5539
        %v5647 = vpop.f32.mrb[0].mxu0
        %v5648 = vadd.f32 %v5563, %v5647
        %v5649 = vpop.f32.mrb[0].mxu0
        %v5650 = vpop.f32.mrb[0].mxu0
        %v5651 = vadd.f32 %v5563, %v5650
        %v5652 = vpop.f32.mrb[0].mxu0
        %5653 = vdwg.mxu0
        %v5654 = vadd.f32 %v4886, %v5648
        %v5655 = vadd.f32 %v4887, %v5651
        %s5656 = scalar_lea.vmem %s7, 3
        %v5657 = vld [vmem:[%s5656] sm:$0x1]
        %s5658 = scalar_lea.vmem %s8, 3
        %v5659 = vld [vmem:[%s5658] sm:$0x1]
        %5660 = vadd.xlane.f32.xlu0 %v5654
        %v5661 = vpop.xlane.xlu0 %5660
        %5662 = vadd.xlane.f32.xlu0 %v5655
        %v5663 = vpop.xlane.xlu0 %5662
        %v5664 = vmul.f32 %v5661, %v1193
        %v5665 = vmul.f32 %v5663, %v1193
        %v5666 = vsub.f32 %v5654, %v5664
        %v5667 = vsub.f32 %v5655, %v5665
        %v5668 = vmul.f32 %v5666, %v5666
        %v5669 = vmul.f32 %v5667, %v5667
        %5670 = vadd.xlane.f32.xlu0 %v5668
        %v5671 = vpop.xlane.xlu0 %5670
        %5672 = vadd.xlane.f32.xlu0 %v5669
        %v5673 = vpop.xlane.xlu0 %5672
        %v5674 = vmul.f32 %v5671, %v1193
        %v5675 = vmul.f32 %v5673, %v1193
        %v5676 = vadd.f32 %v5674, 1e-05
        %v5677 = vadd.f32 %v5675, 1e-05
        %v5678 = vrsqrt.pop %v5676
        %v5679 = vrsqrt.pop %v5677
        %v5680 = vmul.f32 %v5666, %v5678
        %v5681 = vmul.f32 %v5667, %v5679
        %v5683 = vlaneseq
        %v5684 = vshrl.u32 %v5683, 7
        %v5685 = vsub.s32 0, %v5684
        %v5686 = vrot.slane %v5657, %v5685
        %v5688 = vmul.f32 %v5680, %v5686
        %v5689 = vmul.f32 %v5681, %v5686
        %v5691 = vlaneseq
        %v5692 = vshrl.u32 %v5691, 7
        %v5693 = vsub.s32 0, %v5692
        %v5694 = vrot.slane %v5659, %v5693
        %v5696 = vadd.f32 %v5688, %v5694
        %v5697 = vadd.f32 %v5689, %v5694
        %v5698 = vpack.c.bf16 %v5697, %v5696
        %s5699 = scalar_lea.vmem %s9, 768
        %v5700 = vld [vmem:[%s5699] sm:$0xff]
        %v5701 = vld [vmem:[%s5699 + $0x8] sm:$0xff]
        %v5702 = vld [vmem:[%s5699 + $0x10] sm:$0xff]
        %v5703 = vld [vmem:[%s5699 + $0x18] sm:$0xff]
        %v5704 = vld [vmem:[%s5699 + $0x20] sm:$0xff]
        %v5705 = vld [vmem:[%s5699 + $0x28] sm:$0xff]
        %v5706 = vld [vmem:[%s5699 + $0x30] sm:$0xff]
        %v5707 = vld [vmem:[%s5699 + $0x38] sm:$0xff]
        %v5708 = vld [vmem:[%s5699 + $0x40] sm:$0xff]
        %v5709 = vld [vmem:[%s5699 + $0x48] sm:$0xff]
        %v5710 = vld [vmem:[%s5699 + $0x50] sm:$0xff]
        %v5711 = vld [vmem:[%s5699 + $0x58] sm:$0xff]
        %v5712 = vld [vmem:[%s5699 + $0x60] sm:$0xff]
        %v5713 = vld [vmem:[%s5699 + $0x68] sm:$0xff]
        %v5714 = vld [vmem:[%s5699 + $0x70] sm:$0xff]
        %v5715 = vld [vmem:[%s5699 + $0x78] sm:$0xff]
        %v5716 = vld [vmem:[%s5699 + $0x80] sm:$0xff]
        %v5717 = vld [vmem:[%s5699 + $0x88] sm:$0xff]
        %v5718 = vld [vmem:[%s5699 + $0x90] sm:$0xff]
        %v5719 = vld [vmem:[%s5699 + $0x98] sm:$0xff]
        %v5720 = vld [vmem:[%s5699 + $0xa0] sm:$0xff]
        %v5721 = vld [vmem:[%s5699 + $0xa8] sm:$0xff]
        %v5722 = vld [vmem:[%s5699 + $0xb0] sm:$0xff]
        %v5723 = vld [vmem:[%s5699 + $0xb8] sm:$0xff]
        %v5724 = vld [vmem:[%s5699 + $0xc0] sm:$0xff]
        %v5725 = vld [vmem:[%s5699 + $0xc8] sm:$0xff]
        %v5726 = vld [vmem:[%s5699 + $0xd0] sm:$0xff]
        %v5727 = vld [vmem:[%s5699 + $0xd8] sm:$0xff]
        %v5728 = vld [vmem:[%s5699 + $0xe0] sm:$0xff]
        %v5729 = vld [vmem:[%s5699 + $0xe8] sm:$0xff]
        %v5730 = vld [vmem:[%s5699 + $0xf0] sm:$0xff]
        %v5731 = vld [vmem:[%s5699 + $0xf8] sm:$0xff]
        %s5732 = scalar_lea.vmem %s10, 12
        %v5733 = vld [vmem:[%s5732] sm:$0xf]
        %v5735 = vlaneseq
        %v5736 = vshrl.u32 %v5735, 7
        %v5737 = vsub.s32 0, %v5736
        %v5738 = vrot.slane %v5733, %v5737
        %v5739 = vlaneseq
        %v5740 = vshrl.u32 %v5739, 7
        %v5741 = vsub.s32 1, %v5740
        %v5742 = vrot.slane %v5733, %v5741
        %v5743 = vlaneseq
        %v5744 = vshrl.u32 %v5743, 7
        %v5745 = vsub.s32 2, %v5744
        %v5746 = vrot.slane %v5733, %v5745
        %v5747 = vlaneseq
        %v5748 = vshrl.u32 %v5747, 7
        %v5749 = vsub.s32 3, %v5748
        %v5750 = vrot.slane %v5733, %v5749
        %v5787 = vunpack.c.l.b16 %v5700
        %v5788 = vunpack.c.h.b16 %v5700
        %v5789 = vunpack.c.l.b16 %v5701
        %v5790 = vunpack.c.h.b16 %v5701
        %v5791 = vunpack.c.l.b16 %v5702
        %v5792 = vunpack.c.h.b16 %v5702
        %v5793 = vunpack.c.l.b16 %v5703
        %v5794 = vunpack.c.h.b16 %v5703
        %v5795 = vunpack.c.l.b16 %v5704
        %v5796 = vunpack.c.h.b16 %v5704
        %v5797 = vunpack.c.l.b16 %v5705
        %v5798 = vunpack.c.h.b16 %v5705
        %v5799 = vunpack.c.l.b16 %v5706
        %v5800 = vunpack.c.h.b16 %v5706
        %v5801 = vunpack.c.l.b16 %v5707
        %v5802 = vunpack.c.h.b16 %v5707
        %v5803 = vunpack.c.l.b16 %v5708
        %v5804 = vunpack.c.h.b16 %v5708
        %v5805 = vunpack.c.l.b16 %v5709
        %v5806 = vunpack.c.h.b16 %v5709
        %v5807 = vunpack.c.l.b16 %v5710
        %v5808 = vunpack.c.h.b16 %v5710
        %v5809 = vunpack.c.l.b16 %v5711
        %v5810 = vunpack.c.h.b16 %v5711
        %v5811 = vunpack.c.l.b16 %v5712
        %v5812 = vunpack.c.h.b16 %v5712
        %v5813 = vunpack.c.l.b16 %v5713
        %v5814 = vunpack.c.h.b16 %v5713
        %v5815 = vunpack.c.l.b16 %v5714
        %v5816 = vunpack.c.h.b16 %v5714
        %v5817 = vunpack.c.l.b16 %v5715
        %v5818 = vunpack.c.h.b16 %v5715
        %v5819 = vunpack.c.l.b16 %v5716
        %v5820 = vunpack.c.h.b16 %v5716
        %v5821 = vunpack.c.l.b16 %v5717
        %v5822 = vunpack.c.h.b16 %v5717
        %v5823 = vunpack.c.l.b16 %v5718
        %v5824 = vunpack.c.h.b16 %v5718
        %v5825 = vunpack.c.l.b16 %v5719
        %v5826 = vunpack.c.h.b16 %v5719
        %v5827 = vunpack.c.l.b16 %v5720
        %v5828 = vunpack.c.h.b16 %v5720
        %v5829 = vunpack.c.l.b16 %v5721
        %v5830 = vunpack.c.h.b16 %v5721
        %v5831 = vunpack.c.l.b16 %v5722
        %v5832 = vunpack.c.h.b16 %v5722
        %v5833 = vunpack.c.l.b16 %v5723
        %v5834 = vunpack.c.h.b16 %v5723
        %v5835 = vunpack.c.l.b16 %v5724
        %v5836 = vunpack.c.h.b16 %v5724
        %v5837 = vunpack.c.l.b16 %v5725
        %v5838 = vunpack.c.h.b16 %v5725
        %v5839 = vunpack.c.l.b16 %v5726
        %v5840 = vunpack.c.h.b16 %v5726
        %v5841 = vunpack.c.l.b16 %v5727
        %v5842 = vunpack.c.h.b16 %v5727
        %v5843 = vunpack.c.l.b16 %v5728
        %v5844 = vunpack.c.h.b16 %v5728
        %v5845 = vunpack.c.l.b16 %v5729
        %v5846 = vunpack.c.h.b16 %v5729
        %v5847 = vunpack.c.l.b16 %v5730
        %v5848 = vunpack.c.h.b16 %v5730
        %v5849 = vunpack.c.l.b16 %v5731
        %v5850 = vunpack.c.h.b16 %v5731
        %v5851 = vpack.c.b16 %v5791, %v5787
        %v5852 = vpack.c.b16 %v5792, %v5788
        %v5853 = vpack.c.b16 %v5793, %v5789
        %v5854 = vpack.c.b16 %v5794, %v5790
        %v5855 = vpack.c.b16 %v5799, %v5795
        %v5856 = vpack.c.b16 %v5800, %v5796
        %v5857 = vpack.c.b16 %v5801, %v5797
        %v5858 = vpack.c.b16 %v5802, %v5798
        %v5859 = vpack.c.b16 %v5807, %v5803
        %v5860 = vpack.c.b16 %v5808, %v5804
        %v5861 = vpack.c.b16 %v5809, %v5805
        %v5862 = vpack.c.b16 %v5810, %v5806
        %v5863 = vpack.c.b16 %v5815, %v5811
        %v5864 = vpack.c.b16 %v5816, %v5812
        %v5865 = vpack.c.b16 %v5817, %v5813
        %v5866 = vpack.c.b16 %v5818, %v5814
        %v5867 = vpack.c.b16 %v5823, %v5819
        %v5868 = vpack.c.b16 %v5824, %v5820
        %v5869 = vpack.c.b16 %v5825, %v5821
        %v5870 = vpack.c.b16 %v5826, %v5822
        %v5871 = vpack.c.b16 %v5831, %v5827
        %v5872 = vpack.c.b16 %v5832, %v5828
        %v5873 = vpack.c.b16 %v5833, %v5829
        %v5874 = vpack.c.b16 %v5834, %v5830
        %v5875 = vpack.c.b16 %v5839, %v5835
        %v5876 = vpack.c.b16 %v5840, %v5836
        %v5877 = vpack.c.b16 %v5841, %v5837
        %v5878 = vpack.c.b16 %v5842, %v5838
        %v5879 = vpack.c.b16 %v5847, %v5843
        %v5880 = vpack.c.b16 %v5848, %v5844
        %v5881 = vpack.c.b16 %v5849, %v5845
        %v5882 = vpack.c.b16 %v5850, %v5846
        %5915 = vmatprep.subr.bf16.mxu0 %v5852
        %5916 = vmatpush1.bf16.msra.mxu0 %v5851
        %5917 = vmatprep.subr.bf16.mxu0 %v5856
        %5918 = vmatpush1.bf16.msra.mxu0 %v5855
        %5919 = vmatprep.subr.bf16.mxu0 %v5860
        %5920 = vmatpush1.bf16.msra.mxu0 %v5859
        %5921 = vmatprep.subr.bf16.mxu0 %v5864
        %5922 = vmatpush1.bf16.msra.mxu0 %v5863
        %5923 = vmatprep.subr.bf16.mxu0 %v5868
        %5924 = vmatpush1.bf16.msra.mxu0 %v5867
        %5925 = vmatprep.subr.bf16.mxu0 %v5872
        %5926 = vmatpush1.bf16.msra.mxu0 %v5871
        %5927 = vmatprep.subr.bf16.mxu0 %v5876
        %5928 = vmatpush1.bf16.msra.mxu0 %v5875
        %5929 = vmatprep.subr.bf16.mxu0 %v5880
        %5930 = vmatpush1.bf16.msra.mxu0 %v5879
        %5931 = vmatprep.subr.bf16.mxu0 0
        %5932 = vmatpush1.bf16.msra.mxu0 0
        %5933 = vmatprep.subr.bf16.mxu0 0
        %5934 = vmatpush1.bf16.msra.mxu0 0
        %5935 = vmatprep.subr.bf16.mxu0 0
        %5936 = vmatpush1.bf16.msra.mxu0 0
        %5937 = vmatprep.subr.bf16.mxu0 0
        %5938 = vmatpush1.bf16.msra.mxu0 0
        %5939 = vmatprep.subr.bf16.mxu0 0
        %5940 = vmatpush1.bf16.msra.mxu0 0
        %5941 = vmatprep.subr.bf16.mxu0 0
        %5942 = vmatpush1.bf16.msra.mxu0 0
        %5943 = vmatprep.subr.bf16.mxu0 0
        %5944 = vmatpush1.bf16.msra.mxu0 0
        %5945 = vmatprep.subr.bf16.mxu0 0
        %5946 = vmatpush1.bf16.msra.mxu0 0
        %5947 = vmatprep.mubr.bf16.mxu0 0
        %5948 = vmatmul.mubr.bf16.gmra.mrb[0].mxu0 %v5698
        %v5949 = vpop.f32.mrb[0].mxu0
        %v5950 = vadd.f32 %v5738, %v5949
        %v5951 = vpop.f32.mrb[0].mxu0
        %v5952 = vadd.f32 %v5742, %v5951
        %v5953 = vpop.f32.mrb[0].mxu0
        %v5954 = vadd.f32 %v5738, %v5953
        %v5955 = vpop.f32.mrb[0].mxu0
        %v5956 = vadd.f32 %v5742, %v5955
        %5957 = vdwg.mxu0
        %5958 = vmatprep.subr.bf16.mxu0 %v5854
        %5959 = vmatpush1.bf16.msra.mxu0 %v5853
        %5960 = vmatprep.subr.bf16.mxu0 %v5858
        %5961 = vmatpush1.bf16.msra.mxu0 %v5857
        %5962 = vmatprep.subr.bf16.mxu0 %v5862
        %5963 = vmatpush1.bf16.msra.mxu0 %v5861
        %5964 = vmatprep.subr.bf16.mxu0 %v5866
        %5965 = vmatpush1.bf16.msra.mxu0 %v5865
        %5966 = vmatprep.subr.bf16.mxu0 %v5870
        %5967 = vmatpush1.bf16.msra.mxu0 %v5869
        %5968 = vmatprep.subr.bf16.mxu0 %v5874
        %5969 = vmatpush1.bf16.msra.mxu0 %v5873
        %5970 = vmatprep.subr.bf16.mxu0 %v5878
        %5971 = vmatpush1.bf16.msra.mxu0 %v5877
        %5972 = vmatprep.subr.bf16.mxu0 %v5882
        %5973 = vmatpush1.bf16.msra.mxu0 %v5881
        %5974 = vmatprep.subr.bf16.mxu0 0
        %5975 = vmatpush1.bf16.msra.mxu0 0
        %5976 = vmatprep.subr.bf16.mxu0 0
        %5977 = vmatpush1.bf16.msra.mxu0 0
        %5978 = vmatprep.subr.bf16.mxu0 0
        %5979 = vmatpush1.bf16.msra.mxu0 0
        %5980 = vmatprep.subr.bf16.mxu0 0
        %5981 = vmatpush1.bf16.msra.mxu0 0
        %5982 = vmatprep.subr.bf16.mxu0 0
        %5983 = vmatpush1.bf16.msra.mxu0 0
        %5984 = vmatprep.subr.bf16.mxu0 0
        %5985 = vmatpush1.bf16.msra.mxu0 0
        %5986 = vmatprep.subr.bf16.mxu0 0
        %5987 = vmatpush1.bf16.msra.mxu0 0
        %5988 = vmatprep.subr.bf16.mxu0 0
        %5989 = vmatpush1.bf16.msra.mxu0 0
        %5990 = vmatprep.mubr.bf16.mxu0 0
        %5991 = vmatmul.mubr.bf16.gmra.mrb[0].mxu0 %v5698
        %v5992 = vpop.f32.mrb[0].mxu0
        %v5993 = vadd.f32 %v5746, %v5992
        %v5994 = vpop.f32.mrb[0].mxu0
        %v5995 = vadd.f32 %v5750, %v5994
        %v5996 = vpop.f32.mrb[0].mxu0
        %v5997 = vadd.f32 %v5746, %v5996
        %v5998 = vpop.f32.mrb[0].mxu0
        %v5999 = vadd.f32 %v5750, %v5998
        %6000 = vdwg.mxu0
        %v6001 = vmul.f32 %v5950, 0.5
        %v6002 = vmul.f32 %v5952, 0.5
        %v6003 = vmul.f32 %v5993, 0.5
        %v6004 = vmul.f32 %v5995, 0.5
        %v6005 = vmul.f32 %v5954, 0.5
        %v6006 = vmul.f32 %v5956, 0.5
        %v6007 = vmul.f32 %v5997, 0.5
        %v6008 = vmul.f32 %v5999, 0.5
        %v6009 = vmul.f32 %v5950, 0.70710677
        %v6010 = vmul.f32 %v5952, 0.70710677
        %v6011 = vmul.f32 %v5993, 0.70710677
        %v6012 = vmul.f32 %v5995, 0.70710677
        %v6013 = vmul.f32 %v5954, 0.70710677
        %v6014 = vmul.f32 %v5956, 0.70710677
        %v6015 = vmul.f32 %v5997, 0.70710677
        %v6016 = vmul.f32 %v5999, 0.70710677
        %v6017 = verf.f32.pop %v6009
        %v6018 = verf.f32.pop %v6010
        %v6019 = verf.f32.pop %v6011
        %v6020 = verf.f32.pop %v6012
        %v6021 = verf.f32.pop %v6013
        %v6022 = verf.f32.pop %v6014
        %v6023 = verf.f32.pop %v6015
        %v6024 = verf.f32.pop %v6016
        %v6025 = vadd.f32 %v6017, 1.0
        %v6026 = vadd.f32 %v6018, 1.0
        %v6027 = vadd.f32 %v6019, 1.0
        %v6028 = vadd.f32 %v6020, 1.0
        %v6029 = vadd.f32 %v6021, 1.0
        %v6030 = vadd.f32 %v6022, 1.0
        %v6031 = vadd.f32 %v6023, 1.0
        %v6032 = vadd.f32 %v6024, 1.0
        %v6033 = vmul.f32 %v6001, %v6025
        %v6034 = vmul.f32 %v6002, %v6026
        %v6035 = vmul.f32 %v6003, %v6027
        %v6036 = vmul.f32 %v6004, %v6028
        %v6037 = vmul.f32 %v6005, %v6029
        %v6038 = vmul.f32 %v6006, %v6030
        %v6039 = vmul.f32 %v6007, %v6031
        %v6040 = vmul.f32 %v6008, %v6032
        %v6041 = vpack.c.bf16 %v6037, %v6033
        %v6042 = vpack.c.bf16 %v6038, %v6034
        %v6043 = vpack.c.bf16 %v6039, %v6035
        %v6044 = vpack.c.bf16 %v6040, %v6036
        %s6045 = scalar_lea.vmem %s11, 768
        %v6046 = vld [vmem:[%s6045] sm:$0xf]
        %v6047 = vld [vmem:[%s6045 + $0x4] sm:$0xf]
        %v6048 = vld [vmem:[%s6045 + $0x8] sm:$0xf]
        %v6049 = vld [vmem:[%s6045 + $0xc] sm:$0xf]
        %v6050 = vld [vmem:[%s6045 + $0x10] sm:$0xf]
        %v6051 = vld [vmem:[%s6045 + $0x14] sm:$0xf]
        %v6052 = vld [vmem:[%s6045 + $0x18] sm:$0xf]
        %v6053 = vld [vmem:[%s6045 + $0x1c] sm:$0xf]
        %v6054 = vld [vmem:[%s6045 + $0x20] sm:$0xf]
        %v6055 = vld [vmem:[%s6045 + $0x24] sm:$0xf]
        %v6056 = vld [vmem:[%s6045 + $0x28] sm:$0xf]
        %v6057 = vld [vmem:[%s6045 + $0x2c] sm:$0xf]
        %v6058 = vld [vmem:[%s6045 + $0x30] sm:$0xf]
        %v6059 = vld [vmem:[%s6045 + $0x34] sm:$0xf]
        %v6060 = vld [vmem:[%s6045 + $0x38] sm:$0xf]
        %v6061 = vld [vmem:[%s6045 + $0x3c] sm:$0xf]
        %v6062 = vld [vmem:[%s6045 + $0x40] sm:$0xf]
        %v6063 = vld [vmem:[%s6045 + $0x44] sm:$0xf]
        %v6064 = vld [vmem:[%s6045 + $0x48] sm:$0xf]
        %v6065 = vld [vmem:[%s6045 + $0x4c] sm:$0xf]
        %v6066 = vld [vmem:[%s6045 + $0x50] sm:$0xf]
        %v6067 = vld [vmem:[%s6045 + $0x54] sm:$0xf]
        %v6068 = vld [vmem:[%s6045 + $0x58] sm:$0xf]
        %v6069 = vld [vmem:[%s6045 + $0x5c] sm:$0xf]
        %v6070 = vld [vmem:[%s6045 + $0x60] sm:$0xf]
        %v6071 = vld [vmem:[%s6045 + $0x64] sm:$0xf]
        %v6072 = vld [vmem:[%s6045 + $0x68] sm:$0xf]
        %v6073 = vld [vmem:[%s6045 + $0x6c] sm:$0xf]
        %v6074 = vld [vmem:[%s6045 + $0x70] sm:$0xf]
        %v6075 = vld [vmem:[%s6045 + $0x74] sm:$0xf]
        %v6076 = vld [vmem:[%s6045 + $0x78] sm:$0xf]
        %v6077 = vld [vmem:[%s6045 + $0x7c] sm:$0xf]
        %v6078 = vld [vmem:[%s6045 + $0x80] sm:$0xf]
        %v6079 = vld [vmem:[%s6045 + $0x84] sm:$0xf]
        %v6080 = vld [vmem:[%s6045 + $0x88] sm:$0xf]
        %v6081 = vld [vmem:[%s6045 + $0x8c] sm:$0xf]
        %v6082 = vld [vmem:[%s6045 + $0x90] sm:$0xf]
        %v6083 = vld [vmem:[%s6045 + $0x94] sm:$0xf]
        %v6084 = vld [vmem:[%s6045 + $0x98] sm:$0xf]
        %v6085 = vld [vmem:[%s6045 + $0x9c] sm:$0xf]
        %v6086 = vld [vmem:[%s6045 + $0xa0] sm:$0xf]
        %v6087 = vld [vmem:[%s6045 + $0xa4] sm:$0xf]
        %v6088 = vld [vmem:[%s6045 + $0xa8] sm:$0xf]
        %v6089 = vld [vmem:[%s6045 + $0xac] sm:$0xf]
        %v6090 = vld [vmem:[%s6045 + $0xb0] sm:$0xf]
        %v6091 = vld [vmem:[%s6045 + $0xb4] sm:$0xf]
        %v6092 = vld [vmem:[%s6045 + $0xb8] sm:$0xf]
        %v6093 = vld [vmem:[%s6045 + $0xbc] sm:$0xf]
        %v6094 = vld [vmem:[%s6045 + $0xc0] sm:$0xf]
        %v6095 = vld [vmem:[%s6045 + $0xc4] sm:$0xf]
        %v6096 = vld [vmem:[%s6045 + $0xc8] sm:$0xf]
        %v6097 = vld [vmem:[%s6045 + $0xcc] sm:$0xf]
        %v6098 = vld [vmem:[%s6045 + $0xd0] sm:$0xf]
        %v6099 = vld [vmem:[%s6045 + $0xd4] sm:$0xf]
        %v6100 = vld [vmem:[%s6045 + $0xd8] sm:$0xf]
        %v6101 = vld [vmem:[%s6045 + $0xdc] sm:$0xf]
        %v6102 = vld [vmem:[%s6045 + $0xe0] sm:$0xf]
        %v6103 = vld [vmem:[%s6045 + $0xe4] sm:$0xf]
        %v6104 = vld [vmem:[%s6045 + $0xe8] sm:$0xf]
        %v6105 = vld [vmem:[%s6045 + $0xec] sm:$0xf]
        %v6106 = vld [vmem:[%s6045 + $0xf0] sm:$0xf]
        %v6107 = vld [vmem:[%s6045 + $0xf4] sm:$0xf]
        %v6108 = vld [vmem:[%s6045 + $0xf8] sm:$0xf]
        %v6109 = vld [vmem:[%s6045 + $0xfc] sm:$0xf]
        %s6110 = scalar_lea.vmem %s12, 3
        %v6111 = vld [vmem:[%s6110] sm:$0x1]
        %v6113 = vlaneseq
        %v6114 = vshrl.u32 %v6113, 7
        %v6115 = vsub.s32 0, %v6114
        %v6116 = vrot.slane %v6111, %v6115
        %v6182 = vunpack.c.l.b16 %v6046
        %v6183 = vunpack.c.l.b16 %v6047
        %v6184 = vunpack.c.l.b16 %v6048
        %v6185 = vunpack.c.l.b16 %v6049
        %v6186 = vunpack.c.l.b16 %v6050
        %v6187 = vunpack.c.l.b16 %v6051
        %v6188 = vunpack.c.l.b16 %v6052
        %v6189 = vunpack.c.l.b16 %v6053
        %v6190 = vunpack.c.l.b16 %v6054
        %v6191 = vunpack.c.l.b16 %v6055
        %v6192 = vunpack.c.l.b16 %v6056
        %v6193 = vunpack.c.l.b16 %v6057
        %v6194 = vunpack.c.l.b16 %v6058
        %v6195 = vunpack.c.l.b16 %v6059
        %v6196 = vunpack.c.l.b16 %v6060
        %v6197 = vunpack.c.l.b16 %v6061
        %v6198 = vunpack.c.l.b16 %v6062
        %v6199 = vunpack.c.l.b16 %v6063
        %v6200 = vunpack.c.l.b16 %v6064
        %v6201 = vunpack.c.l.b16 %v6065
        %v6202 = vunpack.c.l.b16 %v6066
        %v6203 = vunpack.c.l.b16 %v6067
        %v6204 = vunpack.c.l.b16 %v6068
        %v6205 = vunpack.c.l.b16 %v6069
        %v6206 = vunpack.c.l.b16 %v6070
        %v6207 = vunpack.c.l.b16 %v6071
        %v6208 = vunpack.c.l.b16 %v6072
        %v6209 = vunpack.c.l.b16 %v6073
        %v6210 = vunpack.c.l.b16 %v6074
        %v6211 = vunpack.c.l.b16 %v6075
        %v6212 = vunpack.c.l.b16 %v6076
        %v6213 = vunpack.c.l.b16 %v6077
        %v6214 = vunpack.c.l.b16 %v6078
        %v6215 = vunpack.c.l.b16 %v6079
        %v6216 = vunpack.c.l.b16 %v6080
        %v6217 = vunpack.c.l.b16 %v6081
        %v6218 = vunpack.c.l.b16 %v6082
        %v6219 = vunpack.c.l.b16 %v6083
        %v6220 = vunpack.c.l.b16 %v6084
        %v6221 = vunpack.c.l.b16 %v6085
        %v6222 = vunpack.c.l.b16 %v6086
        %v6223 = vunpack.c.l.b16 %v6087
        %v6224 = vunpack.c.l.b16 %v6088
        %v6225 = vunpack.c.l.b16 %v6089
        %v6226 = vunpack.c.l.b16 %v6090
        %v6227 = vunpack.c.l.b16 %v6091
        %v6228 = vunpack.c.l.b16 %v6092
        %v6229 = vunpack.c.l.b16 %v6093
        %v6230 = vunpack.c.l.b16 %v6094
        %v6231 = vunpack.c.l.b16 %v6095
        %v6232 = vunpack.c.l.b16 %v6096
        %v6233 = vunpack.c.l.b16 %v6097
        %v6234 = vunpack.c.l.b16 %v6098
        %v6235 = vunpack.c.l.b16 %v6099
        %v6236 = vunpack.c.l.b16 %v6100
        %v6237 = vunpack.c.l.b16 %v6101
        %v6238 = vunpack.c.l.b16 %v6102
        %v6239 = vunpack.c.l.b16 %v6103
        %v6240 = vunpack.c.l.b16 %v6104
        %v6241 = vunpack.c.l.b16 %v6105
        %v6242 = vunpack.c.l.b16 %v6106
        %v6243 = vunpack.c.l.b16 %v6107
        %v6244 = vunpack.c.l.b16 %v6108
        %v6245 = vunpack.c.l.b16 %v6109
        %v6246 = vpack.c.b16 %v6183, %v6182
        %v6247 = vpack.c.b16 %v6185, %v6184
        %v6248 = vpack.c.b16 %v6187, %v6186
        %v6249 = vpack.c.b16 %v6189, %v6188
        %v6250 = vpack.c.b16 %v6191, %v6190
        %v6251 = vpack.c.b16 %v6193, %v6192
        %v6252 = vpack.c.b16 %v6195, %v6194
        %v6253 = vpack.c.b16 %v6197, %v6196
        %v6254 = vpack.c.b16 %v6199, %v6198
        %v6255 = vpack.c.b16 %v6201, %v6200
        %v6256 = vpack.c.b16 %v6203, %v6202
        %v6257 = vpack.c.b16 %v6205, %v6204
        %v6258 = vpack.c.b16 %v6207, %v6206
        %v6259 = vpack.c.b16 %v6209, %v6208
        %v6260 = vpack.c.b16 %v6211, %v6210
        %v6261 = vpack.c.b16 %v6213, %v6212
        %v6262 = vpack.c.b16 %v6215, %v6214
        %v6263 = vpack.c.b16 %v6217, %v6216
        %v6264 = vpack.c.b16 %v6219, %v6218
        %v6265 = vpack.c.b16 %v6221, %v6220
        %v6266 = vpack.c.b16 %v6223, %v6222
        %v6267 = vpack.c.b16 %v6225, %v6224
        %v6268 = vpack.c.b16 %v6227, %v6226
        %v6269 = vpack.c.b16 %v6229, %v6228
        %v6270 = vpack.c.b16 %v6231, %v6230
        %v6271 = vpack.c.b16 %v6233, %v6232
        %v6272 = vpack.c.b16 %v6235, %v6234
        %v6273 = vpack.c.b16 %v6237, %v6236
        %v6274 = vpack.c.b16 %v6239, %v6238
        %v6275 = vpack.c.b16 %v6241, %v6240
        %v6276 = vpack.c.b16 %v6243, %v6242
        %v6277 = vpack.c.b16 %v6245, %v6244
        %6310 = vmatprep.subr.bf16.mxu0 0
        %6311 = vmatpush1.bf16.msra.mxu0 %v6246
        %6312 = vmatprep.subr.bf16.mxu0 0
        %6313 = vmatpush1.bf16.msra.mxu0 %v6247
        %6314 = vmatprep.subr.bf16.mxu0 0
        %6315 = vmatpush1.bf16.msra.mxu0 %v6248
        %6316 = vmatprep.subr.bf16.mxu0 0
        %6317 = vmatpush1.bf16.msra.mxu0 %v6249
        %6318 = vmatprep.subr.bf16.mxu0 0
        %6319 = vmatpush1.bf16.msra.mxu0 %v6250
        %6320 = vmatprep.subr.bf16.mxu0 0
        %6321 = vmatpush1.bf16.msra.mxu0 %v6251
        %6322 = vmatprep.subr.bf16.mxu0 0
        %6323 = vmatpush1.bf16.msra.mxu0 %v6252
        %6324 = vmatprep.subr.bf16.mxu0 0
        %6325 = vmatpush1.bf16.msra.mxu0 %v6253
        %6326 = vmatprep.subr.bf16.mxu0 0
        %6327 = vmatpush1.bf16.msra.mxu0 %v6254
        %6328 = vmatprep.subr.bf16.mxu0 0
        %6329 = vmatpush1.bf16.msra.mxu0 %v6255
        %6330 = vmatprep.subr.bf16.mxu0 0
        %6331 = vmatpush1.bf16.msra.mxu0 %v6256
        %6332 = vmatprep.subr.bf16.mxu0 0
        %6333 = vmatpush1.bf16.msra.mxu0 %v6257
        %6334 = vmatprep.subr.bf16.mxu0 0
        %6335 = vmatpush1.bf16.msra.mxu0 %v6258
        %6336 = vmatprep.subr.bf16.mxu0 0
        %6337 = vmatpush1.bf16.msra.mxu0 %v6259
        %6338 = vmatprep.subr.bf16.mxu0 0
        %6339 = vmatpush1.bf16.msra.mxu0 %v6260
        %6340 = vmatprep.subr.bf16.mxu0 0
        %6341 = vmatpush1.bf16.msra.mxu0 %v6261
        %6342 = vmatprep.mubr.bf16.mxu0 %v6042
        %6343 = vmatmul.mubr.bf16.gmra.mrb[0].mxu0 %v6041
        %v6344 = vpop.f32.mrb[0].mxu0
        %v6345 = vadd.f32 %v6116, %v6344
        %v6346 = vpop.f32.mrb[0].mxu0
        %v6347 = vpop.f32.mrb[0].mxu0
        %v6348 = vadd.f32 %v6116, %v6347
        %v6349 = vpop.f32.mrb[0].mxu0
        %6350 = vdwg.mxu0
        %6351 = vmatprep.subr.bf16.mxu0 0
        %6352 = vmatpush1.bf16.msra.mxu0 %v6262
        %6353 = vmatprep.subr.bf16.mxu0 0
        %6354 = vmatpush1.bf16.msra.mxu0 %v6263
        %6355 = vmatprep.subr.bf16.mxu0 0
        %6356 = vmatpush1.bf16.msra.mxu0 %v6264
        %6357 = vmatprep.subr.bf16.mxu0 0
        %6358 = vmatpush1.bf16.msra.mxu0 %v6265
        %6359 = vmatprep.subr.bf16.mxu0 0
        %6360 = vmatpush1.bf16.msra.mxu0 %v6266
        %6361 = vmatprep.subr.bf16.mxu0 0
        %6362 = vmatpush1.bf16.msra.mxu0 %v6267
        %6363 = vmatprep.subr.bf16.mxu0 0
        %6364 = vmatpush1.bf16.msra.mxu0 %v6268
        %6365 = vmatprep.subr.bf16.mxu0 0
        %6366 = vmatpush1.bf16.msra.mxu0 %v6269
        %6367 = vmatprep.subr.bf16.mxu0 0
        %6368 = vmatpush1.bf16.msra.mxu0 %v6270
        %6369 = vmatprep.subr.bf16.mxu0 0
        %6370 = vmatpush1.bf16.msra.mxu0 %v6271
        %6371 = vmatprep.subr.bf16.mxu0 0
        %6372 = vmatpush1.bf16.msra.mxu0 %v6272
        %6373 = vmatprep.subr.bf16.mxu0 0
        %6374 = vmatpush1.bf16.msra.mxu0 %v6273
        %6375 = vmatprep.subr.bf16.mxu0 0
        %6376 = vmatpush1.bf16.msra.mxu0 %v6274
        %6377 = vmatprep.subr.bf16.mxu0 0
        %6378 = vmatpush1.bf16.msra.mxu0 %v6275
        %6379 = vmatprep.subr.bf16.mxu0 0
        %6380 = vmatpush1.bf16.msra.mxu0 %v6276
        %6381 = vmatprep.subr.bf16.mxu0 0
        %6382 = vmatpush1.bf16.msra.mxu0 %v6277
        %6383 = vmatprep.mubr.bf16.mxu0 %v6044
        %6384 = vmatmul.mubr.bf16.gmra.mrb[0].mxu0 %v6043
        %v6385 = vpop.f32.mrb[0].mxu0
        %v6386 = vadd.f32 %v6345, %v6385
        %v6387 = vpop.f32.mrb[0].mxu0
        %v6388 = vpop.f32.mrb[0].mxu0
        %v6389 = vadd.f32 %v6348, %v6388
        %v6390 = vpop.f32.mrb[0].mxu0
        %6391 = vdwg.mxu0
        %v6392 = vadd.f32 %v5654, %v6386
        %v6393 = vadd.f32 %v5655, %v6389
        %6394 = vst [vmem:[%s433] sm:$0xff] %v6392
        %6395 = vst [vmem:[%s433 + $0x8] sm:$0xff] %v6393
        %s6396 = sand.u32 %s313, 1
        %s6397 = scalar_lea.sflag [#allocation5], %s6396
        %s6398 = sand.u32 %s313, 1
        %s6399 = smul.addr %s6398, 16
        %s6400 = scalar_lea.vmem [#allocation4], %s6399
        // Predicated region
        $region73: #{_lambda_.1} parent=71 // pred_check
          %p6401 = pneg %p323
        $region74: #{_lambda_.1} parent=71 // pred_check_branch
          %6403 = sbr.rel (%p6401) target = $region76
        $region75: #{_lambda_.1} parent=71 // pred_region
          %s6405 = ssub.s32 256, 256
          %6406 = vsyncadd %s6397, %s6405
          %s6407 = smul.addr %s27, 2
          %s6408 = smul.addr %s6407, 128
          %s6409 = scalar_lea.hbm %s13, %s6408
          %s6410 = sshll.u32 %s6400, 4
          %s6411 = int_to_ptr.vmem [resolvable:$true] %s6410
          %6416 = dma.vmem_to_hbm [thread:$0]  %s6411, 256, %s6409, %s6397, 128, 128, 8
        $region76: #{_lambda_.1} parent=71 // pred_fallthru
          _
      $region72: #{_lambda_.1} parent=5 // pred_fallthru
        _
      %p6417 = scmp.le.s32.totalorder 2, %s22
      // Predicated region
      $region77: #{_lambda_.1} parent=5 // pred_check
        %p6418 = pneg %p6417
      $region78: #{_lambda_.1} parent=5 // pred_check_branch
        %6420 = sbr.rel (%p6418) target = $region80
      $region79: #{_lambda_.1} parent=5 // pred_region
        %s6421 = ssub.s32 %s22, 2
        // Predicated region
        $region81: #{_lambda_.1} parent=79 // pred_check
          %p6422 = pneg %p329
        $region82: #{_lambda_.1} parent=79 // pred_check_branch
          %6424 = sbr.rel (%p6422) target = $region84
        $region83: #{_lambda_.1} parent=79 // pred_region
          %s6425 = sand.u32 %s314, 1
          %s6426 = scalar_lea.sflag [#allocation5], %s6425
          %s6427 = sand.u32 %s314, 1
          %s6428 = smul.addr %s6427, 16
          %s6429 = scalar_lea.vmem [#allocation4], %s6428
          %6430 = dma.done %s6426, 256
        $region84: #{_lambda_.1} parent=79 // pred_fallthru
          _
      $region80: #{_lambda_.1} parent=5 // pred_fallthru
        _
    $region6: #{_lambda_.1} parent=1 // loop_footer
      %s26 = sadd.s32 1, %s22
    $region7: #{_lambda_.1} parent=1 // loop_footer_branch
      %21 = sbr.rel target = $region3
    $region8: #{_lambda_.1} parent=1 // loop_exit
      _
    %6431 = vsyncpa [#allocation5], 1
    %s6432 = scalar_lea.sflag [#allocation5], 1
    %6433 = vsyncpa %s6432, 1

</llo_original>
